<compile_context>
chip_gen: v6e
topology: v6e:2x2x1
jax: 0.10.0
libtpu: 0.0.40
codegen_flags: <defaults>
</compile_context>

<pallas_src>
import functools

import numpy as np
import jax
import jax.numpy as jnp
from jax import lax
from jax.experimental import pallas as pl
from jax.experimental.pallas import tpu as pltpu


# --------------------------------------------------------------------------- kernel

def _fused_kernel(x_ref, wb1_ref, g1_ref, be1_ref, sel1_ref, til1_ref,
                  wb2_ref, g2_ref, be2_ref, sel2_ref, til2_ref,
                  o_ref, s1pad_ref):
    f32 = jnp.float32
    N = x_ref.shape[0]
    D = x_ref.shape[1] - 2                      # x arrives D/H/W halo-padded
    rows = N * D
    hw = o_ref.shape[1] // sel2_ref.shape[1]    # interior H*W
    inv_cnt = 1.0 / float(rows * hw)            # 1 / (N*D*H*W)
    eps = 1e-5

    def conv(inp_ref, wb_ref):
        # 3 banded MXU matmuls (one per kd); (kh, kw, h, w) are folded into K / lanes.
        kdim = wb_ref.shape[1]
        cols = wb_ref.shape[2]
        cdt = wb_ref.dtype                      # f32 for conv1, bf16 for conv2
        acc = None
        for kd in range(3):
            slab = inp_ref[:, kd:kd + D, :].reshape(rows, kdim).astype(cdt)
            part = jnp.dot(slab, wb_ref[kd], preferred_element_type=f32)
            acc = part if acc is None else acc + part
        return acc

    def bn_spike(act, g_ref, be_ref, sel_ref, til_ref):
        # Training-mode BatchNorm3d (batch stats, biased one-pass var) + IF threshold.
        s1 = jnp.sum(act, axis=0, keepdims=True)            # (1, COLS)
        s2 = jnp.sum(act * act, axis=0, keepdims=True)      # (1, COLS)
        red = jnp.dot(jnp.concatenate([s1, s2], axis=0), sel_ref[...],
                      preferred_element_type=f32) * inv_cnt  # (2, C): [mean; mean_sq]
        mean_c = red[0:1, :]
        var_c = red[1:2, :] - mean_c * mean_c
        scale_c = g_ref[...] * lax.rsqrt(var_c + eps)
        bias_c = be_ref[...] - mean_c * scale_c
        sb = jnp.dot(jnp.concatenate([scale_c, bias_c], axis=0), til_ref[...],
                     preferred_element_type=f32)              # (2, COLS) broadcast
        y = act * sb[0:1, :] + sb[1:2, :]
        return (y >= 1.0).astype(f32)   # IFNode single step, v_threshold = 1.0

    # ---- conv1 -> BN1 -> spike.  Output columns are already in the (H+2, W+2)-halo
    #      padded lane layout; til1 is zero on halo columns, so halo spikes are exactly 0.
    s1 = bn_spike(conv(x_ref, wb1_ref), g1_ref, be1_ref, sel1_ref, til1_ref)

    # ---- D-halo for conv2: zero ONLY the two halo faces, one dense interior store.
    cols1 = s1pad_ref.shape[2]
    zero_face = jnp.zeros((N, 1, cols1), s1pad_ref.dtype)
    s1pad_ref[:, 0:1, :] = zero_face
    s1pad_ref[:, D + 1:D + 2, :] = zero_face
    s1pad_ref[:, 1:D + 1, :] = s1.reshape(N, D, cols1)

    # ---- conv2 (bf16 spikes x bf16 band weights on the MXU) -> BN2 -> spike.
    s2 = bn_spike(conv(s1pad_ref, wb2_ref), g2_ref, be2_ref, sel2_ref, til2_ref)
    o_ref[...] = s2.astype(o_ref.dtype)


# --------------------------------------------------------------- host-side precompute

def _band_weights_np(w, H, W, pad_out):
    # w: (3, 3, 3, Cin, Cout) in DHWIO order.
    # Returns wb: (3, (H+2)*(W+2)*Cin, OH*OW*Cout) so that per kd:
    #   out[(n,d), (ho,wo,co)] = sum_{h',w',ci} xpad[n, d+kd, h', w', ci] * wb[kd][(h',w',ci),(ho,wo,co)]
    _, _, _, cin, cout = w.shape
    PH, PW = H + 2, W + 2
    if pad_out:   # emit output already in the halo-padded column layout (halo cols = 0)
        OH, OW, oh0, ow0 = PH, PW, 1, 1
    else:
        OH, OW, oh0, ow0 = H, W, 0, 0
    wb = np.zeros((3, PH * PW * cin, OH * OW * cout), np.float32)
    for kd in range(3):
        for kh in range(3):
            for kw in range(3):
                blk = np.asarray(w[kd, kh, kw], np.float32)        # (cin, cout)
                for h in range(H):
                    for wx in range(W):
                        r0 = ((h + kh) * PW + (wx + kw)) * cin
                        c0 = ((h + oh0) * OW + (wx + ow0)) * cout
                        wb[kd, r0:r0 + cin, c0:c0 + cout] = blk
    return wb


def _sel_til_np(c, H, W, padded_cols):
    # til: (C, COLS) broadcasts per-channel values to every interior (h, w, c) column
    #      (zero on halo columns). sel = til.T sums the interior replicas per channel.
    if padded_cols:
        OH, OW, oh0, ow0 = H + 2, W + 2, 1, 1
    else:
        OH, OW, oh0, ow0 = H, W, 0, 0
    til = np.zeros((c, OH * OW * c), np.float32)
    eye = np.eye(c, dtype=np.float32)
    for h in range(H):
        for wx in range(W):
            c0 = ((h + oh0) * OW + (wx + ow0)) * c
            til[:, c0:c0 + c] = eye
    return til.T.copy(), til


def prepare_params(params, H, W):
    """Precompute band weights / sel / til once per parameter update (outside the jit)."""
    w1 = np.asarray(params["w1"])
    w2 = np.asarray(params["w2"])
    c1 = w1.shape[-1]
    c0 = w2.shape[-1]
    sel1, til1 = _sel_til_np(c1, H, W, padded_cols=True)
    sel2, til2 = _sel_til_np(c0, H, W, padded_cols=False)
    return dict(
        wb1=jnp.asarray(_band_weights_np(w1, H, W, pad_out=True), jnp.float32),
        wb2=jnp.asarray(_band_weights_np(w2, H, W, pad_out=False), jnp.bfloat16),
        sel1=jnp.asarray(sel1), til1=jnp.asarray(til1),
        sel2=jnp.asarray(sel2), til2=jnp.asarray(til2),
        g1=jnp.asarray(params["gamma1"], jnp.float32).reshape(1, c1),
        b1=jnp.asarray(params["beta1"], jnp.float32).reshape(1, c1),
        g2=jnp.asarray(params["gamma2"], jnp.float32).reshape(1, c0),
        b2=jnp.asarray(params["beta2"], jnp.float32).reshape(1, c0),
        # NOTE: conv biases b1/b2 intentionally omitted — cancelled by training-mode BN.
    )


# ------------------------------------------------------------------------- forward

@jax.jit
def spiking_bottleneck_3d(x_ncdhw, prep):
    # x_ncdhw: (N, C, D, H, W) PyTorch layout; output same layout.
    N, C0, D, H, W = x_ncdhw.shape
    C1 = prep["g1"].shape[1]
    PH, PW = H + 2, W + 2
    cols1 = PH * PW * C1
    cols2 = H * W * C0

    # NCDHW -> NDHWC, zero-pad the D/H/W halo (fuses with the transpose in XLA),
    # then fold (H+2, W+2, C) into the lane dim.
    x = jnp.transpose(x_ncdhw, (0, 2, 3, 4, 1))
    x = jnp.pad(x, ((0, 0), (1, 1), (1, 1), (1, 1), (0, 0)))
    x = x.reshape(N, D + 2, PH * PW * C0)

    out_flat = pl.pallas_call(
        _fused_kernel,
        out_shape=jax.ShapeDtypeStruct((N * D, cols2), jnp.float32),
        scratch_shapes=[
            pltpu.VMEM((N, D + 2, cols1), jnp.float32),   # D-halo-padded spikes
        ],
        compiler_params=pltpu.CompilerParams(vmem_limit_bytes=32 * 1024 * 1024),
    )(x, prep["wb1"], prep["g1"], prep["b1"], prep["sel1"], prep["til1"],
      prep["wb2"], prep["g2"], prep["b2"], prep["sel2"], prep["til2"])

    out = out_flat.reshape(N, D, H, W, C0)
    return jnp.transpose(out, (0, 4, 1, 2, 3))


# ------------------------------------------------------------------- reference / test

def init_params(key, in_channels, hidden_channels):
    k1, k2, k3, k4 = jax.random.split(key, 4)
    fan1 = in_channels * 27
    fan2 = hidden_channels * 27
    return dict(
        w1=jax.random.normal(k1, (3, 3, 3, in_channels, hidden_channels),
                             jnp.float32) / jnp.sqrt(fan1),
        b1=jax.random.normal(k2, (hidden_channels,), jnp.float32) * 0.01,
        gamma1=jnp.ones((hidden_channels,), jnp.float32),
        beta1=jnp.zeros((hidden_channels,), jnp.float32),
        w2=jax.random.normal(k3, (3, 3, 3, hidden_channels, in_channels),
                             jnp.float32) / jnp.sqrt(fan2),
        b2=jax.random.normal(k4, (in_channels,), jnp.float32) * 0.01,
        gamma2=jnp.ones((in_channels,), jnp.float32),
        beta2=jnp.zeros((in_channels,), jnp.float32),
    )


def _reference(x_ncdhw, params, eps=1e-5):
    # Pure-JAX reference of the module forward (with conv bias, training-mode BN,
    # two-pass variance, IF threshold) — demonstrates the bias is indeed cancelled.
    x = jnp.transpose(x_ncdhw, (0, 2, 3, 4, 1))

    def block(inp, w, b, g, be):
        y = lax.conv_general_dilated(
            inp, w, window_strides=(1, 1, 1), padding="SAME",
            dimension_numbers=("NDHWC", "DHWIO", "NDHWC")) + b
        mean = jnp.mean(y, axis=(0, 1, 2, 3))
        var = jnp.mean(jnp.square(y - mean), axis=(0, 1, 2, 3))
        yn = (y - mean) * lax.rsqrt(var + eps) * g + be
        return (yn >= 1.0).astype(jnp.float32)

    s1 = block(x, params["w1"], params["b1"], params["gamma1"], params["beta1"])
    s2 = block(s1, params["w2"], params["b2"], params["gamma2"], params["beta2"])
    return jnp.transpose(s2, (0, 4, 1, 2, 3))


if __name__ == "__main__":
    key = jax.random.PRNGKey(0)
    kx, kp = jax.random.split(key)

    N, C, CH, D, H, W = 2, 4, 8, 8, 8, 8      # in_channels=4, hidden_channels=8
    x = jax.random.normal(kx, (N, C, D, H, W), jnp.float32)
    params = init_params(kp, C, CH)

    prep = prepare_params(params, H, W)       # hoisted out of the per-step path
    out = jax.block_until_ready(spiking_bottleneck_3d(x, prep))
    assert out.shape == (N, C, D, H, W)
    assert out.dtype == jnp.float32
    assert bool(jnp.all((out == 0.0) | (out == 1.0))), "output is not a spike tensor"

    # Full-module correctness vs. pure-JAX reference.  Outputs are 0/1 spikes; allow a
    # tiny fraction of threshold-borderline flips (bf16 conv2 weights, accumulation order).
    ref = jax.block_until_ready(_reference(x, params))
    mismatch_frac = float(jnp.mean(jnp.abs(out - ref)))
    assert mismatch_frac < 5e-3, f"spike mismatch fraction {mismatch_frac}"

    print("KERNEL_OK")
</pallas_src>

<mosaic_0001>
module attributes {stable_mosaic.version = 11 : i64} {
  func.func @_fused_kernel(%arg0: memref<2x10x400xf32, #tpu.memory_space<vmem>>, %arg1: memref<3x400x800xf32, #tpu.memory_space<vmem>>, %arg2: memref<1x8xf32, #tpu.memory_space<vmem>>, %arg3: memref<1x8xf32, #tpu.memory_space<vmem>>, %arg4: memref<800x8xf32, #tpu.memory_space<vmem>>, %arg5: memref<8x800xf32, #tpu.memory_space<vmem>>, %arg6: memref<3x800x256xbf16, #tpu.memory_space<vmem>>, %arg7: memref<1x4xf32, #tpu.memory_space<vmem>>, %arg8: memref<1x4xf32, #tpu.memory_space<vmem>>, %arg9: memref<256x4xf32, #tpu.memory_space<vmem>>, %arg10: memref<4x256xf32, #tpu.memory_space<vmem>>, %arg11: memref<16x256xf32, #tpu.memory_space<vmem>>, %arg12: memref<2x10x800xf32, #tpu.memory_space<vmem>>) attributes {dimension_semantics = [], scalar_prefetch = 0 : i64, scratch_operands = 1 : i64, tpu.core_type = #tpu.core_type<tc>} {
    %c0 = arith.constant 0 : index
    %c0_0 = arith.constant 0 : index
    %c0_1 = arith.constant 0 : index
    %0 = vector.load %arg0[%c0, %c0_0, %c0_1] : memref<2x10x400xf32, #tpu.memory_space<vmem>>, vector<2x8x400xf32>
    %1 = vector.shape_cast %0 : vector<2x8x400xf32> to vector<16x400xf32>
    %c0_2 = arith.constant 0 : index
    %c0_3 = arith.constant 0 : index
    %c0_4 = arith.constant 0 : index
    %2 = vector.load %arg1[%c0_2, %c0_3, %c0_4] : memref<3x400x800xf32, #tpu.memory_space<vmem>>, vector<1x400x800xf32>
    %3 = vector.shape_cast %2 : vector<1x400x800xf32> to vector<400x800xf32>
    %cst = arith.constant dense<0.000000e+00> : vector<16x800xf32>
    %4 = tpu.matmul %1, %3, %cst {dimension_numbers = #tpu.dot_dimension_numbers<[1], [0], [0], [1], [0, 0, 1, 1], [], []>} : vector<16x400xf32>, vector<400x800xf32>, vector<16x800xf32> -> vector<16x800xf32>
    %c0_5 = arith.constant 0 : index
    %c1 = arith.constant 1 : index
    %c0_6 = arith.constant 0 : index
    %5 = vector.load %arg0[%c0_5, %c1, %c0_6] : memref<2x10x400xf32, #tpu.memory_space<vmem>>, vector<2x8x400xf32>
    %6 = vector.shape_cast %5 : vector<2x8x400xf32> to vector<16x400xf32>
    %c1_7 = arith.constant 1 : index
    %c0_8 = arith.constant 0 : index
    %c0_9 = arith.constant 0 : index
    %7 = vector.load %arg1[%c1_7, %c0_8, %c0_9] : memref<3x400x800xf32, #tpu.memory_space<vmem>>, vector<1x400x800xf32>
    %8 = vector.shape_cast %7 : vector<1x400x800xf32> to vector<400x800xf32>
    %cst_10 = arith.constant dense<0.000000e+00> : vector<16x800xf32>
    %9 = tpu.matmul %6, %8, %cst_10 {dimension_numbers = #tpu.dot_dimension_numbers<[1], [0], [0], [1], [0, 0, 1, 1], [], []>} : vector<16x400xf32>, vector<400x800xf32>, vector<16x800xf32> -> vector<16x800xf32>
    %10 = arith.addf %4, %9 : vector<16x800xf32>
    %c0_11 = arith.constant 0 : index
    %c2 = arith.constant 2 : index
    %c0_12 = arith.constant 0 : index
    %11 = vector.load %arg0[%c0_11, %c2, %c0_12] : memref<2x10x400xf32, #tpu.memory_space<vmem>>, vector<2x8x400xf32>
    %12 = vector.shape_cast %11 : vector<2x8x400xf32> to vector<16x400xf32>
    %c2_13 = arith.constant 2 : index
    %c0_14 = arith.constant 0 : index
    %c0_15 = arith.constant 0 : index
    %13 = vector.load %arg1[%c2_13, %c0_14, %c0_15] : memref<3x400x800xf32, #tpu.memory_space<vmem>>, vector<1x400x800xf32>
    %14 = vector.shape_cast %13 : vector<1x400x800xf32> to vector<400x800xf32>
    %cst_16 = arith.constant dense<0.000000e+00> : vector<16x800xf32>
    %15 = tpu.matmul %12, %14, %cst_16 {dimension_numbers = #tpu.dot_dimension_numbers<[1], [0], [0], [1], [0, 0, 1, 1], [], []>} : vector<16x400xf32>, vector<400x800xf32>, vector<16x800xf32> -> vector<16x800xf32>
    %16 = arith.addf %10, %15 : vector<16x800xf32>
    %cst_17 = arith.constant dense<0.000000e+00> : vector<800xf32>
    %17 = vector.multi_reduction <add>, %16, %cst_17 [0] : vector<16x800xf32> to vector<800xf32>
    %18 = vector.shape_cast %17 : vector<800xf32> to vector<1x800xf32>
    %19 = arith.mulf %16, %16 : vector<16x800xf32>
    %cst_18 = arith.constant dense<0.000000e+00> : vector<800xf32>
    %20 = vector.multi_reduction <add>, %19, %cst_18 [0] : vector<16x800xf32> to vector<800xf32>
    %21 = vector.shape_cast %20 : vector<800xf32> to vector<1x800xf32>
    %22 = tpu.concatenate %18, %21 in 0 : vector<1x800xf32>, vector<1x800xf32> -> vector<2x800xf32>
    %c0_19 = arith.constant 0 : index
    %c0_20 = arith.constant 0 : index
    %23 = vector.load %arg4[%c0_19, %c0_20] : memref<800x8xf32, #tpu.memory_space<vmem>>, vector<800x8xf32>
    %cst_21 = arith.constant dense<0.000000e+00> : vector<2x8xf32>
    %24 = tpu.matmul %22, %23, %cst_21 {dimension_numbers = #tpu.dot_dimension_numbers<[1], [0], [0], [1], [0, 0, 1, 1], [], []>} : vector<2x800xf32>, vector<800x8xf32>, vector<2x8xf32> -> vector<2x8xf32>
    %cst_22 = arith.constant 9.765625E-4 : f32
    %25 = vector.broadcast %cst_22 : f32 to vector<2x8xf32>
    %26 = arith.mulf %24, %25 : vector<2x8xf32>
    %27 = vector.extract_strided_slice %26 {offsets = [0, 0], sizes = [1, 8], strides = [1, 1]} : vector<2x8xf32> to vector<1x8xf32>
    %28 = vector.extract_strided_slice %26 {offsets = [1, 0], sizes = [1, 8], strides = [1, 1]} : vector<2x8xf32> to vector<1x8xf32>
    %29 = arith.mulf %27, %27 : vector<1x8xf32>
    %30 = arith.subf %28, %29 : vector<1x8xf32>
    %c0_23 = arith.constant 0 : index
    %c0_24 = arith.constant 0 : index
    %31 = vector.load %arg2[%c0_23, %c0_24] : memref<1x8xf32, #tpu.memory_space<vmem>>, vector<1x8xf32>
    %cst_25 = arith.constant 9.99999974E-6 : f32
    %32 = vector.broadcast %cst_25 : f32 to vector<1x8xf32>
    %33 = arith.addf %30, %32 : vector<1x8xf32>
    %34 = math.rsqrt %33 : vector<1x8xf32>
    %35 = arith.mulf %31, %34 : vector<1x8xf32>
    %c0_26 = arith.constant 0 : index
    %c0_27 = arith.constant 0 : index
    %36 = vector.load %arg3[%c0_26, %c0_27] : memref<1x8xf32, #tpu.memory_space<vmem>>, vector<1x8xf32>
    %37 = arith.mulf %27, %35 : vector<1x8xf32>
    %38 = arith.subf %36, %37 : vector<1x8xf32>
    %39 = tpu.concatenate %35, %38 in 0 : vector<1x8xf32>, vector<1x8xf32> -> vector<2x8xf32>
    %c0_28 = arith.constant 0 : index
    %c0_29 = arith.constant 0 : index
    %40 = vector.load %arg5[%c0_28, %c0_29] : memref<8x800xf32, #tpu.memory_space<vmem>>, vector<8x800xf32>
    %cst_30 = arith.constant dense<0.000000e+00> : vector<2x800xf32>
    %41 = tpu.matmul %39, %40, %cst_30 {dimension_numbers = #tpu.dot_dimension_numbers<[1], [0], [0], [1], [0, 0, 1, 1], [], []>} : vector<2x8xf32>, vector<8x800xf32>, vector<2x800xf32> -> vector<2x800xf32>
    %42 = vector.extract_strided_slice %41 {offsets = [0, 0], sizes = [1, 800], strides = [1, 1]} : vector<2x800xf32> to vector<1x800xf32>
    %43 = vector.broadcast %42 : vector<1x800xf32> to vector<16x800xf32>
    %44 = arith.mulf %16, %43 : vector<16x800xf32>
    %45 = vector.extract_strided_slice %41 {offsets = [1, 0], sizes = [1, 800], strides = [1, 1]} : vector<2x800xf32> to vector<1x800xf32>
    %46 = vector.broadcast %45 : vector<1x800xf32> to vector<16x800xf32>
    %47 = arith.addf %44, %46 : vector<16x800xf32>
    %cst_31 = arith.constant 1.000000e+00 : f32
    %48 = vector.broadcast %cst_31 : f32 to vector<16x800xf32>
    %49 = arith.cmpf oge, %47, %48 : vector<16x800xf32>
    %50 = arith.extui %49 : vector<16x800xi1> to vector<16x800xi32>
    %51 = arith.sitofp %50 : vector<16x800xi32> to vector<16x800xf32>
    %cst_32 = arith.constant 0.000000e+00 : f32
    %52 = vector.broadcast %cst_32 : f32 to vector<2x1x800xf32>
    %c0_33 = arith.constant 0 : index
    %c0_34 = arith.constant 0 : index
    %c0_35 = arith.constant 0 : index
    %53 = vector.load %arg12[%c0_33, %c0_34, %c0_35] : memref<2x10x800xf32, #tpu.memory_space<vmem>>, vector<2x1x800xf32>
    tpu.vector_store %arg12[%c0_33, %c0_34, %c0_35], %52 {strides = array<i32>} : memref<2x10x800xf32, #tpu.memory_space<vmem>>, vector<2x1x800xf32>,
    %c0_36 = arith.constant 0 : index
    %c9 = arith.constant 9 : index
    %c0_37 = arith.constant 0 : index
    %54 = vector.load %arg12[%c0_36, %c9, %c0_37] : memref<2x10x800xf32, #tpu.memory_space<vmem>>, vector<2x1x800xf32>
    tpu.vector_store %arg12[%c0_36, %c9, %c0_37], %52 {strides = array<i32>} : memref<2x10x800xf32, #tpu.memory_space<vmem>>, vector<2x1x800xf32>,
    %55 = vector.shape_cast %51 : vector<16x800xf32> to vector<2x8x800xf32>
    %c0_38 = arith.constant 0 : index
    %c1_39 = arith.constant 1 : index
    %c0_40 = arith.constant 0 : index
    %56 = vector.load %arg12[%c0_38, %c1_39, %c0_40] : memref<2x10x800xf32, #tpu.memory_space<vmem>>, vector<2x8x800xf32>
    tpu.vector_store %arg12[%c0_38, %c1_39, %c0_40], %55 {strides = array<i32>} : memref<2x10x800xf32, #tpu.memory_space<vmem>>, vector<2x8x800xf32>,
    %c0_41 = arith.constant 0 : index
    %c0_42 = arith.constant 0 : index
    %c0_43 = arith.constant 0 : index
    %57 = vector.load %arg12[%c0_41, %c0_42, %c0_43] : memref<2x10x800xf32, #tpu.memory_space<vmem>>, vector<2x8x800xf32>
    %58 = vector.shape_cast %57 : vector<2x8x800xf32> to vector<16x800xf32>
    %59 = arith.truncf %58 : vector<16x800xf32> to vector<16x800xbf16>
    %c0_44 = arith.constant 0 : index
    %c0_45 = arith.constant 0 : index
    %c0_46 = arith.constant 0 : index
    %60 = vector.load %arg6[%c0_44, %c0_45, %c0_46] : memref<3x800x256xbf16, #tpu.memory_space<vmem>>, vector<1x800x256xbf16>
    %61 = vector.shape_cast %60 : vector<1x800x256xbf16> to vector<800x256xbf16>
    %cst_47 = arith.constant dense<0.000000e+00> : vector<16x256xf32>
    %62 = tpu.matmul %59, %61, %cst_47 {dimension_numbers = #tpu.dot_dimension_numbers<[1], [0], [0], [1], [0, 0, 1, 1], [], []>} : vector<16x800xbf16>, vector<800x256xbf16>, vector<16x256xf32> -> vector<16x256xf32>
    %c0_48 = arith.constant 0 : index
    %c1_49 = arith.constant 1 : index
    %c0_50 = arith.constant 0 : index
    %63 = vector.load %arg12[%c0_48, %c1_49, %c0_50] : memref<2x10x800xf32, #tpu.memory_space<vmem>>, vector<2x8x800xf32>
    %64 = vector.shape_cast %63 : vector<2x8x800xf32> to vector<16x800xf32>
    %65 = arith.truncf %64 : vector<16x800xf32> to vector<16x800xbf16>
    %c1_51 = arith.constant 1 : index
    %c0_52 = arith.constant 0 : index
    %c0_53 = arith.constant 0 : index
    %66 = vector.load %arg6[%c1_51, %c0_52, %c0_53] : memref<3x800x256xbf16, #tpu.memory_space<vmem>>, vector<1x800x256xbf16>
    %67 = vector.shape_cast %66 : vector<1x800x256xbf16> to vector<800x256xbf16>
    %cst_54 = arith.constant dense<0.000000e+00> : vector<16x256xf32>
    %68 = tpu.matmul %65, %67, %cst_54 {dimension_numbers = #tpu.dot_dimension_numbers<[1], [0], [0], [1], [0, 0, 1, 1], [], []>} : vector<16x800xbf16>, vector<800x256xbf16>, vector<16x256xf32> -> vector<16x256xf32>
    %69 = arith.addf %62, %68 : vector<16x256xf32>
    %c0_55 = arith.constant 0 : index
    %c2_56 = arith.constant 2 : index
    %c0_57 = arith.constant 0 : index
    %70 = vector.load %arg12[%c0_55, %c2_56, %c0_57] : memref<2x10x800xf32, #tpu.memory_space<vmem>>, vector<2x8x800xf32>
    %71 = vector.shape_cast %70 : vector<2x8x800xf32> to vector<16x800xf32>
    %72 = arith.truncf %71 : vector<16x800xf32> to vector<16x800xbf16>
    %c2_58 = arith.constant 2 : index
    %c0_59 = arith.constant 0 : index
    %c0_60 = arith.constant 0 : index
    %73 = vector.load %arg6[%c2_58, %c0_59, %c0_60] : memref<3x800x256xbf16, #tpu.memory_space<vmem>>, vector<1x800x256xbf16>
    %74 = vector.shape_cast %73 : vector<1x800x256xbf16> to vector<800x256xbf16>
    %cst_61 = arith.constant dense<0.000000e+00> : vector<16x256xf32>
    %75 = tpu.matmul %72, %74, %cst_61 {dimension_numbers = #tpu.dot_dimension_numbers<[1], [0], [0], [1], [0, 0, 1, 1], [], []>} : vector<16x800xbf16>, vector<800x256xbf16>, vector<16x256xf32> -> vector<16x256xf32>
    %76 = arith.addf %69, %75 : vector<16x256xf32>
    %cst_62 = arith.constant dense<0.000000e+00> : vector<256xf32>
    %77 = vector.multi_reduction <add>, %76, %cst_62 [0] : vector<16x256xf32> to vector<256xf32>
    %78 = vector.shape_cast %77 : vector<256xf32> to vector<1x256xf32>
    %79 = arith.mulf %76, %76 : vector<16x256xf32>
    %cst_63 = arith.constant dense<0.000000e+00> : vector<256xf32>
    %80 = vector.multi_reduction <add>, %79, %cst_63 [0] : vector<16x256xf32> to vector<256xf32>
    %81 = vector.shape_cast %80 : vector<256xf32> to vector<1x256xf32>
    %82 = tpu.concatenate %78, %81 in 0 : vector<1x256xf32>, vector<1x256xf32> -> vector<2x256xf32>
    %c0_64 = arith.constant 0 : index
    %c0_65 = arith.constant 0 : index
    %83 = vector.load %arg9[%c0_64, %c0_65] : memref<256x4xf32, #tpu.memory_space<vmem>>, vector<256x4xf32>
    %cst_66 = arith.constant dense<0.000000e+00> : vector<2x4xf32>
    %84 = tpu.matmul %82, %83, %cst_66 {dimension_numbers = #tpu.dot_dimension_numbers<[1], [0], [0], [1], [0, 0, 1, 1], [], []>} : vector<2x256xf32>, vector<256x4xf32>, vector<2x4xf32> -> vector<2x4xf32>
    %cst_67 = arith.constant 9.765625E-4 : f32
    %85 = vector.broadcast %cst_67 : f32 to vector<2x4xf32>
    %86 = arith.mulf %84, %85 : vector<2x4xf32>
    %87 = vector.extract_strided_slice %86 {offsets = [0, 0], sizes = [1, 4], strides = [1, 1]} : vector<2x4xf32> to vector<1x4xf32>
    %88 = vector.extract_strided_slice %86 {offsets = [1, 0], sizes = [1, 4], strides = [1, 1]} : vector<2x4xf32> to vector<1x4xf32>
    %89 = arith.mulf %87, %87 : vector<1x4xf32>
    %90 = arith.subf %88, %89 : vector<1x4xf32>
    %c0_68 = arith.constant 0 : index
    %c0_69 = arith.constant 0 : index
    %91 = vector.load %arg7[%c0_68, %c0_69] : memref<1x4xf32, #tpu.memory_space<vmem>>, vector<1x4xf32>
    %cst_70 = arith.constant 9.99999974E-6 : f32
    %92 = vector.broadcast %cst_70 : f32 to vector<1x4xf32>
    %93 = arith.addf %90, %92 : vector<1x4xf32>
    %94 = math.rsqrt %93 : vector<1x4xf32>
    %95 = arith.mulf %91, %94 : vector<1x4xf32>
    %c0_71 = arith.constant 0 : index
    %c0_72 = arith.constant 0 : index
    %96 = vector.load %arg8[%c0_71, %c0_72] : memref<1x4xf32, #tpu.memory_space<vmem>>, vector<1x4xf32>
    %97 = arith.mulf %87, %95 : vector<1x4xf32>
    %98 = arith.subf %96, %97 : vector<1x4xf32>
    %99 = tpu.concatenate %95, %98 in 0 : vector<1x4xf32>, vector<1x4xf32> -> vector<2x4xf32>
    %c0_73 = arith.constant 0 : index
    %c0_74 = arith.constant 0 : index
    %100 = vector.load %arg10[%c0_73, %c0_74] : memref<4x256xf32, #tpu.memory_space<vmem>>, vector<4x256xf32>
    %cst_75 = arith.constant dense<0.000000e+00> : vector<2x256xf32>
    %101 = tpu.matmul %99, %100, %cst_75 {dimension_numbers = #tpu.dot_dimension_numbers<[1], [0], [0], [1], [0, 0, 1, 1], [], []>} : vector<2x4xf32>, vector<4x256xf32>, vector<2x256xf32> -> vector<2x256xf32>
    %102 = vector.extract_strided_slice %101 {offsets = [0, 0], sizes = [1, 256], strides = [1, 1]} : vector<2x256xf32> to vector<1x256xf32>
    %103 = vector.broadcast %102 : vector<1x256xf32> to vector<16x256xf32>
    %104 = arith.mulf %76, %103 : vector<16x256xf32>
    %105 = vector.extract_strided_slice %101 {offsets = [1, 0], sizes = [1, 256], strides = [1, 1]} : vector<2x256xf32> to vector<1x256xf32>
    %106 = vector.broadcast %105 : vector<1x256xf32> to vector<16x256xf32>
    %107 = arith.addf %104, %106 : vector<16x256xf32>
    %cst_76 = arith.constant 1.000000e+00 : f32
    %108 = vector.broadcast %cst_76 : f32 to vector<16x256xf32>
    %109 = arith.cmpf oge, %107, %108 : vector<16x256xf32>
    %110 = arith.extui %109 : vector<16x256xi1> to vector<16x256xi32>
    %111 = arith.sitofp %110 : vector<16x256xi32> to vector<16x256xf32>
    %c0_77 = arith.constant 0 : index
    %c0_78 = arith.constant 0 : index
    %112 = vector.load %arg11[%c0_77, %c0_78] : memref<16x256xf32, #tpu.memory_space<vmem>>, vector<16x256xf32>
    tpu.vector_store %arg11[%c0_77, %c0_78], %111 {strides = array<i32>} : memref<16x256xf32, #tpu.memory_space<vmem>>, vector<16x256xf32>,
    return
  }
}

</mosaic_0001>

<llo_original>
// kernel: spiking_bottleneck_3d.1
$region0: #{spiking_bottleneck_3d.1}
  #allocation0 [shape = 'u32[]', space=smem, size = 0x4, offset = 0x4, fixed_abs, tag = 'smem constant byte address 0x4 - core index']
  #allocation1 [shape = 'u32[144,128]{1,0:T(1,128)}', space=vmem, size = 0x12000, scoped, tag = 'internal scratch']
  #allocation2 [shape = 'f32[2,10,800]{2,1,0:T(8,128)}', space=vmem, size = 0x1c000, scoped, tag = 'scratch operand']
  %s0 = inlined_call_operand.vmem [shape: f32[2,10,400], index: 0, kind: input, shape index: {}]
  %s1 = inlined_call_operand.hbm [shape: f32[3,400,800], index: 1, kind: input, shape index: {}]
  %s2 = inlined_call_operand.hbm [shape: f32[1,8], index: 2, kind: input, shape index: {}]
  %s3 = inlined_call_operand.hbm [shape: f32[1,8], index: 3, kind: input, shape index: {}]
  %s4 = inlined_call_operand.vmem [shape: f32[800,8], index: 4, kind: input, shape index: {}]
  %s5 = inlined_call_operand.hbm [shape: f32[8,800], index: 5, kind: input, shape index: {}]
  %s6 = inlined_call_operand.hbm [shape: bf16[3,800,256], index: 6, kind: input, shape index: {}]
  %s7 = inlined_call_operand.hbm [shape: f32[1,4], index: 7, kind: input, shape index: {}]
  %s8 = inlined_call_operand.hbm [shape: f32[1,4], index: 8, kind: input, shape index: {}]
  %s9 = inlined_call_operand.vmem [shape: f32[256,4], index: 9, kind: input, shape index: {}]
  %s10 = inlined_call_operand.hbm [shape: f32[4,256], index: 10, kind: input, shape index: {}]
  %s11 = inlined_call_operand.vmem [shape: f32[16,256], index: 11, kind: output, shape index: {}]
  %s12 = sld [smem:[#allocation0]]
  $region86: #{spiking_bottleneck_3d.1} parent=0
    _
  %s14 = ssub.s32 1, %s12
  %s15 = scalar_select 0, %s14, %s12
  $region1: #{spiking_bottleneck_3d.1} parent=0
    #allocation3 [shape = 'u8[4300800]{0}', space=vmem, size = 0x41a000, scoped, tag = 'input window, operand 1, single buffered']
    #allocation4 [shape = 's32[1]{0}', space=sflag, size = 0x4, scoped, tag = 'scoped memory for spiking_bottleneck_3d.1']
    #allocation5 [shape = 'u8[512]{0}', space=vmem, size = 0x400, scoped, tag = 'input window, operand 2, single buffered']
    #allocation6 [shape = 's32[1]{0}', space=sflag, size = 0x4, scoped, tag = 'scoped memory for spiking_bottleneck_3d.1']
    #allocation7 [shape = 'u8[512]{0}', space=vmem, size = 0x400, scoped, tag = 'input window, operand 3, single buffered']
    #allocation8 [shape = 'u8[28672]{0}', space=vmem, size = 0x7000, scoped, tag = 'input window, operand 5, single buffered']
    #allocation9 [shape = 's32[1]{0}', space=sflag, size = 0x4, scoped, tag = 'scoped memory for spiking_bottleneck_3d.1']
    #allocation10 [shape = 'u8[1228800]{0}', space=vmem, size = 0x12c000, scoped, tag = 'input window, operand 6, single buffered']
    #allocation11 [shape = 'u8[512]{0}', space=vmem, size = 0x400, scoped, tag = 'input window, operand 7, single buffered']
    #allocation12 [shape = 's32[1]{0}', space=sflag, size = 0x4, scoped, tag = 'scoped memory for spiking_bottleneck_3d.1']
    #allocation13 [shape = 'u8[512]{0}', space=vmem, size = 0x400, scoped, tag = 'input window, operand 8, single buffered']
    #allocation14 [shape = 'u8[4096]{0}', space=vmem, size = 0x1000, scoped, tag = 'input window, operand 10, single buffered']
    #allocation15 [shape = 's32[1]{0}', space=sflag, size = 0x4, scoped, tag = 'scoped memory for spiking_bottleneck_3d.1']
    %16 = vsyncpa [#allocation4], 0
    %17 = vsyncpa [#allocation6], 0
    %18 = vsyncpa [#allocation9], 0
    %19 = vsyncpa [#allocation12], 0
    %20 = vsyncpa [#allocation15], 0
    // Predicated region
    $region2: #{spiking_bottleneck_3d.1} parent=1 // pred_check
      _
    $region3: #{spiking_bottleneck_3d.1} parent=1 // pred_check_branch
      %22 = sbr.rel (0) target = $region5
    $region4: #{spiking_bottleneck_3d.1} parent=1 // pred_region
      _
    $region5: #{spiking_bottleneck_3d.1} parent=1 // pred_fallthru
      _
    // Predicated region
    $region6: #{spiking_bottleneck_3d.1} parent=1 // pred_check
      _
    $region7: #{spiking_bottleneck_3d.1} parent=1 // pred_check_branch
      %24 = sbr.rel (0) target = $region9
    $region8: #{spiking_bottleneck_3d.1} parent=1 // pred_region
      %s26 = ssub.s32 134400, 134400
      %27 = vsyncadd [#allocation4], %s26
      %s28 = sshll.u32 [#allocation3], 4
      %s29 = int_to_ptr.vmem [resolvable:$true] %s28
      %34 = dma.hbm_to_vmem [thread:$0]  %s1, 134400, %s29, [#allocation4], 896, 896, 56
    $region9: #{spiking_bottleneck_3d.1} parent=1 // pred_fallthru
      _
    // Predicated region
    $region10: #{spiking_bottleneck_3d.1} parent=1 // pred_check
      _
    $region11: #{spiking_bottleneck_3d.1} parent=1 // pred_check_branch
      %36 = sbr.rel (0) target = $region13
    $region12: #{spiking_bottleneck_3d.1} parent=1 // pred_region
      %s38 = ssub.s32 16, 16
      %39 = vsyncadd [#allocation6], %s38
      %s41 = sshll.u32 [#allocation5], 4
      %s42 = int_to_ptr.vmem [resolvable:$true] %s41
      %44 = dma.hbm_to_vmem [thread:$0]  %s2, 16, %s42, [#allocation6]
    $region13: #{spiking_bottleneck_3d.1} parent=1 // pred_fallthru
      _
    // Predicated region
    $region14: #{spiking_bottleneck_3d.1} parent=1 // pred_check
      _
    $region15: #{spiking_bottleneck_3d.1} parent=1 // pred_check_branch
      %46 = sbr.rel (0) target = $region17
    $region16: #{spiking_bottleneck_3d.1} parent=1 // pred_region
      %s48 = ssub.s32 16, 16
      %49 = vsyncadd [#allocation6], %s48
      %s51 = sshll.u32 [#allocation7], 4
      %s52 = int_to_ptr.vmem [resolvable:$true] %s51
      %54 = dma.hbm_to_vmem [thread:$0]  %s3, 16, %s52, [#allocation6]
    $region17: #{spiking_bottleneck_3d.1} parent=1 // pred_fallthru
      _
    // Predicated region
    $region18: #{spiking_bottleneck_3d.1} parent=1 // pred_check
      _
    $region19: #{spiking_bottleneck_3d.1} parent=1 // pred_check_branch
      %56 = sbr.rel (0) target = $region21
    $region20: #{spiking_bottleneck_3d.1} parent=1 // pred_region
      _
    $region21: #{spiking_bottleneck_3d.1} parent=1 // pred_fallthru
      _
    // Predicated region
    $region22: #{spiking_bottleneck_3d.1} parent=1 // pred_check
      _
    $region23: #{spiking_bottleneck_3d.1} parent=1 // pred_check_branch
      %58 = sbr.rel (0) target = $region25
    $region24: #{spiking_bottleneck_3d.1} parent=1 // pred_region
      %s60 = ssub.s32 896, 896
      %61 = vsyncadd [#allocation9], %s60
      %s63 = sshll.u32 [#allocation8], 4
      %s64 = int_to_ptr.vmem [resolvable:$true] %s63
      %66 = dma.hbm_to_vmem [thread:$0]  %s5, 896, %s64, [#allocation9]
    $region25: #{spiking_bottleneck_3d.1} parent=1 // pred_fallthru
      _
    // Predicated region
    $region26: #{spiking_bottleneck_3d.1} parent=1 // pred_check
      _
    $region27: #{spiking_bottleneck_3d.1} parent=1 // pred_check_branch
      %68 = sbr.rel (0) target = $region29
    $region28: #{spiking_bottleneck_3d.1} parent=1 // pred_region
      %s70 = ssub.s32 38400, 38400
      %71 = vsyncadd [#allocation9], %s70
      %s72 = sshll.u32 [#allocation10], 4
      %s73 = int_to_ptr.vmem [resolvable:$true] %s72
      %78 = dma.hbm_to_vmem [thread:$0]  %s6, 38400, %s73, [#allocation9], 128, 128, 8
    $region29: #{spiking_bottleneck_3d.1} parent=1 // pred_fallthru
      _
    // Predicated region
    $region30: #{spiking_bottleneck_3d.1} parent=1 // pred_check
      _
    $region31: #{spiking_bottleneck_3d.1} parent=1 // pred_check_branch
      %80 = sbr.rel (0) target = $region33
    $region32: #{spiking_bottleneck_3d.1} parent=1 // pred_region
      %s82 = ssub.s32 16, 16
      %83 = vsyncadd [#allocation12], %s82
      %s85 = sshll.u32 [#allocation11], 4
      %s86 = int_to_ptr.vmem [resolvable:$true] %s85
      %88 = dma.hbm_to_vmem [thread:$0]  %s7, 16, %s86, [#allocation12]
    $region33: #{spiking_bottleneck_3d.1} parent=1 // pred_fallthru
      _
    // Predicated region
    $region34: #{spiking_bottleneck_3d.1} parent=1 // pred_check
      _
    $region35: #{spiking_bottleneck_3d.1} parent=1 // pred_check_branch
      %90 = sbr.rel (0) target = $region37
    $region36: #{spiking_bottleneck_3d.1} parent=1 // pred_region
      %s92 = ssub.s32 16, 16
      %93 = vsyncadd [#allocation12], %s92
      %s95 = sshll.u32 [#allocation13], 4
      %s96 = int_to_ptr.vmem [resolvable:$true] %s95
      %98 = dma.hbm_to_vmem [thread:$0]  %s8, 16, %s96, [#allocation12]
    $region37: #{spiking_bottleneck_3d.1} parent=1 // pred_fallthru
      _
    // Predicated region
    $region38: #{spiking_bottleneck_3d.1} parent=1 // pred_check
      _
    $region39: #{spiking_bottleneck_3d.1} parent=1 // pred_check_branch
      %100 = sbr.rel (0) target = $region41
    $region40: #{spiking_bottleneck_3d.1} parent=1 // pred_region
      _
    $region41: #{spiking_bottleneck_3d.1} parent=1 // pred_fallthru
      _
    // Predicated region
    $region42: #{spiking_bottleneck_3d.1} parent=1 // pred_check
      _
    $region43: #{spiking_bottleneck_3d.1} parent=1 // pred_check_branch
      %102 = sbr.rel (0) target = $region45
    $region44: #{spiking_bottleneck_3d.1} parent=1 // pred_region
      %s104 = ssub.s32 128, 128
      %105 = vsyncadd [#allocation15], %s104
      %s107 = sshll.u32 [#allocation14], 4
      %s108 = int_to_ptr.vmem [resolvable:$true] %s107
      %110 = dma.hbm_to_vmem [thread:$0]  %s10, 128, %s108, [#allocation15]
    $region45: #{spiking_bottleneck_3d.1} parent=1 // pred_fallthru
      _
    // Predicated region
    $region46: #{spiking_bottleneck_3d.1} parent=1 // pred_check
      _
    $region47: #{spiking_bottleneck_3d.1} parent=1 // pred_check_branch
      %112 = sbr.rel (0) target = $region49
    $region48: #{spiking_bottleneck_3d.1} parent=1 // pred_region
      %113 = dma.done [#allocation4], 134400
    $region49: #{spiking_bottleneck_3d.1} parent=1 // pred_fallthru
      _
    // Predicated region
    $region50: #{spiking_bottleneck_3d.1} parent=1 // pred_check
      _
    $region51: #{spiking_bottleneck_3d.1} parent=1 // pred_check_branch
      %115 = sbr.rel (0) target = $region53
    $region52: #{spiking_bottleneck_3d.1} parent=1 // pred_region
      %116 = dma.done [#allocation6], 16
    $region53: #{spiking_bottleneck_3d.1} parent=1 // pred_fallthru
      _
    // Predicated region
    $region54: #{spiking_bottleneck_3d.1} parent=1 // pred_check
      _
    $region55: #{spiking_bottleneck_3d.1} parent=1 // pred_check_branch
      %118 = sbr.rel (0) target = $region57
    $region56: #{spiking_bottleneck_3d.1} parent=1 // pred_region
      %119 = dma.done [#allocation6], 16
    $region57: #{spiking_bottleneck_3d.1} parent=1 // pred_fallthru
      _
    // Predicated region
    $region58: #{spiking_bottleneck_3d.1} parent=1 // pred_check
      _
    $region59: #{spiking_bottleneck_3d.1} parent=1 // pred_check_branch
      %121 = sbr.rel (0) target = $region61
    $region60: #{spiking_bottleneck_3d.1} parent=1 // pred_region
      %122 = dma.done [#allocation9], 896
    $region61: #{spiking_bottleneck_3d.1} parent=1 // pred_fallthru
      _
    // Predicated region
    $region62: #{spiking_bottleneck_3d.1} parent=1 // pred_check
      _
    $region63: #{spiking_bottleneck_3d.1} parent=1 // pred_check_branch
      %124 = sbr.rel (0) target = $region65
    $region64: #{spiking_bottleneck_3d.1} parent=1 // pred_region
      %125 = dma.done [#allocation9], 38400
    $region65: #{spiking_bottleneck_3d.1} parent=1 // pred_fallthru
      _
    // Predicated region
    $region66: #{spiking_bottleneck_3d.1} parent=1 // pred_check
      _
    $region67: #{spiking_bottleneck_3d.1} parent=1 // pred_check_branch
      %127 = sbr.rel (0) target = $region69
    $region68: #{spiking_bottleneck_3d.1} parent=1 // pred_region
      %128 = dma.done [#allocation12], 16
    $region69: #{spiking_bottleneck_3d.1} parent=1 // pred_fallthru
      _
    // Predicated region
    $region70: #{spiking_bottleneck_3d.1} parent=1 // pred_check
      _
    $region71: #{spiking_bottleneck_3d.1} parent=1 // pred_check_branch
      %130 = sbr.rel (0) target = $region73
    $region72: #{spiking_bottleneck_3d.1} parent=1 // pred_region
      %131 = dma.done [#allocation12], 16
    $region73: #{spiking_bottleneck_3d.1} parent=1 // pred_fallthru
      _
    // Predicated region
    $region74: #{spiking_bottleneck_3d.1} parent=1 // pred_check
      _
    $region75: #{spiking_bottleneck_3d.1} parent=1 // pred_check_branch
      %133 = sbr.rel (0) target = $region77
    $region76: #{spiking_bottleneck_3d.1} parent=1 // pred_region
      %134 = dma.done [#allocation15], 128
    $region77: #{spiking_bottleneck_3d.1} parent=1 // pred_fallthru
      _
    %v136 = vld [vmem:[%s0] sm:$0xff]
    %v137 = vld [vmem:[%s0 + $0x8] sm:$0xff]
    %v138 = vld [vmem:[%s0 + $0x10] sm:$0xff]
    %v139 = vld [vmem:[%s0 + $0x18] sm:$0xff]
    %v140 = vld [vmem:[%s0 + $0x40] sm:$0xff]
    %v141 = vld [vmem:[%s0 + $0x48] sm:$0xff]
    %v142 = vld [vmem:[%s0 + $0x50] sm:$0xff]
    %v143 = vld [vmem:[%s0 + $0x58] sm:$0xff]
    %v144 = vld [vmem:[#allocation3] sm:$0xff]
    %v145 = vld [vmem:[#allocation3 + $0x8] sm:$0xff]
    %v146 = vld [vmem:[#allocation3 + $0x10] sm:$0xff]
    %v147 = vld [vmem:[#allocation3 + $0x18] sm:$0xff]
    %v148 = vld [vmem:[#allocation3 + $0x20] sm:$0xff]
    %v149 = vld [vmem:[#allocation3 + $0x28] sm:$0xff]
    %v150 = vld [vmem:[#allocation3 + $0x30] sm:$0xff]
    %v151 = vld [vmem:[#allocation3 + $0x38] sm:$0xff]
    %v152 = vld [vmem:[#allocation3 + $0x40] sm:$0xff]
    %v153 = vld [vmem:[#allocation3 + $0x48] sm:$0xff]
    %v154 = vld [vmem:[#allocation3 + $0x50] sm:$0xff]
    %v155 = vld [vmem:[#allocation3 + $0x58] sm:$0xff]
    %v156 = vld [vmem:[#allocation3 + $0x60] sm:$0xff]
    %v157 = vld [vmem:[#allocation3 + $0x68] sm:$0xff]
    %v158 = vld [vmem:[#allocation3 + $0x70] sm:$0xff]
    %v159 = vld [vmem:[#allocation3 + $0x78] sm:$0xff]
    %v160 = vld [vmem:[#allocation3 + $0x80] sm:$0xff]
    %v161 = vld [vmem:[#allocation3 + $0x88] sm:$0xff]
    %v162 = vld [vmem:[#allocation3 + $0x90] sm:$0xff]
    %v163 = vld [vmem:[#allocation3 + $0x98] sm:$0xff]
    %v164 = vld [vmem:[#allocation3 + $0xa0] sm:$0xff]
    %v165 = vld [vmem:[#allocation3 + $0xa8] sm:$0xff]
    %v166 = vld [vmem:[#allocation3 + $0xb0] sm:$0xff]
    %v167 = vld [vmem:[#allocation3 + $0xb8] sm:$0xff]
    %v168 = vld [vmem:[#allocation3 + $0xc0] sm:$0xff]
    %v169 = vld [vmem:[#allocation3 + $0xc8] sm:$0xff]
    %v170 = vld [vmem:[#allocation3 + $0xd0] sm:$0xff]
    %v171 = vld [vmem:[#allocation3 + $0xd8] sm:$0xff]
    %v172 = vld [vmem:[#allocation3 + $0xe0] sm:$0xff]
    %v173 = vld [vmem:[#allocation3 + $0xe8] sm:$0xff]
    %v174 = vld [vmem:[#allocation3 + $0xf0] sm:$0xff]
    %v175 = vld [vmem:[#allocation3 + $0xf8] sm:$0xff]
    %v176 = vld [vmem:[#allocation3 + $0x100] sm:$0xff]
    %v177 = vld [vmem:[#allocation3 + $0x108] sm:$0xff]
    %v178 = vld [vmem:[#allocation3 + $0x110] sm:$0xff]
    %v179 = vld [vmem:[#allocation3 + $0x118] sm:$0xff]
    %v180 = vld [vmem:[#allocation3 + $0x120] sm:$0xff]
    %v181 = vld [vmem:[#allocation3 + $0x128] sm:$0xff]
    %v182 = vld [vmem:[#allocation3 + $0x130] sm:$0xff]
    %v183 = vld [vmem:[#allocation3 + $0x138] sm:$0xff]
    %v184 = vld [vmem:[#allocation3 + $0x140] sm:$0xff]
    %v185 = vld [vmem:[#allocation3 + $0x148] sm:$0xff]
    %v186 = vld [vmem:[#allocation3 + $0x150] sm:$0xff]
    %v187 = vld [vmem:[#allocation3 + $0x158] sm:$0xff]
    %v188 = vld [vmem:[#allocation3 + $0x160] sm:$0xff]
    %v189 = vld [vmem:[#allocation3 + $0x168] sm:$0xff]
    %v190 = vld [vmem:[#allocation3 + $0x170] sm:$0xff]
    %v191 = vld [vmem:[#allocation3 + $0x178] sm:$0xff]
    %v192 = vld [vmem:[#allocation3 + $0x180] sm:$0xff]
    %v193 = vld [vmem:[#allocation3 + $0x188] sm:$0xff]
    %v194 = vld [vmem:[#allocation3 + $0x190] sm:$0xff]
    %v195 = vld [vmem:[#allocation3 + $0x198] sm:$0xff]
    %v196 = vld [vmem:[#allocation3 + $0x1a0] sm:$0xff]
    %v197 = vld [vmem:[#allocation3 + $0x1a8] sm:$0xff]
    %v198 = vld [vmem:[#allocation3 + $0x1b0] sm:$0xff]
    %v199 = vld [vmem:[#allocation3 + $0x1b8] sm:$0xff]
    %v200 = vld [vmem:[#allocation3 + $0x1c0] sm:$0xff]
    %v201 = vld [vmem:[#allocation3 + $0x1c8] sm:$0xff]
    %v202 = vld [vmem:[#allocation3 + $0x1d0] sm:$0xff]
    %v203 = vld [vmem:[#allocation3 + $0x1d8] sm:$0xff]
    %v204 = vld [vmem:[#allocation3 + $0x1e0] sm:$0xff]
    %v205 = vld [vmem:[#allocation3 + $0x1e8] sm:$0xff]
    %v206 = vld [vmem:[#allocation3 + $0x1f0] sm:$0xff]
    %v207 = vld [vmem:[#allocation3 + $0x1f8] sm:$0xff]
    %v208 = vld [vmem:[#allocation3 + $0x200] sm:$0xff]
    %v209 = vld [vmem:[#allocation3 + $0x208] sm:$0xff]
    %v210 = vld [vmem:[#allocation3 + $0x210] sm:$0xff]
    %v211 = vld [vmem:[#allocation3 + $0x218] sm:$0xff]
    %v212 = vld [vmem:[#allocation3 + $0x220] sm:$0xff]
    %v213 = vld [vmem:[#allocation3 + $0x228] sm:$0xff]
    %v214 = vld [vmem:[#allocation3 + $0x230] sm:$0xff]
    %v215 = vld [vmem:[#allocation3 + $0x238] sm:$0xff]
    %v216 = vld [vmem:[#allocation3 + $0x240] sm:$0xff]
    %v217 = vld [vmem:[#allocation3 + $0x248] sm:$0xff]
    %v218 = vld [vmem:[#allocation3 + $0x250] sm:$0xff]
    %v219 = vld [vmem:[#allocation3 + $0x258] sm:$0xff]
    %v220 = vld [vmem:[#allocation3 + $0x260] sm:$0xff]
    %v221 = vld [vmem:[#allocation3 + $0x268] sm:$0xff]
    %v222 = vld [vmem:[#allocation3 + $0x270] sm:$0xff]
    %v223 = vld [vmem:[#allocation3 + $0x278] sm:$0xff]
    %v224 = vld [vmem:[#allocation3 + $0x280] sm:$0xff]
    %v225 = vld [vmem:[#allocation3 + $0x288] sm:$0xff]
    %v226 = vld [vmem:[#allocation3 + $0x290] sm:$0xff]
    %v227 = vld [vmem:[#allocation3 + $0x298] sm:$0xff]
    %v228 = vld [vmem:[#allocation3 + $0x2a0] sm:$0xff]
    %v229 = vld [vmem:[#allocation3 + $0x2a8] sm:$0xff]
    %v230 = vld [vmem:[#allocation3 + $0x2b0] sm:$0xff]
    %v231 = vld [vmem:[#allocation3 + $0x2b8] sm:$0xff]
    %v232 = vld [vmem:[#allocation3 + $0x2c0] sm:$0xff]
    %v233 = vld [vmem:[#allocation3 + $0x2c8] sm:$0xff]
    %v234 = vld [vmem:[#allocation3 + $0x2d0] sm:$0xff]
    %v235 = vld [vmem:[#allocation3 + $0x2d8] sm:$0xff]
    %v236 = vld [vmem:[#allocation3 + $0x2e0] sm:$0xff]
    %v237 = vld [vmem:[#allocation3 + $0x2e8] sm:$0xff]
    %v238 = vld [vmem:[#allocation3 + $0x2f0] sm:$0xff]
    %v239 = vld [vmem:[#allocation3 + $0x2f8] sm:$0xff]
    %v240 = vld [vmem:[#allocation3 + $0x300] sm:$0xff]
    %v241 = vld [vmem:[#allocation3 + $0x308] sm:$0xff]
    %v242 = vld [vmem:[#allocation3 + $0x310] sm:$0xff]
    %v243 = vld [vmem:[#allocation3 + $0x318] sm:$0xff]
    %v244 = vld [vmem:[#allocation3 + $0x320] sm:$0xff]
    %v245 = vld [vmem:[#allocation3 + $0x328] sm:$0xff]
    %v246 = vld [vmem:[#allocation3 + $0x330] sm:$0xff]
    %v247 = vld [vmem:[#allocation3 + $0x338] sm:$0xff]
    %v248 = vld [vmem:[#allocation3 + $0x340] sm:$0xff]
    %v249 = vld [vmem:[#allocation3 + $0x348] sm:$0xff]
    %v250 = vld [vmem:[#allocation3 + $0x350] sm:$0xff]
    %v251 = vld [vmem:[#allocation3 + $0x358] sm:$0xff]
    %v252 = vld [vmem:[#allocation3 + $0x360] sm:$0xff]
    %v253 = vld [vmem:[#allocation3 + $0x368] sm:$0xff]
    %v254 = vld [vmem:[#allocation3 + $0x370] sm:$0xff]
    %v255 = vld [vmem:[#allocation3 + $0x378] sm:$0xff]
    %v256 = vld [vmem:[#allocation3 + $0x380] sm:$0xff]
    %v257 = vld [vmem:[#allocation3 + $0x388] sm:$0xff]
    %v258 = vld [vmem:[#allocation3 + $0x390] sm:$0xff]
    %v259 = vld [vmem:[#allocation3 + $0x398] sm:$0xff]
    %v260 = vld [vmem:[#allocation3 + $0x3a0] sm:$0xff]
    %v261 = vld [vmem:[#allocation3 + $0x3a8] sm:$0xff]
    %v262 = vld [vmem:[#allocation3 + $0x3b0] sm:$0xff]
    %v263 = vld [vmem:[#allocation3 + $0x3b8] sm:$0xff]
    %v264 = vld [vmem:[#allocation3 + $0x3c0] sm:$0xff]
    %v265 = vld [vmem:[#allocation3 + $0x3c8] sm:$0xff]
    %v266 = vld [vmem:[#allocation3 + $0x3d0] sm:$0xff]
    %v267 = vld [vmem:[#allocation3 + $0x3d8] sm:$0xff]
    %v268 = vld [vmem:[#allocation3 + $0x3e0] sm:$0xff]
    %v269 = vld [vmem:[#allocation3 + $0x3e8] sm:$0xff]
    %v270 = vld [vmem:[#allocation3 + $0x3f0] sm:$0xff]
    %v271 = vld [vmem:[#allocation3 + $0x3f8] sm:$0xff]
    %v272 = vld [vmem:[#allocation3 + $0x400] sm:$0xff]
    %v273 = vld [vmem:[#allocation3 + $0x408] sm:$0xff]
    %v274 = vld [vmem:[#allocation3 + $0x410] sm:$0xff]
    %v275 = vld [vmem:[#allocation3 + $0x418] sm:$0xff]
    %v276 = vld [vmem:[#allocation3 + $0x420] sm:$0xff]
    %v277 = vld [vmem:[#allocation3 + $0x428] sm:$0xff]
    %v278 = vld [vmem:[#allocation3 + $0x430] sm:$0xff]
    %v279 = vld [vmem:[#allocation3 + $0x438] sm:$0xff]
    %v280 = vld [vmem:[#allocation3 + $0x440] sm:$0xff]
    %v281 = vld [vmem:[#allocation3 + $0x448] sm:$0xff]
    %v282 = vld [vmem:[#allocation3 + $0x450] sm:$0xff]
    %v283 = vld [vmem:[#allocation3 + $0x458] sm:$0xff]
    %v284 = vld [vmem:[#allocation3 + $0x460] sm:$0xff]
    %v285 = vld [vmem:[#allocation3 + $0x468] sm:$0xff]
    %v286 = vld [vmem:[#allocation3 + $0x470] sm:$0xff]
    %v287 = vld [vmem:[#allocation3 + $0x478] sm:$0xff]
    %v288 = vld [vmem:[#allocation3 + $0x480] sm:$0xff]
    %v289 = vld [vmem:[#allocation3 + $0x488] sm:$0xff]
    %v290 = vld [vmem:[#allocation3 + $0x490] sm:$0xff]
    %v291 = vld [vmem:[#allocation3 + $0x498] sm:$0xff]
    %v292 = vld [vmem:[#allocation3 + $0x4a0] sm:$0xff]
    %v293 = vld [vmem:[#allocation3 + $0x4a8] sm:$0xff]
    %v294 = vld [vmem:[#allocation3 + $0x4b0] sm:$0xff]
    %v295 = vld [vmem:[#allocation3 + $0x4b8] sm:$0xff]
    %v296 = vld [vmem:[#allocation3 + $0x4c0] sm:$0xff]
    %v297 = vld [vmem:[#allocation3 + $0x4c8] sm:$0xff]
    %v298 = vld [vmem:[#allocation3 + $0x4d0] sm:$0xff]
    %v299 = vld [vmem:[#allocation3 + $0x4d8] sm:$0xff]
    %v300 = vld [vmem:[#allocation3 + $0x4e0] sm:$0xff]
    %v301 = vld [vmem:[#allocation3 + $0x4e8] sm:$0xff]
    %v302 = vld [vmem:[#allocation3 + $0x4f0] sm:$0xff]
    %v303 = vld [vmem:[#allocation3 + $0x4f8] sm:$0xff]
    %v304 = vld [vmem:[#allocation3 + $0x500] sm:$0xff]
    %v305 = vld [vmem:[#allocation3 + $0x508] sm:$0xff]
    %v306 = vld [vmem:[#allocation3 + $0x510] sm:$0xff]
    %v307 = vld [vmem:[#allocation3 + $0x518] sm:$0xff]
    %v308 = vld [vmem:[#allocation3 + $0x520] sm:$0xff]
    %v309 = vld [vmem:[#allocation3 + $0x528] sm:$0xff]
    %v310 = vld [vmem:[#allocation3 + $0x530] sm:$0xff]
    %v311 = vld [vmem:[#allocation3 + $0x538] sm:$0xff]
    %v312 = vld [vmem:[#allocation3 + $0x540] sm:$0xff]
    %v313 = vld [vmem:[#allocation3 + $0x548] sm:$0xff]
    %v314 = vld [vmem:[#allocation3 + $0x550] sm:$0xff]
    %v315 = vld [vmem:[#allocation3 + $0x558] sm:$0xff]
    %v316 = vld [vmem:[#allocation3 + $0x560] sm:$0xff]
    %v317 = vld [vmem:[#allocation3 + $0x568] sm:$0xff]
    %v318 = vld [vmem:[#allocation3 + $0x570] sm:$0xff]
    %v319 = vld [vmem:[#allocation3 + $0x578] sm:$0xff]
    %v320 = vld [vmem:[#allocation3 + $0x580] sm:$0xff]
    %v321 = vld [vmem:[#allocation3 + $0x588] sm:$0xff]
    %v322 = vld [vmem:[#allocation3 + $0x590] sm:$0xff]
    %v323 = vld [vmem:[#allocation3 + $0x598] sm:$0xff]
    %v324 = vld [vmem:[#allocation3 + $0x5a0] sm:$0xff]
    %v325 = vld [vmem:[#allocation3 + $0x5a8] sm:$0xff]
    %v326 = vld [vmem:[#allocation3 + $0x5b0] sm:$0xff]
    %v327 = vld [vmem:[#allocation3 + $0x5b8] sm:$0xff]
    %v328 = vld [vmem:[#allocation3 + $0x5c0] sm:$0xff]
    %v329 = vld [vmem:[#allocation3 + $0x5c8] sm:$0xff]
    %v330 = vld [vmem:[#allocation3 + $0x5d0] sm:$0xff]
    %v331 = vld [vmem:[#allocation3 + $0x5d8] sm:$0xff]
    %v332 = vld [vmem:[#allocation3 + $0x5e0] sm:$0xff]
    %v333 = vld [vmem:[#allocation3 + $0x5e8] sm:$0xff]
    %v334 = vld [vmem:[#allocation3 + $0x5f0] sm:$0xff]
    %v335 = vld [vmem:[#allocation3 + $0x5f8] sm:$0xff]
    %v336 = vld [vmem:[#allocation3 + $0x600] sm:$0xff]
    %v337 = vld [vmem:[#allocation3 + $0x608] sm:$0xff]
    %v338 = vld [vmem:[#allocation3 + $0x610] sm:$0xff]
    %v339 = vld [vmem:[#allocation3 + $0x618] sm:$0xff]
    %v340 = vld [vmem:[#allocation3 + $0x620] sm:$0xff]
    %v341 = vld [vmem:[#allocation3 + $0x628] sm:$0xff]
    %v342 = vld [vmem:[#allocation3 + $0x630] sm:$0xff]
    %v343 = vld [vmem:[#allocation3 + $0x638] sm:$0xff]
    %v344 = vld [vmem:[#allocation3 + $0x640] sm:$0xff]
    %v345 = vld [vmem:[#allocation3 + $0x648] sm:$0xff]
    %v346 = vld [vmem:[#allocation3 + $0x650] sm:$0xff]
    %v347 = vld [vmem:[#allocation3 + $0x658] sm:$0xff]
    %v348 = vld [vmem:[#allocation3 + $0x660] sm:$0xff]
    %v349 = vld [vmem:[#allocation3 + $0x668] sm:$0xff]
    %v350 = vld [vmem:[#allocation3 + $0x670] sm:$0xff]
    %v351 = vld [vmem:[#allocation3 + $0x678] sm:$0xff]
    %v352 = vld [vmem:[#allocation3 + $0x680] sm:$0xff]
    %v353 = vld [vmem:[#allocation3 + $0x688] sm:$0xff]
    %v354 = vld [vmem:[#allocation3 + $0x690] sm:$0xff]
    %v355 = vld [vmem:[#allocation3 + $0x698] sm:$0xff]
    %v356 = vld [vmem:[#allocation3 + $0x6a0] sm:$0xff]
    %v357 = vld [vmem:[#allocation3 + $0x6a8] sm:$0xff]
    %v358 = vld [vmem:[#allocation3 + $0x6b0] sm:$0xff]
    %v359 = vld [vmem:[#allocation3 + $0x6b8] sm:$0xff]
    %v360 = vld [vmem:[#allocation3 + $0x6c0] sm:$0xff]
    %v361 = vld [vmem:[#allocation3 + $0x6c8] sm:$0xff]
    %v362 = vld [vmem:[#allocation3 + $0x6d0] sm:$0xff]
    %v363 = vld [vmem:[#allocation3 + $0x6d8] sm:$0xff]
    %v364 = vld [vmem:[#allocation3 + $0x6e0] sm:$0xff]
    %v365 = vld [vmem:[#allocation3 + $0x6e8] sm:$0xff]
    %v366 = vld [vmem:[#allocation3 + $0x6f0] sm:$0xff]
    %v367 = vld [vmem:[#allocation3 + $0x6f8] sm:$0xff]
    %v368 = vld [vmem:[#allocation3 + $0x700] sm:$0xff]
    %v369 = vld [vmem:[#allocation3 + $0x708] sm:$0xff]
    %v370 = vld [vmem:[#allocation3 + $0x710] sm:$0xff]
    %v371 = vld [vmem:[#allocation3 + $0x718] sm:$0xff]
    %v372 = vld [vmem:[#allocation3 + $0x720] sm:$0xff]
    %v373 = vld [vmem:[#allocation3 + $0x728] sm:$0xff]
    %v374 = vld [vmem:[#allocation3 + $0x730] sm:$0xff]
    %v375 = vld [vmem:[#allocation3 + $0x738] sm:$0xff]
    %v376 = vld [vmem:[#allocation3 + $0x740] sm:$0xff]
    %v377 = vld [vmem:[#allocation3 + $0x748] sm:$0xff]
    %v378 = vld [vmem:[#allocation3 + $0x750] sm:$0xff]
    %v379 = vld [vmem:[#allocation3 + $0x758] sm:$0xff]
    %v380 = vld [vmem:[#allocation3 + $0x760] sm:$0xff]
    %v381 = vld [vmem:[#allocation3 + $0x768] sm:$0xff]
    %v382 = vld [vmem:[#allocation3 + $0x770] sm:$0xff]
    %v383 = vld [vmem:[#allocation3 + $0x778] sm:$0xff]
    %v384 = vld [vmem:[#allocation3 + $0x780] sm:$0xff]
    %v385 = vld [vmem:[#allocation3 + $0x788] sm:$0xff]
    %v386 = vld [vmem:[#allocation3 + $0x790] sm:$0xff]
    %v387 = vld [vmem:[#allocation3 + $0x798] sm:$0xff]
    %v388 = vld [vmem:[#allocation3 + $0x7a0] sm:$0xff]
    %v389 = vld [vmem:[#allocation3 + $0x7a8] sm:$0xff]
    %v390 = vld [vmem:[#allocation3 + $0x7b0] sm:$0xff]
    %v391 = vld [vmem:[#allocation3 + $0x7b8] sm:$0xff]
    %v392 = vld [vmem:[#allocation3 + $0x7c0] sm:$0xff]
    %v393 = vld [vmem:[#allocation3 + $0x7c8] sm:$0xff]
    %v394 = vld [vmem:[#allocation3 + $0x7d0] sm:$0xff]
    %v395 = vld [vmem:[#allocation3 + $0x7d8] sm:$0xff]
    %v396 = vld [vmem:[#allocation3 + $0x7e0] sm:$0xff]
    %v397 = vld [vmem:[#allocation3 + $0x7e8] sm:$0xff]
    %v398 = vld [vmem:[#allocation3 + $0x7f0] sm:$0xff]
    %v399 = vld [vmem:[#allocation3 + $0x7f8] sm:$0xff]
    %v400 = vld [vmem:[#allocation3 + $0x800] sm:$0xff]
    %v401 = vld [vmem:[#allocation3 + $0x808] sm:$0xff]
    %v402 = vld [vmem:[#allocation3 + $0x810] sm:$0xff]
    %v403 = vld [vmem:[#allocation3 + $0x818] sm:$0xff]
    %v404 = vld [vmem:[#allocation3 + $0x820] sm:$0xff]
    %v405 = vld [vmem:[#allocation3 + $0x828] sm:$0xff]
    %v406 = vld [vmem:[#allocation3 + $0x830] sm:$0xff]
    %v407 = vld [vmem:[#allocation3 + $0x838] sm:$0xff]
    %v408 = vld [vmem:[#allocation3 + $0x840] sm:$0xff]
    %v409 = vld [vmem:[#allocation3 + $0x848] sm:$0xff]
    %v410 = vld [vmem:[#allocation3 + $0x850] sm:$0xff]
    %v411 = vld [vmem:[#allocation3 + $0x858] sm:$0xff]
    %v412 = vld [vmem:[#allocation3 + $0x860] sm:$0xff]
    %v413 = vld [vmem:[#allocation3 + $0x868] sm:$0xff]
    %v414 = vld [vmem:[#allocation3 + $0x870] sm:$0xff]
    %v415 = vld [vmem:[#allocation3 + $0x878] sm:$0xff]
    %v416 = vld [vmem:[#allocation3 + $0x880] sm:$0xff]
    %v417 = vld [vmem:[#allocation3 + $0x888] sm:$0xff]
    %v418 = vld [vmem:[#allocation3 + $0x890] sm:$0xff]
    %v419 = vld [vmem:[#allocation3 + $0x898] sm:$0xff]
    %v420 = vld [vmem:[#allocation3 + $0x8a0] sm:$0xff]
    %v421 = vld [vmem:[#allocation3 + $0x8a8] sm:$0xff]
    %v422 = vld [vmem:[#allocation3 + $0x8b0] sm:$0xff]
    %v423 = vld [vmem:[#allocation3 + $0x8b8] sm:$0xff]
    %v424 = vld [vmem:[#allocation3 + $0x8c0] sm:$0xff]
    %v425 = vld [vmem:[#allocation3 + $0x8c8] sm:$0xff]
    %v426 = vld [vmem:[#allocation3 + $0x8d0] sm:$0xff]
    %v427 = vld [vmem:[#allocation3 + $0x8d8] sm:$0xff]
    %v428 = vld [vmem:[#allocation3 + $0x8e0] sm:$0xff]
    %v429 = vld [vmem:[#allocation3 + $0x8e8] sm:$0xff]
    %v430 = vld [vmem:[#allocation3 + $0x8f0] sm:$0xff]
    %v431 = vld [vmem:[#allocation3 + $0x8f8] sm:$0xff]
    %v432 = vld [vmem:[#allocation3 + $0x900] sm:$0xff]
    %v433 = vld [vmem:[#allocation3 + $0x908] sm:$0xff]
    %v434 = vld [vmem:[#allocation3 + $0x910] sm:$0xff]
    %v435 = vld [vmem:[#allocation3 + $0x918] sm:$0xff]
    %v436 = vld [vmem:[#allocation3 + $0x920] sm:$0xff]
    %v437 = vld [vmem:[#allocation3 + $0x928] sm:$0xff]
    %v438 = vld [vmem:[#allocation3 + $0x930] sm:$0xff]
    %v439 = vld [vmem:[#allocation3 + $0x938] sm:$0xff]
    %v440 = vld [vmem:[#allocation3 + $0x940] sm:$0xff]
    %v441 = vld [vmem:[#allocation3 + $0x948] sm:$0xff]
    %v442 = vld [vmem:[#allocation3 + $0x950] sm:$0xff]
    %v443 = vld [vmem:[#allocation3 + $0x958] sm:$0xff]
    %v444 = vld [vmem:[#allocation3 + $0x960] sm:$0xff]
    %v445 = vld [vmem:[#allocation3 + $0x968] sm:$0xff]
    %v446 = vld [vmem:[#allocation3 + $0x970] sm:$0xff]
    %v447 = vld [vmem:[#allocation3 + $0x978] sm:$0xff]
    %v448 = vld [vmem:[#allocation3 + $0x980] sm:$0xff]
    %v449 = vld [vmem:[#allocation3 + $0x988] sm:$0xff]
    %v450 = vld [vmem:[#allocation3 + $0x990] sm:$0xff]
    %v451 = vld [vmem:[#allocation3 + $0x998] sm:$0xff]
    %v452 = vld [vmem:[#allocation3 + $0x9a0] sm:$0xff]
    %v453 = vld [vmem:[#allocation3 + $0x9a8] sm:$0xff]
    %v454 = vld [vmem:[#allocation3 + $0x9b0] sm:$0xff]
    %v455 = vld [vmem:[#allocation3 + $0x9b8] sm:$0xff]
    %v456 = vld [vmem:[#allocation3 + $0x9c0] sm:$0xff]
    %v457 = vld [vmem:[#allocation3 + $0x9c8] sm:$0xff]
    %v458 = vld [vmem:[#allocation3 + $0x9d0] sm:$0xff]
    %v459 = vld [vmem:[#allocation3 + $0x9d8] sm:$0xff]
    %v460 = vld [vmem:[#allocation3 + $0x9e0] sm:$0xff]
    %v461 = vld [vmem:[#allocation3 + $0x9e8] sm:$0xff]
    %v462 = vld [vmem:[#allocation3 + $0x9f0] sm:$0xff]
    %v463 = vld [vmem:[#allocation3 + $0x9f8] sm:$0xff]
    %v464 = vld [vmem:[#allocation3 + $0xa00] sm:$0xff]
    %v465 = vld [vmem:[#allocation3 + $0xa08] sm:$0xff]
    %v466 = vld [vmem:[#allocation3 + $0xa10] sm:$0xff]
    %v467 = vld [vmem:[#allocation3 + $0xa18] sm:$0xff]
    %v468 = vld [vmem:[#allocation3 + $0xa20] sm:$0xff]
    %v469 = vld [vmem:[#allocation3 + $0xa28] sm:$0xff]
    %v470 = vld [vmem:[#allocation3 + $0xa30] sm:$0xff]
    %v471 = vld [vmem:[#allocation3 + $0xa38] sm:$0xff]
    %v472 = vld [vmem:[#allocation3 + $0xa40] sm:$0xff]
    %v473 = vld [vmem:[#allocation3 + $0xa48] sm:$0xff]
    %v474 = vld [vmem:[#allocation3 + $0xa50] sm:$0xff]
    %v475 = vld [vmem:[#allocation3 + $0xa58] sm:$0xff]
    %v476 = vld [vmem:[#allocation3 + $0xa60] sm:$0xff]
    %v477 = vld [vmem:[#allocation3 + $0xa68] sm:$0xff]
    %v478 = vld [vmem:[#allocation3 + $0xa70] sm:$0xff]
    %v479 = vld [vmem:[#allocation3 + $0xa78] sm:$0xff]
    %v480 = vld [vmem:[#allocation3 + $0xa80] sm:$0xff]
    %v481 = vld [vmem:[#allocation3 + $0xa88] sm:$0xff]
    %v482 = vld [vmem:[#allocation3 + $0xa90] sm:$0xff]
    %v483 = vld [vmem:[#allocation3 + $0xa98] sm:$0xff]
    %v484 = vld [vmem:[#allocation3 + $0xaa0] sm:$0xff]
    %v485 = vld [vmem:[#allocation3 + $0xaa8] sm:$0xff]
    %v486 = vld [vmem:[#allocation3 + $0xab0] sm:$0xff]
    %v487 = vld [vmem:[#allocation3 + $0xab8] sm:$0xff]
    %v488 = vld [vmem:[#allocation3 + $0xac0] sm:$0xff]
    %v489 = vld [vmem:[#allocation3 + $0xac8] sm:$0xff]
    %v490 = vld [vmem:[#allocation3 + $0xad0] sm:$0xff]
    %v491 = vld [vmem:[#allocation3 + $0xad8] sm:$0xff]
    %v492 = vld [vmem:[#allocation3 + $0xae0] sm:$0xff]
    %v493 = vld [vmem:[#allocation3 + $0xae8] sm:$0xff]
    %v494 = vld [vmem:[%s0] sm:$0xfe]
    %v495 = vld [vmem:[%s0 + $0x8] sm:$0xfe]
    %v496 = vld [vmem:[%s0 + $0x10] sm:$0xfe]
    %v497 = vld [vmem:[%s0 + $0x18] sm:$0xfe]
    %v498 = vld [vmem:[%s0 + $0x20] sm:$0x1]
    %v499 = vld [vmem:[%s0 + $0x28] sm:$0x1]
    %v500 = vld [vmem:[%s0 + $0x30] sm:$0x1]
    %v501 = vld [vmem:[%s0 + $0x38] sm:$0x1]
    %v502 = vld [vmem:[%s0 + $0x40] sm:$0xfe]
    %v503 = vld [vmem:[%s0 + $0x48] sm:$0xfe]
    %v504 = vld [vmem:[%s0 + $0x50] sm:$0xfe]
    %v505 = vld [vmem:[%s0 + $0x58] sm:$0xfe]
    %v506 = vld [vmem:[%s0 + $0x60] sm:$0x1]
    %v507 = vld [vmem:[%s0 + $0x68] sm:$0x1]
    %v508 = vld [vmem:[%s0 + $0x70] sm:$0x1]
    %v509 = vld [vmem:[%s0 + $0x78] sm:$0x1]
    %vm526 = vcmask 1046528
    %v527 = vrot.slane %v494, 1
    %v528 = vrot.slane %v498, 1
    %v529 = vsel %vm526, %v527, %v528
    %v530 = vrot.slane %v495, 1
    %v531 = vrot.slane %v499, 1
    %v532 = vsel %vm526, %v530, %v531
    %v533 = vrot.slane %v496, 1
    %v534 = vrot.slane %v500, 1
    %v535 = vsel %vm526, %v533, %v534
    %v536 = vrot.slane %v497, 1
    %v537 = vrot.slane %v501, 1
    %v538 = vsel %vm526, %v536, %v537
    %v539 = vrot.slane %v502, 1
    %v540 = vrot.slane %v506, 1
    %v541 = vsel %vm526, %v539, %v540
    %v542 = vrot.slane %v503, 1
    %v543 = vrot.slane %v507, 1
    %v544 = vsel %vm526, %v542, %v543
    %v545 = vrot.slane %v504, 1
    %v546 = vrot.slane %v508, 1
    %v547 = vsel %vm526, %v545, %v546
    %v548 = vrot.slane %v505, 1
    %v549 = vrot.slane %v509, 1
    %v550 = vsel %vm526, %v548, %v549
    %s557 = scalar_lea.vmem [#allocation3], 2800
    %v558 = vld [vmem:[%s557] sm:$0xff]
    %v559 = vld [vmem:[%s557 + $0x8] sm:$0xff]
    %v560 = vld [vmem:[%s557 + $0x10] sm:$0xff]
    %v561 = vld [vmem:[%s557 + $0x18] sm:$0xff]
    %v562 = vld [vmem:[%s557 + $0x20] sm:$0xff]
    %v563 = vld [vmem:[%s557 + $0x28] sm:$0xff]
    %v564 = vld [vmem:[%s557 + $0x30] sm:$0xff]
    %v565 = vld [vmem:[%s557 + $0x38] sm:$0xff]
    %v566 = vld [vmem:[%s557 + $0x40] sm:$0xff]
    %v567 = vld [vmem:[%s557 + $0x48] sm:$0xff]
    %v568 = vld [vmem:[%s557 + $0x50] sm:$0xff]
    %v569 = vld [vmem:[%s557 + $0x58] sm:$0xff]
    %v570 = vld [vmem:[%s557 + $0x60] sm:$0xff]
    %v571 = vld [vmem:[%s557 + $0x68] sm:$0xff]
    %v572 = vld [vmem:[%s557 + $0x70] sm:$0xff]
    %v573 = vld [vmem:[%s557 + $0x78] sm:$0xff]
    %v574 = vld [vmem:[%s557 + $0x80] sm:$0xff]
    %v575 = vld [vmem:[%s557 + $0x88] sm:$0xff]
    %v576 = vld [vmem:[%s557 + $0x90] sm:$0xff]
    %v577 = vld [vmem:[%s557 + $0x98] sm:$0xff]
    %v578 = vld [vmem:[%s557 + $0xa0] sm:$0xff]
    %v579 = vld [vmem:[%s557 + $0xa8] sm:$0xff]
    %v580 = vld [vmem:[%s557 + $0xb0] sm:$0xff]
    %v581 = vld [vmem:[%s557 + $0xb8] sm:$0xff]
    %v582 = vld [vmem:[%s557 + $0xc0] sm:$0xff]
    %v583 = vld [vmem:[%s557 + $0xc8] sm:$0xff]
    %v584 = vld [vmem:[%s557 + $0xd0] sm:$0xff]
    %v585 = vld [vmem:[%s557 + $0xd8] sm:$0xff]
    %v586 = vld [vmem:[%s557 + $0xe0] sm:$0xff]
    %v587 = vld [vmem:[%s557 + $0xe8] sm:$0xff]
    %v588 = vld [vmem:[%s557 + $0xf0] sm:$0xff]
    %v589 = vld [vmem:[%s557 + $0xf8] sm:$0xff]
    %v590 = vld [vmem:[%s557 + $0x100] sm:$0xff]
    %v591 = vld [vmem:[%s557 + $0x108] sm:$0xff]
    %v592 = vld [vmem:[%s557 + $0x110] sm:$0xff]
    %v593 = vld [vmem:[%s557 + $0x118] sm:$0xff]
    %v594 = vld [vmem:[%s557 + $0x120] sm:$0xff]
    %v595 = vld [vmem:[%s557 + $0x128] sm:$0xff]
    %v596 = vld [vmem:[%s557 + $0x130] sm:$0xff]
    %v597 = vld [vmem:[%s557 + $0x138] sm:$0xff]
    %v598 = vld [vmem:[%s557 + $0x140] sm:$0xff]
    %v599 = vld [vmem:[%s557 + $0x148] sm:$0xff]
    %v600 = vld [vmem:[%s557 + $0x150] sm:$0xff]
    %v601 = vld [vmem:[%s557 + $0x158] sm:$0xff]
    %v602 = vld [vmem:[%s557 + $0x160] sm:$0xff]
    %v603 = vld [vmem:[%s557 + $0x168] sm:$0xff]
    %v604 = vld [vmem:[%s557 + $0x170] sm:$0xff]
    %v605 = vld [vmem:[%s557 + $0x178] sm:$0xff]
    %v606 = vld [vmem:[%s557 + $0x180] sm:$0xff]
    %v607 = vld [vmem:[%s557 + $0x188] sm:$0xff]
    %v608 = vld [vmem:[%s557 + $0x190] sm:$0xff]
    %v609 = vld [vmem:[%s557 + $0x198] sm:$0xff]
    %v610 = vld [vmem:[%s557 + $0x1a0] sm:$0xff]
    %v611 = vld [vmem:[%s557 + $0x1a8] sm:$0xff]
    %v612 = vld [vmem:[%s557 + $0x1b0] sm:$0xff]
    %v613 = vld [vmem:[%s557 + $0x1b8] sm:$0xff]
    %v614 = vld [vmem:[%s557 + $0x1c0] sm:$0xff]
    %v615 = vld [vmem:[%s557 + $0x1c8] sm:$0xff]
    %v616 = vld [vmem:[%s557 + $0x1d0] sm:$0xff]
    %v617 = vld [vmem:[%s557 + $0x1d8] sm:$0xff]
    %v618 = vld [vmem:[%s557 + $0x1e0] sm:$0xff]
    %v619 = vld [vmem:[%s557 + $0x1e8] sm:$0xff]
    %v620 = vld [vmem:[%s557 + $0x1f0] sm:$0xff]
    %v621 = vld [vmem:[%s557 + $0x1f8] sm:$0xff]
    %v622 = vld [vmem:[%s557 + $0x200] sm:$0xff]
    %v623 = vld [vmem:[%s557 + $0x208] sm:$0xff]
    %v624 = vld [vmem:[%s557 + $0x210] sm:$0xff]
    %v625 = vld [vmem:[%s557 + $0x218] sm:$0xff]
    %v626 = vld [vmem:[%s557 + $0x220] sm:$0xff]
    %v627 = vld [vmem:[%s557 + $0x228] sm:$0xff]
    %v628 = vld [vmem:[%s557 + $0x230] sm:$0xff]
    %v629 = vld [vmem:[%s557 + $0x238] sm:$0xff]
    %v630 = vld [vmem:[%s557 + $0x240] sm:$0xff]
    %v631 = vld [vmem:[%s557 + $0x248] sm:$0xff]
    %v632 = vld [vmem:[%s557 + $0x250] sm:$0xff]
    %v633 = vld [vmem:[%s557 + $0x258] sm:$0xff]
    %v634 = vld [vmem:[%s557 + $0x260] sm:$0xff]
    %v635 = vld [vmem:[%s557 + $0x268] sm:$0xff]
    %v636 = vld [vmem:[%s557 + $0x270] sm:$0xff]
    %v637 = vld [vmem:[%s557 + $0x278] sm:$0xff]
    %v638 = vld [vmem:[%s557 + $0x280] sm:$0xff]
    %v639 = vld [vmem:[%s557 + $0x288] sm:$0xff]
    %v640 = vld [vmem:[%s557 + $0x290] sm:$0xff]
    %v641 = vld [vmem:[%s557 + $0x298] sm:$0xff]
    %v642 = vld [vmem:[%s557 + $0x2a0] sm:$0xff]
    %v643 = vld [vmem:[%s557 + $0x2a8] sm:$0xff]
    %v644 = vld [vmem:[%s557 + $0x2b0] sm:$0xff]
    %v645 = vld [vmem:[%s557 + $0x2b8] sm:$0xff]
    %v646 = vld [vmem:[%s557 + $0x2c0] sm:$0xff]
    %v647 = vld [vmem:[%s557 + $0x2c8] sm:$0xff]
    %v648 = vld [vmem:[%s557 + $0x2d0] sm:$0xff]
    %v649 = vld [vmem:[%s557 + $0x2d8] sm:$0xff]
    %v650 = vld [vmem:[%s557 + $0x2e0] sm:$0xff]
    %v651 = vld [vmem:[%s557 + $0x2e8] sm:$0xff]
    %v652 = vld [vmem:[%s557 + $0x2f0] sm:$0xff]
    %v653 = vld [vmem:[%s557 + $0x2f8] sm:$0xff]
    %v654 = vld [vmem:[%s557 + $0x300] sm:$0xff]
    %v655 = vld [vmem:[%s557 + $0x308] sm:$0xff]
    %v656 = vld [vmem:[%s557 + $0x310] sm:$0xff]
    %v657 = vld [vmem:[%s557 + $0x318] sm:$0xff]
    %v658 = vld [vmem:[%s557 + $0x320] sm:$0xff]
    %v659 = vld [vmem:[%s557 + $0x328] sm:$0xff]
    %v660 = vld [vmem:[%s557 + $0x330] sm:$0xff]
    %v661 = vld [vmem:[%s557 + $0x338] sm:$0xff]
    %v662 = vld [vmem:[%s557 + $0x340] sm:$0xff]
    %v663 = vld [vmem:[%s557 + $0x348] sm:$0xff]
    %v664 = vld [vmem:[%s557 + $0x350] sm:$0xff]
    %v665 = vld [vmem:[%s557 + $0x358] sm:$0xff]
    %v666 = vld [vmem:[%s557 + $0x360] sm:$0xff]
    %v667 = vld [vmem:[%s557 + $0x368] sm:$0xff]
    %v668 = vld [vmem:[%s557 + $0x370] sm:$0xff]
    %v669 = vld [vmem:[%s557 + $0x378] sm:$0xff]
    %v670 = vld [vmem:[%s557 + $0x380] sm:$0xff]
    %v671 = vld [vmem:[%s557 + $0x388] sm:$0xff]
    %v672 = vld [vmem:[%s557 + $0x390] sm:$0xff]
    %v673 = vld [vmem:[%s557 + $0x398] sm:$0xff]
    %v674 = vld [vmem:[%s557 + $0x3a0] sm:$0xff]
    %v675 = vld [vmem:[%s557 + $0x3a8] sm:$0xff]
    %v676 = vld [vmem:[%s557 + $0x3b0] sm:$0xff]
    %v677 = vld [vmem:[%s557 + $0x3b8] sm:$0xff]
    %v678 = vld [vmem:[%s557 + $0x3c0] sm:$0xff]
    %v679 = vld [vmem:[%s557 + $0x3c8] sm:$0xff]
    %v680 = vld [vmem:[%s557 + $0x3d0] sm:$0xff]
    %v681 = vld [vmem:[%s557 + $0x3d8] sm:$0xff]
    %v682 = vld [vmem:[%s557 + $0x3e0] sm:$0xff]
    %v683 = vld [vmem:[%s557 + $0x3e8] sm:$0xff]
    %v684 = vld [vmem:[%s557 + $0x3f0] sm:$0xff]
    %v685 = vld [vmem:[%s557 + $0x3f8] sm:$0xff]
    %v686 = vld [vmem:[%s557 + $0x400] sm:$0xff]
    %v687 = vld [vmem:[%s557 + $0x408] sm:$0xff]
    %v688 = vld [vmem:[%s557 + $0x410] sm:$0xff]
    %v689 = vld [vmem:[%s557 + $0x418] sm:$0xff]
    %v690 = vld [vmem:[%s557 + $0x420] sm:$0xff]
    %v691 = vld [vmem:[%s557 + $0x428] sm:$0xff]
    %v692 = vld [vmem:[%s557 + $0x430] sm:$0xff]
    %v693 = vld [vmem:[%s557 + $0x438] sm:$0xff]
    %v694 = vld [vmem:[%s557 + $0x440] sm:$0xff]
    %v695 = vld [vmem:[%s557 + $0x448] sm:$0xff]
    %v696 = vld [vmem:[%s557 + $0x450] sm:$0xff]
    %v697 = vld [vmem:[%s557 + $0x458] sm:$0xff]
    %v698 = vld [vmem:[%s557 + $0x460] sm:$0xff]
    %v699 = vld [vmem:[%s557 + $0x468] sm:$0xff]
    %v700 = vld [vmem:[%s557 + $0x470] sm:$0xff]
    %v701 = vld [vmem:[%s557 + $0x478] sm:$0xff]
    %v702 = vld [vmem:[%s557 + $0x480] sm:$0xff]
    %v703 = vld [vmem:[%s557 + $0x488] sm:$0xff]
    %v704 = vld [vmem:[%s557 + $0x490] sm:$0xff]
    %v705 = vld [vmem:[%s557 + $0x498] sm:$0xff]
    %v706 = vld [vmem:[%s557 + $0x4a0] sm:$0xff]
    %v707 = vld [vmem:[%s557 + $0x4a8] sm:$0xff]
    %v708 = vld [vmem:[%s557 + $0x4b0] sm:$0xff]
    %v709 = vld [vmem:[%s557 + $0x4b8] sm:$0xff]
    %v710 = vld [vmem:[%s557 + $0x4c0] sm:$0xff]
    %v711 = vld [vmem:[%s557 + $0x4c8] sm:$0xff]
    %v712 = vld [vmem:[%s557 + $0x4d0] sm:$0xff]
    %v713 = vld [vmem:[%s557 + $0x4d8] sm:$0xff]
    %v714 = vld [vmem:[%s557 + $0x4e0] sm:$0xff]
    %v715 = vld [vmem:[%s557 + $0x4e8] sm:$0xff]
    %v716 = vld [vmem:[%s557 + $0x4f0] sm:$0xff]
    %v717 = vld [vmem:[%s557 + $0x4f8] sm:$0xff]
    %v718 = vld [vmem:[%s557 + $0x500] sm:$0xff]
    %v719 = vld [vmem:[%s557 + $0x508] sm:$0xff]
    %v720 = vld [vmem:[%s557 + $0x510] sm:$0xff]
    %v721 = vld [vmem:[%s557 + $0x518] sm:$0xff]
    %v722 = vld [vmem:[%s557 + $0x520] sm:$0xff]
    %v723 = vld [vmem:[%s557 + $0x528] sm:$0xff]
    %v724 = vld [vmem:[%s557 + $0x530] sm:$0xff]
    %v725 = vld [vmem:[%s557 + $0x538] sm:$0xff]
    %v726 = vld [vmem:[%s557 + $0x540] sm:$0xff]
    %v727 = vld [vmem:[%s557 + $0x548] sm:$0xff]
    %v728 = vld [vmem:[%s557 + $0x550] sm:$0xff]
    %v729 = vld [vmem:[%s557 + $0x558] sm:$0xff]
    %v730 = vld [vmem:[%s557 + $0x560] sm:$0xff]
    %v731 = vld [vmem:[%s557 + $0x568] sm:$0xff]
    %v732 = vld [vmem:[%s557 + $0x570] sm:$0xff]
    %v733 = vld [vmem:[%s557 + $0x578] sm:$0xff]
    %v734 = vld [vmem:[%s557 + $0x580] sm:$0xff]
    %v735 = vld [vmem:[%s557 + $0x588] sm:$0xff]
    %v736 = vld [vmem:[%s557 + $0x590] sm:$0xff]
    %v737 = vld [vmem:[%s557 + $0x598] sm:$0xff]
    %v738 = vld [vmem:[%s557 + $0x5a0] sm:$0xff]
    %v739 = vld [vmem:[%s557 + $0x5a8] sm:$0xff]
    %v740 = vld [vmem:[%s557 + $0x5b0] sm:$0xff]
    %v741 = vld [vmem:[%s557 + $0x5b8] sm:$0xff]
    %v742 = vld [vmem:[%s557 + $0x5c0] sm:$0xff]
    %v743 = vld [vmem:[%s557 + $0x5c8] sm:$0xff]
    %v744 = vld [vmem:[%s557 + $0x5d0] sm:$0xff]
    %v745 = vld [vmem:[%s557 + $0x5d8] sm:$0xff]
    %v746 = vld [vmem:[%s557 + $0x5e0] sm:$0xff]
    %v747 = vld [vmem:[%s557 + $0x5e8] sm:$0xff]
    %v748 = vld [vmem:[%s557 + $0x5f0] sm:$0xff]
    %v749 = vld [vmem:[%s557 + $0x5f8] sm:$0xff]
    %v750 = vld [vmem:[%s557 + $0x600] sm:$0xff]
    %v751 = vld [vmem:[%s557 + $0x608] sm:$0xff]
    %v752 = vld [vmem:[%s557 + $0x610] sm:$0xff]
    %v753 = vld [vmem:[%s557 + $0x618] sm:$0xff]
    %v754 = vld [vmem:[%s557 + $0x620] sm:$0xff]
    %v755 = vld [vmem:[%s557 + $0x628] sm:$0xff]
    %v756 = vld [vmem:[%s557 + $0x630] sm:$0xff]
    %v757 = vld [vmem:[%s557 + $0x638] sm:$0xff]
    %v758 = vld [vmem:[%s557 + $0x640] sm:$0xff]
    %v759 = vld [vmem:[%s557 + $0x648] sm:$0xff]
    %v760 = vld [vmem:[%s557 + $0x650] sm:$0xff]
    %v761 = vld [vmem:[%s557 + $0x658] sm:$0xff]
    %v762 = vld [vmem:[%s557 + $0x660] sm:$0xff]
    %v763 = vld [vmem:[%s557 + $0x668] sm:$0xff]
    %v764 = vld [vmem:[%s557 + $0x670] sm:$0xff]
    %v765 = vld [vmem:[%s557 + $0x678] sm:$0xff]
    %v766 = vld [vmem:[%s557 + $0x680] sm:$0xff]
    %v767 = vld [vmem:[%s557 + $0x688] sm:$0xff]
    %v768 = vld [vmem:[%s557 + $0x690] sm:$0xff]
    %v769 = vld [vmem:[%s557 + $0x698] sm:$0xff]
    %v770 = vld [vmem:[%s557 + $0x6a0] sm:$0xff]
    %v771 = vld [vmem:[%s557 + $0x6a8] sm:$0xff]
    %v772 = vld [vmem:[%s557 + $0x6b0] sm:$0xff]
    %v773 = vld [vmem:[%s557 + $0x6b8] sm:$0xff]
    %v774 = vld [vmem:[%s557 + $0x6c0] sm:$0xff]
    %v775 = vld [vmem:[%s557 + $0x6c8] sm:$0xff]
    %v776 = vld [vmem:[%s557 + $0x6d0] sm:$0xff]
    %v777 = vld [vmem:[%s557 + $0x6d8] sm:$0xff]
    %v778 = vld [vmem:[%s557 + $0x6e0] sm:$0xff]
    %v779 = vld [vmem:[%s557 + $0x6e8] sm:$0xff]
    %v780 = vld [vmem:[%s557 + $0x6f0] sm:$0xff]
    %v781 = vld [vmem:[%s557 + $0x6f8] sm:$0xff]
    %v782 = vld [vmem:[%s557 + $0x700] sm:$0xff]
    %v783 = vld [vmem:[%s557 + $0x708] sm:$0xff]
    %v784 = vld [vmem:[%s557 + $0x710] sm:$0xff]
    %v785 = vld [vmem:[%s557 + $0x718] sm:$0xff]
    %v786 = vld [vmem:[%s557 + $0x720] sm:$0xff]
    %v787 = vld [vmem:[%s557 + $0x728] sm:$0xff]
    %v788 = vld [vmem:[%s557 + $0x730] sm:$0xff]
    %v789 = vld [vmem:[%s557 + $0x738] sm:$0xff]
    %v790 = vld [vmem:[%s557 + $0x740] sm:$0xff]
    %v791 = vld [vmem:[%s557 + $0x748] sm:$0xff]
    %v792 = vld [vmem:[%s557 + $0x750] sm:$0xff]
    %v793 = vld [vmem:[%s557 + $0x758] sm:$0xff]
    %v794 = vld [vmem:[%s557 + $0x760] sm:$0xff]
    %v795 = vld [vmem:[%s557 + $0x768] sm:$0xff]
    %v796 = vld [vmem:[%s557 + $0x770] sm:$0xff]
    %v797 = vld [vmem:[%s557 + $0x778] sm:$0xff]
    %v798 = vld [vmem:[%s557 + $0x780] sm:$0xff]
    %v799 = vld [vmem:[%s557 + $0x788] sm:$0xff]
    %v800 = vld [vmem:[%s557 + $0x790] sm:$0xff]
    %v801 = vld [vmem:[%s557 + $0x798] sm:$0xff]
    %v802 = vld [vmem:[%s557 + $0x7a0] sm:$0xff]
    %v803 = vld [vmem:[%s557 + $0x7a8] sm:$0xff]
    %v804 = vld [vmem:[%s557 + $0x7b0] sm:$0xff]
    %v805 = vld [vmem:[%s557 + $0x7b8] sm:$0xff]
    %v806 = vld [vmem:[%s557 + $0x7c0] sm:$0xff]
    %v807 = vld [vmem:[%s557 + $0x7c8] sm:$0xff]
    %v808 = vld [vmem:[%s557 + $0x7d0] sm:$0xff]
    %v809 = vld [vmem:[%s557 + $0x7d8] sm:$0xff]
    %v810 = vld [vmem:[%s557 + $0x7e0] sm:$0xff]
    %v811 = vld [vmem:[%s557 + $0x7e8] sm:$0xff]
    %v812 = vld [vmem:[%s557 + $0x7f0] sm:$0xff]
    %v813 = vld [vmem:[%s557 + $0x7f8] sm:$0xff]
    %v814 = vld [vmem:[%s557 + $0x800] sm:$0xff]
    %v815 = vld [vmem:[%s557 + $0x808] sm:$0xff]
    %v816 = vld [vmem:[%s557 + $0x810] sm:$0xff]
    %v817 = vld [vmem:[%s557 + $0x818] sm:$0xff]
    %v818 = vld [vmem:[%s557 + $0x820] sm:$0xff]
    %v819 = vld [vmem:[%s557 + $0x828] sm:$0xff]
    %v820 = vld [vmem:[%s557 + $0x830] sm:$0xff]
    %v821 = vld [vmem:[%s557 + $0x838] sm:$0xff]
    %v822 = vld [vmem:[%s557 + $0x840] sm:$0xff]
    %v823 = vld [vmem:[%s557 + $0x848] sm:$0xff]
    %v824 = vld [vmem:[%s557 + $0x850] sm:$0xff]
    %v825 = vld [vmem:[%s557 + $0x858] sm:$0xff]
    %v826 = vld [vmem:[%s557 + $0x860] sm:$0xff]
    %v827 = vld [vmem:[%s557 + $0x868] sm:$0xff]
    %v828 = vld [vmem:[%s557 + $0x870] sm:$0xff]
    %v829 = vld [vmem:[%s557 + $0x878] sm:$0xff]
    %v830 = vld [vmem:[%s557 + $0x880] sm:$0xff]
    %v831 = vld [vmem:[%s557 + $0x888] sm:$0xff]
    %v832 = vld [vmem:[%s557 + $0x890] sm:$0xff]
    %v833 = vld [vmem:[%s557 + $0x898] sm:$0xff]
    %v834 = vld [vmem:[%s557 + $0x8a0] sm:$0xff]
    %v835 = vld [vmem:[%s557 + $0x8a8] sm:$0xff]
    %v836 = vld [vmem:[%s557 + $0x8b0] sm:$0xff]
    %v837 = vld [vmem:[%s557 + $0x8b8] sm:$0xff]
    %v838 = vld [vmem:[%s557 + $0x8c0] sm:$0xff]
    %v839 = vld [vmem:[%s557 + $0x8c8] sm:$0xff]
    %v840 = vld [vmem:[%s557 + $0x8d0] sm:$0xff]
    %v841 = vld [vmem:[%s557 + $0x8d8] sm:$0xff]
    %v842 = vld [vmem:[%s557 + $0x8e0] sm:$0xff]
    %v843 = vld [vmem:[%s557 + $0x8e8] sm:$0xff]
    %v844 = vld [vmem:[%s557 + $0x8f0] sm:$0xff]
    %v845 = vld [vmem:[%s557 + $0x8f8] sm:$0xff]
    %v846 = vld [vmem:[%s557 + $0x900] sm:$0xff]
    %v847 = vld [vmem:[%s557 + $0x908] sm:$0xff]
    %v848 = vld [vmem:[%s557 + $0x910] sm:$0xff]
    %v849 = vld [vmem:[%s557 + $0x918] sm:$0xff]
    %v850 = vld [vmem:[%s557 + $0x920] sm:$0xff]
    %v851 = vld [vmem:[%s557 + $0x928] sm:$0xff]
    %v852 = vld [vmem:[%s557 + $0x930] sm:$0xff]
    %v853 = vld [vmem:[%s557 + $0x938] sm:$0xff]
    %v854 = vld [vmem:[%s557 + $0x940] sm:$0xff]
    %v855 = vld [vmem:[%s557 + $0x948] sm:$0xff]
    %v856 = vld [vmem:[%s557 + $0x950] sm:$0xff]
    %v857 = vld [vmem:[%s557 + $0x958] sm:$0xff]
    %v858 = vld [vmem:[%s557 + $0x960] sm:$0xff]
    %v859 = vld [vmem:[%s557 + $0x968] sm:$0xff]
    %v860 = vld [vmem:[%s557 + $0x970] sm:$0xff]
    %v861 = vld [vmem:[%s557 + $0x978] sm:$0xff]
    %v862 = vld [vmem:[%s557 + $0x980] sm:$0xff]
    %v863 = vld [vmem:[%s557 + $0x988] sm:$0xff]
    %v864 = vld [vmem:[%s557 + $0x990] sm:$0xff]
    %v865 = vld [vmem:[%s557 + $0x998] sm:$0xff]
    %v866 = vld [vmem:[%s557 + $0x9a0] sm:$0xff]
    %v867 = vld [vmem:[%s557 + $0x9a8] sm:$0xff]
    %v868 = vld [vmem:[%s557 + $0x9b0] sm:$0xff]
    %v869 = vld [vmem:[%s557 + $0x9b8] sm:$0xff]
    %v870 = vld [vmem:[%s557 + $0x9c0] sm:$0xff]
    %v871 = vld [vmem:[%s557 + $0x9c8] sm:$0xff]
    %v872 = vld [vmem:[%s557 + $0x9d0] sm:$0xff]
    %v873 = vld [vmem:[%s557 + $0x9d8] sm:$0xff]
    %v874 = vld [vmem:[%s557 + $0x9e0] sm:$0xff]
    %v875 = vld [vmem:[%s557 + $0x9e8] sm:$0xff]
    %v876 = vld [vmem:[%s557 + $0x9f0] sm:$0xff]
    %v877 = vld [vmem:[%s557 + $0x9f8] sm:$0xff]
    %v878 = vld [vmem:[%s557 + $0xa00] sm:$0xff]
    %v879 = vld [vmem:[%s557 + $0xa08] sm:$0xff]
    %v880 = vld [vmem:[%s557 + $0xa10] sm:$0xff]
    %v881 = vld [vmem:[%s557 + $0xa18] sm:$0xff]
    %v882 = vld [vmem:[%s557 + $0xa20] sm:$0xff]
    %v883 = vld [vmem:[%s557 + $0xa28] sm:$0xff]
    %v884 = vld [vmem:[%s557 + $0xa30] sm:$0xff]
    %v885 = vld [vmem:[%s557 + $0xa38] sm:$0xff]
    %v886 = vld [vmem:[%s557 + $0xa40] sm:$0xff]
    %v887 = vld [vmem:[%s557 + $0xa48] sm:$0xff]
    %v888 = vld [vmem:[%s557 + $0xa50] sm:$0xff]
    %v889 = vld [vmem:[%s557 + $0xa58] sm:$0xff]
    %v890 = vld [vmem:[%s557 + $0xa60] sm:$0xff]
    %v891 = vld [vmem:[%s557 + $0xa68] sm:$0xff]
    %v892 = vld [vmem:[%s557 + $0xa70] sm:$0xff]
    %v893 = vld [vmem:[%s557 + $0xa78] sm:$0xff]
    %v894 = vld [vmem:[%s557 + $0xa80] sm:$0xff]
    %v895 = vld [vmem:[%s557 + $0xa88] sm:$0xff]
    %v896 = vld [vmem:[%s557 + $0xa90] sm:$0xff]
    %v897 = vld [vmem:[%s557 + $0xa98] sm:$0xff]
    %v898 = vld [vmem:[%s557 + $0xaa0] sm:$0xff]
    %v899 = vld [vmem:[%s557 + $0xaa8] sm:$0xff]
    %v900 = vld [vmem:[%s557 + $0xab0] sm:$0xff]
    %v901 = vld [vmem:[%s557 + $0xab8] sm:$0xff]
    %v902 = vld [vmem:[%s557 + $0xac0] sm:$0xff]
    %v903 = vld [vmem:[%s557 + $0xac8] sm:$0xff]
    %v904 = vld [vmem:[%s557 + $0xad0] sm:$0xff]
    %v905 = vld [vmem:[%s557 + $0xad8] sm:$0xff]
    %v906 = vld [vmem:[%s557 + $0xae0] sm:$0xff]
    %v907 = vld [vmem:[%s557 + $0xae8] sm:$0xff]
    %vm908 = vcmask 130048
    %v909 = vsel %vm908, %v538, 0
    %v911 = vsel %vm908, %v550, 0
    %913 = vmatprep.subr.mxu0 %v664
    %914 = vmatpush1.msra.mxu0 %v663
    %915 = vmatprep.subr.mxu0 %v657
    %916 = vmatpush1.msra.mxu0 %v656
    %917 = vmatprep.subr.mxu0 %v650
    %918 = vmatpush1.msra.mxu0 %v649
    %919 = vmatprep.subr.mxu0 %v643
    %920 = vmatpush1.msra.mxu0 %v642
    %921 = vmatprep.subr.mxu0 %v636
    %922 = vmatpush1.msra.mxu0 %v635
    %923 = vmatprep.subr.mxu0 %v629
    %924 = vmatpush1.msra.mxu0 %v628
    %925 = vmatprep.subr.mxu0 %v622
    %926 = vmatpush1.msra.mxu0 %v621
    %927 = vmatprep.subr.mxu0 %v615
    %928 = vmatpush1.msra.mxu0 %v614
    %929 = vmatprep.subr.mxu0 %v608
    %930 = vmatpush1.msra.mxu0 %v607
    %931 = vmatprep.subr.mxu0 %v601
    %932 = vmatpush1.msra.mxu0 %v600
    %933 = vmatprep.subr.mxu0 %v594
    %934 = vmatpush1.msra.mxu0 %v593
    %935 = vmatprep.subr.mxu0 %v587
    %936 = vmatpush1.msra.mxu0 %v586
    %937 = vmatprep.subr.mxu0 %v580
    %938 = vmatpush1.msra.mxu0 %v579
    %939 = vmatprep.subr.mxu0 %v573
    %940 = vmatpush1.msra.mxu0 %v572
    %941 = vmatprep.subr.mxu0 %v566
    %942 = vmatpush1.msra.mxu0 %v565
    %943 = vmatprep.subr.mxu0 %v559
    %944 = vmatpush1.msra.mxu0 %v558
    %945 = vmatprep.subr.mxu0 %v776
    %946 = vmatpush2.msra.mxu0 %v775
    %947 = vmatprep.subr.mxu0 %v769
    %948 = vmatpush2.msra.mxu0 %v768
    %949 = vmatprep.subr.mxu0 %v762
    %950 = vmatpush2.msra.mxu0 %v761
    %951 = vmatprep.subr.mxu0 %v755
    %952 = vmatpush2.msra.mxu0 %v754
    %953 = vmatprep.subr.mxu0 %v748
    %954 = vmatpush2.msra.mxu0 %v747
    %955 = vmatprep.subr.mxu0 %v741
    %956 = vmatpush2.msra.mxu0 %v740
    %957 = vmatprep.subr.mxu0 %v734
    %958 = vmatpush2.msra.mxu0 %v733
    %959 = vmatprep.subr.mxu0 %v727
    %960 = vmatpush2.msra.mxu0 %v726
    %961 = vmatprep.subr.mxu0 %v720
    %962 = vmatpush2.msra.mxu0 %v719
    %963 = vmatprep.subr.mxu0 %v713
    %964 = vmatpush2.msra.mxu0 %v712
    %965 = vmatprep.subr.mxu0 %v706
    %966 = vmatpush2.msra.mxu0 %v705
    %967 = vmatprep.subr.mxu0 %v699
    %968 = vmatpush2.msra.mxu0 %v698
    %969 = vmatprep.subr.mxu0 %v692
    %970 = vmatpush2.msra.mxu0 %v691
    %971 = vmatprep.subr.mxu0 %v685
    %972 = vmatpush2.msra.mxu0 %v684
    %973 = vmatprep.subr.mxu0 %v678
    %974 = vmatpush2.msra.mxu0 %v677
    %975 = vmatprep.subr.mxu0 %v671
    %976 = vmatpush2.msra.mxu0 %v670
    %977 = vmatprep.mubr.f32.mxu0 %v532
    %978 = vmatmul.mubr.f32.gmra.mxu0 %v529
    %v979 = vpop.f32.mrf.mxu0
    %v980 = vadd.f32 0.0, %v979
    %v981 = vpop.f32.mrf.mxu0
    %v982 = vadd.f32 0.0, %v981
    %983 = vmatprep.mubr.f32.mxu0 %v544
    %984 = vmatmul.mubr.f32.gmra.mxu0 %v541
    %v985 = vpop.f32.mrf.mxu0
    %v986 = vadd.f32 0.0, %v985
    %v987 = vpop.f32.mrf.mxu0
    %v988 = vadd.f32 0.0, %v987
    %989 = vdwg.mxu0
    %990 = vmatprep.subr.mxu0 %v888
    %991 = vmatpush1.msra.mxu0 %v887
    %992 = vmatprep.subr.mxu0 %v881
    %993 = vmatpush1.msra.mxu0 %v880
    %994 = vmatprep.subr.mxu0 %v874
    %995 = vmatpush1.msra.mxu0 %v873
    %996 = vmatprep.subr.mxu0 %v867
    %997 = vmatpush1.msra.mxu0 %v866
    %998 = vmatprep.subr.mxu0 %v860
    %999 = vmatpush1.msra.mxu0 %v859
    %1000 = vmatprep.subr.mxu0 %v853
    %1001 = vmatpush1.msra.mxu0 %v852
    %1002 = vmatprep.subr.mxu0 %v846
    %1003 = vmatpush1.msra.mxu0 %v845
    %1004 = vmatprep.subr.mxu0 %v839
    %1005 = vmatpush1.msra.mxu0 %v838
    %1006 = vmatprep.subr.mxu0 %v832
    %1007 = vmatpush1.msra.mxu0 %v831
    %1008 = vmatprep.subr.mxu0 %v825
    %1009 = vmatpush1.msra.mxu0 %v824
    %1010 = vmatprep.subr.mxu0 %v818
    %1011 = vmatpush1.msra.mxu0 %v817
    %1012 = vmatprep.subr.mxu0 %v811
    %1013 = vmatpush1.msra.mxu0 %v810
    %1014 = vmatprep.subr.mxu0 %v804
    %1015 = vmatpush1.msra.mxu0 %v803
    %1016 = vmatprep.subr.mxu0 %v797
    %1017 = vmatpush1.msra.mxu0 %v796
    %1018 = vmatprep.subr.mxu0 %v790
    %1019 = vmatpush1.msra.mxu0 %v789
    %1020 = vmatprep.subr.mxu0 %v783
    %1021 = vmatpush1.msra.mxu0 %v782
    %1022 = vmatprep.subr.mxu0 0.0
    %1023 = vmatpush2.msra.mxu0 0.0
    %1024 = vmatprep.subr.mxu0 0.0
    %1025 = vmatpush2.msra.mxu0 0.0
    %1026 = vmatprep.subr.mxu0 0.0
    %1027 = vmatpush2.msra.mxu0 0.0
    %1028 = vmatprep.subr.mxu0 0.0
    %1029 = vmatpush2.msra.mxu0 0.0
    %1030 = vmatprep.subr.mxu0 0.0
    %1031 = vmatpush2.msra.mxu0 0.0
    %1032 = vmatprep.subr.mxu0 0.0
    %1033 = vmatpush2.msra.mxu0 0.0
    %1034 = vmatprep.subr.mxu0 0.0
    %1035 = vmatpush2.msra.mxu0 0.0
    %1036 = vmatprep.subr.mxu0 0.0
    %1037 = vmatpush2.msra.mxu0 0.0
    %1038 = vmatprep.subr.mxu0 0.0
    %1039 = vmatpush2.msra.mxu0 0.0
    %1040 = vmatprep.subr.mxu0 0.0
    %1041 = vmatpush2.msra.mxu0 0.0
    %1042 = vmatprep.subr.mxu0 0.0
    %1043 = vmatpush2.msra.mxu0 0.0
    %1044 = vmatprep.subr.mxu0 0.0
    %1045 = vmatpush2.msra.mxu0 0.0
    %1046 = vmatprep.subr.mxu0 0.0
    %1047 = vmatpush2.msra.mxu0 0.0
    %1048 = vmatprep.subr.mxu0 0.0
    %1049 = vmatpush2.msra.mxu0 0.0
    %1050 = vmatprep.subr.mxu0 %v902
    %1051 = vmatpush2.msra.mxu0 %v901
    %1052 = vmatprep.subr.mxu0 %v895
    %1053 = vmatpush2.msra.mxu0 %v894
    %1054 = vmatprep.mubr.f32.mxu0 %v909
    %1055 = vmatmul.mubr.f32.gmra.mxu0 %v535
    %v1056 = vpop.f32.mrf.mxu0
    %v1057 = vadd.f32 %v980, %v1056
    %v1058 = vpop.f32.mrf.mxu0
    %v1059 = vadd.f32 %v982, %v1058
    %1060 = vmatprep.mubr.f32.mxu0 %v911
    %1061 = vmatmul.mubr.f32.gmra.mxu0 %v547
    %v1062 = vpop.f32.mrf.mxu0
    %v1063 = vadd.f32 %v986, %v1062
    %v1064 = vpop.f32.mrf.mxu0
    %v1065 = vadd.f32 %v988, %v1064
    %1066 = vdwg.mxu0
    %1067 = vmatprep.subr.mxu0 %v666
    %1068 = vmatpush1.msra.mxu0 %v665
    %1069 = vmatprep.subr.mxu0 %v659
    %1070 = vmatpush1.msra.mxu0 %v658
    %1071 = vmatprep.subr.mxu0 %v652
    %1072 = vmatpush1.msra.mxu0 %v651
    %1073 = vmatprep.subr.mxu0 %v645
    %1074 = vmatpush1.msra.mxu0 %v644
    %1075 = vmatprep.subr.mxu0 %v638
    %1076 = vmatpush1.msra.mxu0 %v637
    %1077 = vmatprep.subr.mxu0 %v631
    %1078 = vmatpush1.msra.mxu0 %v630
    %1079 = vmatprep.subr.mxu0 %v624
    %1080 = vmatpush1.msra.mxu0 %v623
    %1081 = vmatprep.subr.mxu0 %v617
    %1082 = vmatpush1.msra.mxu0 %v616
    %1083 = vmatprep.subr.mxu0 %v610
    %1084 = vmatpush1.msra.mxu0 %v609
    %1085 = vmatprep.subr.mxu0 %v603
    %1086 = vmatpush1.msra.mxu0 %v602
    %1087 = vmatprep.subr.mxu0 %v596
    %1088 = vmatpush1.msra.mxu0 %v595
    %1089 = vmatprep.subr.mxu0 %v589
    %1090 = vmatpush1.msra.mxu0 %v588
    %1091 = vmatprep.subr.mxu0 %v582
    %1092 = vmatpush1.msra.mxu0 %v581
    %1093 = vmatprep.subr.mxu0 %v575
    %1094 = vmatpush1.msra.mxu0 %v574
    %1095 = vmatprep.subr.mxu0 %v568
    %1096 = vmatpush1.msra.mxu0 %v567
    %1097 = vmatprep.subr.mxu0 %v561
    %1098 = vmatpush1.msra.mxu0 %v560
    %1099 = vmatprep.subr.mxu0 %v778
    %1100 = vmatpush2.msra.mxu0 %v777
    %1101 = vmatprep.subr.mxu0 %v771
    %1102 = vmatpush2.msra.mxu0 %v770
    %1103 = vmatprep.subr.mxu0 %v764
    %1104 = vmatpush2.msra.mxu0 %v763
    %1105 = vmatprep.subr.mxu0 %v757
    %1106 = vmatpush2.msra.mxu0 %v756
    %1107 = vmatprep.subr.mxu0 %v750
    %1108 = vmatpush2.msra.mxu0 %v749
    %1109 = vmatprep.subr.mxu0 %v743
    %1110 = vmatpush2.msra.mxu0 %v742
    %1111 = vmatprep.subr.mxu0 %v736
    %1112 = vmatpush2.msra.mxu0 %v735
    %1113 = vmatprep.subr.mxu0 %v729
    %1114 = vmatpush2.msra.mxu0 %v728
    %1115 = vmatprep.subr.mxu0 %v722
    %1116 = vmatpush2.msra.mxu0 %v721
    %1117 = vmatprep.subr.mxu0 %v715
    %1118 = vmatpush2.msra.mxu0 %v714
    %1119 = vmatprep.subr.mxu0 %v708
    %1120 = vmatpush2.msra.mxu0 %v707
    %1121 = vmatprep.subr.mxu0 %v701
    %1122 = vmatpush2.msra.mxu0 %v700
    %1123 = vmatprep.subr.mxu0 %v694
    %1124 = vmatpush2.msra.mxu0 %v693
    %1125 = vmatprep.subr.mxu0 %v687
    %1126 = vmatpush2.msra.mxu0 %v686
    %1127 = vmatprep.subr.mxu0 %v680
    %1128 = vmatpush2.msra.mxu0 %v679
    %1129 = vmatprep.subr.mxu0 %v673
    %1130 = vmatpush2.msra.mxu0 %v672
    %1131 = vmatprep.mubr.f32.mxu0 %v532
    %1132 = vmatmul.mubr.f32.gmra.mxu0 %v529
    %v1133 = vpop.f32.mrf.mxu0
    %v1134 = vadd.f32 0.0, %v1133
    %v1135 = vpop.f32.mrf.mxu0
    %v1136 = vadd.f32 0.0, %v1135
    %1137 = vmatprep.mubr.f32.mxu0 %v544
    %1138 = vmatmul.mubr.f32.gmra.mxu0 %v541
    %v1139 = vpop.f32.mrf.mxu0
    %v1140 = vadd.f32 0.0, %v1139
    %v1141 = vpop.f32.mrf.mxu0
    %v1142 = vadd.f32 0.0, %v1141
    %1143 = vdwg.mxu0
    %1144 = vmatprep.subr.mxu0 %v890
    %1145 = vmatpush1.msra.mxu0 %v889
    %1146 = vmatprep.subr.mxu0 %v883
    %1147 = vmatpush1.msra.mxu0 %v882
    %1148 = vmatprep.subr.mxu0 %v876
    %1149 = vmatpush1.msra.mxu0 %v875
    %1150 = vmatprep.subr.mxu0 %v869
    %1151 = vmatpush1.msra.mxu0 %v868
    %1152 = vmatprep.subr.mxu0 %v862
    %1153 = vmatpush1.msra.mxu0 %v861
    %1154 = vmatprep.subr.mxu0 %v855
    %1155 = vmatpush1.msra.mxu0 %v854
    %1156 = vmatprep.subr.mxu0 %v848
    %1157 = vmatpush1.msra.mxu0 %v847
    %1158 = vmatprep.subr.mxu0 %v841
    %1159 = vmatpush1.msra.mxu0 %v840
    %1160 = vmatprep.subr.mxu0 %v834
    %1161 = vmatpush1.msra.mxu0 %v833
    %1162 = vmatprep.subr.mxu0 %v827
    %1163 = vmatpush1.msra.mxu0 %v826
    %1164 = vmatprep.subr.mxu0 %v820
    %1165 = vmatpush1.msra.mxu0 %v819
    %1166 = vmatprep.subr.mxu0 %v813
    %1167 = vmatpush1.msra.mxu0 %v812
    %1168 = vmatprep.subr.mxu0 %v806
    %1169 = vmatpush1.msra.mxu0 %v805
    %1170 = vmatprep.subr.mxu0 %v799
    %1171 = vmatpush1.msra.mxu0 %v798
    %1172 = vmatprep.subr.mxu0 %v792
    %1173 = vmatpush1.msra.mxu0 %v791
    %1174 = vmatprep.subr.mxu0 %v785
    %1175 = vmatpush1.msra.mxu0 %v784
    %1176 = vmatprep.subr.mxu0 0.0
    %1177 = vmatpush2.msra.mxu0 0.0
    %1178 = vmatprep.subr.mxu0 0.0
    %1179 = vmatpush2.msra.mxu0 0.0
    %1180 = vmatprep.subr.mxu0 0.0
    %1181 = vmatpush2.msra.mxu0 0.0
    %1182 = vmatprep.subr.mxu0 0.0
    %1183 = vmatpush2.msra.mxu0 0.0
    %1184 = vmatprep.subr.mxu0 0.0
    %1185 = vmatpush2.msra.mxu0 0.0
    %1186 = vmatprep.subr.mxu0 0.0
    %1187 = vmatpush2.msra.mxu0 0.0
    %1188 = vmatprep.subr.mxu0 0.0
    %1189 = vmatpush2.msra.mxu0 0.0
    %1190 = vmatprep.subr.mxu0 0.0
    %1191 = vmatpush2.msra.mxu0 0.0
    %1192 = vmatprep.subr.mxu0 0.0
    %1193 = vmatpush2.msra.mxu0 0.0
    %1194 = vmatprep.subr.mxu0 0.0
    %1195 = vmatpush2.msra.mxu0 0.0
    %1196 = vmatprep.subr.mxu0 0.0
    %1197 = vmatpush2.msra.mxu0 0.0
    %1198 = vmatprep.subr.mxu0 0.0
    %1199 = vmatpush2.msra.mxu0 0.0
    %1200 = vmatprep.subr.mxu0 0.0
    %1201 = vmatpush2.msra.mxu0 0.0
    %1202 = vmatprep.subr.mxu0 0.0
    %1203 = vmatpush2.msra.mxu0 0.0
    %1204 = vmatprep.subr.mxu0 %v904
    %1205 = vmatpush2.msra.mxu0 %v903
    %1206 = vmatprep.subr.mxu0 %v897
    %1207 = vmatpush2.msra.mxu0 %v896
    %1208 = vmatprep.mubr.f32.mxu0 %v909
    %1209 = vmatmul.mubr.f32.gmra.mxu0 %v535
    %v1210 = vpop.f32.mrf.mxu0
    %v1211 = vadd.f32 %v1134, %v1210
    %v1212 = vpop.f32.mrf.mxu0
    %v1213 = vadd.f32 %v1136, %v1212
    %1214 = vmatprep.mubr.f32.mxu0 %v911
    %1215 = vmatmul.mubr.f32.gmra.mxu0 %v547
    %v1216 = vpop.f32.mrf.mxu0
    %v1217 = vadd.f32 %v1140, %v1216
    %v1218 = vpop.f32.mrf.mxu0
    %v1219 = vadd.f32 %v1142, %v1218
    %1220 = vdwg.mxu0
    %1221 = vmatprep.subr.mxu0 %v668
    %1222 = vmatpush1.msra.mxu0 %v667
    %1223 = vmatprep.subr.mxu0 %v661
    %1224 = vmatpush1.msra.mxu0 %v660
    %1225 = vmatprep.subr.mxu0 %v654
    %1226 = vmatpush1.msra.mxu0 %v653
    %1227 = vmatprep.subr.mxu0 %v647
    %1228 = vmatpush1.msra.mxu0 %v646
    %1229 = vmatprep.subr.mxu0 %v640
    %1230 = vmatpush1.msra.mxu0 %v639
    %1231 = vmatprep.subr.mxu0 %v633
    %1232 = vmatpush1.msra.mxu0 %v632
    %1233 = vmatprep.subr.mxu0 %v626
    %1234 = vmatpush1.msra.mxu0 %v625
    %1235 = vmatprep.subr.mxu0 %v619
    %1236 = vmatpush1.msra.mxu0 %v618
    %1237 = vmatprep.subr.mxu0 %v612
    %1238 = vmatpush1.msra.mxu0 %v611
    %1239 = vmatprep.subr.mxu0 %v605
    %1240 = vmatpush1.msra.mxu0 %v604
    %1241 = vmatprep.subr.mxu0 %v598
    %1242 = vmatpush1.msra.mxu0 %v597
    %1243 = vmatprep.subr.mxu0 %v591
    %1244 = vmatpush1.msra.mxu0 %v590
    %1245 = vmatprep.subr.mxu0 %v584
    %1246 = vmatpush1.msra.mxu0 %v583
    %1247 = vmatprep.subr.mxu0 %v577
    %1248 = vmatpush1.msra.mxu0 %v576
    %1249 = vmatprep.subr.mxu0 %v570
    %1250 = vmatpush1.msra.mxu0 %v569
    %1251 = vmatprep.subr.mxu0 %v563
    %1252 = vmatpush1.msra.mxu0 %v562
    %1253 = vmatprep.subr.mxu0 %v780
    %1254 = vmatpush2.msra.mxu0 %v779
    %1255 = vmatprep.subr.mxu0 %v773
    %1256 = vmatpush2.msra.mxu0 %v772
    %1257 = vmatprep.subr.mxu0 %v766
    %1258 = vmatpush2.msra.mxu0 %v765
    %1259 = vmatprep.subr.mxu0 %v759
    %1260 = vmatpush2.msra.mxu0 %v758
    %1261 = vmatprep.subr.mxu0 %v752
    %1262 = vmatpush2.msra.mxu0 %v751
    %1263 = vmatprep.subr.mxu0 %v745
    %1264 = vmatpush2.msra.mxu0 %v744
    %1265 = vmatprep.subr.mxu0 %v738
    %1266 = vmatpush2.msra.mxu0 %v737
    %1267 = vmatprep.subr.mxu0 %v731
    %1268 = vmatpush2.msra.mxu0 %v730
    %1269 = vmatprep.subr.mxu0 %v724
    %1270 = vmatpush2.msra.mxu0 %v723
    %1271 = vmatprep.subr.mxu0 %v717
    %1272 = vmatpush2.msra.mxu0 %v716
    %1273 = vmatprep.subr.mxu0 %v710
    %1274 = vmatpush2.msra.mxu0 %v709
    %1275 = vmatprep.subr.mxu0 %v703
    %1276 = vmatpush2.msra.mxu0 %v702
    %1277 = vmatprep.subr.mxu0 %v696
    %1278 = vmatpush2.msra.mxu0 %v695
    %1279 = vmatprep.subr.mxu0 %v689
    %1280 = vmatpush2.msra.mxu0 %v688
    %1281 = vmatprep.subr.mxu0 %v682
    %1282 = vmatpush2.msra.mxu0 %v681
    %1283 = vmatprep.subr.mxu0 %v675
    %1284 = vmatpush2.msra.mxu0 %v674
    %1285 = vmatprep.mubr.f32.mxu0 %v532
    %1286 = vmatmul.mubr.f32.gmra.mxu0 %v529
    %v1287 = vpop.f32.mrf.mxu0
    %v1288 = vadd.f32 0.0, %v1287
    %v1289 = vpop.f32.mrf.mxu0
    %v1290 = vadd.f32 0.0, %v1289
    %1291 = vmatprep.mubr.f32.mxu0 %v544
    %1292 = vmatmul.mubr.f32.gmra.mxu0 %v541
    %v1293 = vpop.f32.mrf.mxu0
    %v1294 = vadd.f32 0.0, %v1293
    %v1295 = vpop.f32.mrf.mxu0
    %v1296 = vadd.f32 0.0, %v1295
    %1297 = vdwg.mxu0
    %1298 = vmatprep.subr.mxu0 %v892
    %1299 = vmatpush1.msra.mxu0 %v891
    %1300 = vmatprep.subr.mxu0 %v885
    %1301 = vmatpush1.msra.mxu0 %v884
    %1302 = vmatprep.subr.mxu0 %v878
    %1303 = vmatpush1.msra.mxu0 %v877
    %1304 = vmatprep.subr.mxu0 %v871
    %1305 = vmatpush1.msra.mxu0 %v870
    %1306 = vmatprep.subr.mxu0 %v864
    %1307 = vmatpush1.msra.mxu0 %v863
    %1308 = vmatprep.subr.mxu0 %v857
    %1309 = vmatpush1.msra.mxu0 %v856
    %1310 = vmatprep.subr.mxu0 %v850
    %1311 = vmatpush1.msra.mxu0 %v849
    %1312 = vmatprep.subr.mxu0 %v843
    %1313 = vmatpush1.msra.mxu0 %v842
    %1314 = vmatprep.subr.mxu0 %v836
    %1315 = vmatpush1.msra.mxu0 %v835
    %1316 = vmatprep.subr.mxu0 %v829
    %1317 = vmatpush1.msra.mxu0 %v828
    %1318 = vmatprep.subr.mxu0 %v822
    %1319 = vmatpush1.msra.mxu0 %v821
    %1320 = vmatprep.subr.mxu0 %v815
    %1321 = vmatpush1.msra.mxu0 %v814
    %1322 = vmatprep.subr.mxu0 %v808
    %1323 = vmatpush1.msra.mxu0 %v807
    %1324 = vmatprep.subr.mxu0 %v801
    %1325 = vmatpush1.msra.mxu0 %v800
    %1326 = vmatprep.subr.mxu0 %v794
    %1327 = vmatpush1.msra.mxu0 %v793
    %1328 = vmatprep.subr.mxu0 %v787
    %1329 = vmatpush1.msra.mxu0 %v786
    %1330 = vmatprep.subr.mxu0 0.0
    %1331 = vmatpush2.msra.mxu0 0.0
    %1332 = vmatprep.subr.mxu0 0.0
    %1333 = vmatpush2.msra.mxu0 0.0
    %1334 = vmatprep.subr.mxu0 0.0
    %1335 = vmatpush2.msra.mxu0 0.0
    %1336 = vmatprep.subr.mxu0 0.0
    %1337 = vmatpush2.msra.mxu0 0.0
    %1338 = vmatprep.subr.mxu0 0.0
    %1339 = vmatpush2.msra.mxu0 0.0
    %1340 = vmatprep.subr.mxu0 0.0
    %1341 = vmatpush2.msra.mxu0 0.0
    %1342 = vmatprep.subr.mxu0 0.0
    %1343 = vmatpush2.msra.mxu0 0.0
    %1344 = vmatprep.subr.mxu0 0.0
    %1345 = vmatpush2.msra.mxu0 0.0
    %1346 = vmatprep.subr.mxu0 0.0
    %1347 = vmatpush2.msra.mxu0 0.0
    %1348 = vmatprep.subr.mxu0 0.0
    %1349 = vmatpush2.msra.mxu0 0.0
    %1350 = vmatprep.subr.mxu0 0.0
    %1351 = vmatpush2.msra.mxu0 0.0
    %1352 = vmatprep.subr.mxu0 0.0
    %1353 = vmatpush2.msra.mxu0 0.0
    %1354 = vmatprep.subr.mxu0 0.0
    %1355 = vmatpush2.msra.mxu0 0.0
    %1356 = vmatprep.subr.mxu0 0.0
    %1357 = vmatpush2.msra.mxu0 0.0
    %1358 = vmatprep.subr.mxu0 %v906
    %1359 = vmatpush2.msra.mxu0 %v905
    %1360 = vmatprep.subr.mxu0 %v899
    %1361 = vmatpush2.msra.mxu0 %v898
    %1362 = vmatprep.mubr.f32.mxu0 %v909
    %1363 = vmatmul.mubr.f32.gmra.mxu0 %v535
    %v1364 = vpop.f32.mrf.mxu0
    %v1365 = vadd.f32 %v1288, %v1364
    %v1366 = vpop.f32.mrf.mxu0
    %v1367 = vadd.f32 %v1290, %v1366
    %1368 = vmatprep.mubr.f32.mxu0 %v911
    %1369 = vmatmul.mubr.f32.gmra.mxu0 %v547
    %v1370 = vpop.f32.mrf.mxu0
    %v1371 = vadd.f32 %v1294, %v1370
    %v1372 = vpop.f32.mrf.mxu0
    %v1373 = vadd.f32 %v1296, %v1372
    %1374 = vdwg.mxu0
    %1375 = vmatprep.subr.mxu0 0.0
    %1376 = vmatpush1.msra.mxu0 %v669
    %1377 = vmatprep.subr.mxu0 0.0
    %1378 = vmatpush1.msra.mxu0 %v662
    %1379 = vmatprep.subr.mxu0 0.0
    %1380 = vmatpush1.msra.mxu0 %v655
    %1381 = vmatprep.subr.mxu0 0.0
    %1382 = vmatpush1.msra.mxu0 %v648
    %1383 = vmatprep.subr.mxu0 0.0
    %1384 = vmatpush1.msra.mxu0 %v641
    %1385 = vmatprep.subr.mxu0 0.0
    %1386 = vmatpush1.msra.mxu0 %v634
    %1387 = vmatprep.subr.mxu0 0.0
    %1388 = vmatpush1.msra.mxu0 %v627
    %1389 = vmatprep.subr.mxu0 0.0
    %1390 = vmatpush1.msra.mxu0 %v620
    %1391 = vmatprep.subr.mxu0 0.0
    %1392 = vmatpush1.msra.mxu0 %v613
    %1393 = vmatprep.subr.mxu0 0.0
    %1394 = vmatpush1.msra.mxu0 %v606
    %1395 = vmatprep.subr.mxu0 0.0
    %1396 = vmatpush1.msra.mxu0 %v599
    %1397 = vmatprep.subr.mxu0 0.0
    %1398 = vmatpush1.msra.mxu0 %v592
    %1399 = vmatprep.subr.mxu0 0.0
    %1400 = vmatpush1.msra.mxu0 %v585
    %1401 = vmatprep.subr.mxu0 0.0
    %1402 = vmatpush1.msra.mxu0 %v578
    %1403 = vmatprep.subr.mxu0 0.0
    %1404 = vmatpush1.msra.mxu0 %v571
    %1405 = vmatprep.subr.mxu0 0.0
    %1406 = vmatpush1.msra.mxu0 %v564
    %1407 = vmatprep.subr.mxu0 0.0
    %1408 = vmatpush2.msra.mxu0 %v781
    %1409 = vmatprep.subr.mxu0 0.0
    %1410 = vmatpush2.msra.mxu0 %v774
    %1411 = vmatprep.subr.mxu0 0.0
    %1412 = vmatpush2.msra.mxu0 %v767
    %1413 = vmatprep.subr.mxu0 0.0
    %1414 = vmatpush2.msra.mxu0 %v760
    %1415 = vmatprep.subr.mxu0 0.0
    %1416 = vmatpush2.msra.mxu0 %v753
    %1417 = vmatprep.subr.mxu0 0.0
    %1418 = vmatpush2.msra.mxu0 %v746
    %1419 = vmatprep.subr.mxu0 0.0
    %1420 = vmatpush2.msra.mxu0 %v739
    %1421 = vmatprep.subr.mxu0 0.0
    %1422 = vmatpush2.msra.mxu0 %v732
    %1423 = vmatprep.subr.mxu0 0.0
    %1424 = vmatpush2.msra.mxu0 %v725
    %1425 = vmatprep.subr.mxu0 0.0
    %1426 = vmatpush2.msra.mxu0 %v718
    %1427 = vmatprep.subr.mxu0 0.0
    %1428 = vmatpush2.msra.mxu0 %v711
    %1429 = vmatprep.subr.mxu0 0.0
    %1430 = vmatpush2.msra.mxu0 %v704
    %1431 = vmatprep.subr.mxu0 0.0
    %1432 = vmatpush2.msra.mxu0 %v697
    %1433 = vmatprep.subr.mxu0 0.0
    %1434 = vmatpush2.msra.mxu0 %v690
    %1435 = vmatprep.subr.mxu0 0.0
    %1436 = vmatpush2.msra.mxu0 %v683
    %1437 = vmatprep.subr.mxu0 0.0
    %1438 = vmatpush2.msra.mxu0 %v676
    %1439 = vmatprep.mubr.f32.mxu0 %v532
    %1440 = vmatmul.mubr.f32.gmra.mxu0 %v529
    %v1441 = vpop.f32.mrf.mxu0
    %v1442 = vadd.f32 0.0, %v1441
    %v1443 = vpop.f32.mrf.mxu0
    %1444 = vmatprep.mubr.f32.mxu0 %v544
    %1445 = vmatmul.mubr.f32.gmra.mxu0 %v541
    %v1446 = vpop.f32.mrf.mxu0
    %v1447 = vadd.f32 0.0, %v1446
    %v1448 = vpop.f32.mrf.mxu0
    %1449 = vdwg.mxu0
    %1450 = vmatprep.subr.mxu0 0.0
    %1451 = vmatpush1.msra.mxu0 %v893
    %1452 = vmatprep.subr.mxu0 0.0
    %1453 = vmatpush1.msra.mxu0 %v886
    %1454 = vmatprep.subr.mxu0 0.0
    %1455 = vmatpush1.msra.mxu0 %v879
    %1456 = vmatprep.subr.mxu0 0.0
    %1457 = vmatpush1.msra.mxu0 %v872
    %1458 = vmatprep.subr.mxu0 0.0
    %1459 = vmatpush1.msra.mxu0 %v865
    %1460 = vmatprep.subr.mxu0 0.0
    %1461 = vmatpush1.msra.mxu0 %v858
    %1462 = vmatprep.subr.mxu0 0.0
    %1463 = vmatpush1.msra.mxu0 %v851
    %1464 = vmatprep.subr.mxu0 0.0
    %1465 = vmatpush1.msra.mxu0 %v844
    %1466 = vmatprep.subr.mxu0 0.0
    %1467 = vmatpush1.msra.mxu0 %v837
    %1468 = vmatprep.subr.mxu0 0.0
    %1469 = vmatpush1.msra.mxu0 %v830
    %1470 = vmatprep.subr.mxu0 0.0
    %1471 = vmatpush1.msra.mxu0 %v823
    %1472 = vmatprep.subr.mxu0 0.0
    %1473 = vmatpush1.msra.mxu0 %v816
    %1474 = vmatprep.subr.mxu0 0.0
    %1475 = vmatpush1.msra.mxu0 %v809
    %1476 = vmatprep.subr.mxu0 0.0
    %1477 = vmatpush1.msra.mxu0 %v802
    %1478 = vmatprep.subr.mxu0 0.0
    %1479 = vmatpush1.msra.mxu0 %v795
    %1480 = vmatprep.subr.mxu0 0.0
    %1481 = vmatpush1.msra.mxu0 %v788
    %1482 = vmatprep.subr.mxu0 0.0
    %1483 = vmatpush2.msra.mxu0 0.0
    %1484 = vmatprep.subr.mxu0 0.0
    %1485 = vmatpush2.msra.mxu0 0.0
    %1486 = vmatprep.subr.mxu0 0.0
    %1487 = vmatpush2.msra.mxu0 0.0
    %1488 = vmatprep.subr.mxu0 0.0
    %1489 = vmatpush2.msra.mxu0 0.0
    %1490 = vmatprep.subr.mxu0 0.0
    %1491 = vmatpush2.msra.mxu0 0.0
    %1492 = vmatprep.subr.mxu0 0.0
    %1493 = vmatpush2.msra.mxu0 0.0
    %1494 = vmatprep.subr.mxu0 0.0
    %1495 = vmatpush2.msra.mxu0 0.0
    %1496 = vmatprep.subr.mxu0 0.0
    %1497 = vmatpush2.msra.mxu0 0.0
    %1498 = vmatprep.subr.mxu0 0.0
    %1499 = vmatpush2.msra.mxu0 0.0
    %1500 = vmatprep.subr.mxu0 0.0
    %1501 = vmatpush2.msra.mxu0 0.0
    %1502 = vmatprep.subr.mxu0 0.0
    %1503 = vmatpush2.msra.mxu0 0.0
    %1504 = vmatprep.subr.mxu0 0.0
    %1505 = vmatpush2.msra.mxu0 0.0
    %1506 = vmatprep.subr.mxu0 0.0
    %1507 = vmatpush2.msra.mxu0 0.0
    %1508 = vmatprep.subr.mxu0 0.0
    %1509 = vmatpush2.msra.mxu0 0.0
    %1510 = vmatprep.subr.mxu0 0.0
    %1511 = vmatpush2.msra.mxu0 %v907
    %1512 = vmatprep.subr.mxu0 0.0
    %1513 = vmatpush2.msra.mxu0 %v900
    %1514 = vmatprep.mubr.f32.mxu0 %v909
    %1515 = vmatmul.mubr.f32.gmra.mxu0 %v535
    %v1516 = vpop.f32.mrf.mxu0
    %v1517 = vadd.f32 %v1442, %v1516
    %v1518 = vpop.f32.mrf.mxu0
    %1519 = vmatprep.mubr.f32.mxu0 %v911
    %1520 = vmatmul.mubr.f32.gmra.mxu0 %v547
    %v1521 = vpop.f32.mrf.mxu0
    %v1522 = vadd.f32 %v1447, %v1521
    %v1523 = vpop.f32.mrf.mxu0
    %1524 = vdwg.mxu0
    %v1526 = vsel %vm908, %v139, 0
    %v1529 = vsel %vm908, %v143, 0
    %1531 = vmatprep.subr.mxu0 %v250
    %1532 = vmatpush1.msra.mxu0 %v249
    %1533 = vmatprep.subr.mxu0 %v243
    %1534 = vmatpush1.msra.mxu0 %v242
    %1535 = vmatprep.subr.mxu0 %v236
    %1536 = vmatpush1.msra.mxu0 %v235
    %1537 = vmatprep.subr.mxu0 %v229
    %1538 = vmatpush1.msra.mxu0 %v228
    %1539 = vmatprep.subr.mxu0 %v222
    %1540 = vmatpush1.msra.mxu0 %v221
    %1541 = vmatprep.subr.mxu0 %v215
    %1542 = vmatpush1.msra.mxu0 %v214
    %1543 = vmatprep.subr.mxu0 %v208
    %1544 = vmatpush1.msra.mxu0 %v207
    %1545 = vmatprep.subr.mxu0 %v201
    %1546 = vmatpush1.msra.mxu0 %v200
    %1547 = vmatprep.subr.mxu0 %v194
    %1548 = vmatpush1.msra.mxu0 %v193
    %1549 = vmatprep.subr.mxu0 %v187
    %1550 = vmatpush1.msra.mxu0 %v186
    %1551 = vmatprep.subr.mxu0 %v180
    %1552 = vmatpush1.msra.mxu0 %v179
    %1553 = vmatprep.subr.mxu0 %v173
    %1554 = vmatpush1.msra.mxu0 %v172
    %1555 = vmatprep.subr.mxu0 %v166
    %1556 = vmatpush1.msra.mxu0 %v165
    %1557 = vmatprep.subr.mxu0 %v159
    %1558 = vmatpush1.msra.mxu0 %v158
    %1559 = vmatprep.subr.mxu0 %v152
    %1560 = vmatpush1.msra.mxu0 %v151
    %1561 = vmatprep.subr.mxu0 %v145
    %1562 = vmatpush1.msra.mxu0 %v144
    %1563 = vmatprep.subr.mxu0 %v362
    %1564 = vmatpush2.msra.mxu0 %v361
    %1565 = vmatprep.subr.mxu0 %v355
    %1566 = vmatpush2.msra.mxu0 %v354
    %1567 = vmatprep.subr.mxu0 %v348
    %1568 = vmatpush2.msra.mxu0 %v347
    %1569 = vmatprep.subr.mxu0 %v341
    %1570 = vmatpush2.msra.mxu0 %v340
    %1571 = vmatprep.subr.mxu0 %v334
    %1572 = vmatpush2.msra.mxu0 %v333
    %1573 = vmatprep.subr.mxu0 %v327
    %1574 = vmatpush2.msra.mxu0 %v326
    %1575 = vmatprep.subr.mxu0 %v320
    %1576 = vmatpush2.msra.mxu0 %v319
    %1577 = vmatprep.subr.mxu0 %v313
    %1578 = vmatpush2.msra.mxu0 %v312
    %1579 = vmatprep.subr.mxu0 %v306
    %1580 = vmatpush2.msra.mxu0 %v305
    %1581 = vmatprep.subr.mxu0 %v299
    %1582 = vmatpush2.msra.mxu0 %v298
    %1583 = vmatprep.subr.mxu0 %v292
    %1584 = vmatpush2.msra.mxu0 %v291
    %1585 = vmatprep.subr.mxu0 %v285
    %1586 = vmatpush2.msra.mxu0 %v284
    %1587 = vmatprep.subr.mxu0 %v278
    %1588 = vmatpush2.msra.mxu0 %v277
    %1589 = vmatprep.subr.mxu0 %v271
    %1590 = vmatpush2.msra.mxu0 %v270
    %1591 = vmatprep.subr.mxu0 %v264
    %1592 = vmatpush2.msra.mxu0 %v263
    %1593 = vmatprep.subr.mxu0 %v257
    %1594 = vmatpush2.msra.mxu0 %v256
    %1595 = vmatprep.mubr.f32.mxu0 %v137
    %1596 = vmatmul.mubr.f32.gmra.mxu0 %v136
    %v1597 = vpop.f32.mrf.mxu0
    %v1598 = vadd.f32 %v1057, %v1597
    %v1599 = vpop.f32.mrf.mxu0
    %v1600 = vadd.f32 %v1059, %v1599
    %1601 = vmatprep.mubr.f32.mxu0 %v141
    %1602 = vmatmul.mubr.f32.gmra.mxu0 %v140
    %v1603 = vpop.f32.mrf.mxu0
    %v1604 = vadd.f32 %v1063, %v1603
    %v1605 = vpop.f32.mrf.mxu0
    %v1606 = vadd.f32 %v1065, %v1605
    %1607 = vdwg.mxu0
    %1608 = vmatprep.subr.mxu0 %v474
    %1609 = vmatpush1.msra.mxu0 %v473
    %1610 = vmatprep.subr.mxu0 %v467
    %1611 = vmatpush1.msra.mxu0 %v466
    %1612 = vmatprep.subr.mxu0 %v460
    %1613 = vmatpush1.msra.mxu0 %v459
    %1614 = vmatprep.subr.mxu0 %v453
    %1615 = vmatpush1.msra.mxu0 %v452
    %1616 = vmatprep.subr.mxu0 %v446
    %1617 = vmatpush1.msra.mxu0 %v445
    %1618 = vmatprep.subr.mxu0 %v439
    %1619 = vmatpush1.msra.mxu0 %v438
    %1620 = vmatprep.subr.mxu0 %v432
    %1621 = vmatpush1.msra.mxu0 %v431
    %1622 = vmatprep.subr.mxu0 %v425
    %1623 = vmatpush1.msra.mxu0 %v424
    %1624 = vmatprep.subr.mxu0 %v418
    %1625 = vmatpush1.msra.mxu0 %v417
    %1626 = vmatprep.subr.mxu0 %v411
    %1627 = vmatpush1.msra.mxu0 %v410
    %1628 = vmatprep.subr.mxu0 %v404
    %1629 = vmatpush1.msra.mxu0 %v403
    %1630 = vmatprep.subr.mxu0 %v397
    %1631 = vmatpush1.msra.mxu0 %v396
    %1632 = vmatprep.subr.mxu0 %v390
    %1633 = vmatpush1.msra.mxu0 %v389
    %1634 = vmatprep.subr.mxu0 %v383
    %1635 = vmatpush1.msra.mxu0 %v382
    %1636 = vmatprep.subr.mxu0 %v376
    %1637 = vmatpush1.msra.mxu0 %v375
    %1638 = vmatprep.subr.mxu0 %v369
    %1639 = vmatpush1.msra.mxu0 %v368
    %1640 = vmatprep.subr.mxu0 0.0
    %1641 = vmatpush2.msra.mxu0 0.0
    %1642 = vmatprep.subr.mxu0 0.0
    %1643 = vmatpush2.msra.mxu0 0.0
    %1644 = vmatprep.subr.mxu0 0.0
    %1645 = vmatpush2.msra.mxu0 0.0
    %1646 = vmatprep.subr.mxu0 0.0
    %1647 = vmatpush2.msra.mxu0 0.0
    %1648 = vmatprep.subr.mxu0 0.0
    %1649 = vmatpush2.msra.mxu0 0.0
    %1650 = vmatprep.subr.mxu0 0.0
    %1651 = vmatpush2.msra.mxu0 0.0
    %1652 = vmatprep.subr.mxu0 0.0
    %1653 = vmatpush2.msra.mxu0 0.0
    %1654 = vmatprep.subr.mxu0 0.0
    %1655 = vmatpush2.msra.mxu0 0.0
    %1656 = vmatprep.subr.mxu0 0.0
    %1657 = vmatpush2.msra.mxu0 0.0
    %1658 = vmatprep.subr.mxu0 0.0
    %1659 = vmatpush2.msra.mxu0 0.0
    %1660 = vmatprep.subr.mxu0 0.0
    %1661 = vmatpush2.msra.mxu0 0.0
    %1662 = vmatprep.subr.mxu0 0.0
    %1663 = vmatpush2.msra.mxu0 0.0
    %1664 = vmatprep.subr.mxu0 0.0
    %1665 = vmatpush2.msra.mxu0 0.0
    %1666 = vmatprep.subr.mxu0 0.0
    %1667 = vmatpush2.msra.mxu0 0.0
    %1668 = vmatprep.subr.mxu0 %v488
    %1669 = vmatpush2.msra.mxu0 %v487
    %1670 = vmatprep.subr.mxu0 %v481
    %1671 = vmatpush2.msra.mxu0 %v480
    %1672 = vmatprep.mubr.f32.mxu0 %v1526
    %1673 = vmatmul.mubr.f32.gmra.mxu0 %v138
    %v1674 = vpop.f32.mrf.mxu0
    %v1675 = vadd.f32 %v1598, %v1674
    %v1676 = vpop.f32.mrf.mxu0
    %v1677 = vadd.f32 %v1600, %v1676
    %1678 = vmatprep.mubr.f32.mxu0 %v1529
    %1679 = vmatmul.mubr.f32.gmra.mxu0 %v142
    %v1680 = vpop.f32.mrf.mxu0
    %v1681 = vadd.f32 %v1604, %v1680
    %v1682 = vpop.f32.mrf.mxu0
    %v1683 = vadd.f32 %v1606, %v1682
    %1684 = vdwg.mxu0
    %1685 = vmatprep.subr.mxu0 %v252
    %1686 = vmatpush1.msra.mxu0 %v251
    %1687 = vmatprep.subr.mxu0 %v245
    %1688 = vmatpush1.msra.mxu0 %v244
    %1689 = vmatprep.subr.mxu0 %v238
    %1690 = vmatpush1.msra.mxu0 %v237
    %1691 = vmatprep.subr.mxu0 %v231
    %1692 = vmatpush1.msra.mxu0 %v230
    %1693 = vmatprep.subr.mxu0 %v224
    %1694 = vmatpush1.msra.mxu0 %v223
    %1695 = vmatprep.subr.mxu0 %v217
    %1696 = vmatpush1.msra.mxu0 %v216
    %1697 = vmatprep.subr.mxu0 %v210
    %1698 = vmatpush1.msra.mxu0 %v209
    %1699 = vmatprep.subr.mxu0 %v203
    %1700 = vmatpush1.msra.mxu0 %v202
    %1701 = vmatprep.subr.mxu0 %v196
    %1702 = vmatpush1.msra.mxu0 %v195
    %1703 = vmatprep.subr.mxu0 %v189
    %1704 = vmatpush1.msra.mxu0 %v188
    %1705 = vmatprep.subr.mxu0 %v182
    %1706 = vmatpush1.msra.mxu0 %v181
    %1707 = vmatprep.subr.mxu0 %v175
    %1708 = vmatpush1.msra.mxu0 %v174
    %1709 = vmatprep.subr.mxu0 %v168
    %1710 = vmatpush1.msra.mxu0 %v167
    %1711 = vmatprep.subr.mxu0 %v161
    %1712 = vmatpush1.msra.mxu0 %v160
    %1713 = vmatprep.subr.mxu0 %v154
    %1714 = vmatpush1.msra.mxu0 %v153
    %1715 = vmatprep.subr.mxu0 %v147
    %1716 = vmatpush1.msra.mxu0 %v146
    %1717 = vmatprep.subr.mxu0 %v364
    %1718 = vmatpush2.msra.mxu0 %v363
    %1719 = vmatprep.subr.mxu0 %v357
    %1720 = vmatpush2.msra.mxu0 %v356
    %1721 = vmatprep.subr.mxu0 %v350
    %1722 = vmatpush2.msra.mxu0 %v349
    %1723 = vmatprep.subr.mxu0 %v343
    %1724 = vmatpush2.msra.mxu0 %v342
    %1725 = vmatprep.subr.mxu0 %v336
    %1726 = vmatpush2.msra.mxu0 %v335
    %1727 = vmatprep.subr.mxu0 %v329
    %1728 = vmatpush2.msra.mxu0 %v328
    %1729 = vmatprep.subr.mxu0 %v322
    %1730 = vmatpush2.msra.mxu0 %v321
    %1731 = vmatprep.subr.mxu0 %v315
    %1732 = vmatpush2.msra.mxu0 %v314
    %1733 = vmatprep.subr.mxu0 %v308
    %1734 = vmatpush2.msra.mxu0 %v307
    %1735 = vmatprep.subr.mxu0 %v301
    %1736 = vmatpush2.msra.mxu0 %v300
    %1737 = vmatprep.subr.mxu0 %v294
    %1738 = vmatpush2.msra.mxu0 %v293
    %1739 = vmatprep.subr.mxu0 %v287
    %1740 = vmatpush2.msra.mxu0 %v286
    %1741 = vmatprep.subr.mxu0 %v280
    %1742 = vmatpush2.msra.mxu0 %v279
    %1743 = vmatprep.subr.mxu0 %v273
    %1744 = vmatpush2.msra.mxu0 %v272
    %1745 = vmatprep.subr.mxu0 %v266
    %1746 = vmatpush2.msra.mxu0 %v265
    %1747 = vmatprep.subr.mxu0 %v259
    %1748 = vmatpush2.msra.mxu0 %v258
    %1749 = vmatprep.mubr.f32.mxu0 %v137
    %1750 = vmatmul.mubr.f32.gmra.mxu0 %v136
    %v1751 = vpop.f32.mrf.mxu0
    %v1752 = vadd.f32 %v1211, %v1751
    %v1753 = vpop.f32.mrf.mxu0
    %v1754 = vadd.f32 %v1213, %v1753
    %1755 = vmatprep.mubr.f32.mxu0 %v141
    %1756 = vmatmul.mubr.f32.gmra.mxu0 %v140
    %v1757 = vpop.f32.mrf.mxu0
    %v1758 = vadd.f32 %v1217, %v1757
    %v1759 = vpop.f32.mrf.mxu0
    %v1760 = vadd.f32 %v1219, %v1759
    %1761 = vdwg.mxu0
    %1762 = vmatprep.subr.mxu0 %v476
    %1763 = vmatpush1.msra.mxu0 %v475
    %1764 = vmatprep.subr.mxu0 %v469
    %1765 = vmatpush1.msra.mxu0 %v468
    %1766 = vmatprep.subr.mxu0 %v462
    %1767 = vmatpush1.msra.mxu0 %v461
    %1768 = vmatprep.subr.mxu0 %v455
    %1769 = vmatpush1.msra.mxu0 %v454
    %1770 = vmatprep.subr.mxu0 %v448
    %1771 = vmatpush1.msra.mxu0 %v447
    %1772 = vmatprep.subr.mxu0 %v441
    %1773 = vmatpush1.msra.mxu0 %v440
    %1774 = vmatprep.subr.mxu0 %v434
    %1775 = vmatpush1.msra.mxu0 %v433
    %1776 = vmatprep.subr.mxu0 %v427
    %1777 = vmatpush1.msra.mxu0 %v426
    %1778 = vmatprep.subr.mxu0 %v420
    %1779 = vmatpush1.msra.mxu0 %v419
    %1780 = vmatprep.subr.mxu0 %v413
    %1781 = vmatpush1.msra.mxu0 %v412
    %1782 = vmatprep.subr.mxu0 %v406
    %1783 = vmatpush1.msra.mxu0 %v405
    %1784 = vmatprep.subr.mxu0 %v399
    %1785 = vmatpush1.msra.mxu0 %v398
    %1786 = vmatprep.subr.mxu0 %v392
    %1787 = vmatpush1.msra.mxu0 %v391
    %1788 = vmatprep.subr.mxu0 %v385
    %1789 = vmatpush1.msra.mxu0 %v384
    %1790 = vmatprep.subr.mxu0 %v378
    %1791 = vmatpush1.msra.mxu0 %v377
    %1792 = vmatprep.subr.mxu0 %v371
    %1793 = vmatpush1.msra.mxu0 %v370
    %1794 = vmatprep.subr.mxu0 0.0
    %1795 = vmatpush2.msra.mxu0 0.0
    %1796 = vmatprep.subr.mxu0 0.0
    %1797 = vmatpush2.msra.mxu0 0.0
    %1798 = vmatprep.subr.mxu0 0.0
    %1799 = vmatpush2.msra.mxu0 0.0
    %1800 = vmatprep.subr.mxu0 0.0
    %1801 = vmatpush2.msra.mxu0 0.0
    %1802 = vmatprep.subr.mxu0 0.0
    %1803 = vmatpush2.msra.mxu0 0.0
    %1804 = vmatprep.subr.mxu0 0.0
    %1805 = vmatpush2.msra.mxu0 0.0
    %1806 = vmatprep.subr.mxu0 0.0
    %1807 = vmatpush2.msra.mxu0 0.0
    %1808 = vmatprep.subr.mxu0 0.0
    %1809 = vmatpush2.msra.mxu0 0.0
    %1810 = vmatprep.subr.mxu0 0.0
    %1811 = vmatpush2.msra.mxu0 0.0
    %1812 = vmatprep.subr.mxu0 0.0
    %1813 = vmatpush2.msra.mxu0 0.0
    %1814 = vmatprep.subr.mxu0 0.0
    %1815 = vmatpush2.msra.mxu0 0.0
    %1816 = vmatprep.subr.mxu0 0.0
    %1817 = vmatpush2.msra.mxu0 0.0
    %1818 = vmatprep.subr.mxu0 0.0
    %1819 = vmatpush2.msra.mxu0 0.0
    %1820 = vmatprep.subr.mxu0 0.0
    %1821 = vmatpush2.msra.mxu0 0.0
    %1822 = vmatprep.subr.mxu0 %v490
    %1823 = vmatpush2.msra.mxu0 %v489
    %1824 = vmatprep.subr.mxu0 %v483
    %1825 = vmatpush2.msra.mxu0 %v482
    %1826 = vmatprep.mubr.f32.mxu0 %v1526
    %1827 = vmatmul.mubr.f32.gmra.mxu0 %v138
    %v1828 = vpop.f32.mrf.mxu0
    %v1829 = vadd.f32 %v1752, %v1828
    %v1830 = vpop.f32.mrf.mxu0
    %v1831 = vadd.f32 %v1754, %v1830
    %1832 = vmatprep.mubr.f32.mxu0 %v1529
    %1833 = vmatmul.mubr.f32.gmra.mxu0 %v142
    %v1834 = vpop.f32.mrf.mxu0
    %v1835 = vadd.f32 %v1758, %v1834
    %v1836 = vpop.f32.mrf.mxu0
    %v1837 = vadd.f32 %v1760, %v1836
    %1838 = vdwg.mxu0
    %1839 = vmatprep.subr.mxu0 %v254
    %1840 = vmatpush1.msra.mxu0 %v253
    %1841 = vmatprep.subr.mxu0 %v247
    %1842 = vmatpush1.msra.mxu0 %v246
    %1843 = vmatprep.subr.mxu0 %v240
    %1844 = vmatpush1.msra.mxu0 %v239
    %1845 = vmatprep.subr.mxu0 %v233
    %1846 = vmatpush1.msra.mxu0 %v232
    %1847 = vmatprep.subr.mxu0 %v226
    %1848 = vmatpush1.msra.mxu0 %v225
    %1849 = vmatprep.subr.mxu0 %v219
    %1850 = vmatpush1.msra.mxu0 %v218
    %1851 = vmatprep.subr.mxu0 %v212
    %1852 = vmatpush1.msra.mxu0 %v211
    %1853 = vmatprep.subr.mxu0 %v205
    %1854 = vmatpush1.msra.mxu0 %v204
    %1855 = vmatprep.subr.mxu0 %v198
    %1856 = vmatpush1.msra.mxu0 %v197
    %1857 = vmatprep.subr.mxu0 %v191
    %1858 = vmatpush1.msra.mxu0 %v190
    %1859 = vmatprep.subr.mxu0 %v184
    %1860 = vmatpush1.msra.mxu0 %v183
    %1861 = vmatprep.subr.mxu0 %v177
    %1862 = vmatpush1.msra.mxu0 %v176
    %1863 = vmatprep.subr.mxu0 %v170
    %1864 = vmatpush1.msra.mxu0 %v169
    %1865 = vmatprep.subr.mxu0 %v163
    %1866 = vmatpush1.msra.mxu0 %v162
    %1867 = vmatprep.subr.mxu0 %v156
    %1868 = vmatpush1.msra.mxu0 %v155
    %1869 = vmatprep.subr.mxu0 %v149
    %1870 = vmatpush1.msra.mxu0 %v148
    %1871 = vmatprep.subr.mxu0 %v366
    %1872 = vmatpush2.msra.mxu0 %v365
    %1873 = vmatprep.subr.mxu0 %v359
    %1874 = vmatpush2.msra.mxu0 %v358
    %1875 = vmatprep.subr.mxu0 %v352
    %1876 = vmatpush2.msra.mxu0 %v351
    %1877 = vmatprep.subr.mxu0 %v345
    %1878 = vmatpush2.msra.mxu0 %v344
    %1879 = vmatprep.subr.mxu0 %v338
    %1880 = vmatpush2.msra.mxu0 %v337
    %1881 = vmatprep.subr.mxu0 %v331
    %1882 = vmatpush2.msra.mxu0 %v330
    %1883 = vmatprep.subr.mxu0 %v324
    %1884 = vmatpush2.msra.mxu0 %v323
    %1885 = vmatprep.subr.mxu0 %v317
    %1886 = vmatpush2.msra.mxu0 %v316
    %1887 = vmatprep.subr.mxu0 %v310
    %1888 = vmatpush2.msra.mxu0 %v309
    %1889 = vmatprep.subr.mxu0 %v303
    %1890 = vmatpush2.msra.mxu0 %v302
    %1891 = vmatprep.subr.mxu0 %v296
    %1892 = vmatpush2.msra.mxu0 %v295
    %1893 = vmatprep.subr.mxu0 %v289
    %1894 = vmatpush2.msra.mxu0 %v288
    %1895 = vmatprep.subr.mxu0 %v282
    %1896 = vmatpush2.msra.mxu0 %v281
    %1897 = vmatprep.subr.mxu0 %v275
    %1898 = vmatpush2.msra.mxu0 %v274
    %1899 = vmatprep.subr.mxu0 %v268
    %1900 = vmatpush2.msra.mxu0 %v267
    %1901 = vmatprep.subr.mxu0 %v261
    %1902 = vmatpush2.msra.mxu0 %v260
    %1903 = vmatprep.mubr.f32.mxu0 %v137
    %1904 = vmatmul.mubr.f32.gmra.mxu0 %v136
    %v1905 = vpop.f32.mrf.mxu0
    %v1906 = vadd.f32 %v1365, %v1905
    %v1907 = vpop.f32.mrf.mxu0
    %v1908 = vadd.f32 %v1367, %v1907
    %1909 = vmatprep.mubr.f32.mxu0 %v141
    %1910 = vmatmul.mubr.f32.gmra.mxu0 %v140
    %v1911 = vpop.f32.mrf.mxu0
    %v1912 = vadd.f32 %v1371, %v1911
    %v1913 = vpop.f32.mrf.mxu0
    %v1914 = vadd.f32 %v1373, %v1913
    %1915 = vdwg.mxu0
    %1916 = vmatprep.subr.mxu0 %v478
    %1917 = vmatpush1.msra.mxu0 %v477
    %1918 = vmatprep.subr.mxu0 %v471
    %1919 = vmatpush1.msra.mxu0 %v470
    %1920 = vmatprep.subr.mxu0 %v464
    %1921 = vmatpush1.msra.mxu0 %v463
    %1922 = vmatprep.subr.mxu0 %v457
    %1923 = vmatpush1.msra.mxu0 %v456
    %1924 = vmatprep.subr.mxu0 %v450
    %1925 = vmatpush1.msra.mxu0 %v449
    %1926 = vmatprep.subr.mxu0 %v443
    %1927 = vmatpush1.msra.mxu0 %v442
    %1928 = vmatprep.subr.mxu0 %v436
    %1929 = vmatpush1.msra.mxu0 %v435
    %1930 = vmatprep.subr.mxu0 %v429
    %1931 = vmatpush1.msra.mxu0 %v428
    %1932 = vmatprep.subr.mxu0 %v422
    %1933 = vmatpush1.msra.mxu0 %v421
    %1934 = vmatprep.subr.mxu0 %v415
    %1935 = vmatpush1.msra.mxu0 %v414
    %1936 = vmatprep.subr.mxu0 %v408
    %1937 = vmatpush1.msra.mxu0 %v407
    %1938 = vmatprep.subr.mxu0 %v401
    %1939 = vmatpush1.msra.mxu0 %v400
    %1940 = vmatprep.subr.mxu0 %v394
    %1941 = vmatpush1.msra.mxu0 %v393
    %1942 = vmatprep.subr.mxu0 %v387
    %1943 = vmatpush1.msra.mxu0 %v386
    %1944 = vmatprep.subr.mxu0 %v380
    %1945 = vmatpush1.msra.mxu0 %v379
    %1946 = vmatprep.subr.mxu0 %v373
    %1947 = vmatpush1.msra.mxu0 %v372
    %1948 = vmatprep.subr.mxu0 0.0
    %1949 = vmatpush2.msra.mxu0 0.0
    %1950 = vmatprep.subr.mxu0 0.0
    %1951 = vmatpush2.msra.mxu0 0.0
    %1952 = vmatprep.subr.mxu0 0.0
    %1953 = vmatpush2.msra.mxu0 0.0
    %1954 = vmatprep.subr.mxu0 0.0
    %1955 = vmatpush2.msra.mxu0 0.0
    %1956 = vmatprep.subr.mxu0 0.0
    %1957 = vmatpush2.msra.mxu0 0.0
    %1958 = vmatprep.subr.mxu0 0.0
    %1959 = vmatpush2.msra.mxu0 0.0
    %1960 = vmatprep.subr.mxu0 0.0
    %1961 = vmatpush2.msra.mxu0 0.0
    %1962 = vmatprep.subr.mxu0 0.0
    %1963 = vmatpush2.msra.mxu0 0.0
    %1964 = vmatprep.subr.mxu0 0.0
    %1965 = vmatpush2.msra.mxu0 0.0
    %1966 = vmatprep.subr.mxu0 0.0
    %1967 = vmatpush2.msra.mxu0 0.0
    %1968 = vmatprep.subr.mxu0 0.0
    %1969 = vmatpush2.msra.mxu0 0.0
    %1970 = vmatprep.subr.mxu0 0.0
    %1971 = vmatpush2.msra.mxu0 0.0
    %1972 = vmatprep.subr.mxu0 0.0
    %1973 = vmatpush2.msra.mxu0 0.0
    %1974 = vmatprep.subr.mxu0 0.0
    %1975 = vmatpush2.msra.mxu0 0.0
    %1976 = vmatprep.subr.mxu0 %v492
    %1977 = vmatpush2.msra.mxu0 %v491
    %1978 = vmatprep.subr.mxu0 %v485
    %1979 = vmatpush2.msra.mxu0 %v484
    %1980 = vmatprep.mubr.f32.mxu0 %v1526
    %1981 = vmatmul.mubr.f32.gmra.mxu0 %v138
    %v1982 = vpop.f32.mrf.mxu0
    %v1983 = vadd.f32 %v1906, %v1982
    %v1984 = vpop.f32.mrf.mxu0
    %v1985 = vadd.f32 %v1908, %v1984
    %1986 = vmatprep.mubr.f32.mxu0 %v1529
    %1987 = vmatmul.mubr.f32.gmra.mxu0 %v142
    %v1988 = vpop.f32.mrf.mxu0
    %v1989 = vadd.f32 %v1912, %v1988
    %v1990 = vpop.f32.mrf.mxu0
    %v1991 = vadd.f32 %v1914, %v1990
    %1992 = vdwg.mxu0
    %1993 = vmatprep.subr.mxu0 0.0
    %1994 = vmatpush1.msra.mxu0 %v255
    %1995 = vmatprep.subr.mxu0 0.0
    %1996 = vmatpush1.msra.mxu0 %v248
    %1997 = vmatprep.subr.mxu0 0.0
    %1998 = vmatpush1.msra.mxu0 %v241
    %1999 = vmatprep.subr.mxu0 0.0
    %2000 = vmatpush1.msra.mxu0 %v234
    %2001 = vmatprep.subr.mxu0 0.0
    %2002 = vmatpush1.msra.mxu0 %v227
    %2003 = vmatprep.subr.mxu0 0.0
    %2004 = vmatpush1.msra.mxu0 %v220
    %2005 = vmatprep.subr.mxu0 0.0
    %2006 = vmatpush1.msra.mxu0 %v213
    %2007 = vmatprep.subr.mxu0 0.0
    %2008 = vmatpush1.msra.mxu0 %v206
    %2009 = vmatprep.subr.mxu0 0.0
    %2010 = vmatpush1.msra.mxu0 %v199
    %2011 = vmatprep.subr.mxu0 0.0
    %2012 = vmatpush1.msra.mxu0 %v192
    %2013 = vmatprep.subr.mxu0 0.0
    %2014 = vmatpush1.msra.mxu0 %v185
    %2015 = vmatprep.subr.mxu0 0.0
    %2016 = vmatpush1.msra.mxu0 %v178
    %2017 = vmatprep.subr.mxu0 0.0
    %2018 = vmatpush1.msra.mxu0 %v171
    %2019 = vmatprep.subr.mxu0 0.0
    %2020 = vmatpush1.msra.mxu0 %v164
    %2021 = vmatprep.subr.mxu0 0.0
    %2022 = vmatpush1.msra.mxu0 %v157
    %2023 = vmatprep.subr.mxu0 0.0
    %2024 = vmatpush1.msra.mxu0 %v150
    %2025 = vmatprep.subr.mxu0 0.0
    %2026 = vmatpush2.msra.mxu0 %v367
    %2027 = vmatprep.subr.mxu0 0.0
    %2028 = vmatpush2.msra.mxu0 %v360
    %2029 = vmatprep.subr.mxu0 0.0
    %2030 = vmatpush2.msra.mxu0 %v353
    %2031 = vmatprep.subr.mxu0 0.0
    %2032 = vmatpush2.msra.mxu0 %v346
    %2033 = vmatprep.subr.mxu0 0.0
    %2034 = vmatpush2.msra.mxu0 %v339
    %2035 = vmatprep.subr.mxu0 0.0
    %2036 = vmatpush2.msra.mxu0 %v332
    %2037 = vmatprep.subr.mxu0 0.0
    %2038 = vmatpush2.msra.mxu0 %v325
    %2039 = vmatprep.subr.mxu0 0.0
    %2040 = vmatpush2.msra.mxu0 %v318
    %2041 = vmatprep.subr.mxu0 0.0
    %2042 = vmatpush2.msra.mxu0 %v311
    %2043 = vmatprep.subr.mxu0 0.0
    %2044 = vmatpush2.msra.mxu0 %v304
    %2045 = vmatprep.subr.mxu0 0.0
    %2046 = vmatpush2.msra.mxu0 %v297
    %2047 = vmatprep.subr.mxu0 0.0
    %2048 = vmatpush2.msra.mxu0 %v290
    %2049 = vmatprep.subr.mxu0 0.0
    %2050 = vmatpush2.msra.mxu0 %v283
    %2051 = vmatprep.subr.mxu0 0.0
    %2052 = vmatpush2.msra.mxu0 %v276
    %2053 = vmatprep.subr.mxu0 0.0
    %2054 = vmatpush2.msra.mxu0 %v269
    %2055 = vmatprep.subr.mxu0 0.0
    %2056 = vmatpush2.msra.mxu0 %v262
    %2057 = vmatprep.mubr.f32.mxu0 %v137
    %2058 = vmatmul.mubr.f32.gmra.mxu0 %v136
    %v2059 = vpop.f32.mrf.mxu0
    %v2060 = vadd.f32 %v1517, %v2059
    %v2061 = vpop.f32.mrf.mxu0
    %2062 = vmatprep.mubr.f32.mxu0 %v141
    %2063 = vmatmul.mubr.f32.gmra.mxu0 %v140
    %v2064 = vpop.f32.mrf.mxu0
    %v2065 = vadd.f32 %v1522, %v2064
    %v2066 = vpop.f32.mrf.mxu0
    %2067 = vdwg.mxu0
    %2068 = vmatprep.subr.mxu0 0.0
    %2069 = vmatpush1.msra.mxu0 %v479
    %2070 = vmatprep.subr.mxu0 0.0
    %2071 = vmatpush1.msra.mxu0 %v472
    %2072 = vmatprep.subr.mxu0 0.0
    %2073 = vmatpush1.msra.mxu0 %v465
    %2074 = vmatprep.subr.mxu0 0.0
    %2075 = vmatpush1.msra.mxu0 %v458
    %2076 = vmatprep.subr.mxu0 0.0
    %2077 = vmatpush1.msra.mxu0 %v451
    %2078 = vmatprep.subr.mxu0 0.0
    %2079 = vmatpush1.msra.mxu0 %v444
    %2080 = vmatprep.subr.mxu0 0.0
    %2081 = vmatpush1.msra.mxu0 %v437
    %2082 = vmatprep.subr.mxu0 0.0
    %2083 = vmatpush1.msra.mxu0 %v430
    %2084 = vmatprep.subr.mxu0 0.0
    %2085 = vmatpush1.msra.mxu0 %v423
    %2086 = vmatprep.subr.mxu0 0.0
    %2087 = vmatpush1.msra.mxu0 %v416
    %2088 = vmatprep.subr.mxu0 0.0
    %2089 = vmatpush1.msra.mxu0 %v409
    %2090 = vmatprep.subr.mxu0 0.0
    %2091 = vmatpush1.msra.mxu0 %v402
    %2092 = vmatprep.subr.mxu0 0.0
    %2093 = vmatpush1.msra.mxu0 %v395
    %2094 = vmatprep.subr.mxu0 0.0
    %2095 = vmatpush1.msra.mxu0 %v388
    %2096 = vmatprep.subr.mxu0 0.0
    %2097 = vmatpush1.msra.mxu0 %v381
    %2098 = vmatprep.subr.mxu0 0.0
    %2099 = vmatpush1.msra.mxu0 %v374
    %2100 = vmatprep.subr.mxu0 0.0
    %2101 = vmatpush2.msra.mxu0 0.0
    %2102 = vmatprep.subr.mxu0 0.0
    %2103 = vmatpush2.msra.mxu0 0.0
    %2104 = vmatprep.subr.mxu0 0.0
    %2105 = vmatpush2.msra.mxu0 0.0
    %2106 = vmatprep.subr.mxu0 0.0
    %2107 = vmatpush2.msra.mxu0 0.0
    %2108 = vmatprep.subr.mxu0 0.0
    %2109 = vmatpush2.msra.mxu0 0.0
    %2110 = vmatprep.subr.mxu0 0.0
    %2111 = vmatpush2.msra.mxu0 0.0
    %2112 = vmatprep.subr.mxu0 0.0
    %2113 = vmatpush2.msra.mxu0 0.0
    %2114 = vmatprep.subr.mxu0 0.0
    %2115 = vmatpush2.msra.mxu0 0.0
    %2116 = vmatprep.subr.mxu0 0.0
    %2117 = vmatpush2.msra.mxu0 0.0
    %2118 = vmatprep.subr.mxu0 0.0
    %2119 = vmatpush2.msra.mxu0 0.0
    %2120 = vmatprep.subr.mxu0 0.0
    %2121 = vmatpush2.msra.mxu0 0.0
    %2122 = vmatprep.subr.mxu0 0.0
    %2123 = vmatpush2.msra.mxu0 0.0
    %2124 = vmatprep.subr.mxu0 0.0
    %2125 = vmatpush2.msra.mxu0 0.0
    %2126 = vmatprep.subr.mxu0 0.0
    %2127 = vmatpush2.msra.mxu0 0.0
    %2128 = vmatprep.subr.mxu0 0.0
    %2129 = vmatpush2.msra.mxu0 %v493
    %2130 = vmatprep.subr.mxu0 0.0
    %2131 = vmatpush2.msra.mxu0 %v486
    %2132 = vmatprep.mubr.f32.mxu0 %v1526
    %2133 = vmatmul.mubr.f32.gmra.mxu0 %v138
    %v2134 = vpop.f32.mrf.mxu0
    %v2135 = vadd.f32 %v2060, %v2134
    %v2136 = vpop.f32.mrf.mxu0
    %2137 = vmatprep.mubr.f32.mxu0 %v1529
    %2138 = vmatmul.mubr.f32.gmra.mxu0 %v142
    %v2139 = vpop.f32.mrf.mxu0
    %v2140 = vadd.f32 %v2065, %v2139
    %v2141 = vpop.f32.mrf.mxu0
    %2142 = vdwg.mxu0
    %v2143 = vld [vmem:[%s0] sm:$0xfc]
    %v2144 = vld [vmem:[%s0 + $0x8] sm:$0xfc]
    %v2145 = vld [vmem:[%s0 + $0x10] sm:$0xfc]
    %v2146 = vld [vmem:[%s0 + $0x18] sm:$0xfc]
    %v2147 = vld [vmem:[%s0 + $0x20] sm:$0x3]
    %v2148 = vld [vmem:[%s0 + $0x28] sm:$0x3]
    %v2149 = vld [vmem:[%s0 + $0x30] sm:$0x3]
    %v2150 = vld [vmem:[%s0 + $0x38] sm:$0x3]
    %v2151 = vld [vmem:[%s0 + $0x40] sm:$0xfc]
    %v2152 = vld [vmem:[%s0 + $0x48] sm:$0xfc]
    %v2153 = vld [vmem:[%s0 + $0x50] sm:$0xfc]
    %v2154 = vld [vmem:[%s0 + $0x58] sm:$0xfc]
    %v2155 = vld [vmem:[%s0 + $0x60] sm:$0x3]
    %v2156 = vld [vmem:[%s0 + $0x68] sm:$0x3]
    %v2157 = vld [vmem:[%s0 + $0x70] sm:$0x3]
    %v2158 = vld [vmem:[%s0 + $0x78] sm:$0x3]
    %vm2175 = vcmask 1045504
    %v2176 = vrot.slane %v2143, 2
    %v2177 = vrot.slane %v2147, 2
    %v2178 = vsel %vm2175, %v2176, %v2177
    %v2179 = vrot.slane %v2144, 2
    %v2180 = vrot.slane %v2148, 2
    %v2181 = vsel %vm2175, %v2179, %v2180
    %v2182 = vrot.slane %v2145, 2
    %v2183 = vrot.slane %v2149, 2
    %v2184 = vsel %vm2175, %v2182, %v2183
    %v2185 = vrot.slane %v2146, 2
    %v2186 = vrot.slane %v2150, 2
    %v2187 = vsel %vm2175, %v2185, %v2186
    %v2188 = vrot.slane %v2151, 2
    %v2189 = vrot.slane %v2155, 2
    %v2190 = vsel %vm2175, %v2188, %v2189
    %v2191 = vrot.slane %v2152, 2
    %v2192 = vrot.slane %v2156, 2
    %v2193 = vsel %vm2175, %v2191, %v2192
    %v2194 = vrot.slane %v2153, 2
    %v2195 = vrot.slane %v2157, 2
    %v2196 = vsel %vm2175, %v2194, %v2195
    %v2197 = vrot.slane %v2154, 2
    %v2198 = vrot.slane %v2158, 2
    %v2199 = vsel %vm2175, %v2197, %v2198
    %s2206 = scalar_lea.vmem [#allocation3], 5600
    %v2207 = vld [vmem:[%s2206] sm:$0xff]
    %v2208 = vld [vmem:[%s2206 + $0x8] sm:$0xff]
    %v2209 = vld [vmem:[%s2206 + $0x10] sm:$0xff]
    %v2210 = vld [vmem:[%s2206 + $0x18] sm:$0xff]
    %v2211 = vld [vmem:[%s2206 + $0x20] sm:$0xff]
    %v2212 = vld [vmem:[%s2206 + $0x28] sm:$0xff]
    %v2213 = vld [vmem:[%s2206 + $0x30] sm:$0xff]
    %v2214 = vld [vmem:[%s2206 + $0x38] sm:$0xff]
    %v2215 = vld [vmem:[%s2206 + $0x40] sm:$0xff]
    %v2216 = vld [vmem:[%s2206 + $0x48] sm:$0xff]
    %v2217 = vld [vmem:[%s2206 + $0x50] sm:$0xff]
    %v2218 = vld [vmem:[%s2206 + $0x58] sm:$0xff]
    %v2219 = vld [vmem:[%s2206 + $0x60] sm:$0xff]
    %v2220 = vld [vmem:[%s2206 + $0x68] sm:$0xff]
    %v2221 = vld [vmem:[%s2206 + $0x70] sm:$0xff]
    %v2222 = vld [vmem:[%s2206 + $0x78] sm:$0xff]
    %v2223 = vld [vmem:[%s2206 + $0x80] sm:$0xff]
    %v2224 = vld [vmem:[%s2206 + $0x88] sm:$0xff]
    %v2225 = vld [vmem:[%s2206 + $0x90] sm:$0xff]
    %v2226 = vld [vmem:[%s2206 + $0x98] sm:$0xff]
    %v2227 = vld [vmem:[%s2206 + $0xa0] sm:$0xff]
    %v2228 = vld [vmem:[%s2206 + $0xa8] sm:$0xff]
    %v2229 = vld [vmem:[%s2206 + $0xb0] sm:$0xff]
    %v2230 = vld [vmem:[%s2206 + $0xb8] sm:$0xff]
    %v2231 = vld [vmem:[%s2206 + $0xc0] sm:$0xff]
    %v2232 = vld [vmem:[%s2206 + $0xc8] sm:$0xff]
    %v2233 = vld [vmem:[%s2206 + $0xd0] sm:$0xff]
    %v2234 = vld [vmem:[%s2206 + $0xd8] sm:$0xff]
    %v2235 = vld [vmem:[%s2206 + $0xe0] sm:$0xff]
    %v2236 = vld [vmem:[%s2206 + $0xe8] sm:$0xff]
    %v2237 = vld [vmem:[%s2206 + $0xf0] sm:$0xff]
    %v2238 = vld [vmem:[%s2206 + $0xf8] sm:$0xff]
    %v2239 = vld [vmem:[%s2206 + $0x100] sm:$0xff]
    %v2240 = vld [vmem:[%s2206 + $0x108] sm:$0xff]
    %v2241 = vld [vmem:[%s2206 + $0x110] sm:$0xff]
    %v2242 = vld [vmem:[%s2206 + $0x118] sm:$0xff]
    %v2243 = vld [vmem:[%s2206 + $0x120] sm:$0xff]
    %v2244 = vld [vmem:[%s2206 + $0x128] sm:$0xff]
    %v2245 = vld [vmem:[%s2206 + $0x130] sm:$0xff]
    %v2246 = vld [vmem:[%s2206 + $0x138] sm:$0xff]
    %v2247 = vld [vmem:[%s2206 + $0x140] sm:$0xff]
    %v2248 = vld [vmem:[%s2206 + $0x148] sm:$0xff]
    %v2249 = vld [vmem:[%s2206 + $0x150] sm:$0xff]
    %v2250 = vld [vmem:[%s2206 + $0x158] sm:$0xff]
    %v2251 = vld [vmem:[%s2206 + $0x160] sm:$0xff]
    %v2252 = vld [vmem:[%s2206 + $0x168] sm:$0xff]
    %v2253 = vld [vmem:[%s2206 + $0x170] sm:$0xff]
    %v2254 = vld [vmem:[%s2206 + $0x178] sm:$0xff]
    %v2255 = vld [vmem:[%s2206 + $0x180] sm:$0xff]
    %v2256 = vld [vmem:[%s2206 + $0x188] sm:$0xff]
    %v2257 = vld [vmem:[%s2206 + $0x190] sm:$0xff]
    %v2258 = vld [vmem:[%s2206 + $0x198] sm:$0xff]
    %v2259 = vld [vmem:[%s2206 + $0x1a0] sm:$0xff]
    %v2260 = vld [vmem:[%s2206 + $0x1a8] sm:$0xff]
    %v2261 = vld [vmem:[%s2206 + $0x1b0] sm:$0xff]
    %v2262 = vld [vmem:[%s2206 + $0x1b8] sm:$0xff]
    %v2263 = vld [vmem:[%s2206 + $0x1c0] sm:$0xff]
    %v2264 = vld [vmem:[%s2206 + $0x1c8] sm:$0xff]
    %v2265 = vld [vmem:[%s2206 + $0x1d0] sm:$0xff]
    %v2266 = vld [vmem:[%s2206 + $0x1d8] sm:$0xff]
    %v2267 = vld [vmem:[%s2206 + $0x1e0] sm:$0xff]
    %v2268 = vld [vmem:[%s2206 + $0x1e8] sm:$0xff]
    %v2269 = vld [vmem:[%s2206 + $0x1f0] sm:$0xff]
    %v2270 = vld [vmem:[%s2206 + $0x1f8] sm:$0xff]
    %v2271 = vld [vmem:[%s2206 + $0x200] sm:$0xff]
    %v2272 = vld [vmem:[%s2206 + $0x208] sm:$0xff]
    %v2273 = vld [vmem:[%s2206 + $0x210] sm:$0xff]
    %v2274 = vld [vmem:[%s2206 + $0x218] sm:$0xff]
    %v2275 = vld [vmem:[%s2206 + $0x220] sm:$0xff]
    %v2276 = vld [vmem:[%s2206 + $0x228] sm:$0xff]
    %v2277 = vld [vmem:[%s2206 + $0x230] sm:$0xff]
    %v2278 = vld [vmem:[%s2206 + $0x238] sm:$0xff]
    %v2279 = vld [vmem:[%s2206 + $0x240] sm:$0xff]
    %v2280 = vld [vmem:[%s2206 + $0x248] sm:$0xff]
    %v2281 = vld [vmem:[%s2206 + $0x250] sm:$0xff]
    %v2282 = vld [vmem:[%s2206 + $0x258] sm:$0xff]
    %v2283 = vld [vmem:[%s2206 + $0x260] sm:$0xff]
    %v2284 = vld [vmem:[%s2206 + $0x268] sm:$0xff]
    %v2285 = vld [vmem:[%s2206 + $0x270] sm:$0xff]
    %v2286 = vld [vmem:[%s2206 + $0x278] sm:$0xff]
    %v2287 = vld [vmem:[%s2206 + $0x280] sm:$0xff]
    %v2288 = vld [vmem:[%s2206 + $0x288] sm:$0xff]
    %v2289 = vld [vmem:[%s2206 + $0x290] sm:$0xff]
    %v2290 = vld [vmem:[%s2206 + $0x298] sm:$0xff]
    %v2291 = vld [vmem:[%s2206 + $0x2a0] sm:$0xff]
    %v2292 = vld [vmem:[%s2206 + $0x2a8] sm:$0xff]
    %v2293 = vld [vmem:[%s2206 + $0x2b0] sm:$0xff]
    %v2294 = vld [vmem:[%s2206 + $0x2b8] sm:$0xff]
    %v2295 = vld [vmem:[%s2206 + $0x2c0] sm:$0xff]
    %v2296 = vld [vmem:[%s2206 + $0x2c8] sm:$0xff]
    %v2297 = vld [vmem:[%s2206 + $0x2d0] sm:$0xff]
    %v2298 = vld [vmem:[%s2206 + $0x2d8] sm:$0xff]
    %v2299 = vld [vmem:[%s2206 + $0x2e0] sm:$0xff]
    %v2300 = vld [vmem:[%s2206 + $0x2e8] sm:$0xff]
    %v2301 = vld [vmem:[%s2206 + $0x2f0] sm:$0xff]
    %v2302 = vld [vmem:[%s2206 + $0x2f8] sm:$0xff]
    %v2303 = vld [vmem:[%s2206 + $0x300] sm:$0xff]
    %v2304 = vld [vmem:[%s2206 + $0x308] sm:$0xff]
    %v2305 = vld [vmem:[%s2206 + $0x310] sm:$0xff]
    %v2306 = vld [vmem:[%s2206 + $0x318] sm:$0xff]
    %v2307 = vld [vmem:[%s2206 + $0x320] sm:$0xff]
    %v2308 = vld [vmem:[%s2206 + $0x328] sm:$0xff]
    %v2309 = vld [vmem:[%s2206 + $0x330] sm:$0xff]
    %v2310 = vld [vmem:[%s2206 + $0x338] sm:$0xff]
    %v2311 = vld [vmem:[%s2206 + $0x340] sm:$0xff]
    %v2312 = vld [vmem:[%s2206 + $0x348] sm:$0xff]
    %v2313 = vld [vmem:[%s2206 + $0x350] sm:$0xff]
    %v2314 = vld [vmem:[%s2206 + $0x358] sm:$0xff]
    %v2315 = vld [vmem:[%s2206 + $0x360] sm:$0xff]
    %v2316 = vld [vmem:[%s2206 + $0x368] sm:$0xff]
    %v2317 = vld [vmem:[%s2206 + $0x370] sm:$0xff]
    %v2318 = vld [vmem:[%s2206 + $0x378] sm:$0xff]
    %v2319 = vld [vmem:[%s2206 + $0x380] sm:$0xff]
    %v2320 = vld [vmem:[%s2206 + $0x388] sm:$0xff]
    %v2321 = vld [vmem:[%s2206 + $0x390] sm:$0xff]
    %v2322 = vld [vmem:[%s2206 + $0x398] sm:$0xff]
    %v2323 = vld [vmem:[%s2206 + $0x3a0] sm:$0xff]
    %v2324 = vld [vmem:[%s2206 + $0x3a8] sm:$0xff]
    %v2325 = vld [vmem:[%s2206 + $0x3b0] sm:$0xff]
    %v2326 = vld [vmem:[%s2206 + $0x3b8] sm:$0xff]
    %v2327 = vld [vmem:[%s2206 + $0x3c0] sm:$0xff]
    %v2328 = vld [vmem:[%s2206 + $0x3c8] sm:$0xff]
    %v2329 = vld [vmem:[%s2206 + $0x3d0] sm:$0xff]
    %v2330 = vld [vmem:[%s2206 + $0x3d8] sm:$0xff]
    %v2331 = vld [vmem:[%s2206 + $0x3e0] sm:$0xff]
    %v2332 = vld [vmem:[%s2206 + $0x3e8] sm:$0xff]
    %v2333 = vld [vmem:[%s2206 + $0x3f0] sm:$0xff]
    %v2334 = vld [vmem:[%s2206 + $0x3f8] sm:$0xff]
    %v2335 = vld [vmem:[%s2206 + $0x400] sm:$0xff]
    %v2336 = vld [vmem:[%s2206 + $0x408] sm:$0xff]
    %v2337 = vld [vmem:[%s2206 + $0x410] sm:$0xff]
    %v2338 = vld [vmem:[%s2206 + $0x418] sm:$0xff]
    %v2339 = vld [vmem:[%s2206 + $0x420] sm:$0xff]
    %v2340 = vld [vmem:[%s2206 + $0x428] sm:$0xff]
    %v2341 = vld [vmem:[%s2206 + $0x430] sm:$0xff]
    %v2342 = vld [vmem:[%s2206 + $0x438] sm:$0xff]
    %v2343 = vld [vmem:[%s2206 + $0x440] sm:$0xff]
    %v2344 = vld [vmem:[%s2206 + $0x448] sm:$0xff]
    %v2345 = vld [vmem:[%s2206 + $0x450] sm:$0xff]
    %v2346 = vld [vmem:[%s2206 + $0x458] sm:$0xff]
    %v2347 = vld [vmem:[%s2206 + $0x460] sm:$0xff]
    %v2348 = vld [vmem:[%s2206 + $0x468] sm:$0xff]
    %v2349 = vld [vmem:[%s2206 + $0x470] sm:$0xff]
    %v2350 = vld [vmem:[%s2206 + $0x478] sm:$0xff]
    %v2351 = vld [vmem:[%s2206 + $0x480] sm:$0xff]
    %v2352 = vld [vmem:[%s2206 + $0x488] sm:$0xff]
    %v2353 = vld [vmem:[%s2206 + $0x490] sm:$0xff]
    %v2354 = vld [vmem:[%s2206 + $0x498] sm:$0xff]
    %v2355 = vld [vmem:[%s2206 + $0x4a0] sm:$0xff]
    %v2356 = vld [vmem:[%s2206 + $0x4a8] sm:$0xff]
    %v2357 = vld [vmem:[%s2206 + $0x4b0] sm:$0xff]
    %v2358 = vld [vmem:[%s2206 + $0x4b8] sm:$0xff]
    %v2359 = vld [vmem:[%s2206 + $0x4c0] sm:$0xff]
    %v2360 = vld [vmem:[%s2206 + $0x4c8] sm:$0xff]
    %v2361 = vld [vmem:[%s2206 + $0x4d0] sm:$0xff]
    %v2362 = vld [vmem:[%s2206 + $0x4d8] sm:$0xff]
    %v2363 = vld [vmem:[%s2206 + $0x4e0] sm:$0xff]
    %v2364 = vld [vmem:[%s2206 + $0x4e8] sm:$0xff]
    %v2365 = vld [vmem:[%s2206 + $0x4f0] sm:$0xff]
    %v2366 = vld [vmem:[%s2206 + $0x4f8] sm:$0xff]
    %v2367 = vld [vmem:[%s2206 + $0x500] sm:$0xff]
    %v2368 = vld [vmem:[%s2206 + $0x508] sm:$0xff]
    %v2369 = vld [vmem:[%s2206 + $0x510] sm:$0xff]
    %v2370 = vld [vmem:[%s2206 + $0x518] sm:$0xff]
    %v2371 = vld [vmem:[%s2206 + $0x520] sm:$0xff]
    %v2372 = vld [vmem:[%s2206 + $0x528] sm:$0xff]
    %v2373 = vld [vmem:[%s2206 + $0x530] sm:$0xff]
    %v2374 = vld [vmem:[%s2206 + $0x538] sm:$0xff]
    %v2375 = vld [vmem:[%s2206 + $0x540] sm:$0xff]
    %v2376 = vld [vmem:[%s2206 + $0x548] sm:$0xff]
    %v2377 = vld [vmem:[%s2206 + $0x550] sm:$0xff]
    %v2378 = vld [vmem:[%s2206 + $0x558] sm:$0xff]
    %v2379 = vld [vmem:[%s2206 + $0x560] sm:$0xff]
    %v2380 = vld [vmem:[%s2206 + $0x568] sm:$0xff]
    %v2381 = vld [vmem:[%s2206 + $0x570] sm:$0xff]
    %v2382 = vld [vmem:[%s2206 + $0x578] sm:$0xff]
    %v2383 = vld [vmem:[%s2206 + $0x580] sm:$0xff]
    %v2384 = vld [vmem:[%s2206 + $0x588] sm:$0xff]
    %v2385 = vld [vmem:[%s2206 + $0x590] sm:$0xff]
    %v2386 = vld [vmem:[%s2206 + $0x598] sm:$0xff]
    %v2387 = vld [vmem:[%s2206 + $0x5a0] sm:$0xff]
    %v2388 = vld [vmem:[%s2206 + $0x5a8] sm:$0xff]
    %v2389 = vld [vmem:[%s2206 + $0x5b0] sm:$0xff]
    %v2390 = vld [vmem:[%s2206 + $0x5b8] sm:$0xff]
    %v2391 = vld [vmem:[%s2206 + $0x5c0] sm:$0xff]
    %v2392 = vld [vmem:[%s2206 + $0x5c8] sm:$0xff]
    %v2393 = vld [vmem:[%s2206 + $0x5d0] sm:$0xff]
    %v2394 = vld [vmem:[%s2206 + $0x5d8] sm:$0xff]
    %v2395 = vld [vmem:[%s2206 + $0x5e0] sm:$0xff]
    %v2396 = vld [vmem:[%s2206 + $0x5e8] sm:$0xff]
    %v2397 = vld [vmem:[%s2206 + $0x5f0] sm:$0xff]
    %v2398 = vld [vmem:[%s2206 + $0x5f8] sm:$0xff]
    %v2399 = vld [vmem:[%s2206 + $0x600] sm:$0xff]
    %v2400 = vld [vmem:[%s2206 + $0x608] sm:$0xff]
    %v2401 = vld [vmem:[%s2206 + $0x610] sm:$0xff]
    %v2402 = vld [vmem:[%s2206 + $0x618] sm:$0xff]
    %v2403 = vld [vmem:[%s2206 + $0x620] sm:$0xff]
    %v2404 = vld [vmem:[%s2206 + $0x628] sm:$0xff]
    %v2405 = vld [vmem:[%s2206 + $0x630] sm:$0xff]
    %v2406 = vld [vmem:[%s2206 + $0x638] sm:$0xff]
    %v2407 = vld [vmem:[%s2206 + $0x640] sm:$0xff]
    %v2408 = vld [vmem:[%s2206 + $0x648] sm:$0xff]
    %v2409 = vld [vmem:[%s2206 + $0x650] sm:$0xff]
    %v2410 = vld [vmem:[%s2206 + $0x658] sm:$0xff]
    %v2411 = vld [vmem:[%s2206 + $0x660] sm:$0xff]
    %v2412 = vld [vmem:[%s2206 + $0x668] sm:$0xff]
    %v2413 = vld [vmem:[%s2206 + $0x670] sm:$0xff]
    %v2414 = vld [vmem:[%s2206 + $0x678] sm:$0xff]
    %v2415 = vld [vmem:[%s2206 + $0x680] sm:$0xff]
    %v2416 = vld [vmem:[%s2206 + $0x688] sm:$0xff]
    %v2417 = vld [vmem:[%s2206 + $0x690] sm:$0xff]
    %v2418 = vld [vmem:[%s2206 + $0x698] sm:$0xff]
    %v2419 = vld [vmem:[%s2206 + $0x6a0] sm:$0xff]
    %v2420 = vld [vmem:[%s2206 + $0x6a8] sm:$0xff]
    %v2421 = vld [vmem:[%s2206 + $0x6b0] sm:$0xff]
    %v2422 = vld [vmem:[%s2206 + $0x6b8] sm:$0xff]
    %v2423 = vld [vmem:[%s2206 + $0x6c0] sm:$0xff]
    %v2424 = vld [vmem:[%s2206 + $0x6c8] sm:$0xff]
    %v2425 = vld [vmem:[%s2206 + $0x6d0] sm:$0xff]
    %v2426 = vld [vmem:[%s2206 + $0x6d8] sm:$0xff]
    %v2427 = vld [vmem:[%s2206 + $0x6e0] sm:$0xff]
    %v2428 = vld [vmem:[%s2206 + $0x6e8] sm:$0xff]
    %v2429 = vld [vmem:[%s2206 + $0x6f0] sm:$0xff]
    %v2430 = vld [vmem:[%s2206 + $0x6f8] sm:$0xff]
    %v2431 = vld [vmem:[%s2206 + $0x700] sm:$0xff]
    %v2432 = vld [vmem:[%s2206 + $0x708] sm:$0xff]
    %v2433 = vld [vmem:[%s2206 + $0x710] sm:$0xff]
    %v2434 = vld [vmem:[%s2206 + $0x718] sm:$0xff]
    %v2435 = vld [vmem:[%s2206 + $0x720] sm:$0xff]
    %v2436 = vld [vmem:[%s2206 + $0x728] sm:$0xff]
    %v2437 = vld [vmem:[%s2206 + $0x730] sm:$0xff]
    %v2438 = vld [vmem:[%s2206 + $0x738] sm:$0xff]
    %v2439 = vld [vmem:[%s2206 + $0x740] sm:$0xff]
    %v2440 = vld [vmem:[%s2206 + $0x748] sm:$0xff]
    %v2441 = vld [vmem:[%s2206 + $0x750] sm:$0xff]
    %v2442 = vld [vmem:[%s2206 + $0x758] sm:$0xff]
    %v2443 = vld [vmem:[%s2206 + $0x760] sm:$0xff]
    %v2444 = vld [vmem:[%s2206 + $0x768] sm:$0xff]
    %v2445 = vld [vmem:[%s2206 + $0x770] sm:$0xff]
    %v2446 = vld [vmem:[%s2206 + $0x778] sm:$0xff]
    %v2447 = vld [vmem:[%s2206 + $0x780] sm:$0xff]
    %v2448 = vld [vmem:[%s2206 + $0x788] sm:$0xff]
    %v2449 = vld [vmem:[%s2206 + $0x790] sm:$0xff]
    %v2450 = vld [vmem:[%s2206 + $0x798] sm:$0xff]
    %v2451 = vld [vmem:[%s2206 + $0x7a0] sm:$0xff]
    %v2452 = vld [vmem:[%s2206 + $0x7a8] sm:$0xff]
    %v2453 = vld [vmem:[%s2206 + $0x7b0] sm:$0xff]
    %v2454 = vld [vmem:[%s2206 + $0x7b8] sm:$0xff]
    %v2455 = vld [vmem:[%s2206 + $0x7c0] sm:$0xff]
    %v2456 = vld [vmem:[%s2206 + $0x7c8] sm:$0xff]
    %v2457 = vld [vmem:[%s2206 + $0x7d0] sm:$0xff]
    %v2458 = vld [vmem:[%s2206 + $0x7d8] sm:$0xff]
    %v2459 = vld [vmem:[%s2206 + $0x7e0] sm:$0xff]
    %v2460 = vld [vmem:[%s2206 + $0x7e8] sm:$0xff]
    %v2461 = vld [vmem:[%s2206 + $0x7f0] sm:$0xff]
    %v2462 = vld [vmem:[%s2206 + $0x7f8] sm:$0xff]
    %v2463 = vld [vmem:[%s2206 + $0x800] sm:$0xff]
    %v2464 = vld [vmem:[%s2206 + $0x808] sm:$0xff]
    %v2465 = vld [vmem:[%s2206 + $0x810] sm:$0xff]
    %v2466 = vld [vmem:[%s2206 + $0x818] sm:$0xff]
    %v2467 = vld [vmem:[%s2206 + $0x820] sm:$0xff]
    %v2468 = vld [vmem:[%s2206 + $0x828] sm:$0xff]
    %v2469 = vld [vmem:[%s2206 + $0x830] sm:$0xff]
    %v2470 = vld [vmem:[%s2206 + $0x838] sm:$0xff]
    %v2471 = vld [vmem:[%s2206 + $0x840] sm:$0xff]
    %v2472 = vld [vmem:[%s2206 + $0x848] sm:$0xff]
    %v2473 = vld [vmem:[%s2206 + $0x850] sm:$0xff]
    %v2474 = vld [vmem:[%s2206 + $0x858] sm:$0xff]
    %v2475 = vld [vmem:[%s2206 + $0x860] sm:$0xff]
    %v2476 = vld [vmem:[%s2206 + $0x868] sm:$0xff]
    %v2477 = vld [vmem:[%s2206 + $0x870] sm:$0xff]
    %v2478 = vld [vmem:[%s2206 + $0x878] sm:$0xff]
    %v2479 = vld [vmem:[%s2206 + $0x880] sm:$0xff]
    %v2480 = vld [vmem:[%s2206 + $0x888] sm:$0xff]
    %v2481 = vld [vmem:[%s2206 + $0x890] sm:$0xff]
    %v2482 = vld [vmem:[%s2206 + $0x898] sm:$0xff]
    %v2483 = vld [vmem:[%s2206 + $0x8a0] sm:$0xff]
    %v2484 = vld [vmem:[%s2206 + $0x8a8] sm:$0xff]
    %v2485 = vld [vmem:[%s2206 + $0x8b0] sm:$0xff]
    %v2486 = vld [vmem:[%s2206 + $0x8b8] sm:$0xff]
    %v2487 = vld [vmem:[%s2206 + $0x8c0] sm:$0xff]
    %v2488 = vld [vmem:[%s2206 + $0x8c8] sm:$0xff]
    %v2489 = vld [vmem:[%s2206 + $0x8d0] sm:$0xff]
    %v2490 = vld [vmem:[%s2206 + $0x8d8] sm:$0xff]
    %v2491 = vld [vmem:[%s2206 + $0x8e0] sm:$0xff]
    %v2492 = vld [vmem:[%s2206 + $0x8e8] sm:$0xff]
    %v2493 = vld [vmem:[%s2206 + $0x8f0] sm:$0xff]
    %v2494 = vld [vmem:[%s2206 + $0x8f8] sm:$0xff]
    %v2495 = vld [vmem:[%s2206 + $0x900] sm:$0xff]
    %v2496 = vld [vmem:[%s2206 + $0x908] sm:$0xff]
    %v2497 = vld [vmem:[%s2206 + $0x910] sm:$0xff]
    %v2498 = vld [vmem:[%s2206 + $0x918] sm:$0xff]
    %v2499 = vld [vmem:[%s2206 + $0x920] sm:$0xff]
    %v2500 = vld [vmem:[%s2206 + $0x928] sm:$0xff]
    %v2501 = vld [vmem:[%s2206 + $0x930] sm:$0xff]
    %v2502 = vld [vmem:[%s2206 + $0x938] sm:$0xff]
    %v2503 = vld [vmem:[%s2206 + $0x940] sm:$0xff]
    %v2504 = vld [vmem:[%s2206 + $0x948] sm:$0xff]
    %v2505 = vld [vmem:[%s2206 + $0x950] sm:$0xff]
    %v2506 = vld [vmem:[%s2206 + $0x958] sm:$0xff]
    %v2507 = vld [vmem:[%s2206 + $0x960] sm:$0xff]
    %v2508 = vld [vmem:[%s2206 + $0x968] sm:$0xff]
    %v2509 = vld [vmem:[%s2206 + $0x970] sm:$0xff]
    %v2510 = vld [vmem:[%s2206 + $0x978] sm:$0xff]
    %v2511 = vld [vmem:[%s2206 + $0x980] sm:$0xff]
    %v2512 = vld [vmem:[%s2206 + $0x988] sm:$0xff]
    %v2513 = vld [vmem:[%s2206 + $0x990] sm:$0xff]
    %v2514 = vld [vmem:[%s2206 + $0x998] sm:$0xff]
    %v2515 = vld [vmem:[%s2206 + $0x9a0] sm:$0xff]
    %v2516 = vld [vmem:[%s2206 + $0x9a8] sm:$0xff]
    %v2517 = vld [vmem:[%s2206 + $0x9b0] sm:$0xff]
    %v2518 = vld [vmem:[%s2206 + $0x9b8] sm:$0xff]
    %v2519 = vld [vmem:[%s2206 + $0x9c0] sm:$0xff]
    %v2520 = vld [vmem:[%s2206 + $0x9c8] sm:$0xff]
    %v2521 = vld [vmem:[%s2206 + $0x9d0] sm:$0xff]
    %v2522 = vld [vmem:[%s2206 + $0x9d8] sm:$0xff]
    %v2523 = vld [vmem:[%s2206 + $0x9e0] sm:$0xff]
    %v2524 = vld [vmem:[%s2206 + $0x9e8] sm:$0xff]
    %v2525 = vld [vmem:[%s2206 + $0x9f0] sm:$0xff]
    %v2526 = vld [vmem:[%s2206 + $0x9f8] sm:$0xff]
    %v2527 = vld [vmem:[%s2206 + $0xa00] sm:$0xff]
    %v2528 = vld [vmem:[%s2206 + $0xa08] sm:$0xff]
    %v2529 = vld [vmem:[%s2206 + $0xa10] sm:$0xff]
    %v2530 = vld [vmem:[%s2206 + $0xa18] sm:$0xff]
    %v2531 = vld [vmem:[%s2206 + $0xa20] sm:$0xff]
    %v2532 = vld [vmem:[%s2206 + $0xa28] sm:$0xff]
    %v2533 = vld [vmem:[%s2206 + $0xa30] sm:$0xff]
    %v2534 = vld [vmem:[%s2206 + $0xa38] sm:$0xff]
    %v2535 = vld [vmem:[%s2206 + $0xa40] sm:$0xff]
    %v2536 = vld [vmem:[%s2206 + $0xa48] sm:$0xff]
    %v2537 = vld [vmem:[%s2206 + $0xa50] sm:$0xff]
    %v2538 = vld [vmem:[%s2206 + $0xa58] sm:$0xff]
    %v2539 = vld [vmem:[%s2206 + $0xa60] sm:$0xff]
    %v2540 = vld [vmem:[%s2206 + $0xa68] sm:$0xff]
    %v2541 = vld [vmem:[%s2206 + $0xa70] sm:$0xff]
    %v2542 = vld [vmem:[%s2206 + $0xa78] sm:$0xff]
    %v2543 = vld [vmem:[%s2206 + $0xa80] sm:$0xff]
    %v2544 = vld [vmem:[%s2206 + $0xa88] sm:$0xff]
    %v2545 = vld [vmem:[%s2206 + $0xa90] sm:$0xff]
    %v2546 = vld [vmem:[%s2206 + $0xa98] sm:$0xff]
    %v2547 = vld [vmem:[%s2206 + $0xaa0] sm:$0xff]
    %v2548 = vld [vmem:[%s2206 + $0xaa8] sm:$0xff]
    %v2549 = vld [vmem:[%s2206 + $0xab0] sm:$0xff]
    %v2550 = vld [vmem:[%s2206 + $0xab8] sm:$0xff]
    %v2551 = vld [vmem:[%s2206 + $0xac0] sm:$0xff]
    %v2552 = vld [vmem:[%s2206 + $0xac8] sm:$0xff]
    %v2553 = vld [vmem:[%s2206 + $0xad0] sm:$0xff]
    %v2554 = vld [vmem:[%s2206 + $0xad8] sm:$0xff]
    %v2555 = vld [vmem:[%s2206 + $0xae0] sm:$0xff]
    %v2556 = vld [vmem:[%s2206 + $0xae8] sm:$0xff]
    %v2557 = vsel %vm908, %v2187, 0
    %v2559 = vsel %vm908, %v2199, 0
    %2561 = vmatprep.subr.mxu0 %v2313
    %2562 = vmatpush1.msra.mxu0 %v2312
    %2563 = vmatprep.subr.mxu0 %v2306
    %2564 = vmatpush1.msra.mxu0 %v2305
    %2565 = vmatprep.subr.mxu0 %v2299
    %2566 = vmatpush1.msra.mxu0 %v2298
    %2567 = vmatprep.subr.mxu0 %v2292
    %2568 = vmatpush1.msra.mxu0 %v2291
    %2569 = vmatprep.subr.mxu0 %v2285
    %2570 = vmatpush1.msra.mxu0 %v2284
    %2571 = vmatprep.subr.mxu0 %v2278
    %2572 = vmatpush1.msra.mxu0 %v2277
    %2573 = vmatprep.subr.mxu0 %v2271
    %2574 = vmatpush1.msra.mxu0 %v2270
    %2575 = vmatprep.subr.mxu0 %v2264
    %2576 = vmatpush1.msra.mxu0 %v2263
    %2577 = vmatprep.subr.mxu0 %v2257
    %2578 = vmatpush1.msra.mxu0 %v2256
    %2579 = vmatprep.subr.mxu0 %v2250
    %2580 = vmatpush1.msra.mxu0 %v2249
    %2581 = vmatprep.subr.mxu0 %v2243
    %2582 = vmatpush1.msra.mxu0 %v2242
    %2583 = vmatprep.subr.mxu0 %v2236
    %2584 = vmatpush1.msra.mxu0 %v2235
    %2585 = vmatprep.subr.mxu0 %v2229
    %2586 = vmatpush1.msra.mxu0 %v2228
    %2587 = vmatprep.subr.mxu0 %v2222
    %2588 = vmatpush1.msra.mxu0 %v2221
    %2589 = vmatprep.subr.mxu0 %v2215
    %2590 = vmatpush1.msra.mxu0 %v2214
    %2591 = vmatprep.subr.mxu0 %v2208
    %2592 = vmatpush1.msra.mxu0 %v2207
    %2593 = vmatprep.subr.mxu0 %v2425
    %2594 = vmatpush2.msra.mxu0 %v2424
    %2595 = vmatprep.subr.mxu0 %v2418
    %2596 = vmatpush2.msra.mxu0 %v2417
    %2597 = vmatprep.subr.mxu0 %v2411
    %2598 = vmatpush2.msra.mxu0 %v2410
    %2599 = vmatprep.subr.mxu0 %v2404
    %2600 = vmatpush2.msra.mxu0 %v2403
    %2601 = vmatprep.subr.mxu0 %v2397
    %2602 = vmatpush2.msra.mxu0 %v2396
    %2603 = vmatprep.subr.mxu0 %v2390
    %2604 = vmatpush2.msra.mxu0 %v2389
    %2605 = vmatprep.subr.mxu0 %v2383
    %2606 = vmatpush2.msra.mxu0 %v2382
    %2607 = vmatprep.subr.mxu0 %v2376
    %2608 = vmatpush2.msra.mxu0 %v2375
    %2609 = vmatprep.subr.mxu0 %v2369
    %2610 = vmatpush2.msra.mxu0 %v2368
    %2611 = vmatprep.subr.mxu0 %v2362
    %2612 = vmatpush2.msra.mxu0 %v2361
    %2613 = vmatprep.subr.mxu0 %v2355
    %2614 = vmatpush2.msra.mxu0 %v2354
    %2615 = vmatprep.subr.mxu0 %v2348
    %2616 = vmatpush2.msra.mxu0 %v2347
    %2617 = vmatprep.subr.mxu0 %v2341
    %2618 = vmatpush2.msra.mxu0 %v2340
    %2619 = vmatprep.subr.mxu0 %v2334
    %2620 = vmatpush2.msra.mxu0 %v2333
    %2621 = vmatprep.subr.mxu0 %v2327
    %2622 = vmatpush2.msra.mxu0 %v2326
    %2623 = vmatprep.subr.mxu0 %v2320
    %2624 = vmatpush2.msra.mxu0 %v2319
    %2625 = vmatprep.mubr.f32.mxu0 %v2181
    %2626 = vmatmul.mubr.f32.gmra.mxu0 %v2178
    %v2627 = vpop.f32.mrf.mxu0
    %v2628 = vadd.f32 0.0, %v2627
    %v2629 = vpop.f32.mrf.mxu0
    %v2630 = vadd.f32 0.0, %v2629
    %2631 = vmatprep.mubr.f32.mxu0 %v2193
    %2632 = vmatmul.mubr.f32.gmra.mxu0 %v2190
    %v2633 = vpop.f32.mrf.mxu0
    %v2634 = vadd.f32 0.0, %v2633
    %v2635 = vpop.f32.mrf.mxu0
    %v2636 = vadd.f32 0.0, %v2635
    %2637 = vdwg.mxu0
    %2638 = vmatprep.subr.mxu0 %v2537
    %2639 = vmatpush1.msra.mxu0 %v2536
    %2640 = vmatprep.subr.mxu0 %v2530
    %2641 = vmatpush1.msra.mxu0 %v2529
    %2642 = vmatprep.subr.mxu0 %v2523
    %2643 = vmatpush1.msra.mxu0 %v2522
    %2644 = vmatprep.subr.mxu0 %v2516
    %2645 = vmatpush1.msra.mxu0 %v2515
    %2646 = vmatprep.subr.mxu0 %v2509
    %2647 = vmatpush1.msra.mxu0 %v2508
    %2648 = vmatprep.subr.mxu0 %v2502
    %2649 = vmatpush1.msra.mxu0 %v2501
    %2650 = vmatprep.subr.mxu0 %v2495
    %2651 = vmatpush1.msra.mxu0 %v2494
    %2652 = vmatprep.subr.mxu0 %v2488
    %2653 = vmatpush1.msra.mxu0 %v2487
    %2654 = vmatprep.subr.mxu0 %v2481
    %2655 = vmatpush1.msra.mxu0 %v2480
    %2656 = vmatprep.subr.mxu0 %v2474
    %2657 = vmatpush1.msra.mxu0 %v2473
    %2658 = vmatprep.subr.mxu0 %v2467
    %2659 = vmatpush1.msra.mxu0 %v2466
    %2660 = vmatprep.subr.mxu0 %v2460
    %2661 = vmatpush1.msra.mxu0 %v2459
    %2662 = vmatprep.subr.mxu0 %v2453
    %2663 = vmatpush1.msra.mxu0 %v2452
    %2664 = vmatprep.subr.mxu0 %v2446
    %2665 = vmatpush1.msra.mxu0 %v2445
    %2666 = vmatprep.subr.mxu0 %v2439
    %2667 = vmatpush1.msra.mxu0 %v2438
    %2668 = vmatprep.subr.mxu0 %v2432
    %2669 = vmatpush1.msra.mxu0 %v2431
    %2670 = vmatprep.subr.mxu0 0.0
    %2671 = vmatpush2.msra.mxu0 0.0
    %2672 = vmatprep.subr.mxu0 0.0
    %2673 = vmatpush2.msra.mxu0 0.0
    %2674 = vmatprep.subr.mxu0 0.0
    %2675 = vmatpush2.msra.mxu0 0.0
    %2676 = vmatprep.subr.mxu0 0.0
    %2677 = vmatpush2.msra.mxu0 0.0
    %2678 = vmatprep.subr.mxu0 0.0
    %2679 = vmatpush2.msra.mxu0 0.0
    %2680 = vmatprep.subr.mxu0 0.0
    %2681 = vmatpush2.msra.mxu0 0.0
    %2682 = vmatprep.subr.mxu0 0.0
    %2683 = vmatpush2.msra.mxu0 0.0
    %2684 = vmatprep.subr.mxu0 0.0
    %2685 = vmatpush2.msra.mxu0 0.0
    %2686 = vmatprep.subr.mxu0 0.0
    %2687 = vmatpush2.msra.mxu0 0.0
    %2688 = vmatprep.subr.mxu0 0.0
    %2689 = vmatpush2.msra.mxu0 0.0
    %2690 = vmatprep.subr.mxu0 0.0
    %2691 = vmatpush2.msra.mxu0 0.0
    %2692 = vmatprep.subr.mxu0 0.0
    %2693 = vmatpush2.msra.mxu0 0.0
    %2694 = vmatprep.subr.mxu0 0.0
    %2695 = vmatpush2.msra.mxu0 0.0
    %2696 = vmatprep.subr.mxu0 0.0
    %2697 = vmatpush2.msra.mxu0 0.0
    %2698 = vmatprep.subr.mxu0 %v2551
    %2699 = vmatpush2.msra.mxu0 %v2550
    %2700 = vmatprep.subr.mxu0 %v2544
    %2701 = vmatpush2.msra.mxu0 %v2543
    %2702 = vmatprep.mubr.f32.mxu0 %v2557
    %2703 = vmatmul.mubr.f32.gmra.mxu0 %v2184
    %v2704 = vpop.f32.mrf.mxu0
    %v2705 = vadd.f32 %v2628, %v2704
    %v2706 = vpop.f32.mrf.mxu0
    %v2707 = vadd.f32 %v2630, %v2706
    %2708 = vmatprep.mubr.f32.mxu0 %v2559
    %2709 = vmatmul.mubr.f32.gmra.mxu0 %v2196
    %v2710 = vpop.f32.mrf.mxu0
    %v2711 = vadd.f32 %v2634, %v2710
    %v2712 = vpop.f32.mrf.mxu0
    %v2713 = vadd.f32 %v2636, %v2712
    %2714 = vdwg.mxu0
    %2715 = vmatprep.subr.mxu0 %v2315
    %2716 = vmatpush1.msra.mxu0 %v2314
    %2717 = vmatprep.subr.mxu0 %v2308
    %2718 = vmatpush1.msra.mxu0 %v2307
    %2719 = vmatprep.subr.mxu0 %v2301
    %2720 = vmatpush1.msra.mxu0 %v2300
    %2721 = vmatprep.subr.mxu0 %v2294
    %2722 = vmatpush1.msra.mxu0 %v2293
    %2723 = vmatprep.subr.mxu0 %v2287
    %2724 = vmatpush1.msra.mxu0 %v2286
    %2725 = vmatprep.subr.mxu0 %v2280
    %2726 = vmatpush1.msra.mxu0 %v2279
    %2727 = vmatprep.subr.mxu0 %v2273
    %2728 = vmatpush1.msra.mxu0 %v2272
    %2729 = vmatprep.subr.mxu0 %v2266
    %2730 = vmatpush1.msra.mxu0 %v2265
    %2731 = vmatprep.subr.mxu0 %v2259
    %2732 = vmatpush1.msra.mxu0 %v2258
    %2733 = vmatprep.subr.mxu0 %v2252
    %2734 = vmatpush1.msra.mxu0 %v2251
    %2735 = vmatprep.subr.mxu0 %v2245
    %2736 = vmatpush1.msra.mxu0 %v2244
    %2737 = vmatprep.subr.mxu0 %v2238
    %2738 = vmatpush1.msra.mxu0 %v2237
    %2739 = vmatprep.subr.mxu0 %v2231
    %2740 = vmatpush1.msra.mxu0 %v2230
    %2741 = vmatprep.subr.mxu0 %v2224
    %2742 = vmatpush1.msra.mxu0 %v2223
    %2743 = vmatprep.subr.mxu0 %v2217
    %2744 = vmatpush1.msra.mxu0 %v2216
    %2745 = vmatprep.subr.mxu0 %v2210
    %2746 = vmatpush1.msra.mxu0 %v2209
    %2747 = vmatprep.subr.mxu0 %v2427
    %2748 = vmatpush2.msra.mxu0 %v2426
    %2749 = vmatprep.subr.mxu0 %v2420
    %2750 = vmatpush2.msra.mxu0 %v2419
    %2751 = vmatprep.subr.mxu0 %v2413
    %2752 = vmatpush2.msra.mxu0 %v2412
    %2753 = vmatprep.subr.mxu0 %v2406
    %2754 = vmatpush2.msra.mxu0 %v2405
    %2755 = vmatprep.subr.mxu0 %v2399
    %2756 = vmatpush2.msra.mxu0 %v2398
    %2757 = vmatprep.subr.mxu0 %v2392
    %2758 = vmatpush2.msra.mxu0 %v2391
    %2759 = vmatprep.subr.mxu0 %v2385
    %2760 = vmatpush2.msra.mxu0 %v2384
    %2761 = vmatprep.subr.mxu0 %v2378
    %2762 = vmatpush2.msra.mxu0 %v2377
    %2763 = vmatprep.subr.mxu0 %v2371
    %2764 = vmatpush2.msra.mxu0 %v2370
    %2765 = vmatprep.subr.mxu0 %v2364
    %2766 = vmatpush2.msra.mxu0 %v2363
    %2767 = vmatprep.subr.mxu0 %v2357
    %2768 = vmatpush2.msra.mxu0 %v2356
    %2769 = vmatprep.subr.mxu0 %v2350
    %2770 = vmatpush2.msra.mxu0 %v2349
    %2771 = vmatprep.subr.mxu0 %v2343
    %2772 = vmatpush2.msra.mxu0 %v2342
    %2773 = vmatprep.subr.mxu0 %v2336
    %2774 = vmatpush2.msra.mxu0 %v2335
    %2775 = vmatprep.subr.mxu0 %v2329
    %2776 = vmatpush2.msra.mxu0 %v2328
    %2777 = vmatprep.subr.mxu0 %v2322
    %2778 = vmatpush2.msra.mxu0 %v2321
    %2779 = vmatprep.mubr.f32.mxu0 %v2181
    %2780 = vmatmul.mubr.f32.gmra.mxu0 %v2178
    %v2781 = vpop.f32.mrf.mxu0
    %v2782 = vadd.f32 0.0, %v2781
    %v2783 = vpop.f32.mrf.mxu0
    %v2784 = vadd.f32 0.0, %v2783
    %2785 = vmatprep.mubr.f32.mxu0 %v2193
    %2786 = vmatmul.mubr.f32.gmra.mxu0 %v2190
    %v2787 = vpop.f32.mrf.mxu0
    %v2788 = vadd.f32 0.0, %v2787
    %v2789 = vpop.f32.mrf.mxu0
    %v2790 = vadd.f32 0.0, %v2789
    %2791 = vdwg.mxu0
    %2792 = vmatprep.subr.mxu0 %v2539
    %2793 = vmatpush1.msra.mxu0 %v2538
    %2794 = vmatprep.subr.mxu0 %v2532
    %2795 = vmatpush1.msra.mxu0 %v2531
    %2796 = vmatprep.subr.mxu0 %v2525
    %2797 = vmatpush1.msra.mxu0 %v2524
    %2798 = vmatprep.subr.mxu0 %v2518
    %2799 = vmatpush1.msra.mxu0 %v2517
    %2800 = vmatprep.subr.mxu0 %v2511
    %2801 = vmatpush1.msra.mxu0 %v2510
    %2802 = vmatprep.subr.mxu0 %v2504
    %2803 = vmatpush1.msra.mxu0 %v2503
    %2804 = vmatprep.subr.mxu0 %v2497
    %2805 = vmatpush1.msra.mxu0 %v2496
    %2806 = vmatprep.subr.mxu0 %v2490
    %2807 = vmatpush1.msra.mxu0 %v2489
    %2808 = vmatprep.subr.mxu0 %v2483
    %2809 = vmatpush1.msra.mxu0 %v2482
    %2810 = vmatprep.subr.mxu0 %v2476
    %2811 = vmatpush1.msra.mxu0 %v2475
    %2812 = vmatprep.subr.mxu0 %v2469
    %2813 = vmatpush1.msra.mxu0 %v2468
    %2814 = vmatprep.subr.mxu0 %v2462
    %2815 = vmatpush1.msra.mxu0 %v2461
    %2816 = vmatprep.subr.mxu0 %v2455
    %2817 = vmatpush1.msra.mxu0 %v2454
    %2818 = vmatprep.subr.mxu0 %v2448
    %2819 = vmatpush1.msra.mxu0 %v2447
    %2820 = vmatprep.subr.mxu0 %v2441
    %2821 = vmatpush1.msra.mxu0 %v2440
    %2822 = vmatprep.subr.mxu0 %v2434
    %2823 = vmatpush1.msra.mxu0 %v2433
    %2824 = vmatprep.subr.mxu0 0.0
    %2825 = vmatpush2.msra.mxu0 0.0
    %2826 = vmatprep.subr.mxu0 0.0
    %2827 = vmatpush2.msra.mxu0 0.0
    %2828 = vmatprep.subr.mxu0 0.0
    %2829 = vmatpush2.msra.mxu0 0.0
    %2830 = vmatprep.subr.mxu0 0.0
    %2831 = vmatpush2.msra.mxu0 0.0
    %2832 = vmatprep.subr.mxu0 0.0
    %2833 = vmatpush2.msra.mxu0 0.0
    %2834 = vmatprep.subr.mxu0 0.0
    %2835 = vmatpush2.msra.mxu0 0.0
    %2836 = vmatprep.subr.mxu0 0.0
    %2837 = vmatpush2.msra.mxu0 0.0
    %2838 = vmatprep.subr.mxu0 0.0
    %2839 = vmatpush2.msra.mxu0 0.0
    %2840 = vmatprep.subr.mxu0 0.0
    %2841 = vmatpush2.msra.mxu0 0.0
    %2842 = vmatprep.subr.mxu0 0.0
    %2843 = vmatpush2.msra.mxu0 0.0
    %2844 = vmatprep.subr.mxu0 0.0
    %2845 = vmatpush2.msra.mxu0 0.0
    %2846 = vmatprep.subr.mxu0 0.0
    %2847 = vmatpush2.msra.mxu0 0.0
    %2848 = vmatprep.subr.mxu0 0.0
    %2849 = vmatpush2.msra.mxu0 0.0
    %2850 = vmatprep.subr.mxu0 0.0
    %2851 = vmatpush2.msra.mxu0 0.0
    %2852 = vmatprep.subr.mxu0 %v2553
    %2853 = vmatpush2.msra.mxu0 %v2552
    %2854 = vmatprep.subr.mxu0 %v2546
    %2855 = vmatpush2.msra.mxu0 %v2545
    %2856 = vmatprep.mubr.f32.mxu0 %v2557
    %2857 = vmatmul.mubr.f32.gmra.mxu0 %v2184
    %v2858 = vpop.f32.mrf.mxu0
    %v2859 = vadd.f32 %v2782, %v2858
    %v2860 = vpop.f32.mrf.mxu0
    %v2861 = vadd.f32 %v2784, %v2860
    %2862 = vmatprep.mubr.f32.mxu0 %v2559
    %2863 = vmatmul.mubr.f32.gmra.mxu0 %v2196
    %v2864 = vpop.f32.mrf.mxu0
    %v2865 = vadd.f32 %v2788, %v2864
    %v2866 = vpop.f32.mrf.mxu0
    %v2867 = vadd.f32 %v2790, %v2866
    %2868 = vdwg.mxu0
    %2869 = vmatprep.subr.mxu0 %v2317
    %2870 = vmatpush1.msra.mxu0 %v2316
    %2871 = vmatprep.subr.mxu0 %v2310
    %2872 = vmatpush1.msra.mxu0 %v2309
    %2873 = vmatprep.subr.mxu0 %v2303
    %2874 = vmatpush1.msra.mxu0 %v2302
    %2875 = vmatprep.subr.mxu0 %v2296
    %2876 = vmatpush1.msra.mxu0 %v2295
    %2877 = vmatprep.subr.mxu0 %v2289
    %2878 = vmatpush1.msra.mxu0 %v2288
    %2879 = vmatprep.subr.mxu0 %v2282
    %2880 = vmatpush1.msra.mxu0 %v2281
    %2881 = vmatprep.subr.mxu0 %v2275
    %2882 = vmatpush1.msra.mxu0 %v2274
    %2883 = vmatprep.subr.mxu0 %v2268
    %2884 = vmatpush1.msra.mxu0 %v2267
    %2885 = vmatprep.subr.mxu0 %v2261
    %2886 = vmatpush1.msra.mxu0 %v2260
    %2887 = vmatprep.subr.mxu0 %v2254
    %2888 = vmatpush1.msra.mxu0 %v2253
    %2889 = vmatprep.subr.mxu0 %v2247
    %2890 = vmatpush1.msra.mxu0 %v2246
    %2891 = vmatprep.subr.mxu0 %v2240
    %2892 = vmatpush1.msra.mxu0 %v2239
    %2893 = vmatprep.subr.mxu0 %v2233
    %2894 = vmatpush1.msra.mxu0 %v2232
    %2895 = vmatprep.subr.mxu0 %v2226
    %2896 = vmatpush1.msra.mxu0 %v2225
    %2897 = vmatprep.subr.mxu0 %v2219
    %2898 = vmatpush1.msra.mxu0 %v2218
    %2899 = vmatprep.subr.mxu0 %v2212
    %2900 = vmatpush1.msra.mxu0 %v2211
    %2901 = vmatprep.subr.mxu0 %v2429
    %2902 = vmatpush2.msra.mxu0 %v2428
    %2903 = vmatprep.subr.mxu0 %v2422
    %2904 = vmatpush2.msra.mxu0 %v2421
    %2905 = vmatprep.subr.mxu0 %v2415
    %2906 = vmatpush2.msra.mxu0 %v2414
    %2907 = vmatprep.subr.mxu0 %v2408
    %2908 = vmatpush2.msra.mxu0 %v2407
    %2909 = vmatprep.subr.mxu0 %v2401
    %2910 = vmatpush2.msra.mxu0 %v2400
    %2911 = vmatprep.subr.mxu0 %v2394
    %2912 = vmatpush2.msra.mxu0 %v2393
    %2913 = vmatprep.subr.mxu0 %v2387
    %2914 = vmatpush2.msra.mxu0 %v2386
    %2915 = vmatprep.subr.mxu0 %v2380
    %2916 = vmatpush2.msra.mxu0 %v2379
    %2917 = vmatprep.subr.mxu0 %v2373
    %2918 = vmatpush2.msra.mxu0 %v2372
    %2919 = vmatprep.subr.mxu0 %v2366
    %2920 = vmatpush2.msra.mxu0 %v2365
    %2921 = vmatprep.subr.mxu0 %v2359
    %2922 = vmatpush2.msra.mxu0 %v2358
    %2923 = vmatprep.subr.mxu0 %v2352
    %2924 = vmatpush2.msra.mxu0 %v2351
    %2925 = vmatprep.subr.mxu0 %v2345
    %2926 = vmatpush2.msra.mxu0 %v2344
    %2927 = vmatprep.subr.mxu0 %v2338
    %2928 = vmatpush2.msra.mxu0 %v2337
    %2929 = vmatprep.subr.mxu0 %v2331
    %2930 = vmatpush2.msra.mxu0 %v2330
    %2931 = vmatprep.subr.mxu0 %v2324
    %2932 = vmatpush2.msra.mxu0 %v2323
    %2933 = vmatprep.mubr.f32.mxu0 %v2181
    %2934 = vmatmul.mubr.f32.gmra.mxu0 %v2178
    %v2935 = vpop.f32.mrf.mxu0
    %v2936 = vadd.f32 0.0, %v2935
    %v2937 = vpop.f32.mrf.mxu0
    %v2938 = vadd.f32 0.0, %v2937
    %2939 = vmatprep.mubr.f32.mxu0 %v2193
    %2940 = vmatmul.mubr.f32.gmra.mxu0 %v2190
    %v2941 = vpop.f32.mrf.mxu0
    %v2942 = vadd.f32 0.0, %v2941
    %v2943 = vpop.f32.mrf.mxu0
    %v2944 = vadd.f32 0.0, %v2943
    %2945 = vdwg.mxu0
    %2946 = vmatprep.subr.mxu0 %v2541
    %2947 = vmatpush1.msra.mxu0 %v2540
    %2948 = vmatprep.subr.mxu0 %v2534
    %2949 = vmatpush1.msra.mxu0 %v2533
    %2950 = vmatprep.subr.mxu0 %v2527
    %2951 = vmatpush1.msra.mxu0 %v2526
    %2952 = vmatprep.subr.mxu0 %v2520
    %2953 = vmatpush1.msra.mxu0 %v2519
    %2954 = vmatprep.subr.mxu0 %v2513
    %2955 = vmatpush1.msra.mxu0 %v2512
    %2956 = vmatprep.subr.mxu0 %v2506
    %2957 = vmatpush1.msra.mxu0 %v2505
    %2958 = vmatprep.subr.mxu0 %v2499
    %2959 = vmatpush1.msra.mxu0 %v2498
    %2960 = vmatprep.subr.mxu0 %v2492
    %2961 = vmatpush1.msra.mxu0 %v2491
    %2962 = vmatprep.subr.mxu0 %v2485
    %2963 = vmatpush1.msra.mxu0 %v2484
    %2964 = vmatprep.subr.mxu0 %v2478
    %2965 = vmatpush1.msra.mxu0 %v2477
    %2966 = vmatprep.subr.mxu0 %v2471
    %2967 = vmatpush1.msra.mxu0 %v2470
    %2968 = vmatprep.subr.mxu0 %v2464
    %2969 = vmatpush1.msra.mxu0 %v2463
    %2970 = vmatprep.subr.mxu0 %v2457
    %2971 = vmatpush1.msra.mxu0 %v2456
    %2972 = vmatprep.subr.mxu0 %v2450
    %2973 = vmatpush1.msra.mxu0 %v2449
    %2974 = vmatprep.subr.mxu0 %v2443
    %2975 = vmatpush1.msra.mxu0 %v2442
    %2976 = vmatprep.subr.mxu0 %v2436
    %2977 = vmatpush1.msra.mxu0 %v2435
    %2978 = vmatprep.subr.mxu0 0.0
    %2979 = vmatpush2.msra.mxu0 0.0
    %2980 = vmatprep.subr.mxu0 0.0
    %2981 = vmatpush2.msra.mxu0 0.0
    %2982 = vmatprep.subr.mxu0 0.0
    %2983 = vmatpush2.msra.mxu0 0.0
    %2984 = vmatprep.subr.mxu0 0.0
    %2985 = vmatpush2.msra.mxu0 0.0
    %2986 = vmatprep.subr.mxu0 0.0
    %2987 = vmatpush2.msra.mxu0 0.0
    %2988 = vmatprep.subr.mxu0 0.0
    %2989 = vmatpush2.msra.mxu0 0.0
    %2990 = vmatprep.subr.mxu0 0.0
    %2991 = vmatpush2.msra.mxu0 0.0
    %2992 = vmatprep.subr.mxu0 0.0
    %2993 = vmatpush2.msra.mxu0 0.0
    %2994 = vmatprep.subr.mxu0 0.0
    %2995 = vmatpush2.msra.mxu0 0.0
    %2996 = vmatprep.subr.mxu0 0.0
    %2997 = vmatpush2.msra.mxu0 0.0
    %2998 = vmatprep.subr.mxu0 0.0
    %2999 = vmatpush2.msra.mxu0 0.0
    %3000 = vmatprep.subr.mxu0 0.0
    %3001 = vmatpush2.msra.mxu0 0.0
    %3002 = vmatprep.subr.mxu0 0.0
    %3003 = vmatpush2.msra.mxu0 0.0
    %3004 = vmatprep.subr.mxu0 0.0
    %3005 = vmatpush2.msra.mxu0 0.0
    %3006 = vmatprep.subr.mxu0 %v2555
    %3007 = vmatpush2.msra.mxu0 %v2554
    %3008 = vmatprep.subr.mxu0 %v2548
    %3009 = vmatpush2.msra.mxu0 %v2547
    %3010 = vmatprep.mubr.f32.mxu0 %v2557
    %3011 = vmatmul.mubr.f32.gmra.mxu0 %v2184
    %v3012 = vpop.f32.mrf.mxu0
    %v3013 = vadd.f32 %v2936, %v3012
    %v3014 = vpop.f32.mrf.mxu0
    %v3015 = vadd.f32 %v2938, %v3014
    %3016 = vmatprep.mubr.f32.mxu0 %v2559
    %3017 = vmatmul.mubr.f32.gmra.mxu0 %v2196
    %v3018 = vpop.f32.mrf.mxu0
    %v3019 = vadd.f32 %v2942, %v3018
    %v3020 = vpop.f32.mrf.mxu0
    %v3021 = vadd.f32 %v2944, %v3020
    %3022 = vdwg.mxu0
    %3023 = vmatprep.subr.mxu0 0.0
    %3024 = vmatpush1.msra.mxu0 %v2318
    %3025 = vmatprep.subr.mxu0 0.0
    %3026 = vmatpush1.msra.mxu0 %v2311
    %3027 = vmatprep.subr.mxu0 0.0
    %3028 = vmatpush1.msra.mxu0 %v2304
    %3029 = vmatprep.subr.mxu0 0.0
    %3030 = vmatpush1.msra.mxu0 %v2297
    %3031 = vmatprep.subr.mxu0 0.0
    %3032 = vmatpush1.msra.mxu0 %v2290
    %3033 = vmatprep.subr.mxu0 0.0
    %3034 = vmatpush1.msra.mxu0 %v2283
    %3035 = vmatprep.subr.mxu0 0.0
    %3036 = vmatpush1.msra.mxu0 %v2276
    %3037 = vmatprep.subr.mxu0 0.0
    %3038 = vmatpush1.msra.mxu0 %v2269
    %3039 = vmatprep.subr.mxu0 0.0
    %3040 = vmatpush1.msra.mxu0 %v2262
    %3041 = vmatprep.subr.mxu0 0.0
    %3042 = vmatpush1.msra.mxu0 %v2255
    %3043 = vmatprep.subr.mxu0 0.0
    %3044 = vmatpush1.msra.mxu0 %v2248
    %3045 = vmatprep.subr.mxu0 0.0
    %3046 = vmatpush1.msra.mxu0 %v2241
    %3047 = vmatprep.subr.mxu0 0.0
    %3048 = vmatpush1.msra.mxu0 %v2234
    %3049 = vmatprep.subr.mxu0 0.0
    %3050 = vmatpush1.msra.mxu0 %v2227
    %3051 = vmatprep.subr.mxu0 0.0
    %3052 = vmatpush1.msra.mxu0 %v2220
    %3053 = vmatprep.subr.mxu0 0.0
    %3054 = vmatpush1.msra.mxu0 %v2213
    %3055 = vmatprep.subr.mxu0 0.0
    %3056 = vmatpush2.msra.mxu0 %v2430
    %3057 = vmatprep.subr.mxu0 0.0
    %3058 = vmatpush2.msra.mxu0 %v2423
    %3059 = vmatprep.subr.mxu0 0.0
    %3060 = vmatpush2.msra.mxu0 %v2416
    %3061 = vmatprep.subr.mxu0 0.0
    %3062 = vmatpush2.msra.mxu0 %v2409
    %3063 = vmatprep.subr.mxu0 0.0
    %3064 = vmatpush2.msra.mxu0 %v2402
    %3065 = vmatprep.subr.mxu0 0.0
    %3066 = vmatpush2.msra.mxu0 %v2395
    %3067 = vmatprep.subr.mxu0 0.0
    %3068 = vmatpush2.msra.mxu0 %v2388
    %3069 = vmatprep.subr.mxu0 0.0
    %3070 = vmatpush2.msra.mxu0 %v2381
    %3071 = vmatprep.subr.mxu0 0.0
    %3072 = vmatpush2.msra.mxu0 %v2374
    %3073 = vmatprep.subr.mxu0 0.0
    %3074 = vmatpush2.msra.mxu0 %v2367
    %3075 = vmatprep.subr.mxu0 0.0
    %3076 = vmatpush2.msra.mxu0 %v2360
    %3077 = vmatprep.subr.mxu0 0.0
    %3078 = vmatpush2.msra.mxu0 %v2353
    %3079 = vmatprep.subr.mxu0 0.0
    %3080 = vmatpush2.msra.mxu0 %v2346
    %3081 = vmatprep.subr.mxu0 0.0
    %3082 = vmatpush2.msra.mxu0 %v2339
    %3083 = vmatprep.subr.mxu0 0.0
    %3084 = vmatpush2.msra.mxu0 %v2332
    %3085 = vmatprep.subr.mxu0 0.0
    %3086 = vmatpush2.msra.mxu0 %v2325
    %3087 = vmatprep.mubr.f32.mxu0 %v2181
    %3088 = vmatmul.mubr.f32.gmra.mxu0 %v2178
    %v3089 = vpop.f32.mrf.mxu0
    %v3090 = vadd.f32 0.0, %v3089
    %v3091 = vpop.f32.mrf.mxu0
    %3092 = vmatprep.mubr.f32.mxu0 %v2193
    %3093 = vmatmul.mubr.f32.gmra.mxu0 %v2190
    %v3094 = vpop.f32.mrf.mxu0
    %v3095 = vadd.f32 0.0, %v3094
    %v3096 = vpop.f32.mrf.mxu0
    %3097 = vdwg.mxu0
    %3098 = vmatprep.subr.mxu0 0.0
    %3099 = vmatpush1.msra.mxu0 %v2542
    %3100 = vmatprep.subr.mxu0 0.0
    %3101 = vmatpush1.msra.mxu0 %v2535
    %3102 = vmatprep.subr.mxu0 0.0
    %3103 = vmatpush1.msra.mxu0 %v2528
    %3104 = vmatprep.subr.mxu0 0.0
    %3105 = vmatpush1.msra.mxu0 %v2521
    %3106 = vmatprep.subr.mxu0 0.0
    %3107 = vmatpush1.msra.mxu0 %v2514
    %3108 = vmatprep.subr.mxu0 0.0
    %3109 = vmatpush1.msra.mxu0 %v2507
    %3110 = vmatprep.subr.mxu0 0.0
    %3111 = vmatpush1.msra.mxu0 %v2500
    %3112 = vmatprep.subr.mxu0 0.0
    %3113 = vmatpush1.msra.mxu0 %v2493
    %3114 = vmatprep.subr.mxu0 0.0
    %3115 = vmatpush1.msra.mxu0 %v2486
    %3116 = vmatprep.subr.mxu0 0.0
    %3117 = vmatpush1.msra.mxu0 %v2479
    %3118 = vmatprep.subr.mxu0 0.0
    %3119 = vmatpush1.msra.mxu0 %v2472
    %3120 = vmatprep.subr.mxu0 0.0
    %3121 = vmatpush1.msra.mxu0 %v2465
    %3122 = vmatprep.subr.mxu0 0.0
    %3123 = vmatpush1.msra.mxu0 %v2458
    %3124 = vmatprep.subr.mxu0 0.0
    %3125 = vmatpush1.msra.mxu0 %v2451
    %3126 = vmatprep.subr.mxu0 0.0
    %3127 = vmatpush1.msra.mxu0 %v2444
    %3128 = vmatprep.subr.mxu0 0.0
    %3129 = vmatpush1.msra.mxu0 %v2437
    %3130 = vmatprep.subr.mxu0 0.0
    %3131 = vmatpush2.msra.mxu0 0.0
    %3132 = vmatprep.subr.mxu0 0.0
    %3133 = vmatpush2.msra.mxu0 0.0
    %3134 = vmatprep.subr.mxu0 0.0
    %3135 = vmatpush2.msra.mxu0 0.0
    %3136 = vmatprep.subr.mxu0 0.0
    %3137 = vmatpush2.msra.mxu0 0.0
    %3138 = vmatprep.subr.mxu0 0.0
    %3139 = vmatpush2.msra.mxu0 0.0
    %3140 = vmatprep.subr.mxu0 0.0
    %3141 = vmatpush2.msra.mxu0 0.0
    %3142 = vmatprep.subr.mxu0 0.0
    %3143 = vmatpush2.msra.mxu0 0.0
    %3144 = vmatprep.subr.mxu0 0.0
    %3145 = vmatpush2.msra.mxu0 0.0
    %3146 = vmatprep.subr.mxu0 0.0
    %3147 = vmatpush2.msra.mxu0 0.0
    %3148 = vmatprep.subr.mxu0 0.0
    %3149 = vmatpush2.msra.mxu0 0.0
    %3150 = vmatprep.subr.mxu0 0.0
    %3151 = vmatpush2.msra.mxu0 0.0
    %3152 = vmatprep.subr.mxu0 0.0
    %3153 = vmatpush2.msra.mxu0 0.0
    %3154 = vmatprep.subr.mxu0 0.0
    %3155 = vmatpush2.msra.mxu0 0.0
    %3156 = vmatprep.subr.mxu0 0.0
    %3157 = vmatpush2.msra.mxu0 0.0
    %3158 = vmatprep.subr.mxu0 0.0
    %3159 = vmatpush2.msra.mxu0 %v2556
    %3160 = vmatprep.subr.mxu0 0.0
    %3161 = vmatpush2.msra.mxu0 %v2549
    %3162 = vmatprep.mubr.f32.mxu0 %v2557
    %3163 = vmatmul.mubr.f32.gmra.mxu0 %v2184
    %v3164 = vpop.f32.mrf.mxu0
    %v3165 = vadd.f32 %v3090, %v3164
    %v3166 = vpop.f32.mrf.mxu0
    %3167 = vmatprep.mubr.f32.mxu0 %v2559
    %3168 = vmatmul.mubr.f32.gmra.mxu0 %v2196
    %v3169 = vpop.f32.mrf.mxu0
    %v3170 = vadd.f32 %v3095, %v3169
    %v3171 = vpop.f32.mrf.mxu0
    %3172 = vdwg.mxu0
    %v3173 = vadd.f32 %v1675, %v2705
    %v3174 = vadd.f32 %v1677, %v2707
    %v3175 = vadd.f32 %v1829, %v2859
    %v3176 = vadd.f32 %v1831, %v2861
    %v3177 = vadd.f32 %v1983, %v3013
    %v3178 = vadd.f32 %v1985, %v3015
    %v3179 = vadd.f32 %v2135, %v3165
    %v3180 = vadd.f32 %v1681, %v2711
    %v3181 = vadd.f32 %v1683, %v2713
    %v3182 = vadd.f32 %v1835, %v2865
    %v3183 = vadd.f32 %v1837, %v2867
    %v3184 = vadd.f32 %v1989, %v3019
    %v3185 = vadd.f32 %v1991, %v3021
    %v3186 = vadd.f32 %v2140, %v3170
    %v3187 = vadd.f32 %v3173, %v3180
    %v3188 = vrot.slane %v3187, 4
    %v3189 = vadd.f32 %v3187, %v3188
    %v3190 = vrot.slane %v3189, 2
    %v3191 = vadd.f32 %v3189, %v3190
    %v3192 = vrot.slane %v3191, 1
    %v3193 = vadd.f32 %v3191, %v3192
    %v3194 = vadd.f32 %v3174, %v3181
    %v3195 = vrot.slane %v3194, 4
    %v3196 = vadd.f32 %v3194, %v3195
    %v3197 = vrot.slane %v3196, 2
    %v3198 = vadd.f32 %v3196, %v3197
    %v3199 = vrot.slane %v3198, 1
    %v3200 = vadd.f32 %v3198, %v3199
    %v3201 = vadd.f32 %v3175, %v3182
    %v3202 = vrot.slane %v3201, 4
    %v3203 = vadd.f32 %v3201, %v3202
    %v3204 = vrot.slane %v3203, 2
    %v3205 = vadd.f32 %v3203, %v3204
    %v3206 = vrot.slane %v3205, 1
    %v3207 = vadd.f32 %v3205, %v3206
    %v3208 = vadd.f32 %v3176, %v3183
    %v3209 = vrot.slane %v3208, 4
    %v3210 = vadd.f32 %v3208, %v3209
    %v3211 = vrot.slane %v3210, 2
    %v3212 = vadd.f32 %v3210, %v3211
    %v3213 = vrot.slane %v3212, 1
    %v3214 = vadd.f32 %v3212, %v3213
    %v3215 = vadd.f32 %v3177, %v3184
    %v3216 = vrot.slane %v3215, 4
    %v3217 = vadd.f32 %v3215, %v3216
    %v3218 = vrot.slane %v3217, 2
    %v3219 = vadd.f32 %v3217, %v3218
    %v3220 = vrot.slane %v3219, 1
    %v3221 = vadd.f32 %v3219, %v3220
    %v3222 = vadd.f32 %v3178, %v3185
    %v3223 = vrot.slane %v3222, 4
    %v3224 = vadd.f32 %v3222, %v3223
    %v3225 = vrot.slane %v3224, 2
    %v3226 = vadd.f32 %v3224, %v3225
    %v3227 = vrot.slane %v3226, 1
    %v3228 = vadd.f32 %v3226, %v3227
    %vm3229 = vcmask 261120
    %v3230 = vsel %vm3229, %v3179, 0.0
    %v3231 = vsel %vm3229, %v3186, 0.0
    %v3232 = vadd.f32 %v3230, %v3231
    %v3233 = vrot.slane %v3232, 4
    %v3234 = vadd.f32 %v3232, %v3233
    %v3235 = vrot.slane %v3234, 2
    %v3236 = vadd.f32 %v3234, %v3235
    %v3237 = vrot.slane %v3236, 1
    %v3238 = vadd.f32 %v3236, %v3237
    %v3239 = vmul.f32 %v3173, %v3173
    %v3240 = vmul.f32 %v3174, %v3174
    %v3241 = vmul.f32 %v3175, %v3175
    %v3242 = vmul.f32 %v3176, %v3176
    %v3243 = vmul.f32 %v3177, %v3177
    %v3244 = vmul.f32 %v3178, %v3178
    %v3245 = vmul.f32 %v3179, %v3179
    %v3246 = vmul.f32 %v3180, %v3180
    %v3247 = vmul.f32 %v3181, %v3181
    %v3248 = vmul.f32 %v3182, %v3182
    %v3249 = vmul.f32 %v3183, %v3183
    %v3250 = vmul.f32 %v3184, %v3184
    %v3251 = vmul.f32 %v3185, %v3185
    %v3252 = vmul.f32 %v3186, %v3186
    %v3253 = vadd.f32 %v3239, %v3246
    %v3254 = vrot.slane %v3253, 4
    %v3255 = vadd.f32 %v3253, %v3254
    %v3256 = vrot.slane %v3255, 2
    %v3257 = vadd.f32 %v3255, %v3256
    %v3258 = vrot.slane %v3257, 1
    %v3259 = vadd.f32 %v3257, %v3258
    %v3260 = vadd.f32 %v3240, %v3247
    %v3261 = vrot.slane %v3260, 4
    %v3262 = vadd.f32 %v3260, %v3261
    %v3263 = vrot.slane %v3262, 2
    %v3264 = vadd.f32 %v3262, %v3263
    %v3265 = vrot.slane %v3264, 1
    %v3266 = vadd.f32 %v3264, %v3265
    %v3267 = vadd.f32 %v3241, %v3248
    %v3268 = vrot.slane %v3267, 4
    %v3269 = vadd.f32 %v3267, %v3268
    %v3270 = vrot.slane %v3269, 2
    %v3271 = vadd.f32 %v3269, %v3270
    %v3272 = vrot.slane %v3271, 1
    %v3273 = vadd.f32 %v3271, %v3272
    %v3274 = vadd.f32 %v3242, %v3249
    %v3275 = vrot.slane %v3274, 4
    %v3276 = vadd.f32 %v3274, %v3275
    %v3277 = vrot.slane %v3276, 2
    %v3278 = vadd.f32 %v3276, %v3277
    %v3279 = vrot.slane %v3278, 1
    %v3280 = vadd.f32 %v3278, %v3279
    %v3281 = vadd.f32 %v3243, %v3250
    %v3282 = vrot.slane %v3281, 4
    %v3283 = vadd.f32 %v3281, %v3282
    %v3284 = vrot.slane %v3283, 2
    %v3285 = vadd.f32 %v3283, %v3284
    %v3286 = vrot.slane %v3285, 1
    %v3287 = vadd.f32 %v3285, %v3286
    %v3288 = vadd.f32 %v3244, %v3251
    %v3289 = vrot.slane %v3288, 4
    %v3290 = vadd.f32 %v3288, %v3289
    %v3291 = vrot.slane %v3290, 2
    %v3292 = vadd.f32 %v3290, %v3291
    %v3293 = vrot.slane %v3292, 1
    %v3294 = vadd.f32 %v3292, %v3293
    %v3295 = vsel %vm3229, %v3245, 0.0
    %v3296 = vsel %vm3229, %v3252, 0.0
    %v3297 = vadd.f32 %v3295, %v3296
    %v3298 = vrot.slane %v3297, 4
    %v3299 = vadd.f32 %v3297, %v3298
    %v3300 = vrot.slane %v3299, 2
    %v3301 = vadd.f32 %v3299, %v3300
    %v3302 = vrot.slane %v3301, 1
    %v3303 = vadd.f32 %v3301, %v3302
    %vm3304 = vcmask 1040384
    %v3305 = vsel %vm3304, %v3193, %v3259
    %v3306 = vsel %vm3304, %v3200, %v3266
    %v3307 = vsel %vm3304, %v3207, %v3273
    %v3308 = vsel %vm3304, %v3214, %v3280
    %v3309 = vsel %vm3304, %v3221, %v3287
    %v3310 = vsel %vm3304, %v3228, %v3294
    %v3311 = vsel %vm3304, %v3238, %v3303
    %v3312 = vld [vmem:[%s4] sm:$0xff]
    %v3313 = vld [vmem:[%s4 + $0x8] sm:$0xff]
    %v3314 = vld [vmem:[%s4 + $0x10] sm:$0xff]
    %v3315 = vld [vmem:[%s4 + $0x18] sm:$0xff]
    %v3316 = vld [vmem:[%s4 + $0x20] sm:$0xff]
    %v3317 = vld [vmem:[%s4 + $0x28] sm:$0xff]
    %v3318 = vld [vmem:[%s4 + $0x30] sm:$0xff]
    %v3319 = vld [vmem:[%s4 + $0x38] sm:$0xff]
    %v3320 = vld [vmem:[%s4 + $0x40] sm:$0xff]
    %v3321 = vld [vmem:[%s4 + $0x48] sm:$0xff]
    %v3322 = vld [vmem:[%s4 + $0x50] sm:$0xff]
    %v3323 = vld [vmem:[%s4 + $0x58] sm:$0xff]
    %v3324 = vld [vmem:[%s4 + $0x60] sm:$0xff]
    %v3325 = vld [vmem:[%s4 + $0x68] sm:$0xff]
    %v3326 = vld [vmem:[%s4 + $0x70] sm:$0xff]
    %v3327 = vld [vmem:[%s4 + $0x78] sm:$0xff]
    %v3328 = vld [vmem:[%s4 + $0x80] sm:$0xff]
    %v3329 = vld [vmem:[%s4 + $0x88] sm:$0xff]
    %v3330 = vld [vmem:[%s4 + $0x90] sm:$0xff]
    %v3331 = vld [vmem:[%s4 + $0x98] sm:$0xff]
    %v3332 = vld [vmem:[%s4 + $0xa0] sm:$0xff]
    %v3333 = vld [vmem:[%s4 + $0xa8] sm:$0xff]
    %v3334 = vld [vmem:[%s4 + $0xb0] sm:$0xff]
    %v3335 = vld [vmem:[%s4 + $0xb8] sm:$0xff]
    %v3336 = vld [vmem:[%s4 + $0xc0] sm:$0xff]
    %v3337 = vld [vmem:[%s4 + $0xc8] sm:$0xff]
    %v3338 = vld [vmem:[%s4 + $0xd0] sm:$0xff]
    %v3339 = vld [vmem:[%s4 + $0xd8] sm:$0xff]
    %v3340 = vld [vmem:[%s4 + $0xe0] sm:$0xff]
    %v3341 = vld [vmem:[%s4 + $0xe8] sm:$0xff]
    %v3342 = vld [vmem:[%s4 + $0xf0] sm:$0xff]
    %v3343 = vld [vmem:[%s4 + $0xf8] sm:$0xff]
    %v3344 = vld [vmem:[%s4 + $0x100] sm:$0xff]
    %v3345 = vld [vmem:[%s4 + $0x108] sm:$0xff]
    %v3346 = vld [vmem:[%s4 + $0x110] sm:$0xff]
    %v3347 = vld [vmem:[%s4 + $0x118] sm:$0xff]
    %v3348 = vld [vmem:[%s4 + $0x120] sm:$0xff]
    %v3349 = vld [vmem:[%s4 + $0x128] sm:$0xff]
    %v3350 = vld [vmem:[%s4 + $0x130] sm:$0xff]
    %v3351 = vld [vmem:[%s4 + $0x138] sm:$0xff]
    %v3352 = vld [vmem:[%s4 + $0x140] sm:$0xff]
    %v3353 = vld [vmem:[%s4 + $0x148] sm:$0xff]
    %v3354 = vld [vmem:[%s4 + $0x150] sm:$0xff]
    %v3355 = vld [vmem:[%s4 + $0x158] sm:$0xff]
    %v3356 = vld [vmem:[%s4 + $0x160] sm:$0xff]
    %v3357 = vld [vmem:[%s4 + $0x168] sm:$0xff]
    %v3358 = vld [vmem:[%s4 + $0x170] sm:$0xff]
    %v3359 = vld [vmem:[%s4 + $0x178] sm:$0xff]
    %v3360 = vld [vmem:[%s4 + $0x180] sm:$0xff]
    %v3361 = vld [vmem:[%s4 + $0x188] sm:$0xff]
    %v3362 = vld [vmem:[%s4 + $0x190] sm:$0xff]
    %v3363 = vld [vmem:[%s4 + $0x198] sm:$0xff]
    %v3364 = vld [vmem:[%s4 + $0x1a0] sm:$0xff]
    %v3365 = vld [vmem:[%s4 + $0x1a8] sm:$0xff]
    %v3366 = vld [vmem:[%s4 + $0x1b0] sm:$0xff]
    %v3367 = vld [vmem:[%s4 + $0x1b8] sm:$0xff]
    %v3368 = vld [vmem:[%s4 + $0x1c0] sm:$0xff]
    %v3369 = vld [vmem:[%s4 + $0x1c8] sm:$0xff]
    %v3370 = vld [vmem:[%s4 + $0x1d0] sm:$0xff]
    %v3371 = vld [vmem:[%s4 + $0x1d8] sm:$0xff]
    %v3372 = vld [vmem:[%s4 + $0x1e0] sm:$0xff]
    %v3373 = vld [vmem:[%s4 + $0x1e8] sm:$0xff]
    %v3374 = vld [vmem:[%s4 + $0x1f0] sm:$0xff]
    %v3375 = vld [vmem:[%s4 + $0x1f8] sm:$0xff]
    %v3376 = vld [vmem:[%s4 + $0x200] sm:$0xff]
    %v3377 = vld [vmem:[%s4 + $0x208] sm:$0xff]
    %v3378 = vld [vmem:[%s4 + $0x210] sm:$0xff]
    %v3379 = vld [vmem:[%s4 + $0x218] sm:$0xff]
    %v3380 = vld [vmem:[%s4 + $0x220] sm:$0xff]
    %v3381 = vld [vmem:[%s4 + $0x228] sm:$0xff]
    %v3382 = vld [vmem:[%s4 + $0x230] sm:$0xff]
    %v3383 = vld [vmem:[%s4 + $0x238] sm:$0xff]
    %v3384 = vld [vmem:[%s4 + $0x240] sm:$0xff]
    %v3385 = vld [vmem:[%s4 + $0x248] sm:$0xff]
    %v3386 = vld [vmem:[%s4 + $0x250] sm:$0xff]
    %v3387 = vld [vmem:[%s4 + $0x258] sm:$0xff]
    %v3388 = vld [vmem:[%s4 + $0x260] sm:$0xff]
    %v3389 = vld [vmem:[%s4 + $0x268] sm:$0xff]
    %v3390 = vld [vmem:[%s4 + $0x270] sm:$0xff]
    %v3391 = vld [vmem:[%s4 + $0x278] sm:$0xff]
    %v3392 = vld [vmem:[%s4 + $0x280] sm:$0xff]
    %v3393 = vld [vmem:[%s4 + $0x288] sm:$0xff]
    %v3394 = vld [vmem:[%s4 + $0x290] sm:$0xff]
    %v3395 = vld [vmem:[%s4 + $0x298] sm:$0xff]
    %v3396 = vld [vmem:[%s4 + $0x2a0] sm:$0xff]
    %v3397 = vld [vmem:[%s4 + $0x2a8] sm:$0xff]
    %v3398 = vld [vmem:[%s4 + $0x2b0] sm:$0xff]
    %v3399 = vld [vmem:[%s4 + $0x2b8] sm:$0xff]
    %v3400 = vld [vmem:[%s4 + $0x2c0] sm:$0xff]
    %v3401 = vld [vmem:[%s4 + $0x2c8] sm:$0xff]
    %v3402 = vld [vmem:[%s4 + $0x2d0] sm:$0xff]
    %v3403 = vld [vmem:[%s4 + $0x2d8] sm:$0xff]
    %v3404 = vld [vmem:[%s4 + $0x2e0] sm:$0xff]
    %v3405 = vld [vmem:[%s4 + $0x2e8] sm:$0xff]
    %v3406 = vld [vmem:[%s4 + $0x2f0] sm:$0xff]
    %v3407 = vld [vmem:[%s4 + $0x2f8] sm:$0xff]
    %v3408 = vld [vmem:[%s4 + $0x300] sm:$0xff]
    %v3409 = vld [vmem:[%s4 + $0x308] sm:$0xff]
    %v3410 = vld [vmem:[%s4 + $0x310] sm:$0xff]
    %v3411 = vld [vmem:[%s4 + $0x318] sm:$0xff]
    %v3413 = vsel %vm3229, %v3311, 0
    %3415 = vmatprep.subr.mxu0 0.0
    %3416 = vmatpush1.msra.mxu0 %v3327
    %3417 = vmatprep.subr.mxu0 0.0
    %3418 = vmatpush1.msra.mxu0 %v3326
    %3419 = vmatprep.subr.mxu0 0.0
    %3420 = vmatpush1.msra.mxu0 %v3325
    %3421 = vmatprep.subr.mxu0 0.0
    %3422 = vmatpush1.msra.mxu0 %v3324
    %3423 = vmatprep.subr.mxu0 0.0
    %3424 = vmatpush1.msra.mxu0 %v3323
    %3425 = vmatprep.subr.mxu0 0.0
    %3426 = vmatpush1.msra.mxu0 %v3322
    %3427 = vmatprep.subr.mxu0 0.0
    %3428 = vmatpush1.msra.mxu0 %v3321
    %3429 = vmatprep.subr.mxu0 0.0
    %3430 = vmatpush1.msra.mxu0 %v3320
    %3431 = vmatprep.subr.mxu0 0.0
    %3432 = vmatpush1.msra.mxu0 %v3319
    %3433 = vmatprep.subr.mxu0 0.0
    %3434 = vmatpush1.msra.mxu0 %v3318
    %3435 = vmatprep.subr.mxu0 0.0
    %3436 = vmatpush1.msra.mxu0 %v3317
    %3437 = vmatprep.subr.mxu0 0.0
    %3438 = vmatpush1.msra.mxu0 %v3316
    %3439 = vmatprep.subr.mxu0 0.0
    %3440 = vmatpush1.msra.mxu0 %v3315
    %3441 = vmatprep.subr.mxu0 0.0
    %3442 = vmatpush1.msra.mxu0 %v3314
    %3443 = vmatprep.subr.mxu0 0.0
    %3444 = vmatpush1.msra.mxu0 %v3313
    %3445 = vmatprep.subr.mxu0 0.0
    %3446 = vmatpush1.msra.mxu0 %v3312
    %3447 = vmatprep.subr.mxu0 0.0
    %3448 = vmatpush2.msra.mxu0 %v3343
    %3449 = vmatprep.subr.mxu0 0.0
    %3450 = vmatpush2.msra.mxu0 %v3342
    %3451 = vmatprep.subr.mxu0 0.0
    %3452 = vmatpush2.msra.mxu0 %v3341
    %3453 = vmatprep.subr.mxu0 0.0
    %3454 = vmatpush2.msra.mxu0 %v3340
    %3455 = vmatprep.subr.mxu0 0.0
    %3456 = vmatpush2.msra.mxu0 %v3339
    %3457 = vmatprep.subr.mxu0 0.0
    %3458 = vmatpush2.msra.mxu0 %v3338
    %3459 = vmatprep.subr.mxu0 0.0
    %3460 = vmatpush2.msra.mxu0 %v3337
    %3461 = vmatprep.subr.mxu0 0.0
    %3462 = vmatpush2.msra.mxu0 %v3336
    %3463 = vmatprep.subr.mxu0 0.0
    %3464 = vmatpush2.msra.mxu0 %v3335
    %3465 = vmatprep.subr.mxu0 0.0
    %3466 = vmatpush2.msra.mxu0 %v3334
    %3467 = vmatprep.subr.mxu0 0.0
    %3468 = vmatpush2.msra.mxu0 %v3333
    %3469 = vmatprep.subr.mxu0 0.0
    %3470 = vmatpush2.msra.mxu0 %v3332
    %3471 = vmatprep.subr.mxu0 0.0
    %3472 = vmatpush2.msra.mxu0 %v3331
    %3473 = vmatprep.subr.mxu0 0.0
    %3474 = vmatpush2.msra.mxu0 %v3330
    %3475 = vmatprep.subr.mxu0 0.0
    %3476 = vmatpush2.msra.mxu0 %v3329
    %3477 = vmatprep.subr.mxu0 0.0
    %3478 = vmatpush2.msra.mxu0 %v3328
    %3479 = vmatprep.mubr.f32.mxu0 %v3306
    %3480 = vmatmul.mubr.f32.gmra.mxu0 %v3305
    %v3481 = vpop.f32.mrf.mxu0
    %v3482 = vadd.f32 0.0, %v3481
    %v3483 = vpop.f32.mrf.mxu0
    %3484 = vdwg.mxu0
    %3485 = vmatprep.subr.mxu0 0.0
    %3486 = vmatpush1.msra.mxu0 %v3359
    %3487 = vmatprep.subr.mxu0 0.0
    %3488 = vmatpush1.msra.mxu0 %v3358
    %3489 = vmatprep.subr.mxu0 0.0
    %3490 = vmatpush1.msra.mxu0 %v3357
    %3491 = vmatprep.subr.mxu0 0.0
    %3492 = vmatpush1.msra.mxu0 %v3356
    %3493 = vmatprep.subr.mxu0 0.0
    %3494 = vmatpush1.msra.mxu0 %v3355
    %3495 = vmatprep.subr.mxu0 0.0
    %3496 = vmatpush1.msra.mxu0 %v3354
    %3497 = vmatprep.subr.mxu0 0.0
    %3498 = vmatpush1.msra.mxu0 %v3353
    %3499 = vmatprep.subr.mxu0 0.0
    %3500 = vmatpush1.msra.mxu0 %v3352
    %3501 = vmatprep.subr.mxu0 0.0
    %3502 = vmatpush1.msra.mxu0 %v3351
    %3503 = vmatprep.subr.mxu0 0.0
    %3504 = vmatpush1.msra.mxu0 %v3350
    %3505 = vmatprep.subr.mxu0 0.0
    %3506 = vmatpush1.msra.mxu0 %v3349
    %3507 = vmatprep.subr.mxu0 0.0
    %3508 = vmatpush1.msra.mxu0 %v3348
    %3509 = vmatprep.subr.mxu0 0.0
    %3510 = vmatpush1.msra.mxu0 %v3347
    %3511 = vmatprep.subr.mxu0 0.0
    %3512 = vmatpush1.msra.mxu0 %v3346
    %3513 = vmatprep.subr.mxu0 0.0
    %3514 = vmatpush1.msra.mxu0 %v3345
    %3515 = vmatprep.subr.mxu0 0.0
    %3516 = vmatpush1.msra.mxu0 %v3344
    %3517 = vmatprep.subr.mxu0 0.0
    %3518 = vmatpush2.msra.mxu0 %v3375
    %3519 = vmatprep.subr.mxu0 0.0
    %3520 = vmatpush2.msra.mxu0 %v3374
    %3521 = vmatprep.subr.mxu0 0.0
    %3522 = vmatpush2.msra.mxu0 %v3373
    %3523 = vmatprep.subr.mxu0 0.0
    %3524 = vmatpush2.msra.mxu0 %v3372
    %3525 = vmatprep.subr.mxu0 0.0
    %3526 = vmatpush2.msra.mxu0 %v3371
    %3527 = vmatprep.subr.mxu0 0.0
    %3528 = vmatpush2.msra.mxu0 %v3370
    %3529 = vmatprep.subr.mxu0 0.0
    %3530 = vmatpush2.msra.mxu0 %v3369
    %3531 = vmatprep.subr.mxu0 0.0
    %3532 = vmatpush2.msra.mxu0 %v3368
    %3533 = vmatprep.subr.mxu0 0.0
    %3534 = vmatpush2.msra.mxu0 %v3367
    %3535 = vmatprep.subr.mxu0 0.0
    %3536 = vmatpush2.msra.mxu0 %v3366
    %3537 = vmatprep.subr.mxu0 0.0
    %3538 = vmatpush2.msra.mxu0 %v3365
    %3539 = vmatprep.subr.mxu0 0.0
    %3540 = vmatpush2.msra.mxu0 %v3364
    %3541 = vmatprep.subr.mxu0 0.0
    %3542 = vmatpush2.msra.mxu0 %v3363
    %3543 = vmatprep.subr.mxu0 0.0
    %3544 = vmatpush2.msra.mxu0 %v3362
    %3545 = vmatprep.subr.mxu0 0.0
    %3546 = vmatpush2.msra.mxu0 %v3361
    %3547 = vmatprep.subr.mxu0 0.0
    %3548 = vmatpush2.msra.mxu0 %v3360
    %3549 = vmatprep.mubr.f32.mxu0 %v3308
    %3550 = vmatmul.mubr.f32.gmra.mxu0 %v3307
    %v3551 = vpop.f32.mrf.mxu0
    %v3552 = vadd.f32 %v3482, %v3551
    %v3553 = vpop.f32.mrf.mxu0
    %3554 = vdwg.mxu0
    %3555 = vmatprep.subr.mxu0 0.0
    %3556 = vmatpush1.msra.mxu0 %v3391
    %3557 = vmatprep.subr.mxu0 0.0
    %3558 = vmatpush1.msra.mxu0 %v3390
    %3559 = vmatprep.subr.mxu0 0.0
    %3560 = vmatpush1.msra.mxu0 %v3389
    %3561 = vmatprep.subr.mxu0 0.0
    %3562 = vmatpush1.msra.mxu0 %v3388
    %3563 = vmatprep.subr.mxu0 0.0
    %3564 = vmatpush1.msra.mxu0 %v3387
    %3565 = vmatprep.subr.mxu0 0.0
    %3566 = vmatpush1.msra.mxu0 %v3386
    %3567 = vmatprep.subr.mxu0 0.0
    %3568 = vmatpush1.msra.mxu0 %v3385
    %3569 = vmatprep.subr.mxu0 0.0
    %3570 = vmatpush1.msra.mxu0 %v3384
    %3571 = vmatprep.subr.mxu0 0.0
    %3572 = vmatpush1.msra.mxu0 %v3383
    %3573 = vmatprep.subr.mxu0 0.0
    %3574 = vmatpush1.msra.mxu0 %v3382
    %3575 = vmatprep.subr.mxu0 0.0
    %3576 = vmatpush1.msra.mxu0 %v3381
    %3577 = vmatprep.subr.mxu0 0.0
    %3578 = vmatpush1.msra.mxu0 %v3380
    %3579 = vmatprep.subr.mxu0 0.0
    %3580 = vmatpush1.msra.mxu0 %v3379
    %3581 = vmatprep.subr.mxu0 0.0
    %3582 = vmatpush1.msra.mxu0 %v3378
    %3583 = vmatprep.subr.mxu0 0.0
    %3584 = vmatpush1.msra.mxu0 %v3377
    %3585 = vmatprep.subr.mxu0 0.0
    %3586 = vmatpush1.msra.mxu0 %v3376
    %3587 = vmatprep.subr.mxu0 0.0
    %3588 = vmatpush2.msra.mxu0 %v3407
    %3589 = vmatprep.subr.mxu0 0.0
    %3590 = vmatpush2.msra.mxu0 %v3406
    %3591 = vmatprep.subr.mxu0 0.0
    %3592 = vmatpush2.msra.mxu0 %v3405
    %3593 = vmatprep.subr.mxu0 0.0
    %3594 = vmatpush2.msra.mxu0 %v3404
    %3595 = vmatprep.subr.mxu0 0.0
    %3596 = vmatpush2.msra.mxu0 %v3403
    %3597 = vmatprep.subr.mxu0 0.0
    %3598 = vmatpush2.msra.mxu0 %v3402
    %3599 = vmatprep.subr.mxu0 0.0
    %3600 = vmatpush2.msra.mxu0 %v3401
    %3601 = vmatprep.subr.mxu0 0.0
    %3602 = vmatpush2.msra.mxu0 %v3400
    %3603 = vmatprep.subr.mxu0 0.0
    %3604 = vmatpush2.msra.mxu0 %v3399
    %3605 = vmatprep.subr.mxu0 0.0
    %3606 = vmatpush2.msra.mxu0 %v3398
    %3607 = vmatprep.subr.mxu0 0.0
    %3608 = vmatpush2.msra.mxu0 %v3397
    %3609 = vmatprep.subr.mxu0 0.0
    %3610 = vmatpush2.msra.mxu0 %v3396
    %3611 = vmatprep.subr.mxu0 0.0
    %3612 = vmatpush2.msra.mxu0 %v3395
    %3613 = vmatprep.subr.mxu0 0.0
    %3614 = vmatpush2.msra.mxu0 %v3394
    %3615 = vmatprep.subr.mxu0 0.0
    %3616 = vmatpush2.msra.mxu0 %v3393
    %3617 = vmatprep.subr.mxu0 0.0
    %3618 = vmatpush2.msra.mxu0 %v3392
    %3619 = vmatprep.mubr.f32.mxu0 %v3310
    %3620 = vmatmul.mubr.f32.gmra.mxu0 %v3309
    %v3621 = vpop.f32.mrf.mxu0
    %v3622 = vadd.f32 %v3552, %v3621
    %v3623 = vpop.f32.mrf.mxu0
    %3624 = vdwg.mxu0
    %3625 = vmatprep.subr.mxu0 0.0
    %3626 = vmatpush1.msra.mxu0 0.0
    %3627 = vmatprep.subr.mxu0 0.0
    %3628 = vmatpush1.msra.mxu0 0.0
    %3629 = vmatprep.subr.mxu0 0.0
    %3630 = vmatpush1.msra.mxu0 0.0
    %3631 = vmatprep.subr.mxu0 0.0
    %3632 = vmatpush1.msra.mxu0 0.0
    %3633 = vmatprep.subr.mxu0 0.0
    %3634 = vmatpush1.msra.mxu0 0.0
    %3635 = vmatprep.subr.mxu0 0.0
    %3636 = vmatpush1.msra.mxu0 0.0
    %3637 = vmatprep.subr.mxu0 0.0
    %3638 = vmatpush1.msra.mxu0 0.0
    %3639 = vmatprep.subr.mxu0 0.0
    %3640 = vmatpush1.msra.mxu0 0.0
    %3641 = vmatprep.subr.mxu0 0.0
    %3642 = vmatpush1.msra.mxu0 0.0
    %3643 = vmatprep.subr.mxu0 0.0
    %3644 = vmatpush1.msra.mxu0 0.0
    %3645 = vmatprep.subr.mxu0 0.0
    %3646 = vmatpush1.msra.mxu0 0.0
    %3647 = vmatprep.subr.mxu0 0.0
    %3648 = vmatpush1.msra.mxu0 0.0
    %3649 = vmatprep.subr.mxu0 0.0
    %3650 = vmatpush1.msra.mxu0 %v3411
    %3651 = vmatprep.subr.mxu0 0.0
    %3652 = vmatpush1.msra.mxu0 %v3410
    %3653 = vmatprep.subr.mxu0 0.0
    %3654 = vmatpush1.msra.mxu0 %v3409
    %3655 = vmatprep.subr.mxu0 0.0
    %3656 = vmatpush1.msra.mxu0 %v3408
    %3657 = vmatprep.subr.mxu0 0.0
    %3658 = vmatpush2.msra.mxu0 0.0
    %3659 = vmatprep.subr.mxu0 0.0
    %3660 = vmatpush2.msra.mxu0 0.0
    %3661 = vmatprep.subr.mxu0 0.0
    %3662 = vmatpush2.msra.mxu0 0.0
    %3663 = vmatprep.subr.mxu0 0.0
    %3664 = vmatpush2.msra.mxu0 0.0
    %3665 = vmatprep.subr.mxu0 0.0
    %3666 = vmatpush2.msra.mxu0 0.0
    %3667 = vmatprep.subr.mxu0 0.0
    %3668 = vmatpush2.msra.mxu0 0.0
    %3669 = vmatprep.subr.mxu0 0.0
    %3670 = vmatpush2.msra.mxu0 0.0
    %3671 = vmatprep.subr.mxu0 0.0
    %3672 = vmatpush2.msra.mxu0 0.0
    %3673 = vmatprep.subr.mxu0 0.0
    %3674 = vmatpush2.msra.mxu0 0.0
    %3675 = vmatprep.subr.mxu0 0.0
    %3676 = vmatpush2.msra.mxu0 0.0
    %3677 = vmatprep.subr.mxu0 0.0
    %3678 = vmatpush2.msra.mxu0 0.0
    %3679 = vmatprep.subr.mxu0 0.0
    %3680 = vmatpush2.msra.mxu0 0.0
    %3681 = vmatprep.subr.mxu0 0.0
    %3682 = vmatpush2.msra.mxu0 0.0
    %3683 = vmatprep.subr.mxu0 0.0
    %3684 = vmatpush2.msra.mxu0 0.0
    %3685 = vmatprep.subr.mxu0 0.0
    %3686 = vmatpush2.msra.mxu0 0.0
    %3687 = vmatprep.subr.mxu0 0.0
    %3688 = vmatpush2.msra.mxu0 0.0
    %3689 = vmatprep.mubr.f32.mxu0 0.0
    %3690 = vmatmul.mubr.f32.gmra.mxu0 %v3413
    %v3691 = vpop.f32.mrf.mxu0
    %v3692 = vadd.f32 %v3622, %v3691
    %v3693 = vpop.f32.mrf.mxu0
    %3694 = vdwg.mxu0
    %v3695 = vmul.f32 %v3692, 0.0009765625
    %v3696 = vmul.f32 %v3695, %v3695
    %v3698 = vrot.slane %v3696, 7
    %v3700 = vsub.f32 %v3695, %v3698
    %v3701 = vld [vmem:[#allocation5] sm:$0x1]
    %v3702 = vadd.f32 %v3700, 1e-05
    %v3703 = vrsqrt.pop %v3702
    %v3706 = vunpack.c.l.s4 1966171168
    %v3707 = vunpack.c.0.s8 %v3706
    %v3708 = vlaneseq
    %v3709 = vshrl.u32 %v3708, 7
    %v3710 = vsub.s32 %v3707, %v3709
    %v3711 = vrot.slane %v3703, %v3710
    %v3712 = vcombine.high %v3711, %v3711
    %v3714 = vunpack.c.l.s4 1966171168
    %v3715 = vunpack.c.0.s8 %v3714
    %v3716 = vlaneseq
    %v3717 = vshrl.u32 %v3716, 7
    %v3718 = vsub.s32 %v3715, %v3717
    %v3719 = vrot.slane %v3712, %v3718
    %v3721 = vmul.f32 %v3701, %v3719
    %v3722 = vld [vmem:[#allocation7] sm:$0x1]
    %v3723 = vmul.f32 %v3695, %v3721
    %v3724 = vsub.f32 %v3722, %v3723
    %v3726 = vlaneseq
    %v3727 = vshrl.u32 %v3726, 7
    %v3728 = vsub.s32 0, %v3727
    %v3729 = vrot.slane %v3724, %v3728
    %v3731 = vsel %vm3304, %v3721, %v3729
    %v3732 = vld [vmem:[#allocation8] sm:$0xff]
    %v3733 = vld [vmem:[#allocation8 + $0x8] sm:$0xff]
    %v3734 = vld [vmem:[#allocation8 + $0x10] sm:$0xff]
    %v3735 = vld [vmem:[#allocation8 + $0x18] sm:$0xff]
    %v3736 = vld [vmem:[#allocation8 + $0x20] sm:$0xff]
    %v3737 = vld [vmem:[#allocation8 + $0x28] sm:$0xff]
    %v3738 = vld [vmem:[#allocation8 + $0x30] sm:$0xff]
    %vm3739 = vcmask 64512
    %v3741 = vsel %vm3739, %v3731, 0
    %3743 = vmatprep.subr.mxu0 0.0
    %3744 = vmatpush1.msra.mxu0 0.0
    %3745 = vmatprep.subr.mxu0 0.0
    %3746 = vmatpush1.msra.mxu0 0.0
    %3747 = vmatprep.subr.mxu0 0.0
    %3748 = vmatpush1.msra.mxu0 0.0
    %3749 = vmatprep.subr.mxu0 0.0
    %3750 = vmatpush1.msra.mxu0 0.0
    %3751 = vmatprep.subr.mxu0 0.0
    %3752 = vmatpush1.msra.mxu0 0.0
    %3753 = vmatprep.subr.mxu0 0.0
    %3754 = vmatpush1.msra.mxu0 0.0
    %3755 = vmatprep.subr.mxu0 0.0
    %3756 = vmatpush1.msra.mxu0 0.0
    %3757 = vmatprep.subr.mxu0 0.0
    %3758 = vmatpush1.msra.mxu0 0.0
    %3759 = vmatprep.subr.mxu0 0.0
    %3760 = vmatpush1.msra.mxu0 0.0
    %3761 = vmatprep.subr.mxu0 0.0
    %3762 = vmatpush1.msra.mxu0 0.0
    %3763 = vmatprep.subr.mxu0 0.0
    %3764 = vmatpush1.msra.mxu0 0.0
    %3765 = vmatprep.subr.mxu0 0.0
    %3766 = vmatpush1.msra.mxu0 0.0
    %3767 = vmatprep.subr.mxu0 0.0
    %3768 = vmatpush1.msra.mxu0 0.0
    %3769 = vmatprep.subr.mxu0 0.0
    %3770 = vmatpush1.msra.mxu0 0.0
    %3771 = vmatprep.subr.mxu0 0.0
    %3772 = vmatpush1.msra.mxu0 0.0
    %3773 = vmatprep.subr.mxu0 %v3733
    %3774 = vmatpush1.msra.mxu0 %v3732
    %3775 = vmatprep.subr.mxu0 0.0
    %3776 = vmatpush2.msra.mxu0 0.0
    %3777 = vmatprep.subr.mxu0 0.0
    %3778 = vmatpush2.msra.mxu0 0.0
    %3779 = vmatprep.subr.mxu0 0.0
    %3780 = vmatpush2.msra.mxu0 0.0
    %3781 = vmatprep.subr.mxu0 0.0
    %3782 = vmatpush2.msra.mxu0 0.0
    %3783 = vmatprep.subr.mxu0 0.0
    %3784 = vmatpush2.msra.mxu0 0.0
    %3785 = vmatprep.subr.mxu0 0.0
    %3786 = vmatpush2.msra.mxu0 0.0
    %3787 = vmatprep.subr.mxu0 0.0
    %3788 = vmatpush2.msra.mxu0 0.0
    %3789 = vmatprep.subr.mxu0 0.0
    %3790 = vmatpush2.msra.mxu0 0.0
    %3791 = vmatprep.subr.mxu0 0.0
    %3792 = vmatpush2.msra.mxu0 0.0
    %3793 = vmatprep.subr.mxu0 0.0
    %3794 = vmatpush2.msra.mxu0 0.0
    %3795 = vmatprep.subr.mxu0 0.0
    %3796 = vmatpush2.msra.mxu0 0.0
    %3797 = vmatprep.subr.mxu0 0.0
    %3798 = vmatpush2.msra.mxu0 0.0
    %3799 = vmatprep.subr.mxu0 0.0
    %3800 = vmatpush2.msra.mxu0 0.0
    %3801 = vmatprep.subr.mxu0 0.0
    %3802 = vmatpush2.msra.mxu0 0.0
    %3803 = vmatprep.subr.mxu0 0.0
    %3804 = vmatpush2.msra.mxu0 0.0
    %3805 = vmatprep.subr.mxu0 0.0
    %3806 = vmatpush2.msra.mxu0 0.0
    %3807 = vmatprep.mubr.f32.mxu0 0.0
    %3808 = vmatmul.mubr.f32.gmra.mxu0 %v3741
    %v3809 = vpop.f32.mrf.mxu0
    %v3810 = vadd.f32 0.0, %v3809
    %v3811 = vpop.f32.mrf.mxu0
    %v3812 = vadd.f32 0.0, %v3811
    %3813 = vdwg.mxu0
    %3814 = vmatprep.subr.mxu0 0.0
    %3815 = vmatpush1.msra.mxu0 0.0
    %3816 = vmatprep.subr.mxu0 0.0
    %3817 = vmatpush1.msra.mxu0 0.0
    %3818 = vmatprep.subr.mxu0 0.0
    %3819 = vmatpush1.msra.mxu0 0.0
    %3820 = vmatprep.subr.mxu0 0.0
    %3821 = vmatpush1.msra.mxu0 0.0
    %3822 = vmatprep.subr.mxu0 0.0
    %3823 = vmatpush1.msra.mxu0 0.0
    %3824 = vmatprep.subr.mxu0 0.0
    %3825 = vmatpush1.msra.mxu0 0.0
    %3826 = vmatprep.subr.mxu0 0.0
    %3827 = vmatpush1.msra.mxu0 0.0
    %3828 = vmatprep.subr.mxu0 0.0
    %3829 = vmatpush1.msra.mxu0 0.0
    %3830 = vmatprep.subr.mxu0 0.0
    %3831 = vmatpush1.msra.mxu0 0.0
    %3832 = vmatprep.subr.mxu0 0.0
    %3833 = vmatpush1.msra.mxu0 0.0
    %3834 = vmatprep.subr.mxu0 0.0
    %3835 = vmatpush1.msra.mxu0 0.0
    %3836 = vmatprep.subr.mxu0 0.0
    %3837 = vmatpush1.msra.mxu0 0.0
    %3838 = vmatprep.subr.mxu0 0.0
    %3839 = vmatpush1.msra.mxu0 0.0
    %3840 = vmatprep.subr.mxu0 0.0
    %3841 = vmatpush1.msra.mxu0 0.0
    %3842 = vmatprep.subr.mxu0 0.0
    %3843 = vmatpush1.msra.mxu0 0.0
    %3844 = vmatprep.subr.mxu0 %v3735
    %3845 = vmatpush1.msra.mxu0 %v3734
    %3846 = vmatprep.subr.mxu0 0.0
    %3847 = vmatpush2.msra.mxu0 0.0
    %3848 = vmatprep.subr.mxu0 0.0
    %3849 = vmatpush2.msra.mxu0 0.0
    %3850 = vmatprep.subr.mxu0 0.0
    %3851 = vmatpush2.msra.mxu0 0.0
    %3852 = vmatprep.subr.mxu0 0.0
    %3853 = vmatpush2.msra.mxu0 0.0
    %3854 = vmatprep.subr.mxu0 0.0
    %3855 = vmatpush2.msra.mxu0 0.0
    %3856 = vmatprep.subr.mxu0 0.0
    %3857 = vmatpush2.msra.mxu0 0.0
    %3858 = vmatprep.subr.mxu0 0.0
    %3859 = vmatpush2.msra.mxu0 0.0
    %3860 = vmatprep.subr.mxu0 0.0
    %3861 = vmatpush2.msra.mxu0 0.0
    %3862 = vmatprep.subr.mxu0 0.0
    %3863 = vmatpush2.msra.mxu0 0.0
    %3864 = vmatprep.subr.mxu0 0.0
    %3865 = vmatpush2.msra.mxu0 0.0
    %3866 = vmatprep.subr.mxu0 0.0
    %3867 = vmatpush2.msra.mxu0 0.0
    %3868 = vmatprep.subr.mxu0 0.0
    %3869 = vmatpush2.msra.mxu0 0.0
    %3870 = vmatprep.subr.mxu0 0.0
    %3871 = vmatpush2.msra.mxu0 0.0
    %3872 = vmatprep.subr.mxu0 0.0
    %3873 = vmatpush2.msra.mxu0 0.0
    %3874 = vmatprep.subr.mxu0 0.0
    %3875 = vmatpush2.msra.mxu0 0.0
    %3876 = vmatprep.subr.mxu0 0.0
    %3877 = vmatpush2.msra.mxu0 0.0
    %3878 = vmatprep.mubr.f32.mxu0 0.0
    %3879 = vmatmul.mubr.f32.gmra.mxu0 %v3741
    %v3880 = vpop.f32.mrf.mxu0
    %v3881 = vadd.f32 0.0, %v3880
    %v3882 = vpop.f32.mrf.mxu0
    %v3883 = vadd.f32 0.0, %v3882
    %3884 = vdwg.mxu0
    %3885 = vmatprep.subr.mxu0 0.0
    %3886 = vmatpush1.msra.mxu0 0.0
    %3887 = vmatprep.subr.mxu0 0.0
    %3888 = vmatpush1.msra.mxu0 0.0
    %3889 = vmatprep.subr.mxu0 0.0
    %3890 = vmatpush1.msra.mxu0 0.0
    %3891 = vmatprep.subr.mxu0 0.0
    %3892 = vmatpush1.msra.mxu0 0.0
    %3893 = vmatprep.subr.mxu0 0.0
    %3894 = vmatpush1.msra.mxu0 0.0
    %3895 = vmatprep.subr.mxu0 0.0
    %3896 = vmatpush1.msra.mxu0 0.0
    %3897 = vmatprep.subr.mxu0 0.0
    %3898 = vmatpush1.msra.mxu0 0.0
    %3899 = vmatprep.subr.mxu0 0.0
    %3900 = vmatpush1.msra.mxu0 0.0
    %3901 = vmatprep.subr.mxu0 0.0
    %3902 = vmatpush1.msra.mxu0 0.0
    %3903 = vmatprep.subr.mxu0 0.0
    %3904 = vmatpush1.msra.mxu0 0.0
    %3905 = vmatprep.subr.mxu0 0.0
    %3906 = vmatpush1.msra.mxu0 0.0
    %3907 = vmatprep.subr.mxu0 0.0
    %3908 = vmatpush1.msra.mxu0 0.0
    %3909 = vmatprep.subr.mxu0 0.0
    %3910 = vmatpush1.msra.mxu0 0.0
    %3911 = vmatprep.subr.mxu0 0.0
    %3912 = vmatpush1.msra.mxu0 0.0
    %3913 = vmatprep.subr.mxu0 0.0
    %3914 = vmatpush1.msra.mxu0 0.0
    %3915 = vmatprep.subr.mxu0 %v3737
    %3916 = vmatpush1.msra.mxu0 %v3736
    %3917 = vmatprep.subr.mxu0 0.0
    %3918 = vmatpush2.msra.mxu0 0.0
    %3919 = vmatprep.subr.mxu0 0.0
    %3920 = vmatpush2.msra.mxu0 0.0
    %3921 = vmatprep.subr.mxu0 0.0
    %3922 = vmatpush2.msra.mxu0 0.0
    %3923 = vmatprep.subr.mxu0 0.0
    %3924 = vmatpush2.msra.mxu0 0.0
    %3925 = vmatprep.subr.mxu0 0.0
    %3926 = vmatpush2.msra.mxu0 0.0
    %3927 = vmatprep.subr.mxu0 0.0
    %3928 = vmatpush2.msra.mxu0 0.0
    %3929 = vmatprep.subr.mxu0 0.0
    %3930 = vmatpush2.msra.mxu0 0.0
    %3931 = vmatprep.subr.mxu0 0.0
    %3932 = vmatpush2.msra.mxu0 0.0
    %3933 = vmatprep.subr.mxu0 0.0
    %3934 = vmatpush2.msra.mxu0 0.0
    %3935 = vmatprep.subr.mxu0 0.0
    %3936 = vmatpush2.msra.mxu0 0.0
    %3937 = vmatprep.subr.mxu0 0.0
    %3938 = vmatpush2.msra.mxu0 0.0
    %3939 = vmatprep.subr.mxu0 0.0
    %3940 = vmatpush2.msra.mxu0 0.0
    %3941 = vmatprep.subr.mxu0 0.0
    %3942 = vmatpush2.msra.mxu0 0.0
    %3943 = vmatprep.subr.mxu0 0.0
    %3944 = vmatpush2.msra.mxu0 0.0
    %3945 = vmatprep.subr.mxu0 0.0
    %3946 = vmatpush2.msra.mxu0 0.0
    %3947 = vmatprep.subr.mxu0 0.0
    %3948 = vmatpush2.msra.mxu0 0.0
    %3949 = vmatprep.mubr.f32.mxu0 0.0
    %3950 = vmatmul.mubr.f32.gmra.mxu0 %v3741
    %v3951 = vpop.f32.mrf.mxu0
    %v3952 = vadd.f32 0.0, %v3951
    %v3953 = vpop.f32.mrf.mxu0
    %v3954 = vadd.f32 0.0, %v3953
    %3955 = vdwg.mxu0
    %3956 = vmatprep.subr.mxu0 0.0
    %3957 = vmatpush1.msra.mxu0 0.0
    %3958 = vmatprep.subr.mxu0 0.0
    %3959 = vmatpush1.msra.mxu0 0.0
    %3960 = vmatprep.subr.mxu0 0.0
    %3961 = vmatpush1.msra.mxu0 0.0
    %3962 = vmatprep.subr.mxu0 0.0
    %3963 = vmatpush1.msra.mxu0 0.0
    %3964 = vmatprep.subr.mxu0 0.0
    %3965 = vmatpush1.msra.mxu0 0.0
    %3966 = vmatprep.subr.mxu0 0.0
    %3967 = vmatpush1.msra.mxu0 0.0
    %3968 = vmatprep.subr.mxu0 0.0
    %3969 = vmatpush1.msra.mxu0 0.0
    %3970 = vmatprep.subr.mxu0 0.0
    %3971 = vmatpush1.msra.mxu0 0.0
    %3972 = vmatprep.subr.mxu0 0.0
    %3973 = vmatpush1.msra.mxu0 0.0
    %3974 = vmatprep.subr.mxu0 0.0
    %3975 = vmatpush1.msra.mxu0 0.0
    %3976 = vmatprep.subr.mxu0 0.0
    %3977 = vmatpush1.msra.mxu0 0.0
    %3978 = vmatprep.subr.mxu0 0.0
    %3979 = vmatpush1.msra.mxu0 0.0
    %3980 = vmatprep.subr.mxu0 0.0
    %3981 = vmatpush1.msra.mxu0 0.0
    %3982 = vmatprep.subr.mxu0 0.0
    %3983 = vmatpush1.msra.mxu0 0.0
    %3984 = vmatprep.subr.mxu0 0.0
    %3985 = vmatpush1.msra.mxu0 0.0
    %3986 = vmatprep.subr.mxu0 0.0
    %3987 = vmatpush1.msra.mxu0 %v3738
    %3988 = vmatprep.subr.mxu0 0.0
    %3989 = vmatpush2.msra.mxu0 0.0
    %3990 = vmatprep.subr.mxu0 0.0
    %3991 = vmatpush2.msra.mxu0 0.0
    %3992 = vmatprep.subr.mxu0 0.0
    %3993 = vmatpush2.msra.mxu0 0.0
    %3994 = vmatprep.subr.mxu0 0.0
    %3995 = vmatpush2.msra.mxu0 0.0
    %3996 = vmatprep.subr.mxu0 0.0
    %3997 = vmatpush2.msra.mxu0 0.0
    %3998 = vmatprep.subr.mxu0 0.0
    %3999 = vmatpush2.msra.mxu0 0.0
    %4000 = vmatprep.subr.mxu0 0.0
    %4001 = vmatpush2.msra.mxu0 0.0
    %4002 = vmatprep.subr.mxu0 0.0
    %4003 = vmatpush2.msra.mxu0 0.0
    %4004 = vmatprep.subr.mxu0 0.0
    %4005 = vmatpush2.msra.mxu0 0.0
    %4006 = vmatprep.subr.mxu0 0.0
    %4007 = vmatpush2.msra.mxu0 0.0
    %4008 = vmatprep.subr.mxu0 0.0
    %4009 = vmatpush2.msra.mxu0 0.0
    %4010 = vmatprep.subr.mxu0 0.0
    %4011 = vmatpush2.msra.mxu0 0.0
    %4012 = vmatprep.subr.mxu0 0.0
    %4013 = vmatpush2.msra.mxu0 0.0
    %4014 = vmatprep.subr.mxu0 0.0
    %4015 = vmatpush2.msra.mxu0 0.0
    %4016 = vmatprep.subr.mxu0 0.0
    %4017 = vmatpush2.msra.mxu0 0.0
    %4018 = vmatprep.subr.mxu0 0.0
    %4019 = vmatpush2.msra.mxu0 0.0
    %4020 = vmatprep.mubr.f32.mxu0 0.0
    %4021 = vmatmul.mubr.f32.gmra.mxu0 %v3741
    %v4022 = vpop.f32.mrf.mxu0
    %v4023 = vadd.f32 0.0, %v4022
    %v4024 = vpop.f32.mrf.mxu0
    %4025 = vdwg.mxu0
    %v4026 = vlaneseq
    %v4027 = vshrl.u32 %v4026, 7
    %v4028 = vsub.s32 0, %v4027
    %v4029 = vrot.slane %v3810, %v4028
    %v4030 = vlaneseq
    %v4031 = vshrl.u32 %v4030, 7
    %v4032 = vsub.s32 0, %v4031
    %v4033 = vrot.slane %v3812, %v4032
    %v4034 = vlaneseq
    %v4035 = vshrl.u32 %v4034, 7
    %v4036 = vsub.s32 0, %v4035
    %v4037 = vrot.slane %v3881, %v4036
    %v4038 = vlaneseq
    %v4039 = vshrl.u32 %v4038, 7
    %v4040 = vsub.s32 0, %v4039
    %v4041 = vrot.slane %v3883, %v4040
    %v4042 = vlaneseq
    %v4043 = vshrl.u32 %v4042, 7
    %v4044 = vsub.s32 0, %v4043
    %v4045 = vrot.slane %v3952, %v4044
    %v4046 = vlaneseq
    %v4047 = vshrl.u32 %v4046, 7
    %v4048 = vsub.s32 0, %v4047
    %v4049 = vrot.slane %v3954, %v4048
    %v4050 = vlaneseq
    %v4051 = vshrl.u32 %v4050, 7
    %v4052 = vsub.s32 0, %v4051
    %v4053 = vrot.slane %v4023, %v4052
    %v4054 = vmul.f32 %v3173, %v4029
    %v4055 = vmul.f32 %v3174, %v4033
    %v4056 = vmul.f32 %v3175, %v4037
    %v4057 = vmul.f32 %v3176, %v4041
    %v4058 = vmul.f32 %v3177, %v4045
    %v4059 = vmul.f32 %v3178, %v4049
    %v4060 = vmul.f32 %v3179, %v4053
    %v4061 = vmul.f32 %v3180, %v4029
    %v4062 = vmul.f32 %v3181, %v4033
    %v4063 = vmul.f32 %v3182, %v4037
    %v4064 = vmul.f32 %v3183, %v4041
    %v4065 = vmul.f32 %v3184, %v4045
    %v4066 = vmul.f32 %v3185, %v4049
    %v4067 = vmul.f32 %v3186, %v4053
    %v4068 = vlaneseq
    %v4069 = vshrl.u32 %v4068, 7
    %v4070 = vsub.s32 1, %v4069
    %v4071 = vrot.slane %v3810, %v4070
    %v4072 = vlaneseq
    %v4073 = vshrl.u32 %v4072, 7
    %v4074 = vsub.s32 1, %v4073
    %v4075 = vrot.slane %v3812, %v4074
    %v4076 = vlaneseq
    %v4077 = vshrl.u32 %v4076, 7
    %v4078 = vsub.s32 1, %v4077
    %v4079 = vrot.slane %v3881, %v4078
    %v4080 = vlaneseq
    %v4081 = vshrl.u32 %v4080, 7
    %v4082 = vsub.s32 1, %v4081
    %v4083 = vrot.slane %v3883, %v4082
    %v4084 = vlaneseq
    %v4085 = vshrl.u32 %v4084, 7
    %v4086 = vsub.s32 1, %v4085
    %v4087 = vrot.slane %v3952, %v4086
    %v4088 = vlaneseq
    %v4089 = vshrl.u32 %v4088, 7
    %v4090 = vsub.s32 1, %v4089
    %v4091 = vrot.slane %v3954, %v4090
    %v4092 = vlaneseq
    %v4093 = vshrl.u32 %v4092, 7
    %v4094 = vsub.s32 1, %v4093
    %v4095 = vrot.slane %v4023, %v4094
    %v4096 = vadd.f32 %v4054, %v4071
    %v4097 = vadd.f32 %v4055, %v4075
    %v4098 = vadd.f32 %v4056, %v4079
    %v4099 = vadd.f32 %v4057, %v4083
    %v4100 = vadd.f32 %v4058, %v4087
    %v4101 = vadd.f32 %v4059, %v4091
    %v4102 = vadd.f32 %v4060, %v4095
    %v4103 = vadd.f32 %v4061, %v4071
    %v4104 = vadd.f32 %v4062, %v4075
    %v4105 = vadd.f32 %v4063, %v4079
    %v4106 = vadd.f32 %v4064, %v4083
    %v4107 = vadd.f32 %v4065, %v4087
    %v4108 = vadd.f32 %v4066, %v4091
    %v4109 = vadd.f32 %v4067, %v4095
    %vm4110 = vcmp.ge.f32.partialorder %v4096, 1.0
    %vm4111 = vcmp.ge.f32.partialorder %v4097, 1.0
    %vm4112 = vcmp.ge.f32.partialorder %v4098, 1.0
    %vm4113 = vcmp.ge.f32.partialorder %v4099, 1.0
    %vm4114 = vcmp.ge.f32.partialorder %v4100, 1.0
    %vm4115 = vcmp.ge.f32.partialorder %v4101, 1.0
    %vm4116 = vcmp.ge.f32.partialorder %v4102, 1.0
    %vm4117 = vcmp.ge.f32.partialorder %v4103, 1.0
    %vm4118 = vcmp.ge.f32.partialorder %v4104, 1.0
    %vm4119 = vcmp.ge.f32.partialorder %v4105, 1.0
    %vm4120 = vcmp.ge.f32.partialorder %v4106, 1.0
    %vm4121 = vcmp.ge.f32.partialorder %v4107, 1.0
    %vm4122 = vcmp.ge.f32.partialorder %v4108, 1.0
    %vm4123 = vcmp.ge.f32.partialorder %v4109, 1.0
    %v4124 = vsel %vm4110, 1, 0
    %v4125 = vsel %vm4111, 1, 0
    %v4126 = vsel %vm4112, 1, 0
    %v4127 = vsel %vm4113, 1, 0
    %v4128 = vsel %vm4114, 1, 0
    %v4129 = vsel %vm4115, 1, 0
    %v4130 = vsel %vm4116, 1, 0
    %v4131 = vsel %vm4117, 1, 0
    %v4132 = vsel %vm4118, 1, 0
    %v4133 = vsel %vm4119, 1, 0
    %v4134 = vsel %vm4120, 1, 0
    %v4135 = vsel %vm4121, 1, 0
    %v4136 = vsel %vm4122, 1, 0
    %v4137 = vsel %vm4123, 1, 0
    %v4138 = vcvt.s32.f32 %v4124
    %v4139 = vcvt.s32.f32 %v4125
    %v4140 = vcvt.s32.f32 %v4126
    %v4141 = vcvt.s32.f32 %v4127
    %v4142 = vcvt.s32.f32 %v4128
    %v4143 = vcvt.s32.f32 %v4129
    %v4144 = vcvt.s32.f32 %v4130
    %v4145 = vcvt.s32.f32 %v4131
    %v4146 = vcvt.s32.f32 %v4132
    %v4147 = vcvt.s32.f32 %v4133
    %v4148 = vcvt.s32.f32 %v4134
    %v4149 = vcvt.s32.f32 %v4135
    %v4150 = vcvt.s32.f32 %v4136
    %v4151 = vcvt.s32.f32 %v4137
    %v4152 = vlaneseq
    %vm4153 = vcmp.ge.s32.totalorder %v4152, 0
    %vm4154 = vcmp.lt.s32.totalorder %v4152, 800
    %vm4155 = vmand %vm4153, %vm4154
    %4156 = vst.msk [vmem:[#allocation2] ss:$8 sm:$0xf] %vm4155, 0.0
    %4157 = vst.msk [vmem:[#allocation2] ss:$8 sm:$0x70] %vm4155, 0.0
    %s4158 = scalar_lea.vmem [#allocation2], 112
    %4159 = vst.msk [vmem:[%s4158] ss:$8 sm:$0xf] %vm4155, 0.0
    %4160 = vst.msk [vmem:[%s4158] ss:$8 sm:$0x70] %vm4155, 0.0
    %s4161 = scalar_lea.vmem [#allocation2], 57
    %4162 = vst.msk [vmem:[%s4161] ss:$8 sm:$0xf] %vm4155, 0.0
    %4163 = vst.msk [vmem:[%s4161] ss:$8 sm:$0x70] %vm4155, 0.0
    %s4164 = scalar_lea.vmem [#allocation2], 169
    %4165 = vst.msk [vmem:[%s4164] ss:$8 sm:$0xf] %vm4155, 0.0
    %4166 = vst.msk [vmem:[%s4164] ss:$8 sm:$0x70] %vm4155, 0.0
    %v4181 = vrot.slane %v4138, 7
    %v4182 = vrot.slane %v4139, 7
    %v4183 = vrot.slane %v4140, 7
    %v4184 = vrot.slane %v4141, 7
    %v4185 = vrot.slane %v4142, 7
    %v4186 = vrot.slane %v4143, 7
    %v4187 = vrot.slane %v4144, 7
    %v4188 = vrot.slane %v4145, 7
    %v4189 = vrot.slane %v4146, 7
    %v4190 = vrot.slane %v4147, 7
    %v4191 = vrot.slane %v4148, 7
    %v4192 = vrot.slane %v4149, 7
    %v4193 = vrot.slane %v4150, 7
    %v4194 = vrot.slane %v4151, 7
    %4209 = vst [vmem:[#allocation2] sm:$0xfe] %v4181
    %4210 = vst [vmem:[#allocation2 + $0x8] sm:$0xfe] %v4182
    %4211 = vst [vmem:[#allocation2 + $0x10] sm:$0xfe] %v4183
    %4212 = vst [vmem:[#allocation2 + $0x18] sm:$0xfe] %v4184
    %4213 = vst [vmem:[#allocation2 + $0x20] sm:$0xfe] %v4185
    %4214 = vst [vmem:[#allocation2 + $0x28] sm:$0xfe] %v4186
    %vm4215 = vcmask 261121
    %4216 = vst.msk [vmem:[#allocation2 + $0x30] sm:$0xfe] %vm4215, %v4187
    %4217 = vst [vmem:[#allocation2 + $0x38] sm:$0x1] %v4181
    %4218 = vst [vmem:[#allocation2 + $0x40] sm:$0x1] %v4182
    %4219 = vst [vmem:[#allocation2 + $0x48] sm:$0x1] %v4183
    %4220 = vst [vmem:[#allocation2 + $0x50] sm:$0x1] %v4184
    %4221 = vst [vmem:[#allocation2 + $0x58] sm:$0x1] %v4185
    %4222 = vst [vmem:[#allocation2 + $0x60] sm:$0x1] %v4186
    %vm4223 = vcmask 253952
    %4224 = vst.msk [vmem:[#allocation2 + $0x68] sm:$0x1] %vm4223, %v4187
    %4225 = vst [vmem:[#allocation2 + $0x70] sm:$0xfe] %v4188
    %4226 = vst [vmem:[#allocation2 + $0x78] sm:$0xfe] %v4189
    %4227 = vst [vmem:[#allocation2 + $0x80] sm:$0xfe] %v4190
    %4228 = vst [vmem:[#allocation2 + $0x88] sm:$0xfe] %v4191
    %4229 = vst [vmem:[#allocation2 + $0x90] sm:$0xfe] %v4192
    %4230 = vst [vmem:[#allocation2 + $0x98] sm:$0xfe] %v4193
    %4231 = vst.msk [vmem:[#allocation2 + $0xa0] sm:$0xfe] %vm4215, %v4194
    %4232 = vst [vmem:[#allocation2 + $0xa8] sm:$0x1] %v4188
    %4233 = vst [vmem:[#allocation2 + $0xb0] sm:$0x1] %v4189
    %4234 = vst [vmem:[#allocation2 + $0xb8] sm:$0x1] %v4190
    %4235 = vst [vmem:[#allocation2 + $0xc0] sm:$0x1] %v4191
    %4236 = vst [vmem:[#allocation2 + $0xc8] sm:$0x1] %v4192
    %4237 = vst [vmem:[#allocation2 + $0xd0] sm:$0x1] %v4193
    %4238 = vst.msk [vmem:[#allocation2 + $0xd8] sm:$0x1] %vm4223, %v4194
    %v4239 = vld [vmem:[#allocation2] sm:$0xff]
    %v4240 = vld [vmem:[#allocation2 + $0x8] sm:$0xff]
    %v4241 = vld [vmem:[#allocation2 + $0x10] sm:$0xff]
    %v4242 = vld [vmem:[#allocation2 + $0x18] sm:$0xff]
    %v4243 = vld [vmem:[#allocation2 + $0x20] sm:$0xff]
    %v4244 = vld [vmem:[#allocation2 + $0x28] sm:$0xff]
    %v4245 = vld [vmem:[#allocation2 + $0x30] sm:$0xff]
    %v4246 = vld [vmem:[#allocation2 + $0x70] sm:$0xff]
    %v4247 = vld [vmem:[#allocation2 + $0x78] sm:$0xff]
    %v4248 = vld [vmem:[#allocation2 + $0x80] sm:$0xff]
    %v4249 = vld [vmem:[#allocation2 + $0x88] sm:$0xff]
    %v4250 = vld [vmem:[#allocation2 + $0x90] sm:$0xff]
    %v4251 = vld [vmem:[#allocation2 + $0x98] sm:$0xff]
    %v4252 = vld [vmem:[#allocation2 + $0xa0] sm:$0xff]
    %v4253 = vpack.c.bf16 %v4246, %v4239
    %v4254 = vpack.c.bf16 %v4247, %v4240
    %v4255 = vpack.c.bf16 %v4248, %v4241
    %v4256 = vpack.c.bf16 %v4249, %v4242
    %v4257 = vpack.c.bf16 %v4250, %v4243
    %v4258 = vpack.c.bf16 %v4251, %v4244
    %v4259 = vpack.c.bf16 %v4252, %v4245
    %v4260 = vld [vmem:[#allocation10] sm:$0xff]
    %v4261 = vld [vmem:[#allocation10 + $0x8] sm:$0xff]
    %v4262 = vld [vmem:[#allocation10 + $0x10] sm:$0xff]
    %v4263 = vld [vmem:[#allocation10 + $0x18] sm:$0xff]
    %v4264 = vld [vmem:[#allocation10 + $0x20] sm:$0xff]
    %v4265 = vld [vmem:[#allocation10 + $0x28] sm:$0xff]
    %v4266 = vld [vmem:[#allocation10 + $0x30] sm:$0xff]
    %v4267 = vld [vmem:[#allocation10 + $0x38] sm:$0xff]
    %v4268 = vld [vmem:[#allocation10 + $0x40] sm:$0xff]
    %v4269 = vld [vmem:[#allocation10 + $0x48] sm:$0xff]
    %v4270 = vld [vmem:[#allocation10 + $0x50] sm:$0xff]
    %v4271 = vld [vmem:[#allocation10 + $0x58] sm:$0xff]
    %v4272 = vld [vmem:[#allocation10 + $0x60] sm:$0xff]
    %v4273 = vld [vmem:[#allocation10 + $0x68] sm:$0xff]
    %v4274 = vld [vmem:[#allocation10 + $0x70] sm:$0xff]
    %v4275 = vld [vmem:[#allocation10 + $0x78] sm:$0xff]
    %v4276 = vld [vmem:[#allocation10 + $0x80] sm:$0xff]
    %v4277 = vld [vmem:[#allocation10 + $0x88] sm:$0xff]
    %v4278 = vld [vmem:[#allocation10 + $0x90] sm:$0xff]
    %v4279 = vld [vmem:[#allocation10 + $0x98] sm:$0xff]
    %v4280 = vld [vmem:[#allocation10 + $0xa0] sm:$0xff]
    %v4281 = vld [vmem:[#allocation10 + $0xa8] sm:$0xff]
    %v4282 = vld [vmem:[#allocation10 + $0xb0] sm:$0xff]
    %v4283 = vld [vmem:[#allocation10 + $0xb8] sm:$0xff]
    %v4284 = vld [vmem:[#allocation10 + $0xc0] sm:$0xff]
    %v4285 = vld [vmem:[#allocation10 + $0xc8] sm:$0xff]
    %v4286 = vld [vmem:[#allocation10 + $0xd0] sm:$0xff]
    %v4287 = vld [vmem:[#allocation10 + $0xd8] sm:$0xff]
    %v4288 = vld [vmem:[#allocation10 + $0xe0] sm:$0xff]
    %v4289 = vld [vmem:[#allocation10 + $0xe8] sm:$0xff]
    %v4290 = vld [vmem:[#allocation10 + $0xf0] sm:$0xff]
    %v4291 = vld [vmem:[#allocation10 + $0xf8] sm:$0xff]
    %v4292 = vld [vmem:[#allocation10 + $0x100] sm:$0xff]
    %v4293 = vld [vmem:[#allocation10 + $0x108] sm:$0xff]
    %v4294 = vld [vmem:[#allocation10 + $0x110] sm:$0xff]
    %v4295 = vld [vmem:[#allocation10 + $0x118] sm:$0xff]
    %v4296 = vld [vmem:[#allocation10 + $0x120] sm:$0xff]
    %v4297 = vld [vmem:[#allocation10 + $0x128] sm:$0xff]
    %v4298 = vld [vmem:[#allocation10 + $0x130] sm:$0xff]
    %v4299 = vld [vmem:[#allocation10 + $0x138] sm:$0xff]
    %v4300 = vld [vmem:[#allocation10 + $0x140] sm:$0xff]
    %v4301 = vld [vmem:[#allocation10 + $0x148] sm:$0xff]
    %v4302 = vld [vmem:[#allocation10 + $0x150] sm:$0xff]
    %v4303 = vld [vmem:[#allocation10 + $0x158] sm:$0xff]
    %v4304 = vld [vmem:[#allocation10 + $0x160] sm:$0xff]
    %v4305 = vld [vmem:[#allocation10 + $0x168] sm:$0xff]
    %v4306 = vld [vmem:[#allocation10 + $0x170] sm:$0xff]
    %v4307 = vld [vmem:[#allocation10 + $0x178] sm:$0xff]
    %v4308 = vld [vmem:[#allocation10 + $0x180] sm:$0xff]
    %v4309 = vld [vmem:[#allocation10 + $0x188] sm:$0xff]
    %v4310 = vld [vmem:[#allocation10 + $0x190] sm:$0xff]
    %v4311 = vld [vmem:[#allocation10 + $0x198] sm:$0xff]
    %v4312 = vld [vmem:[#allocation10 + $0x1a0] sm:$0xff]
    %v4313 = vld [vmem:[#allocation10 + $0x1a8] sm:$0xff]
    %v4314 = vld [vmem:[#allocation10 + $0x1b0] sm:$0xff]
    %v4315 = vld [vmem:[#allocation10 + $0x1b8] sm:$0xff]
    %v4316 = vld [vmem:[#allocation10 + $0x1c0] sm:$0xff]
    %v4317 = vld [vmem:[#allocation10 + $0x1c8] sm:$0xff]
    %v4318 = vld [vmem:[#allocation10 + $0x1d0] sm:$0xff]
    %v4319 = vld [vmem:[#allocation10 + $0x1d8] sm:$0xff]
    %v4320 = vld [vmem:[#allocation10 + $0x1e0] sm:$0xff]
    %v4321 = vld [vmem:[#allocation10 + $0x1e8] sm:$0xff]
    %v4322 = vld [vmem:[#allocation10 + $0x1f0] sm:$0xff]
    %v4323 = vld [vmem:[#allocation10 + $0x1f8] sm:$0xff]
    %v4324 = vld [vmem:[#allocation10 + $0x200] sm:$0xff]
    %v4325 = vld [vmem:[#allocation10 + $0x208] sm:$0xff]
    %v4326 = vld [vmem:[#allocation10 + $0x210] sm:$0xff]
    %v4327 = vld [vmem:[#allocation10 + $0x218] sm:$0xff]
    %v4328 = vld [vmem:[#allocation10 + $0x220] sm:$0xff]
    %v4329 = vld [vmem:[#allocation10 + $0x228] sm:$0xff]
    %v4330 = vld [vmem:[#allocation10 + $0x230] sm:$0xff]
    %v4331 = vld [vmem:[#allocation10 + $0x238] sm:$0xff]
    %v4332 = vld [vmem:[#allocation10 + $0x240] sm:$0xff]
    %v4333 = vld [vmem:[#allocation10 + $0x248] sm:$0xff]
    %v4334 = vld [vmem:[#allocation10 + $0x250] sm:$0xff]
    %v4335 = vld [vmem:[#allocation10 + $0x258] sm:$0xff]
    %v4336 = vld [vmem:[#allocation10 + $0x260] sm:$0xff]
    %v4337 = vld [vmem:[#allocation10 + $0x268] sm:$0xff]
    %v4338 = vld [vmem:[#allocation10 + $0x270] sm:$0xff]
    %v4339 = vld [vmem:[#allocation10 + $0x278] sm:$0xff]
    %v4340 = vld [vmem:[#allocation10 + $0x280] sm:$0xff]
    %v4341 = vld [vmem:[#allocation10 + $0x288] sm:$0xff]
    %v4342 = vld [vmem:[#allocation10 + $0x290] sm:$0xff]
    %v4343 = vld [vmem:[#allocation10 + $0x298] sm:$0xff]
    %v4344 = vld [vmem:[#allocation10 + $0x2a0] sm:$0xff]
    %v4345 = vld [vmem:[#allocation10 + $0x2a8] sm:$0xff]
    %v4346 = vld [vmem:[#allocation10 + $0x2b0] sm:$0xff]
    %v4347 = vld [vmem:[#allocation10 + $0x2b8] sm:$0xff]
    %v4348 = vld [vmem:[#allocation10 + $0x2c0] sm:$0xff]
    %v4349 = vld [vmem:[#allocation10 + $0x2c8] sm:$0xff]
    %v4350 = vld [vmem:[#allocation10 + $0x2d0] sm:$0xff]
    %v4351 = vld [vmem:[#allocation10 + $0x2d8] sm:$0xff]
    %v4352 = vld [vmem:[#allocation10 + $0x2e0] sm:$0xff]
    %v4353 = vld [vmem:[#allocation10 + $0x2e8] sm:$0xff]
    %v4354 = vld [vmem:[#allocation10 + $0x2f0] sm:$0xff]
    %v4355 = vld [vmem:[#allocation10 + $0x2f8] sm:$0xff]
    %v4356 = vld [vmem:[#allocation10 + $0x300] sm:$0xff]
    %v4357 = vld [vmem:[#allocation10 + $0x308] sm:$0xff]
    %v4358 = vld [vmem:[#allocation10 + $0x310] sm:$0xff]
    %v4359 = vld [vmem:[#allocation10 + $0x318] sm:$0xff]
    %v4360 = vld [vmem:[#allocation2] sm:$0xfe]
    %v4361 = vld [vmem:[#allocation2 + $0x8] sm:$0xfe]
    %v4362 = vld [vmem:[#allocation2 + $0x10] sm:$0xfe]
    %v4363 = vld [vmem:[#allocation2 + $0x18] sm:$0xfe]
    %v4364 = vld [vmem:[#allocation2 + $0x20] sm:$0xfe]
    %v4365 = vld [vmem:[#allocation2 + $0x28] sm:$0xfe]
    %v4366 = vld [vmem:[#allocation2 + $0x30] sm:$0xfe]
    %v4367 = vld [vmem:[#allocation2 + $0x38] sm:$0x1]
    %v4368 = vld [vmem:[#allocation2 + $0x40] sm:$0x1]
    %v4369 = vld [vmem:[#allocation2 + $0x48] sm:$0x1]
    %v4370 = vld [vmem:[#allocation2 + $0x50] sm:$0x1]
    %v4371 = vld [vmem:[#allocation2 + $0x58] sm:$0x1]
    %v4372 = vld [vmem:[#allocation2 + $0x60] sm:$0x1]
    %v4373 = vld [vmem:[#allocation2 + $0x68] sm:$0x1]
    %v4374 = vld [vmem:[#allocation2 + $0x70] sm:$0xfe]
    %v4375 = vld [vmem:[#allocation2 + $0x78] sm:$0xfe]
    %v4376 = vld [vmem:[#allocation2 + $0x80] sm:$0xfe]
    %v4377 = vld [vmem:[#allocation2 + $0x88] sm:$0xfe]
    %v4378 = vld [vmem:[#allocation2 + $0x90] sm:$0xfe]
    %v4379 = vld [vmem:[#allocation2 + $0x98] sm:$0xfe]
    %v4380 = vld [vmem:[#allocation2 + $0xa0] sm:$0xfe]
    %v4381 = vld [vmem:[#allocation2 + $0xa8] sm:$0x1]
    %v4382 = vld [vmem:[#allocation2 + $0xb0] sm:$0x1]
    %v4383 = vld [vmem:[#allocation2 + $0xb8] sm:$0x1]
    %v4384 = vld [vmem:[#allocation2 + $0xc0] sm:$0x1]
    %v4385 = vld [vmem:[#allocation2 + $0xc8] sm:$0x1]
    %v4386 = vld [vmem:[#allocation2 + $0xd0] sm:$0x1]
    %v4387 = vld [vmem:[#allocation2 + $0xd8] sm:$0x1]
    %v4416 = vrot.slane %v4360, 1
    %v4417 = vrot.slane %v4367, 1
    %v4418 = vsel %vm526, %v4416, %v4417
    %v4419 = vrot.slane %v4361, 1
    %v4420 = vrot.slane %v4368, 1
    %v4421 = vsel %vm526, %v4419, %v4420
    %v4422 = vrot.slane %v4362, 1
    %v4423 = vrot.slane %v4369, 1
    %v4424 = vsel %vm526, %v4422, %v4423
    %v4425 = vrot.slane %v4363, 1
    %v4426 = vrot.slane %v4370, 1
    %v4427 = vsel %vm526, %v4425, %v4426
    %v4428 = vrot.slane %v4364, 1
    %v4429 = vrot.slane %v4371, 1
    %v4430 = vsel %vm526, %v4428, %v4429
    %v4431 = vrot.slane %v4365, 1
    %v4432 = vrot.slane %v4372, 1
    %v4433 = vsel %vm526, %v4431, %v4432
    %v4434 = vrot.slane %v4366, 1
    %v4435 = vrot.slane %v4373, 1
    %v4436 = vsel %vm526, %v4434, %v4435
    %v4437 = vrot.slane %v4374, 1
    %v4438 = vrot.slane %v4381, 1
    %v4439 = vsel %vm526, %v4437, %v4438
    %v4440 = vrot.slane %v4375, 1
    %v4441 = vrot.slane %v4382, 1
    %v4442 = vsel %vm526, %v4440, %v4441
    %v4443 = vrot.slane %v4376, 1
    %v4444 = vrot.slane %v4383, 1
    %v4445 = vsel %vm526, %v4443, %v4444
    %v4446 = vrot.slane %v4377, 1
    %v4447 = vrot.slane %v4384, 1
    %v4448 = vsel %vm526, %v4446, %v4447
    %v4449 = vrot.slane %v4378, 1
    %v4450 = vrot.slane %v4385, 1
    %v4451 = vsel %vm526, %v4449, %v4450
    %v4452 = vrot.slane %v4379, 1
    %v4453 = vrot.slane %v4386, 1
    %v4454 = vsel %vm526, %v4452, %v4453
    %v4455 = vrot.slane %v4380, 1
    %v4456 = vrot.slane %v4387, 1
    %v4457 = vsel %vm526, %v4455, %v4456
    %v4472 = vpack.c.bf16 %v4439, %v4418
    %v4473 = vpack.c.bf16 %v4442, %v4421
    %v4474 = vpack.c.bf16 %v4445, %v4424
    %v4475 = vpack.c.bf16 %v4448, %v4427
    %v4476 = vpack.c.bf16 %v4451, %v4430
    %v4477 = vpack.c.bf16 %v4454, %v4433
    %v4478 = vpack.c.bf16 %v4457, %v4436
    %s4479 = scalar_lea.vmem [#allocation10], 800
    %v4480 = vld [vmem:[%s4479] sm:$0xff]
    %v4481 = vld [vmem:[%s4479 + $0x8] sm:$0xff]
    %v4482 = vld [vmem:[%s4479 + $0x10] sm:$0xff]
    %v4483 = vld [vmem:[%s4479 + $0x18] sm:$0xff]
    %v4484 = vld [vmem:[%s4479 + $0x20] sm:$0xff]
    %v4485 = vld [vmem:[%s4479 + $0x28] sm:$0xff]
    %v4486 = vld [vmem:[%s4479 + $0x30] sm:$0xff]
    %v4487 = vld [vmem:[%s4479 + $0x38] sm:$0xff]
    %v4488 = vld [vmem:[%s4479 + $0x40] sm:$0xff]
    %v4489 = vld [vmem:[%s4479 + $0x48] sm:$0xff]
    %v4490 = vld [vmem:[%s4479 + $0x50] sm:$0xff]
    %v4491 = vld [vmem:[%s4479 + $0x58] sm:$0xff]
    %v4492 = vld [vmem:[%s4479 + $0x60] sm:$0xff]
    %v4493 = vld [vmem:[%s4479 + $0x68] sm:$0xff]
    %v4494 = vld [vmem:[%s4479 + $0x70] sm:$0xff]
    %v4495 = vld [vmem:[%s4479 + $0x78] sm:$0xff]
    %v4496 = vld [vmem:[%s4479 + $0x80] sm:$0xff]
    %v4497 = vld [vmem:[%s4479 + $0x88] sm:$0xff]
    %v4498 = vld [vmem:[%s4479 + $0x90] sm:$0xff]
    %v4499 = vld [vmem:[%s4479 + $0x98] sm:$0xff]
    %v4500 = vld [vmem:[%s4479 + $0xa0] sm:$0xff]
    %v4501 = vld [vmem:[%s4479 + $0xa8] sm:$0xff]
    %v4502 = vld [vmem:[%s4479 + $0xb0] sm:$0xff]
    %v4503 = vld [vmem:[%s4479 + $0xb8] sm:$0xff]
    %v4504 = vld [vmem:[%s4479 + $0xc0] sm:$0xff]
    %v4505 = vld [vmem:[%s4479 + $0xc8] sm:$0xff]
    %v4506 = vld [vmem:[%s4479 + $0xd0] sm:$0xff]
    %v4507 = vld [vmem:[%s4479 + $0xd8] sm:$0xff]
    %v4508 = vld [vmem:[%s4479 + $0xe0] sm:$0xff]
    %v4509 = vld [vmem:[%s4479 + $0xe8] sm:$0xff]
    %v4510 = vld [vmem:[%s4479 + $0xf0] sm:$0xff]
    %v4511 = vld [vmem:[%s4479 + $0xf8] sm:$0xff]
    %v4512 = vld [vmem:[%s4479 + $0x100] sm:$0xff]
    %v4513 = vld [vmem:[%s4479 + $0x108] sm:$0xff]
    %v4514 = vld [vmem:[%s4479 + $0x110] sm:$0xff]
    %v4515 = vld [vmem:[%s4479 + $0x118] sm:$0xff]
    %v4516 = vld [vmem:[%s4479 + $0x120] sm:$0xff]
    %v4517 = vld [vmem:[%s4479 + $0x128] sm:$0xff]
    %v4518 = vld [vmem:[%s4479 + $0x130] sm:$0xff]
    %v4519 = vld [vmem:[%s4479 + $0x138] sm:$0xff]
    %v4520 = vld [vmem:[%s4479 + $0x140] sm:$0xff]
    %v4521 = vld [vmem:[%s4479 + $0x148] sm:$0xff]
    %v4522 = vld [vmem:[%s4479 + $0x150] sm:$0xff]
    %v4523 = vld [vmem:[%s4479 + $0x158] sm:$0xff]
    %v4524 = vld [vmem:[%s4479 + $0x160] sm:$0xff]
    %v4525 = vld [vmem:[%s4479 + $0x168] sm:$0xff]
    %v4526 = vld [vmem:[%s4479 + $0x170] sm:$0xff]
    %v4527 = vld [vmem:[%s4479 + $0x178] sm:$0xff]
    %v4528 = vld [vmem:[%s4479 + $0x180] sm:$0xff]
    %v4529 = vld [vmem:[%s4479 + $0x188] sm:$0xff]
    %v4530 = vld [vmem:[%s4479 + $0x190] sm:$0xff]
    %v4531 = vld [vmem:[%s4479 + $0x198] sm:$0xff]
    %v4532 = vld [vmem:[%s4479 + $0x1a0] sm:$0xff]
    %v4533 = vld [vmem:[%s4479 + $0x1a8] sm:$0xff]
    %v4534 = vld [vmem:[%s4479 + $0x1b0] sm:$0xff]
    %v4535 = vld [vmem:[%s4479 + $0x1b8] sm:$0xff]
    %v4536 = vld [vmem:[%s4479 + $0x1c0] sm:$0xff]
    %v4537 = vld [vmem:[%s4479 + $0x1c8] sm:$0xff]
    %v4538 = vld [vmem:[%s4479 + $0x1d0] sm:$0xff]
    %v4539 = vld [vmem:[%s4479 + $0x1d8] sm:$0xff]
    %v4540 = vld [vmem:[%s4479 + $0x1e0] sm:$0xff]
    %v4541 = vld [vmem:[%s4479 + $0x1e8] sm:$0xff]
    %v4542 = vld [vmem:[%s4479 + $0x1f0] sm:$0xff]
    %v4543 = vld [vmem:[%s4479 + $0x1f8] sm:$0xff]
    %v4544 = vld [vmem:[%s4479 + $0x200] sm:$0xff]
    %v4545 = vld [vmem:[%s4479 + $0x208] sm:$0xff]
    %v4546 = vld [vmem:[%s4479 + $0x210] sm:$0xff]
    %v4547 = vld [vmem:[%s4479 + $0x218] sm:$0xff]
    %v4548 = vld [vmem:[%s4479 + $0x220] sm:$0xff]
    %v4549 = vld [vmem:[%s4479 + $0x228] sm:$0xff]
    %v4550 = vld [vmem:[%s4479 + $0x230] sm:$0xff]
    %v4551 = vld [vmem:[%s4479 + $0x238] sm:$0xff]
    %v4552 = vld [vmem:[%s4479 + $0x240] sm:$0xff]
    %v4553 = vld [vmem:[%s4479 + $0x248] sm:$0xff]
    %v4554 = vld [vmem:[%s4479 + $0x250] sm:$0xff]
    %v4555 = vld [vmem:[%s4479 + $0x258] sm:$0xff]
    %v4556 = vld [vmem:[%s4479 + $0x260] sm:$0xff]
    %v4557 = vld [vmem:[%s4479 + $0x268] sm:$0xff]
    %v4558 = vld [vmem:[%s4479 + $0x270] sm:$0xff]
    %v4559 = vld [vmem:[%s4479 + $0x278] sm:$0xff]
    %v4560 = vld [vmem:[%s4479 + $0x280] sm:$0xff]
    %v4561 = vld [vmem:[%s4479 + $0x288] sm:$0xff]
    %v4562 = vld [vmem:[%s4479 + $0x290] sm:$0xff]
    %v4563 = vld [vmem:[%s4479 + $0x298] sm:$0xff]
    %v4564 = vld [vmem:[%s4479 + $0x2a0] sm:$0xff]
    %v4565 = vld [vmem:[%s4479 + $0x2a8] sm:$0xff]
    %v4566 = vld [vmem:[%s4479 + $0x2b0] sm:$0xff]
    %v4567 = vld [vmem:[%s4479 + $0x2b8] sm:$0xff]
    %v4568 = vld [vmem:[%s4479 + $0x2c0] sm:$0xff]
    %v4569 = vld [vmem:[%s4479 + $0x2c8] sm:$0xff]
    %v4570 = vld [vmem:[%s4479 + $0x2d0] sm:$0xff]
    %v4571 = vld [vmem:[%s4479 + $0x2d8] sm:$0xff]
    %v4572 = vld [vmem:[%s4479 + $0x2e0] sm:$0xff]
    %v4573 = vld [vmem:[%s4479 + $0x2e8] sm:$0xff]
    %v4574 = vld [vmem:[%s4479 + $0x2f0] sm:$0xff]
    %v4575 = vld [vmem:[%s4479 + $0x2f8] sm:$0xff]
    %v4576 = vld [vmem:[%s4479 + $0x300] sm:$0xff]
    %v4577 = vld [vmem:[%s4479 + $0x308] sm:$0xff]
    %v4578 = vld [vmem:[%s4479 + $0x310] sm:$0xff]
    %v4579 = vld [vmem:[%s4479 + $0x318] sm:$0xff]
    %v4680 = vunpack.c.l.b16 %v4480
    %v4681 = vunpack.c.h.b16 %v4480
    %v4682 = vunpack.c.l.b16 %v4481
    %v4683 = vunpack.c.h.b16 %v4481
    %v4684 = vunpack.c.l.b16 %v4482
    %v4685 = vunpack.c.h.b16 %v4482
    %v4686 = vunpack.c.l.b16 %v4483
    %v4687 = vunpack.c.h.b16 %v4483
    %v4688 = vunpack.c.l.b16 %v4484
    %v4689 = vunpack.c.h.b16 %v4484
    %v4690 = vunpack.c.l.b16 %v4485
    %v4691 = vunpack.c.h.b16 %v4485
    %v4692 = vunpack.c.l.b16 %v4486
    %v4693 = vunpack.c.h.b16 %v4486
    %v4694 = vunpack.c.l.b16 %v4487
    %v4695 = vunpack.c.h.b16 %v4487
    %v4696 = vunpack.c.l.b16 %v4488
    %v4697 = vunpack.c.h.b16 %v4488
    %v4698 = vunpack.c.l.b16 %v4489
    %v4699 = vunpack.c.h.b16 %v4489
    %v4700 = vunpack.c.l.b16 %v4490
    %v4701 = vunpack.c.h.b16 %v4490
    %v4702 = vunpack.c.l.b16 %v4491
    %v4703 = vunpack.c.h.b16 %v4491
    %v4704 = vunpack.c.l.b16 %v4492
    %v4705 = vunpack.c.h.b16 %v4492
    %v4706 = vunpack.c.l.b16 %v4493
    %v4707 = vunpack.c.h.b16 %v4493
    %v4708 = vunpack.c.l.b16 %v4494
    %v4709 = vunpack.c.h.b16 %v4494
    %v4710 = vunpack.c.l.b16 %v4495
    %v4711 = vunpack.c.h.b16 %v4495
    %v4712 = vunpack.c.l.b16 %v4496
    %v4713 = vunpack.c.h.b16 %v4496
    %v4714 = vunpack.c.l.b16 %v4497
    %v4715 = vunpack.c.h.b16 %v4497
    %v4716 = vunpack.c.l.b16 %v4498
    %v4717 = vunpack.c.h.b16 %v4498
    %v4718 = vunpack.c.l.b16 %v4499
    %v4719 = vunpack.c.h.b16 %v4499
    %v4720 = vunpack.c.l.b16 %v4500
    %v4721 = vunpack.c.h.b16 %v4500
    %v4722 = vunpack.c.l.b16 %v4501
    %v4723 = vunpack.c.h.b16 %v4501
    %v4724 = vunpack.c.l.b16 %v4502
    %v4725 = vunpack.c.h.b16 %v4502
    %v4726 = vunpack.c.l.b16 %v4503
    %v4727 = vunpack.c.h.b16 %v4503
    %v4728 = vunpack.c.l.b16 %v4504
    %v4729 = vunpack.c.h.b16 %v4504
    %v4730 = vunpack.c.l.b16 %v4505
    %v4731 = vunpack.c.h.b16 %v4505
    %v4732 = vunpack.c.l.b16 %v4506
    %v4733 = vunpack.c.h.b16 %v4506
    %v4734 = vunpack.c.l.b16 %v4507
    %v4735 = vunpack.c.h.b16 %v4507
    %v4736 = vunpack.c.l.b16 %v4508
    %v4737 = vunpack.c.h.b16 %v4508
    %v4738 = vunpack.c.l.b16 %v4509
    %v4739 = vunpack.c.h.b16 %v4509
    %v4740 = vunpack.c.l.b16 %v4510
    %v4741 = vunpack.c.h.b16 %v4510
    %v4742 = vunpack.c.l.b16 %v4511
    %v4743 = vunpack.c.h.b16 %v4511
    %v4744 = vunpack.c.l.b16 %v4512
    %v4745 = vunpack.c.h.b16 %v4512
    %v4746 = vunpack.c.l.b16 %v4513
    %v4747 = vunpack.c.h.b16 %v4513
    %v4748 = vunpack.c.l.b16 %v4514
    %v4749 = vunpack.c.h.b16 %v4514
    %v4750 = vunpack.c.l.b16 %v4515
    %v4751 = vunpack.c.h.b16 %v4515
    %v4752 = vunpack.c.l.b16 %v4516
    %v4753 = vunpack.c.h.b16 %v4516
    %v4754 = vunpack.c.l.b16 %v4517
    %v4755 = vunpack.c.h.b16 %v4517
    %v4756 = vunpack.c.l.b16 %v4518
    %v4757 = vunpack.c.h.b16 %v4518
    %v4758 = vunpack.c.l.b16 %v4519
    %v4759 = vunpack.c.h.b16 %v4519
    %v4760 = vunpack.c.l.b16 %v4520
    %v4761 = vunpack.c.h.b16 %v4520
    %v4762 = vunpack.c.l.b16 %v4521
    %v4763 = vunpack.c.h.b16 %v4521
    %v4764 = vunpack.c.l.b16 %v4522
    %v4765 = vunpack.c.h.b16 %v4522
    %v4766 = vunpack.c.l.b16 %v4523
    %v4767 = vunpack.c.h.b16 %v4523
    %v4768 = vunpack.c.l.b16 %v4524
    %v4769 = vunpack.c.h.b16 %v4524
    %v4770 = vunpack.c.l.b16 %v4525
    %v4771 = vunpack.c.h.b16 %v4525
    %v4772 = vunpack.c.l.b16 %v4526
    %v4773 = vunpack.c.h.b16 %v4526
    %v4774 = vunpack.c.l.b16 %v4527
    %v4775 = vunpack.c.h.b16 %v4527
    %v4776 = vunpack.c.l.b16 %v4528
    %v4777 = vunpack.c.h.b16 %v4528
    %v4778 = vunpack.c.l.b16 %v4529
    %v4779 = vunpack.c.h.b16 %v4529
    %v4780 = vunpack.c.l.b16 %v4530
    %v4781 = vunpack.c.h.b16 %v4530
    %v4782 = vunpack.c.l.b16 %v4531
    %v4783 = vunpack.c.h.b16 %v4531
    %v4784 = vunpack.c.l.b16 %v4532
    %v4785 = vunpack.c.h.b16 %v4532
    %v4786 = vunpack.c.l.b16 %v4533
    %v4787 = vunpack.c.h.b16 %v4533
    %v4788 = vunpack.c.l.b16 %v4534
    %v4789 = vunpack.c.h.b16 %v4534
    %v4790 = vunpack.c.l.b16 %v4535
    %v4791 = vunpack.c.h.b16 %v4535
    %v4792 = vunpack.c.l.b16 %v4536
    %v4793 = vunpack.c.h.b16 %v4536
    %v4794 = vunpack.c.l.b16 %v4537
    %v4795 = vunpack.c.h.b16 %v4537
    %v4796 = vunpack.c.l.b16 %v4538
    %v4797 = vunpack.c.h.b16 %v4538
    %v4798 = vunpack.c.l.b16 %v4539
    %v4799 = vunpack.c.h.b16 %v4539
    %v4800 = vunpack.c.l.b16 %v4540
    %v4801 = vunpack.c.h.b16 %v4540
    %v4802 = vunpack.c.l.b16 %v4541
    %v4803 = vunpack.c.h.b16 %v4541
    %v4804 = vunpack.c.l.b16 %v4542
    %v4805 = vunpack.c.h.b16 %v4542
    %v4806 = vunpack.c.l.b16 %v4543
    %v4807 = vunpack.c.h.b16 %v4543
    %v4808 = vunpack.c.l.b16 %v4544
    %v4809 = vunpack.c.h.b16 %v4544
    %v4810 = vunpack.c.l.b16 %v4545
    %v4811 = vunpack.c.h.b16 %v4545
    %v4812 = vunpack.c.l.b16 %v4546
    %v4813 = vunpack.c.h.b16 %v4546
    %v4814 = vunpack.c.l.b16 %v4547
    %v4815 = vunpack.c.h.b16 %v4547
    %v4816 = vunpack.c.l.b16 %v4548
    %v4817 = vunpack.c.h.b16 %v4548
    %v4818 = vunpack.c.l.b16 %v4549
    %v4819 = vunpack.c.h.b16 %v4549
    %v4820 = vunpack.c.l.b16 %v4550
    %v4821 = vunpack.c.h.b16 %v4550
    %v4822 = vunpack.c.l.b16 %v4551
    %v4823 = vunpack.c.h.b16 %v4551
    %v4824 = vunpack.c.l.b16 %v4552
    %v4825 = vunpack.c.h.b16 %v4552
    %v4826 = vunpack.c.l.b16 %v4553
    %v4827 = vunpack.c.h.b16 %v4553
    %v4828 = vunpack.c.l.b16 %v4554
    %v4829 = vunpack.c.h.b16 %v4554
    %v4830 = vunpack.c.l.b16 %v4555
    %v4831 = vunpack.c.h.b16 %v4555
    %v4832 = vunpack.c.l.b16 %v4556
    %v4833 = vunpack.c.h.b16 %v4556
    %v4834 = vunpack.c.l.b16 %v4557
    %v4835 = vunpack.c.h.b16 %v4557
    %v4836 = vunpack.c.l.b16 %v4558
    %v4837 = vunpack.c.h.b16 %v4558
    %v4838 = vunpack.c.l.b16 %v4559
    %v4839 = vunpack.c.h.b16 %v4559
    %v4840 = vunpack.c.l.b16 %v4560
    %v4841 = vunpack.c.h.b16 %v4560
    %v4842 = vunpack.c.l.b16 %v4561
    %v4843 = vunpack.c.h.b16 %v4561
    %v4844 = vunpack.c.l.b16 %v4562
    %v4845 = vunpack.c.h.b16 %v4562
    %v4846 = vunpack.c.l.b16 %v4563
    %v4847 = vunpack.c.h.b16 %v4563
    %v4848 = vunpack.c.l.b16 %v4564
    %v4849 = vunpack.c.h.b16 %v4564
    %v4850 = vunpack.c.l.b16 %v4565
    %v4851 = vunpack.c.h.b16 %v4565
    %v4852 = vunpack.c.l.b16 %v4566
    %v4853 = vunpack.c.h.b16 %v4566
    %v4854 = vunpack.c.l.b16 %v4567
    %v4855 = vunpack.c.h.b16 %v4567
    %v4856 = vunpack.c.l.b16 %v4568
    %v4857 = vunpack.c.h.b16 %v4568
    %v4858 = vunpack.c.l.b16 %v4569
    %v4859 = vunpack.c.h.b16 %v4569
    %v4860 = vunpack.c.l.b16 %v4570
    %v4861 = vunpack.c.h.b16 %v4570
    %v4862 = vunpack.c.l.b16 %v4571
    %v4863 = vunpack.c.h.b16 %v4571
    %v4864 = vunpack.c.l.b16 %v4572
    %v4865 = vunpack.c.h.b16 %v4572
    %v4866 = vunpack.c.l.b16 %v4573
    %v4867 = vunpack.c.h.b16 %v4573
    %v4868 = vunpack.c.l.b16 %v4574
    %v4869 = vunpack.c.h.b16 %v4574
    %v4870 = vunpack.c.l.b16 %v4575
    %v4871 = vunpack.c.h.b16 %v4575
    %v4872 = vunpack.c.l.b16 %v4576
    %v4873 = vunpack.c.h.b16 %v4576
    %v4874 = vunpack.c.l.b16 %v4577
    %v4875 = vunpack.c.h.b16 %v4577
    %v4876 = vunpack.c.l.b16 %v4578
    %v4877 = vunpack.c.h.b16 %v4578
    %v4878 = vunpack.c.l.b16 %v4579
    %v4879 = vunpack.c.h.b16 %v4579
    %v4880 = vpack.c.b16 %v4682, %v4680
    %v4881 = vpack.c.b16 %v4683, %v4681
    %v4882 = vpack.c.b16 %v4686, %v4684
    %v4883 = vpack.c.b16 %v4687, %v4685
    %v4884 = vpack.c.b16 %v4690, %v4688
    %v4885 = vpack.c.b16 %v4691, %v4689
    %v4886 = vpack.c.b16 %v4694, %v4692
    %v4887 = vpack.c.b16 %v4695, %v4693
    %v4888 = vpack.c.b16 %v4698, %v4696
    %v4889 = vpack.c.b16 %v4699, %v4697
    %v4890 = vpack.c.b16 %v4702, %v4700
    %v4891 = vpack.c.b16 %v4703, %v4701
    %v4892 = vpack.c.b16 %v4706, %v4704
    %v4893 = vpack.c.b16 %v4707, %v4705
    %v4894 = vpack.c.b16 %v4710, %v4708
    %v4895 = vpack.c.b16 %v4711, %v4709
    %v4896 = vpack.c.b16 %v4714, %v4712
    %v4897 = vpack.c.b16 %v4715, %v4713
    %v4898 = vpack.c.b16 %v4718, %v4716
    %v4899 = vpack.c.b16 %v4719, %v4717
    %v4900 = vpack.c.b16 %v4722, %v4720
    %v4901 = vpack.c.b16 %v4723, %v4721
    %v4902 = vpack.c.b16 %v4726, %v4724
    %v4903 = vpack.c.b16 %v4727, %v4725
    %v4904 = vpack.c.b16 %v4730, %v4728
    %v4905 = vpack.c.b16 %v4731, %v4729
    %v4906 = vpack.c.b16 %v4734, %v4732
    %v4907 = vpack.c.b16 %v4735, %v4733
    %v4908 = vpack.c.b16 %v4738, %v4736
    %v4909 = vpack.c.b16 %v4739, %v4737
    %v4910 = vpack.c.b16 %v4742, %v4740
    %v4911 = vpack.c.b16 %v4743, %v4741
    %v4912 = vpack.c.b16 %v4746, %v4744
    %v4913 = vpack.c.b16 %v4747, %v4745
    %v4914 = vpack.c.b16 %v4750, %v4748
    %v4915 = vpack.c.b16 %v4751, %v4749
    %v4916 = vpack.c.b16 %v4754, %v4752
    %v4917 = vpack.c.b16 %v4755, %v4753
    %v4918 = vpack.c.b16 %v4758, %v4756
    %v4919 = vpack.c.b16 %v4759, %v4757
    %v4920 = vpack.c.b16 %v4762, %v4760
    %v4921 = vpack.c.b16 %v4763, %v4761
    %v4922 = vpack.c.b16 %v4766, %v4764
    %v4923 = vpack.c.b16 %v4767, %v4765
    %v4924 = vpack.c.b16 %v4770, %v4768
    %v4925 = vpack.c.b16 %v4771, %v4769
    %v4926 = vpack.c.b16 %v4774, %v4772
    %v4927 = vpack.c.b16 %v4775, %v4773
    %v4928 = vpack.c.b16 %v4778, %v4776
    %v4929 = vpack.c.b16 %v4779, %v4777
    %v4930 = vpack.c.b16 %v4782, %v4780
    %v4931 = vpack.c.b16 %v4783, %v4781
    %v4932 = vpack.c.b16 %v4786, %v4784
    %v4933 = vpack.c.b16 %v4787, %v4785
    %v4934 = vpack.c.b16 %v4790, %v4788
    %v4935 = vpack.c.b16 %v4791, %v4789
    %v4936 = vpack.c.b16 %v4794, %v4792
    %v4937 = vpack.c.b16 %v4795, %v4793
    %v4938 = vpack.c.b16 %v4798, %v4796
    %v4939 = vpack.c.b16 %v4799, %v4797
    %v4940 = vpack.c.b16 %v4802, %v4800
    %v4941 = vpack.c.b16 %v4803, %v4801
    %v4942 = vpack.c.b16 %v4806, %v4804
    %v4943 = vpack.c.b16 %v4807, %v4805
    %v4944 = vpack.c.b16 %v4810, %v4808
    %v4945 = vpack.c.b16 %v4811, %v4809
    %v4946 = vpack.c.b16 %v4814, %v4812
    %v4947 = vpack.c.b16 %v4815, %v4813
    %v4948 = vpack.c.b16 %v4818, %v4816
    %v4949 = vpack.c.b16 %v4819, %v4817
    %v4950 = vpack.c.b16 %v4822, %v4820
    %v4951 = vpack.c.b16 %v4823, %v4821
    %v4952 = vpack.c.b16 %v4826, %v4824
    %v4953 = vpack.c.b16 %v4827, %v4825
    %v4954 = vpack.c.b16 %v4830, %v4828
    %v4955 = vpack.c.b16 %v4831, %v4829
    %v4956 = vpack.c.b16 %v4834, %v4832
    %v4957 = vpack.c.b16 %v4835, %v4833
    %v4958 = vpack.c.b16 %v4838, %v4836
    %v4959 = vpack.c.b16 %v4839, %v4837
    %v4960 = vpack.c.b16 %v4842, %v4840
    %v4961 = vpack.c.b16 %v4843, %v4841
    %v4962 = vpack.c.b16 %v4846, %v4844
    %v4963 = vpack.c.b16 %v4847, %v4845
    %v4964 = vpack.c.b16 %v4850, %v4848
    %v4965 = vpack.c.b16 %v4851, %v4849
    %v4966 = vpack.c.b16 %v4854, %v4852
    %v4967 = vpack.c.b16 %v4855, %v4853
    %v4968 = vpack.c.b16 %v4858, %v4856
    %v4969 = vpack.c.b16 %v4859, %v4857
    %v4970 = vpack.c.b16 %v4862, %v4860
    %v4971 = vpack.c.b16 %v4863, %v4861
    %v4972 = vpack.c.b16 %v4866, %v4864
    %v4973 = vpack.c.b16 %v4867, %v4865
    %v4974 = vpack.c.b16 %v4870, %v4868
    %v4975 = vpack.c.b16 %v4871, %v4869
    %v4976 = vpack.c.b16 %v4874, %v4872
    %v4977 = vpack.c.b16 %v4875, %v4873
    %v4978 = vpack.c.b16 %v4878, %v4876
    %v4979 = vpack.c.b16 %v4879, %v4877
    %v5081 = vsel %vm3229, %v4478, 0
    %5083 = vmatprep.subr.bf16.mxu0 %v4895
    %5084 = vmatpush1.bf16.msra.mxu0 %v4894
    %5085 = vmatprep.subr.bf16.mxu0 %v4893
    %5086 = vmatpush1.bf16.msra.mxu0 %v4892
    %5087 = vmatprep.subr.bf16.mxu0 %v4891
    %5088 = vmatpush1.bf16.msra.mxu0 %v4890
    %5089 = vmatprep.subr.bf16.mxu0 %v4889
    %5090 = vmatpush1.bf16.msra.mxu0 %v4888
    %5091 = vmatprep.subr.bf16.mxu0 %v4887
    %5092 = vmatpush1.bf16.msra.mxu0 %v4886
    %5093 = vmatprep.subr.bf16.mxu0 %v4885
    %5094 = vmatpush1.bf16.msra.mxu0 %v4884
    %5095 = vmatprep.subr.bf16.mxu0 %v4883
    %5096 = vmatpush1.bf16.msra.mxu0 %v4882
    %5097 = vmatprep.subr.bf16.mxu0 %v4881
    %5098 = vmatpush1.bf16.msra.mxu0 %v4880
    %5099 = vmatprep.subr.bf16.mxu0 %v4911
    %5100 = vmatpush2.bf16.msra.mxu0 %v4910
    %5101 = vmatprep.subr.bf16.mxu0 %v4909
    %5102 = vmatpush2.bf16.msra.mxu0 %v4908
    %5103 = vmatprep.subr.bf16.mxu0 %v4907
    %5104 = vmatpush2.bf16.msra.mxu0 %v4906
    %5105 = vmatprep.subr.bf16.mxu0 %v4905
    %5106 = vmatpush2.bf16.msra.mxu0 %v4904
    %5107 = vmatprep.subr.bf16.mxu0 %v4903
    %5108 = vmatpush2.bf16.msra.mxu0 %v4902
    %5109 = vmatprep.subr.bf16.mxu0 %v4901
    %5110 = vmatpush2.bf16.msra.mxu0 %v4900
    %5111 = vmatprep.subr.bf16.mxu0 %v4899
    %5112 = vmatpush2.bf16.msra.mxu0 %v4898
    %5113 = vmatprep.subr.bf16.mxu0 %v4897
    %5114 = vmatpush2.bf16.msra.mxu0 %v4896
    %5115 = vmatprep.mubr.bf16.mxu0 %v4473
    %5116 = vmatmul.mubr.bf16.gmra.mxu0 %v4472
    %v5117 = vpop.f32.mrf.mxu0
    %v5118 = vadd.f32 0.0, %v5117
    %v5119 = vpop.f32.mrf.mxu0
    %v5120 = vadd.f32 0.0, %v5119
    %v5121 = vpop.f32.mrf.mxu0
    %v5122 = vadd.f32 0.0, %v5121
    %v5123 = vpop.f32.mrf.mxu0
    %v5124 = vadd.f32 0.0, %v5123
    %5125 = vdwg.mxu0
    %5126 = vmatprep.subr.bf16.mxu0 %v4927
    %5127 = vmatpush1.bf16.msra.mxu0 %v4926
    %5128 = vmatprep.subr.bf16.mxu0 %v4925
    %5129 = vmatpush1.bf16.msra.mxu0 %v4924
    %5130 = vmatprep.subr.bf16.mxu0 %v4923
    %5131 = vmatpush1.bf16.msra.mxu0 %v4922
    %5132 = vmatprep.subr.bf16.mxu0 %v4921
    %5133 = vmatpush1.bf16.msra.mxu0 %v4920
    %5134 = vmatprep.subr.bf16.mxu0 %v4919
    %5135 = vmatpush1.bf16.msra.mxu0 %v4918
    %5136 = vmatprep.subr.bf16.mxu0 %v4917
    %5137 = vmatpush1.bf16.msra.mxu0 %v4916
    %5138 = vmatprep.subr.bf16.mxu0 %v4915
    %5139 = vmatpush1.bf16.msra.mxu0 %v4914
    %5140 = vmatprep.subr.bf16.mxu0 %v4913
    %5141 = vmatpush1.bf16.msra.mxu0 %v4912
    %5142 = vmatprep.subr.bf16.mxu0 %v4943
    %5143 = vmatpush2.bf16.msra.mxu0 %v4942
    %5144 = vmatprep.subr.bf16.mxu0 %v4941
    %5145 = vmatpush2.bf16.msra.mxu0 %v4940
    %5146 = vmatprep.subr.bf16.mxu0 %v4939
    %5147 = vmatpush2.bf16.msra.mxu0 %v4938
    %5148 = vmatprep.subr.bf16.mxu0 %v4937
    %5149 = vmatpush2.bf16.msra.mxu0 %v4936
    %5150 = vmatprep.subr.bf16.mxu0 %v4935
    %5151 = vmatpush2.bf16.msra.mxu0 %v4934
    %5152 = vmatprep.subr.bf16.mxu0 %v4933
    %5153 = vmatpush2.bf16.msra.mxu0 %v4932
    %5154 = vmatprep.subr.bf16.mxu0 %v4931
    %5155 = vmatpush2.bf16.msra.mxu0 %v4930
    %5156 = vmatprep.subr.bf16.mxu0 %v4929
    %5157 = vmatpush2.bf16.msra.mxu0 %v4928
    %5158 = vmatprep.mubr.bf16.mxu0 %v4475
    %5159 = vmatmul.mubr.bf16.gmra.mxu0 %v4474
    %v5160 = vpop.f32.mrf.mxu0
    %v5161 = vadd.f32 %v5118, %v5160
    %v5162 = vpop.f32.mrf.mxu0
    %v5163 = vadd.f32 %v5120, %v5162
    %v5164 = vpop.f32.mrf.mxu0
    %v5165 = vadd.f32 %v5122, %v5164
    %v5166 = vpop.f32.mrf.mxu0
    %v5167 = vadd.f32 %v5124, %v5166
    %5168 = vdwg.mxu0
    %5169 = vmatprep.subr.bf16.mxu0 %v4959
    %5170 = vmatpush1.bf16.msra.mxu0 %v4958
    %5171 = vmatprep.subr.bf16.mxu0 %v4957
    %5172 = vmatpush1.bf16.msra.mxu0 %v4956
    %5173 = vmatprep.subr.bf16.mxu0 %v4955
    %5174 = vmatpush1.bf16.msra.mxu0 %v4954
    %5175 = vmatprep.subr.bf16.mxu0 %v4953
    %5176 = vmatpush1.bf16.msra.mxu0 %v4952
    %5177 = vmatprep.subr.bf16.mxu0 %v4951
    %5178 = vmatpush1.bf16.msra.mxu0 %v4950
    %5179 = vmatprep.subr.bf16.mxu0 %v4949
    %5180 = vmatpush1.bf16.msra.mxu0 %v4948
    %5181 = vmatprep.subr.bf16.mxu0 %v4947
    %5182 = vmatpush1.bf16.msra.mxu0 %v4946
    %5183 = vmatprep.subr.bf16.mxu0 %v4945
    %5184 = vmatpush1.bf16.msra.mxu0 %v4944
    %5185 = vmatprep.subr.bf16.mxu0 %v4975
    %5186 = vmatpush2.bf16.msra.mxu0 %v4974
    %5187 = vmatprep.subr.bf16.mxu0 %v4973
    %5188 = vmatpush2.bf16.msra.mxu0 %v4972
    %5189 = vmatprep.subr.bf16.mxu0 %v4971
    %5190 = vmatpush2.bf16.msra.mxu0 %v4970
    %5191 = vmatprep.subr.bf16.mxu0 %v4969
    %5192 = vmatpush2.bf16.msra.mxu0 %v4968
    %5193 = vmatprep.subr.bf16.mxu0 %v4967
    %5194 = vmatpush2.bf16.msra.mxu0 %v4966
    %5195 = vmatprep.subr.bf16.mxu0 %v4965
    %5196 = vmatpush2.bf16.msra.mxu0 %v4964
    %5197 = vmatprep.subr.bf16.mxu0 %v4963
    %5198 = vmatpush2.bf16.msra.mxu0 %v4962
    %5199 = vmatprep.subr.bf16.mxu0 %v4961
    %5200 = vmatpush2.bf16.msra.mxu0 %v4960
    %5201 = vmatprep.mubr.bf16.mxu0 %v4477
    %5202 = vmatmul.mubr.bf16.gmra.mxu0 %v4476
    %v5203 = vpop.f32.mrf.mxu0
    %v5204 = vadd.f32 %v5161, %v5203
    %v5205 = vpop.f32.mrf.mxu0
    %v5206 = vadd.f32 %v5163, %v5205
    %v5207 = vpop.f32.mrf.mxu0
    %v5208 = vadd.f32 %v5165, %v5207
    %v5209 = vpop.f32.mrf.mxu0
    %v5210 = vadd.f32 %v5167, %v5209
    %5211 = vdwg.mxu0
    %5212 = vmatprep.subr.bf16.mxu0 0
    %5213 = vmatpush1.bf16.msra.mxu0 0
    %5214 = vmatprep.subr.bf16.mxu0 0
    %5215 = vmatpush1.bf16.msra.mxu0 0
    %5216 = vmatprep.subr.bf16.mxu0 0
    %5217 = vmatpush1.bf16.msra.mxu0 0
    %5218 = vmatprep.subr.bf16.mxu0 0
    %5219 = vmatpush1.bf16.msra.mxu0 0
    %5220 = vmatprep.subr.bf16.mxu0 0
    %5221 = vmatpush1.bf16.msra.mxu0 0
    %5222 = vmatprep.subr.bf16.mxu0 0
    %5223 = vmatpush1.bf16.msra.mxu0 0
    %5224 = vmatprep.subr.bf16.mxu0 %v4979
    %5225 = vmatpush1.bf16.msra.mxu0 %v4978
    %5226 = vmatprep.subr.bf16.mxu0 %v4977
    %5227 = vmatpush1.bf16.msra.mxu0 %v4976
    %5228 = vmatprep.subr.bf16.mxu0 0
    %5229 = vmatpush2.bf16.msra.mxu0 0
    %5230 = vmatprep.subr.bf16.mxu0 0
    %5231 = vmatpush2.bf16.msra.mxu0 0
    %5232 = vmatprep.subr.bf16.mxu0 0
    %5233 = vmatpush2.bf16.msra.mxu0 0
    %5234 = vmatprep.subr.bf16.mxu0 0
    %5235 = vmatpush2.bf16.msra.mxu0 0
    %5236 = vmatprep.subr.bf16.mxu0 0
    %5237 = vmatpush2.bf16.msra.mxu0 0
    %5238 = vmatprep.subr.bf16.mxu0 0
    %5239 = vmatpush2.bf16.msra.mxu0 0
    %5240 = vmatprep.subr.bf16.mxu0 0
    %5241 = vmatpush2.bf16.msra.mxu0 0
    %5242 = vmatprep.subr.bf16.mxu0 0
    %5243 = vmatpush2.bf16.msra.mxu0 0
    %5244 = vmatprep.mubr.bf16.mxu0 0
    %5245 = vmatmul.mubr.bf16.gmra.mxu0 %v5081
    %v5246 = vpop.f32.mrf.mxu0
    %v5247 = vadd.f32 %v5204, %v5246
    %v5248 = vpop.f32.mrf.mxu0
    %v5249 = vadd.f32 %v5206, %v5248
    %v5250 = vpop.f32.mrf.mxu0
    %v5251 = vadd.f32 %v5208, %v5250
    %v5252 = vpop.f32.mrf.mxu0
    %v5253 = vadd.f32 %v5210, %v5252
    %5254 = vdwg.mxu0
    %v5355 = vunpack.c.l.b16 %v4260
    %v5356 = vunpack.c.h.b16 %v4260
    %v5357 = vunpack.c.l.b16 %v4261
    %v5358 = vunpack.c.h.b16 %v4261
    %v5359 = vunpack.c.l.b16 %v4262
    %v5360 = vunpack.c.h.b16 %v4262
    %v5361 = vunpack.c.l.b16 %v4263
    %v5362 = vunpack.c.h.b16 %v4263
    %v5363 = vunpack.c.l.b16 %v4264
    %v5364 = vunpack.c.h.b16 %v4264
    %v5365 = vunpack.c.l.b16 %v4265
    %v5366 = vunpack.c.h.b16 %v4265
    %v5367 = vunpack.c.l.b16 %v4266
    %v5368 = vunpack.c.h.b16 %v4266
    %v5369 = vunpack.c.l.b16 %v4267
    %v5370 = vunpack.c.h.b16 %v4267
    %v5371 = vunpack.c.l.b16 %v4268
    %v5372 = vunpack.c.h.b16 %v4268
    %v5373 = vunpack.c.l.b16 %v4269
    %v5374 = vunpack.c.h.b16 %v4269
    %v5375 = vunpack.c.l.b16 %v4270
    %v5376 = vunpack.c.h.b16 %v4270
    %v5377 = vunpack.c.l.b16 %v4271
    %v5378 = vunpack.c.h.b16 %v4271
    %v5379 = vunpack.c.l.b16 %v4272
    %v5380 = vunpack.c.h.b16 %v4272
    %v5381 = vunpack.c.l.b16 %v4273
    %v5382 = vunpack.c.h.b16 %v4273
    %v5383 = vunpack.c.l.b16 %v4274
    %v5384 = vunpack.c.h.b16 %v4274
    %v5385 = vunpack.c.l.b16 %v4275
    %v5386 = vunpack.c.h.b16 %v4275
    %v5387 = vunpack.c.l.b16 %v4276
    %v5388 = vunpack.c.h.b16 %v4276
    %v5389 = vunpack.c.l.b16 %v4277
    %v5390 = vunpack.c.h.b16 %v4277
    %v5391 = vunpack.c.l.b16 %v4278
    %v5392 = vunpack.c.h.b16 %v4278
    %v5393 = vunpack.c.l.b16 %v4279
    %v5394 = vunpack.c.h.b16 %v4279
    %v5395 = vunpack.c.l.b16 %v4280
    %v5396 = vunpack.c.h.b16 %v4280
    %v5397 = vunpack.c.l.b16 %v4281
    %v5398 = vunpack.c.h.b16 %v4281
    %v5399 = vunpack.c.l.b16 %v4282
    %v5400 = vunpack.c.h.b16 %v4282
    %v5401 = vunpack.c.l.b16 %v4283
    %v5402 = vunpack.c.h.b16 %v4283
    %v5403 = vunpack.c.l.b16 %v4284
    %v5404 = vunpack.c.h.b16 %v4284
    %v5405 = vunpack.c.l.b16 %v4285
    %v5406 = vunpack.c.h.b16 %v4285
    %v5407 = vunpack.c.l.b16 %v4286
    %v5408 = vunpack.c.h.b16 %v4286
    %v5409 = vunpack.c.l.b16 %v4287
    %v5410 = vunpack.c.h.b16 %v4287
    %v5411 = vunpack.c.l.b16 %v4288
    %v5412 = vunpack.c.h.b16 %v4288
    %v5413 = vunpack.c.l.b16 %v4289
    %v5414 = vunpack.c.h.b16 %v4289
    %v5415 = vunpack.c.l.b16 %v4290
    %v5416 = vunpack.c.h.b16 %v4290
    %v5417 = vunpack.c.l.b16 %v4291
    %v5418 = vunpack.c.h.b16 %v4291
    %v5419 = vunpack.c.l.b16 %v4292
    %v5420 = vunpack.c.h.b16 %v4292
    %v5421 = vunpack.c.l.b16 %v4293
    %v5422 = vunpack.c.h.b16 %v4293
    %v5423 = vunpack.c.l.b16 %v4294
    %v5424 = vunpack.c.h.b16 %v4294
    %v5425 = vunpack.c.l.b16 %v4295
    %v5426 = vunpack.c.h.b16 %v4295
    %v5427 = vunpack.c.l.b16 %v4296
    %v5428 = vunpack.c.h.b16 %v4296
    %v5429 = vunpack.c.l.b16 %v4297
    %v5430 = vunpack.c.h.b16 %v4297
    %v5431 = vunpack.c.l.b16 %v4298
    %v5432 = vunpack.c.h.b16 %v4298
    %v5433 = vunpack.c.l.b16 %v4299
    %v5434 = vunpack.c.h.b16 %v4299
    %v5435 = vunpack.c.l.b16 %v4300
    %v5436 = vunpack.c.h.b16 %v4300
    %v5437 = vunpack.c.l.b16 %v4301
    %v5438 = vunpack.c.h.b16 %v4301
    %v5439 = vunpack.c.l.b16 %v4302
    %v5440 = vunpack.c.h.b16 %v4302
    %v5441 = vunpack.c.l.b16 %v4303
    %v5442 = vunpack.c.h.b16 %v4303
    %v5443 = vunpack.c.l.b16 %v4304
    %v5444 = vunpack.c.h.b16 %v4304
    %v5445 = vunpack.c.l.b16 %v4305
    %v5446 = vunpack.c.h.b16 %v4305
    %v5447 = vunpack.c.l.b16 %v4306
    %v5448 = vunpack.c.h.b16 %v4306
    %v5449 = vunpack.c.l.b16 %v4307
    %v5450 = vunpack.c.h.b16 %v4307
    %v5451 = vunpack.c.l.b16 %v4308
    %v5452 = vunpack.c.h.b16 %v4308
    %v5453 = vunpack.c.l.b16 %v4309
    %v5454 = vunpack.c.h.b16 %v4309
    %v5455 = vunpack.c.l.b16 %v4310
    %v5456 = vunpack.c.h.b16 %v4310
    %v5457 = vunpack.c.l.b16 %v4311
    %v5458 = vunpack.c.h.b16 %v4311
    %v5459 = vunpack.c.l.b16 %v4312
    %v5460 = vunpack.c.h.b16 %v4312
    %v5461 = vunpack.c.l.b16 %v4313
    %v5462 = vunpack.c.h.b16 %v4313
    %v5463 = vunpack.c.l.b16 %v4314
    %v5464 = vunpack.c.h.b16 %v4314
    %v5465 = vunpack.c.l.b16 %v4315
    %v5466 = vunpack.c.h.b16 %v4315
    %v5467 = vunpack.c.l.b16 %v4316
    %v5468 = vunpack.c.h.b16 %v4316
    %v5469 = vunpack.c.l.b16 %v4317
    %v5470 = vunpack.c.h.b16 %v4317
    %v5471 = vunpack.c.l.b16 %v4318
    %v5472 = vunpack.c.h.b16 %v4318
    %v5473 = vunpack.c.l.b16 %v4319
    %v5474 = vunpack.c.h.b16 %v4319
    %v5475 = vunpack.c.l.b16 %v4320
    %v5476 = vunpack.c.h.b16 %v4320
    %v5477 = vunpack.c.l.b16 %v4321
    %v5478 = vunpack.c.h.b16 %v4321
    %v5479 = vunpack.c.l.b16 %v4322
    %v5480 = vunpack.c.h.b16 %v4322
    %v5481 = vunpack.c.l.b16 %v4323
    %v5482 = vunpack.c.h.b16 %v4323
    %v5483 = vunpack.c.l.b16 %v4324
    %v5484 = vunpack.c.h.b16 %v4324
    %v5485 = vunpack.c.l.b16 %v4325
    %v5486 = vunpack.c.h.b16 %v4325
    %v5487 = vunpack.c.l.b16 %v4326
    %v5488 = vunpack.c.h.b16 %v4326
    %v5489 = vunpack.c.l.b16 %v4327
    %v5490 = vunpack.c.h.b16 %v4327
    %v5491 = vunpack.c.l.b16 %v4328
    %v5492 = vunpack.c.h.b16 %v4328
    %v5493 = vunpack.c.l.b16 %v4329
    %v5494 = vunpack.c.h.b16 %v4329
    %v5495 = vunpack.c.l.b16 %v4330
    %v5496 = vunpack.c.h.b16 %v4330
    %v5497 = vunpack.c.l.b16 %v4331
    %v5498 = vunpack.c.h.b16 %v4331
    %v5499 = vunpack.c.l.b16 %v4332
    %v5500 = vunpack.c.h.b16 %v4332
    %v5501 = vunpack.c.l.b16 %v4333
    %v5502 = vunpack.c.h.b16 %v4333
    %v5503 = vunpack.c.l.b16 %v4334
    %v5504 = vunpack.c.h.b16 %v4334
    %v5505 = vunpack.c.l.b16 %v4335
    %v5506 = vunpack.c.h.b16 %v4335
    %v5507 = vunpack.c.l.b16 %v4336
    %v5508 = vunpack.c.h.b16 %v4336
    %v5509 = vunpack.c.l.b16 %v4337
    %v5510 = vunpack.c.h.b16 %v4337
    %v5511 = vunpack.c.l.b16 %v4338
    %v5512 = vunpack.c.h.b16 %v4338
    %v5513 = vunpack.c.l.b16 %v4339
    %v5514 = vunpack.c.h.b16 %v4339
    %v5515 = vunpack.c.l.b16 %v4340
    %v5516 = vunpack.c.h.b16 %v4340
    %v5517 = vunpack.c.l.b16 %v4341
    %v5518 = vunpack.c.h.b16 %v4341
    %v5519 = vunpack.c.l.b16 %v4342
    %v5520 = vunpack.c.h.b16 %v4342
    %v5521 = vunpack.c.l.b16 %v4343
    %v5522 = vunpack.c.h.b16 %v4343
    %v5523 = vunpack.c.l.b16 %v4344
    %v5524 = vunpack.c.h.b16 %v4344
    %v5525 = vunpack.c.l.b16 %v4345
    %v5526 = vunpack.c.h.b16 %v4345
    %v5527 = vunpack.c.l.b16 %v4346
    %v5528 = vunpack.c.h.b16 %v4346
    %v5529 = vunpack.c.l.b16 %v4347
    %v5530 = vunpack.c.h.b16 %v4347
    %v5531 = vunpack.c.l.b16 %v4348
    %v5532 = vunpack.c.h.b16 %v4348
    %v5533 = vunpack.c.l.b16 %v4349
    %v5534 = vunpack.c.h.b16 %v4349
    %v5535 = vunpack.c.l.b16 %v4350
    %v5536 = vunpack.c.h.b16 %v4350
    %v5537 = vunpack.c.l.b16 %v4351
    %v5538 = vunpack.c.h.b16 %v4351
    %v5539 = vunpack.c.l.b16 %v4352
    %v5540 = vunpack.c.h.b16 %v4352
    %v5541 = vunpack.c.l.b16 %v4353
    %v5542 = vunpack.c.h.b16 %v4353
    %v5543 = vunpack.c.l.b16 %v4354
    %v5544 = vunpack.c.h.b16 %v4354
    %v5545 = vunpack.c.l.b16 %v4355
    %v5546 = vunpack.c.h.b16 %v4355
    %v5547 = vunpack.c.l.b16 %v4356
    %v5548 = vunpack.c.h.b16 %v4356
    %v5549 = vunpack.c.l.b16 %v4357
    %v5550 = vunpack.c.h.b16 %v4357
    %v5551 = vunpack.c.l.b16 %v4358
    %v5552 = vunpack.c.h.b16 %v4358
    %v5553 = vunpack.c.l.b16 %v4359
    %v5554 = vunpack.c.h.b16 %v4359
    %v5555 = vpack.c.b16 %v5357, %v5355
    %v5556 = vpack.c.b16 %v5358, %v5356
    %v5557 = vpack.c.b16 %v5361, %v5359
    %v5558 = vpack.c.b16 %v5362, %v5360
    %v5559 = vpack.c.b16 %v5365, %v5363
    %v5560 = vpack.c.b16 %v5366, %v5364
    %v5561 = vpack.c.b16 %v5369, %v5367
    %v5562 = vpack.c.b16 %v5370, %v5368
    %v5563 = vpack.c.b16 %v5373, %v5371
    %v5564 = vpack.c.b16 %v5374, %v5372
    %v5565 = vpack.c.b16 %v5377, %v5375
    %v5566 = vpack.c.b16 %v5378, %v5376
    %v5567 = vpack.c.b16 %v5381, %v5379
    %v5568 = vpack.c.b16 %v5382, %v5380
    %v5569 = vpack.c.b16 %v5385, %v5383
    %v5570 = vpack.c.b16 %v5386, %v5384
    %v5571 = vpack.c.b16 %v5389, %v5387
    %v5572 = vpack.c.b16 %v5390, %v5388
    %v5573 = vpack.c.b16 %v5393, %v5391
    %v5574 = vpack.c.b16 %v5394, %v5392
    %v5575 = vpack.c.b16 %v5397, %v5395
    %v5576 = vpack.c.b16 %v5398, %v5396
    %v5577 = vpack.c.b16 %v5401, %v5399
    %v5578 = vpack.c.b16 %v5402, %v5400
    %v5579 = vpack.c.b16 %v5405, %v5403
    %v5580 = vpack.c.b16 %v5406, %v5404
    %v5581 = vpack.c.b16 %v5409, %v5407
    %v5582 = vpack.c.b16 %v5410, %v5408
    %v5583 = vpack.c.b16 %v5413, %v5411
    %v5584 = vpack.c.b16 %v5414, %v5412
    %v5585 = vpack.c.b16 %v5417, %v5415
    %v5586 = vpack.c.b16 %v5418, %v5416
    %v5587 = vpack.c.b16 %v5421, %v5419
    %v5588 = vpack.c.b16 %v5422, %v5420
    %v5589 = vpack.c.b16 %v5425, %v5423
    %v5590 = vpack.c.b16 %v5426, %v5424
    %v5591 = vpack.c.b16 %v5429, %v5427
    %v5592 = vpack.c.b16 %v5430, %v5428
    %v5593 = vpack.c.b16 %v5433, %v5431
    %v5594 = vpack.c.b16 %v5434, %v5432
    %v5595 = vpack.c.b16 %v5437, %v5435
    %v5596 = vpack.c.b16 %v5438, %v5436
    %v5597 = vpack.c.b16 %v5441, %v5439
    %v5598 = vpack.c.b16 %v5442, %v5440
    %v5599 = vpack.c.b16 %v5445, %v5443
    %v5600 = vpack.c.b16 %v5446, %v5444
    %v5601 = vpack.c.b16 %v5449, %v5447
    %v5602 = vpack.c.b16 %v5450, %v5448
    %v5603 = vpack.c.b16 %v5453, %v5451
    %v5604 = vpack.c.b16 %v5454, %v5452
    %v5605 = vpack.c.b16 %v5457, %v5455
    %v5606 = vpack.c.b16 %v5458, %v5456
    %v5607 = vpack.c.b16 %v5461, %v5459
    %v5608 = vpack.c.b16 %v5462, %v5460
    %v5609 = vpack.c.b16 %v5465, %v5463
    %v5610 = vpack.c.b16 %v5466, %v5464
    %v5611 = vpack.c.b16 %v5469, %v5467
    %v5612 = vpack.c.b16 %v5470, %v5468
    %v5613 = vpack.c.b16 %v5473, %v5471
    %v5614 = vpack.c.b16 %v5474, %v5472
    %v5615 = vpack.c.b16 %v5477, %v5475
    %v5616 = vpack.c.b16 %v5478, %v5476
    %v5617 = vpack.c.b16 %v5481, %v5479
    %v5618 = vpack.c.b16 %v5482, %v5480
    %v5619 = vpack.c.b16 %v5485, %v5483
    %v5620 = vpack.c.b16 %v5486, %v5484
    %v5621 = vpack.c.b16 %v5489, %v5487
    %v5622 = vpack.c.b16 %v5490, %v5488
    %v5623 = vpack.c.b16 %v5493, %v5491
    %v5624 = vpack.c.b16 %v5494, %v5492
    %v5625 = vpack.c.b16 %v5497, %v5495
    %v5626 = vpack.c.b16 %v5498, %v5496
    %v5627 = vpack.c.b16 %v5501, %v5499
    %v5628 = vpack.c.b16 %v5502, %v5500
    %v5629 = vpack.c.b16 %v5505, %v5503
    %v5630 = vpack.c.b16 %v5506, %v5504
    %v5631 = vpack.c.b16 %v5509, %v5507
    %v5632 = vpack.c.b16 %v5510, %v5508
    %v5633 = vpack.c.b16 %v5513, %v5511
    %v5634 = vpack.c.b16 %v5514, %v5512
    %v5635 = vpack.c.b16 %v5517, %v5515
    %v5636 = vpack.c.b16 %v5518, %v5516
    %v5637 = vpack.c.b16 %v5521, %v5519
    %v5638 = vpack.c.b16 %v5522, %v5520
    %v5639 = vpack.c.b16 %v5525, %v5523
    %v5640 = vpack.c.b16 %v5526, %v5524
    %v5641 = vpack.c.b16 %v5529, %v5527
    %v5642 = vpack.c.b16 %v5530, %v5528
    %v5643 = vpack.c.b16 %v5533, %v5531
    %v5644 = vpack.c.b16 %v5534, %v5532
    %v5645 = vpack.c.b16 %v5537, %v5535
    %v5646 = vpack.c.b16 %v5538, %v5536
    %v5647 = vpack.c.b16 %v5541, %v5539
    %v5648 = vpack.c.b16 %v5542, %v5540
    %v5649 = vpack.c.b16 %v5545, %v5543
    %v5650 = vpack.c.b16 %v5546, %v5544
    %v5651 = vpack.c.b16 %v5549, %v5547
    %v5652 = vpack.c.b16 %v5550, %v5548
    %v5653 = vpack.c.b16 %v5553, %v5551
    %v5654 = vpack.c.b16 %v5554, %v5552
    %v5756 = vsel %vm3229, %v4259, 0
    %5758 = vmatprep.subr.bf16.mxu0 %v5570
    %5759 = vmatpush1.bf16.msra.mxu0 %v5569
    %5760 = vmatprep.subr.bf16.mxu0 %v5568
    %5761 = vmatpush1.bf16.msra.mxu0 %v5567
    %5762 = vmatprep.subr.bf16.mxu0 %v5566
    %5763 = vmatpush1.bf16.msra.mxu0 %v5565
    %5764 = vmatprep.subr.bf16.mxu0 %v5564
    %5765 = vmatpush1.bf16.msra.mxu0 %v5563
    %5766 = vmatprep.subr.bf16.mxu0 %v5562
    %5767 = vmatpush1.bf16.msra.mxu0 %v5561
    %5768 = vmatprep.subr.bf16.mxu0 %v5560
    %5769 = vmatpush1.bf16.msra.mxu0 %v5559
    %5770 = vmatprep.subr.bf16.mxu0 %v5558
    %5771 = vmatpush1.bf16.msra.mxu0 %v5557
    %5772 = vmatprep.subr.bf16.mxu0 %v5556
    %5773 = vmatpush1.bf16.msra.mxu0 %v5555
    %5774 = vmatprep.subr.bf16.mxu0 %v5586
    %5775 = vmatpush2.bf16.msra.mxu0 %v5585
    %5776 = vmatprep.subr.bf16.mxu0 %v5584
    %5777 = vmatpush2.bf16.msra.mxu0 %v5583
    %5778 = vmatprep.subr.bf16.mxu0 %v5582
    %5779 = vmatpush2.bf16.msra.mxu0 %v5581
    %5780 = vmatprep.subr.bf16.mxu0 %v5580
    %5781 = vmatpush2.bf16.msra.mxu0 %v5579
    %5782 = vmatprep.subr.bf16.mxu0 %v5578
    %5783 = vmatpush2.bf16.msra.mxu0 %v5577
    %5784 = vmatprep.subr.bf16.mxu0 %v5576
    %5785 = vmatpush2.bf16.msra.mxu0 %v5575
    %5786 = vmatprep.subr.bf16.mxu0 %v5574
    %5787 = vmatpush2.bf16.msra.mxu0 %v5573
    %5788 = vmatprep.subr.bf16.mxu0 %v5572
    %5789 = vmatpush2.bf16.msra.mxu0 %v5571
    %5790 = vmatprep.mubr.bf16.mxu0 %v4254
    %5791 = vmatmul.mubr.bf16.gmra.mxu0 %v4253
    %v5792 = vpop.f32.mrf.mxu0
    %v5793 = vadd.f32 %v5247, %v5792
    %v5794 = vpop.f32.mrf.mxu0
    %v5795 = vadd.f32 %v5249, %v5794
    %v5796 = vpop.f32.mrf.mxu0
    %v5797 = vadd.f32 %v5251, %v5796
    %v5798 = vpop.f32.mrf.mxu0
    %v5799 = vadd.f32 %v5253, %v5798
    %5800 = vdwg.mxu0
    %5801 = vmatprep.subr.bf16.mxu0 %v5602
    %5802 = vmatpush1.bf16.msra.mxu0 %v5601
    %5803 = vmatprep.subr.bf16.mxu0 %v5600
    %5804 = vmatpush1.bf16.msra.mxu0 %v5599
    %5805 = vmatprep.subr.bf16.mxu0 %v5598
    %5806 = vmatpush1.bf16.msra.mxu0 %v5597
    %5807 = vmatprep.subr.bf16.mxu0 %v5596
    %5808 = vmatpush1.bf16.msra.mxu0 %v5595
    %5809 = vmatprep.subr.bf16.mxu0 %v5594
    %5810 = vmatpush1.bf16.msra.mxu0 %v5593
    %5811 = vmatprep.subr.bf16.mxu0 %v5592
    %5812 = vmatpush1.bf16.msra.mxu0 %v5591
    %5813 = vmatprep.subr.bf16.mxu0 %v5590
    %5814 = vmatpush1.bf16.msra.mxu0 %v5589
    %5815 = vmatprep.subr.bf16.mxu0 %v5588
    %5816 = vmatpush1.bf16.msra.mxu0 %v5587
    %5817 = vmatprep.subr.bf16.mxu0 %v5618
    %5818 = vmatpush2.bf16.msra.mxu0 %v5617
    %5819 = vmatprep.subr.bf16.mxu0 %v5616
    %5820 = vmatpush2.bf16.msra.mxu0 %v5615
    %5821 = vmatprep.subr.bf16.mxu0 %v5614
    %5822 = vmatpush2.bf16.msra.mxu0 %v5613
    %5823 = vmatprep.subr.bf16.mxu0 %v5612
    %5824 = vmatpush2.bf16.msra.mxu0 %v5611
    %5825 = vmatprep.subr.bf16.mxu0 %v5610
    %5826 = vmatpush2.bf16.msra.mxu0 %v5609
    %5827 = vmatprep.subr.bf16.mxu0 %v5608
    %5828 = vmatpush2.bf16.msra.mxu0 %v5607
    %5829 = vmatprep.subr.bf16.mxu0 %v5606
    %5830 = vmatpush2.bf16.msra.mxu0 %v5605
    %5831 = vmatprep.subr.bf16.mxu0 %v5604
    %5832 = vmatpush2.bf16.msra.mxu0 %v5603
    %5833 = vmatprep.mubr.bf16.mxu0 %v4256
    %5834 = vmatmul.mubr.bf16.gmra.mxu0 %v4255
    %v5835 = vpop.f32.mrf.mxu0
    %v5836 = vadd.f32 %v5793, %v5835
    %v5837 = vpop.f32.mrf.mxu0
    %v5838 = vadd.f32 %v5795, %v5837
    %v5839 = vpop.f32.mrf.mxu0
    %v5840 = vadd.f32 %v5797, %v5839
    %v5841 = vpop.f32.mrf.mxu0
    %v5842 = vadd.f32 %v5799, %v5841
    %5843 = vdwg.mxu0
    %5844 = vmatprep.subr.bf16.mxu0 %v5634
    %5845 = vmatpush1.bf16.msra.mxu0 %v5633
    %5846 = vmatprep.subr.bf16.mxu0 %v5632
    %5847 = vmatpush1.bf16.msra.mxu0 %v5631
    %5848 = vmatprep.subr.bf16.mxu0 %v5630
    %5849 = vmatpush1.bf16.msra.mxu0 %v5629
    %5850 = vmatprep.subr.bf16.mxu0 %v5628
    %5851 = vmatpush1.bf16.msra.mxu0 %v5627
    %5852 = vmatprep.subr.bf16.mxu0 %v5626
    %5853 = vmatpush1.bf16.msra.mxu0 %v5625
    %5854 = vmatprep.subr.bf16.mxu0 %v5624
    %5855 = vmatpush1.bf16.msra.mxu0 %v5623
    %5856 = vmatprep.subr.bf16.mxu0 %v5622
    %5857 = vmatpush1.bf16.msra.mxu0 %v5621
    %5858 = vmatprep.subr.bf16.mxu0 %v5620
    %5859 = vmatpush1.bf16.msra.mxu0 %v5619
    %5860 = vmatprep.subr.bf16.mxu0 %v5650
    %5861 = vmatpush2.bf16.msra.mxu0 %v5649
    %5862 = vmatprep.subr.bf16.mxu0 %v5648
    %5863 = vmatpush2.bf16.msra.mxu0 %v5647
    %5864 = vmatprep.subr.bf16.mxu0 %v5646
    %5865 = vmatpush2.bf16.msra.mxu0 %v5645
    %5866 = vmatprep.subr.bf16.mxu0 %v5644
    %5867 = vmatpush2.bf16.msra.mxu0 %v5643
    %5868 = vmatprep.subr.bf16.mxu0 %v5642
    %5869 = vmatpush2.bf16.msra.mxu0 %v5641
    %5870 = vmatprep.subr.bf16.mxu0 %v5640
    %5871 = vmatpush2.bf16.msra.mxu0 %v5639
    %5872 = vmatprep.subr.bf16.mxu0 %v5638
    %5873 = vmatpush2.bf16.msra.mxu0 %v5637
    %5874 = vmatprep.subr.bf16.mxu0 %v5636
    %5875 = vmatpush2.bf16.msra.mxu0 %v5635
    %5876 = vmatprep.mubr.bf16.mxu0 %v4258
    %5877 = vmatmul.mubr.bf16.gmra.mxu0 %v4257
    %v5878 = vpop.f32.mrf.mxu0
    %v5879 = vadd.f32 %v5836, %v5878
    %v5880 = vpop.f32.mrf.mxu0
    %v5881 = vadd.f32 %v5838, %v5880
    %v5882 = vpop.f32.mrf.mxu0
    %v5883 = vadd.f32 %v5840, %v5882
    %v5884 = vpop.f32.mrf.mxu0
    %v5885 = vadd.f32 %v5842, %v5884
    %5886 = vdwg.mxu0
    %5887 = vmatprep.subr.bf16.mxu0 0
    %5888 = vmatpush1.bf16.msra.mxu0 0
    %5889 = vmatprep.subr.bf16.mxu0 0
    %5890 = vmatpush1.bf16.msra.mxu0 0
    %5891 = vmatprep.subr.bf16.mxu0 0
    %5892 = vmatpush1.bf16.msra.mxu0 0
    %5893 = vmatprep.subr.bf16.mxu0 0
    %5894 = vmatpush1.bf16.msra.mxu0 0
    %5895 = vmatprep.subr.bf16.mxu0 0
    %5896 = vmatpush1.bf16.msra.mxu0 0
    %5897 = vmatprep.subr.bf16.mxu0 0
    %5898 = vmatpush1.bf16.msra.mxu0 0
    %5899 = vmatprep.subr.bf16.mxu0 %v5654
    %5900 = vmatpush1.bf16.msra.mxu0 %v5653
    %5901 = vmatprep.subr.bf16.mxu0 %v5652
    %5902 = vmatpush1.bf16.msra.mxu0 %v5651
    %5903 = vmatprep.subr.bf16.mxu0 0
    %5904 = vmatpush2.bf16.msra.mxu0 0
    %5905 = vmatprep.subr.bf16.mxu0 0
    %5906 = vmatpush2.bf16.msra.mxu0 0
    %5907 = vmatprep.subr.bf16.mxu0 0
    %5908 = vmatpush2.bf16.msra.mxu0 0
    %5909 = vmatprep.subr.bf16.mxu0 0
    %5910 = vmatpush2.bf16.msra.mxu0 0
    %5911 = vmatprep.subr.bf16.mxu0 0
    %5912 = vmatpush2.bf16.msra.mxu0 0
    %5913 = vmatprep.subr.bf16.mxu0 0
    %5914 = vmatpush2.bf16.msra.mxu0 0
    %5915 = vmatprep.subr.bf16.mxu0 0
    %5916 = vmatpush2.bf16.msra.mxu0 0
    %5917 = vmatprep.subr.bf16.mxu0 0
    %5918 = vmatpush2.bf16.msra.mxu0 0
    %5919 = vmatprep.mubr.bf16.mxu0 0
    %5920 = vmatmul.mubr.bf16.gmra.mxu0 %v5756
    %v5921 = vpop.f32.mrf.mxu0
    %v5922 = vadd.f32 %v5879, %v5921
    %v5923 = vpop.f32.mrf.mxu0
    %v5924 = vadd.f32 %v5881, %v5923
    %v5925 = vpop.f32.mrf.mxu0
    %v5926 = vadd.f32 %v5883, %v5925
    %v5927 = vpop.f32.mrf.mxu0
    %v5928 = vadd.f32 %v5885, %v5927
    %5929 = vdwg.mxu0
    %v5930 = vld [vmem:[#allocation2] sm:$0xfc]
    %v5931 = vld [vmem:[#allocation2 + $0x8] sm:$0xfc]
    %v5932 = vld [vmem:[#allocation2 + $0x10] sm:$0xfc]
    %v5933 = vld [vmem:[#allocation2 + $0x18] sm:$0xfc]
    %v5934 = vld [vmem:[#allocation2 + $0x20] sm:$0xfc]
    %v5935 = vld [vmem:[#allocation2 + $0x28] sm:$0xfc]
    %v5936 = vld [vmem:[#allocation2 + $0x30] sm:$0xfc]
    %v5937 = vld [vmem:[#allocation2 + $0x38] sm:$0x3]
    %v5938 = vld [vmem:[#allocation2 + $0x40] sm:$0x3]
    %v5939 = vld [vmem:[#allocation2 + $0x48] sm:$0x3]
    %v5940 = vld [vmem:[#allocation2 + $0x50] sm:$0x3]
    %v5941 = vld [vmem:[#allocation2 + $0x58] sm:$0x3]
    %v5942 = vld [vmem:[#allocation2 + $0x60] sm:$0x3]
    %v5943 = vld [vmem:[#allocation2 + $0x68] sm:$0x3]
    %v5944 = vld [vmem:[#allocation2 + $0x70] sm:$0xfc]
    %v5945 = vld [vmem:[#allocation2 + $0x78] sm:$0xfc]
    %v5946 = vld [vmem:[#allocation2 + $0x80] sm:$0xfc]
    %v5947 = vld [vmem:[#allocation2 + $0x88] sm:$0xfc]
    %v5948 = vld [vmem:[#allocation2 + $0x90] sm:$0xfc]
    %v5949 = vld [vmem:[#allocation2 + $0x98] sm:$0xfc]
    %v5950 = vld [vmem:[#allocation2 + $0xa0] sm:$0xfc]
    %v5951 = vld [vmem:[#allocation2 + $0xa8] sm:$0x3]
    %v5952 = vld [vmem:[#allocation2 + $0xb0] sm:$0x3]
    %v5953 = vld [vmem:[#allocation2 + $0xb8] sm:$0x3]
    %v5954 = vld [vmem:[#allocation2 + $0xc0] sm:$0x3]
    %v5955 = vld [vmem:[#allocation2 + $0xc8] sm:$0x3]
    %v5956 = vld [vmem:[#allocation2 + $0xd0] sm:$0x3]
    %v5957 = vld [vmem:[#allocation2 + $0xd8] sm:$0x3]
    %v5986 = vrot.slane %v5930, 2
    %v5987 = vrot.slane %v5937, 2
    %v5988 = vsel %vm2175, %v5986, %v5987
    %v5989 = vrot.slane %v5931, 2
    %v5990 = vrot.slane %v5938, 2
    %v5991 = vsel %vm2175, %v5989, %v5990
    %v5992 = vrot.slane %v5932, 2
    %v5993 = vrot.slane %v5939, 2
    %v5994 = vsel %vm2175, %v5992, %v5993
    %v5995 = vrot.slane %v5933, 2
    %v5996 = vrot.slane %v5940, 2
    %v5997 = vsel %vm2175, %v5995, %v5996
    %v5998 = vrot.slane %v5934, 2
    %v5999 = vrot.slane %v5941, 2
    %v6000 = vsel %vm2175, %v5998, %v5999
    %v6001 = vrot.slane %v5935, 2
    %v6002 = vrot.slane %v5942, 2
    %v6003 = vsel %vm2175, %v6001, %v6002
    %v6004 = vrot.slane %v5936, 2
    %v6005 = vrot.slane %v5943, 2
    %v6006 = vsel %vm2175, %v6004, %v6005
    %v6007 = vrot.slane %v5944, 2
    %v6008 = vrot.slane %v5951, 2
    %v6009 = vsel %vm2175, %v6007, %v6008
    %v6010 = vrot.slane %v5945, 2
    %v6011 = vrot.slane %v5952, 2
    %v6012 = vsel %vm2175, %v6010, %v6011
    %v6013 = vrot.slane %v5946, 2
    %v6014 = vrot.slane %v5953, 2
    %v6015 = vsel %vm2175, %v6013, %v6014
    %v6016 = vrot.slane %v5947, 2
    %v6017 = vrot.slane %v5954, 2
    %v6018 = vsel %vm2175, %v6016, %v6017
    %v6019 = vrot.slane %v5948, 2
    %v6020 = vrot.slane %v5955, 2
    %v6021 = vsel %vm2175, %v6019, %v6020
    %v6022 = vrot.slane %v5949, 2
    %v6023 = vrot.slane %v5956, 2
    %v6024 = vsel %vm2175, %v6022, %v6023
    %v6025 = vrot.slane %v5950, 2
    %v6026 = vrot.slane %v5957, 2
    %v6027 = vsel %vm2175, %v6025, %v6026
    %v6042 = vpack.c.bf16 %v6009, %v5988
    %v6043 = vpack.c.bf16 %v6012, %v5991
    %v6044 = vpack.c.bf16 %v6015, %v5994
    %v6045 = vpack.c.bf16 %v6018, %v5997
    %v6046 = vpack.c.bf16 %v6021, %v6000
    %v6047 = vpack.c.bf16 %v6024, %v6003
    %v6048 = vpack.c.bf16 %v6027, %v6006
    %s6049 = scalar_lea.vmem [#allocation10], 1600
    %v6050 = vld [vmem:[%s6049] sm:$0xff]
    %v6051 = vld [vmem:[%s6049 + $0x8] sm:$0xff]
    %v6052 = vld [vmem:[%s6049 + $0x10] sm:$0xff]
    %v6053 = vld [vmem:[%s6049 + $0x18] sm:$0xff]
    %v6054 = vld [vmem:[%s6049 + $0x20] sm:$0xff]
    %v6055 = vld [vmem:[%s6049 + $0x28] sm:$0xff]
    %v6056 = vld [vmem:[%s6049 + $0x30] sm:$0xff]
    %v6057 = vld [vmem:[%s6049 + $0x38] sm:$0xff]
    %v6058 = vld [vmem:[%s6049 + $0x40] sm:$0xff]
    %v6059 = vld [vmem:[%s6049 + $0x48] sm:$0xff]
    %v6060 = vld [vmem:[%s6049 + $0x50] sm:$0xff]
    %v6061 = vld [vmem:[%s6049 + $0x58] sm:$0xff]
    %v6062 = vld [vmem:[%s6049 + $0x60] sm:$0xff]
    %v6063 = vld [vmem:[%s6049 + $0x68] sm:$0xff]
    %v6064 = vld [vmem:[%s6049 + $0x70] sm:$0xff]
    %v6065 = vld [vmem:[%s6049 + $0x78] sm:$0xff]
    %v6066 = vld [vmem:[%s6049 + $0x80] sm:$0xff]
    %v6067 = vld [vmem:[%s6049 + $0x88] sm:$0xff]
    %v6068 = vld [vmem:[%s6049 + $0x90] sm:$0xff]
    %v6069 = vld [vmem:[%s6049 + $0x98] sm:$0xff]
    %v6070 = vld [vmem:[%s6049 + $0xa0] sm:$0xff]
    %v6071 = vld [vmem:[%s6049 + $0xa8] sm:$0xff]
    %v6072 = vld [vmem:[%s6049 + $0xb0] sm:$0xff]
    %v6073 = vld [vmem:[%s6049 + $0xb8] sm:$0xff]
    %v6074 = vld [vmem:[%s6049 + $0xc0] sm:$0xff]
    %v6075 = vld [vmem:[%s6049 + $0xc8] sm:$0xff]
    %v6076 = vld [vmem:[%s6049 + $0xd0] sm:$0xff]
    %v6077 = vld [vmem:[%s6049 + $0xd8] sm:$0xff]
    %v6078 = vld [vmem:[%s6049 + $0xe0] sm:$0xff]
    %v6079 = vld [vmem:[%s6049 + $0xe8] sm:$0xff]
    %v6080 = vld [vmem:[%s6049 + $0xf0] sm:$0xff]
    %v6081 = vld [vmem:[%s6049 + $0xf8] sm:$0xff]
    %v6082 = vld [vmem:[%s6049 + $0x100] sm:$0xff]
    %v6083 = vld [vmem:[%s6049 + $0x108] sm:$0xff]
    %v6084 = vld [vmem:[%s6049 + $0x110] sm:$0xff]
    %v6085 = vld [vmem:[%s6049 + $0x118] sm:$0xff]
    %v6086 = vld [vmem:[%s6049 + $0x120] sm:$0xff]
    %v6087 = vld [vmem:[%s6049 + $0x128] sm:$0xff]
    %v6088 = vld [vmem:[%s6049 + $0x130] sm:$0xff]
    %v6089 = vld [vmem:[%s6049 + $0x138] sm:$0xff]
    %v6090 = vld [vmem:[%s6049 + $0x140] sm:$0xff]
    %v6091 = vld [vmem:[%s6049 + $0x148] sm:$0xff]
    %v6092 = vld [vmem:[%s6049 + $0x150] sm:$0xff]
    %v6093 = vld [vmem:[%s6049 + $0x158] sm:$0xff]
    %v6094 = vld [vmem:[%s6049 + $0x160] sm:$0xff]
    %v6095 = vld [vmem:[%s6049 + $0x168] sm:$0xff]
    %v6096 = vld [vmem:[%s6049 + $0x170] sm:$0xff]
    %v6097 = vld [vmem:[%s6049 + $0x178] sm:$0xff]
    %v6098 = vld [vmem:[%s6049 + $0x180] sm:$0xff]
    %v6099 = vld [vmem:[%s6049 + $0x188] sm:$0xff]
    %v6100 = vld [vmem:[%s6049 + $0x190] sm:$0xff]
    %v6101 = vld [vmem:[%s6049 + $0x198] sm:$0xff]
    %v6102 = vld [vmem:[%s6049 + $0x1a0] sm:$0xff]
    %v6103 = vld [vmem:[%s6049 + $0x1a8] sm:$0xff]
    %v6104 = vld [vmem:[%s6049 + $0x1b0] sm:$0xff]
    %v6105 = vld [vmem:[%s6049 + $0x1b8] sm:$0xff]
    %v6106 = vld [vmem:[%s6049 + $0x1c0] sm:$0xff]
    %v6107 = vld [vmem:[%s6049 + $0x1c8] sm:$0xff]
    %v6108 = vld [vmem:[%s6049 + $0x1d0] sm:$0xff]
    %v6109 = vld [vmem:[%s6049 + $0x1d8] sm:$0xff]
    %v6110 = vld [vmem:[%s6049 + $0x1e0] sm:$0xff]
    %v6111 = vld [vmem:[%s6049 + $0x1e8] sm:$0xff]
    %v6112 = vld [vmem:[%s6049 + $0x1f0] sm:$0xff]
    %v6113 = vld [vmem:[%s6049 + $0x1f8] sm:$0xff]
    %v6114 = vld [vmem:[%s6049 + $0x200] sm:$0xff]
    %v6115 = vld [vmem:[%s6049 + $0x208] sm:$0xff]
    %v6116 = vld [vmem:[%s6049 + $0x210] sm:$0xff]
    %v6117 = vld [vmem:[%s6049 + $0x218] sm:$0xff]
    %v6118 = vld [vmem:[%s6049 + $0x220] sm:$0xff]
    %v6119 = vld [vmem:[%s6049 + $0x228] sm:$0xff]
    %v6120 = vld [vmem:[%s6049 + $0x230] sm:$0xff]
    %v6121 = vld [vmem:[%s6049 + $0x238] sm:$0xff]
    %v6122 = vld [vmem:[%s6049 + $0x240] sm:$0xff]
    %v6123 = vld [vmem:[%s6049 + $0x248] sm:$0xff]
    %v6124 = vld [vmem:[%s6049 + $0x250] sm:$0xff]
    %v6125 = vld [vmem:[%s6049 + $0x258] sm:$0xff]
    %v6126 = vld [vmem:[%s6049 + $0x260] sm:$0xff]
    %v6127 = vld [vmem:[%s6049 + $0x268] sm:$0xff]
    %v6128 = vld [vmem:[%s6049 + $0x270] sm:$0xff]
    %v6129 = vld [vmem:[%s6049 + $0x278] sm:$0xff]
    %v6130 = vld [vmem:[%s6049 + $0x280] sm:$0xff]
    %v6131 = vld [vmem:[%s6049 + $0x288] sm:$0xff]
    %v6132 = vld [vmem:[%s6049 + $0x290] sm:$0xff]
    %v6133 = vld [vmem:[%s6049 + $0x298] sm:$0xff]
    %v6134 = vld [vmem:[%s6049 + $0x2a0] sm:$0xff]
    %v6135 = vld [vmem:[%s6049 + $0x2a8] sm:$0xff]
    %v6136 = vld [vmem:[%s6049 + $0x2b0] sm:$0xff]
    %v6137 = vld [vmem:[%s6049 + $0x2b8] sm:$0xff]
    %v6138 = vld [vmem:[%s6049 + $0x2c0] sm:$0xff]
    %v6139 = vld [vmem:[%s6049 + $0x2c8] sm:$0xff]
    %v6140 = vld [vmem:[%s6049 + $0x2d0] sm:$0xff]
    %v6141 = vld [vmem:[%s6049 + $0x2d8] sm:$0xff]
    %v6142 = vld [vmem:[%s6049 + $0x2e0] sm:$0xff]
    %v6143 = vld [vmem:[%s6049 + $0x2e8] sm:$0xff]
    %v6144 = vld [vmem:[%s6049 + $0x2f0] sm:$0xff]
    %v6145 = vld [vmem:[%s6049 + $0x2f8] sm:$0xff]
    %v6146 = vld [vmem:[%s6049 + $0x300] sm:$0xff]
    %v6147 = vld [vmem:[%s6049 + $0x308] sm:$0xff]
    %v6148 = vld [vmem:[%s6049 + $0x310] sm:$0xff]
    %v6149 = vld [vmem:[%s6049 + $0x318] sm:$0xff]
    %v6250 = vunpack.c.l.b16 %v6050
    %v6251 = vunpack.c.h.b16 %v6050
    %v6252 = vunpack.c.l.b16 %v6051
    %v6253 = vunpack.c.h.b16 %v6051
    %v6254 = vunpack.c.l.b16 %v6052
    %v6255 = vunpack.c.h.b16 %v6052
    %v6256 = vunpack.c.l.b16 %v6053
    %v6257 = vunpack.c.h.b16 %v6053
    %v6258 = vunpack.c.l.b16 %v6054
    %v6259 = vunpack.c.h.b16 %v6054
    %v6260 = vunpack.c.l.b16 %v6055
    %v6261 = vunpack.c.h.b16 %v6055
    %v6262 = vunpack.c.l.b16 %v6056
    %v6263 = vunpack.c.h.b16 %v6056
    %v6264 = vunpack.c.l.b16 %v6057
    %v6265 = vunpack.c.h.b16 %v6057
    %v6266 = vunpack.c.l.b16 %v6058
    %v6267 = vunpack.c.h.b16 %v6058
    %v6268 = vunpack.c.l.b16 %v6059
    %v6269 = vunpack.c.h.b16 %v6059
    %v6270 = vunpack.c.l.b16 %v6060
    %v6271 = vunpack.c.h.b16 %v6060
    %v6272 = vunpack.c.l.b16 %v6061
    %v6273 = vunpack.c.h.b16 %v6061
    %v6274 = vunpack.c.l.b16 %v6062
    %v6275 = vunpack.c.h.b16 %v6062
    %v6276 = vunpack.c.l.b16 %v6063
    %v6277 = vunpack.c.h.b16 %v6063
    %v6278 = vunpack.c.l.b16 %v6064
    %v6279 = vunpack.c.h.b16 %v6064
    %v6280 = vunpack.c.l.b16 %v6065
    %v6281 = vunpack.c.h.b16 %v6065
    %v6282 = vunpack.c.l.b16 %v6066
    %v6283 = vunpack.c.h.b16 %v6066
    %v6284 = vunpack.c.l.b16 %v6067
    %v6285 = vunpack.c.h.b16 %v6067
    %v6286 = vunpack.c.l.b16 %v6068
    %v6287 = vunpack.c.h.b16 %v6068
    %v6288 = vunpack.c.l.b16 %v6069
    %v6289 = vunpack.c.h.b16 %v6069
    %v6290 = vunpack.c.l.b16 %v6070
    %v6291 = vunpack.c.h.b16 %v6070
    %v6292 = vunpack.c.l.b16 %v6071
    %v6293 = vunpack.c.h.b16 %v6071
    %v6294 = vunpack.c.l.b16 %v6072
    %v6295 = vunpack.c.h.b16 %v6072
    %v6296 = vunpack.c.l.b16 %v6073
    %v6297 = vunpack.c.h.b16 %v6073
    %v6298 = vunpack.c.l.b16 %v6074
    %v6299 = vunpack.c.h.b16 %v6074
    %v6300 = vunpack.c.l.b16 %v6075
    %v6301 = vunpack.c.h.b16 %v6075
    %v6302 = vunpack.c.l.b16 %v6076
    %v6303 = vunpack.c.h.b16 %v6076
    %v6304 = vunpack.c.l.b16 %v6077
    %v6305 = vunpack.c.h.b16 %v6077
    %v6306 = vunpack.c.l.b16 %v6078
    %v6307 = vunpack.c.h.b16 %v6078
    %v6308 = vunpack.c.l.b16 %v6079
    %v6309 = vunpack.c.h.b16 %v6079
    %v6310 = vunpack.c.l.b16 %v6080
    %v6311 = vunpack.c.h.b16 %v6080
    %v6312 = vunpack.c.l.b16 %v6081
    %v6313 = vunpack.c.h.b16 %v6081
    %v6314 = vunpack.c.l.b16 %v6082
    %v6315 = vunpack.c.h.b16 %v6082
    %v6316 = vunpack.c.l.b16 %v6083
    %v6317 = vunpack.c.h.b16 %v6083
    %v6318 = vunpack.c.l.b16 %v6084
    %v6319 = vunpack.c.h.b16 %v6084
    %v6320 = vunpack.c.l.b16 %v6085
    %v6321 = vunpack.c.h.b16 %v6085
    %v6322 = vunpack.c.l.b16 %v6086
    %v6323 = vunpack.c.h.b16 %v6086
    %v6324 = vunpack.c.l.b16 %v6087
    %v6325 = vunpack.c.h.b16 %v6087
    %v6326 = vunpack.c.l.b16 %v6088
    %v6327 = vunpack.c.h.b16 %v6088
    %v6328 = vunpack.c.l.b16 %v6089
    %v6329 = vunpack.c.h.b16 %v6089
    %v6330 = vunpack.c.l.b16 %v6090
    %v6331 = vunpack.c.h.b16 %v6090
    %v6332 = vunpack.c.l.b16 %v6091
    %v6333 = vunpack.c.h.b16 %v6091
    %v6334 = vunpack.c.l.b16 %v6092
    %v6335 = vunpack.c.h.b16 %v6092
    %v6336 = vunpack.c.l.b16 %v6093
    %v6337 = vunpack.c.h.b16 %v6093
    %v6338 = vunpack.c.l.b16 %v6094
    %v6339 = vunpack.c.h.b16 %v6094
    %v6340 = vunpack.c.l.b16 %v6095
    %v6341 = vunpack.c.h.b16 %v6095
    %v6342 = vunpack.c.l.b16 %v6096
    %v6343 = vunpack.c.h.b16 %v6096
    %v6344 = vunpack.c.l.b16 %v6097
    %v6345 = vunpack.c.h.b16 %v6097
    %v6346 = vunpack.c.l.b16 %v6098
    %v6347 = vunpack.c.h.b16 %v6098
    %v6348 = vunpack.c.l.b16 %v6099
    %v6349 = vunpack.c.h.b16 %v6099
    %v6350 = vunpack.c.l.b16 %v6100
    %v6351 = vunpack.c.h.b16 %v6100
    %v6352 = vunpack.c.l.b16 %v6101
    %v6353 = vunpack.c.h.b16 %v6101
    %v6354 = vunpack.c.l.b16 %v6102
    %v6355 = vunpack.c.h.b16 %v6102
    %v6356 = vunpack.c.l.b16 %v6103
    %v6357 = vunpack.c.h.b16 %v6103
    %v6358 = vunpack.c.l.b16 %v6104
    %v6359 = vunpack.c.h.b16 %v6104
    %v6360 = vunpack.c.l.b16 %v6105
    %v6361 = vunpack.c.h.b16 %v6105
    %v6362 = vunpack.c.l.b16 %v6106
    %v6363 = vunpack.c.h.b16 %v6106
    %v6364 = vunpack.c.l.b16 %v6107
    %v6365 = vunpack.c.h.b16 %v6107
    %v6366 = vunpack.c.l.b16 %v6108
    %v6367 = vunpack.c.h.b16 %v6108
    %v6368 = vunpack.c.l.b16 %v6109
    %v6369 = vunpack.c.h.b16 %v6109
    %v6370 = vunpack.c.l.b16 %v6110
    %v6371 = vunpack.c.h.b16 %v6110
    %v6372 = vunpack.c.l.b16 %v6111
    %v6373 = vunpack.c.h.b16 %v6111
    %v6374 = vunpack.c.l.b16 %v6112
    %v6375 = vunpack.c.h.b16 %v6112
    %v6376 = vunpack.c.l.b16 %v6113
    %v6377 = vunpack.c.h.b16 %v6113
    %v6378 = vunpack.c.l.b16 %v6114
    %v6379 = vunpack.c.h.b16 %v6114
    %v6380 = vunpack.c.l.b16 %v6115
    %v6381 = vunpack.c.h.b16 %v6115
    %v6382 = vunpack.c.l.b16 %v6116
    %v6383 = vunpack.c.h.b16 %v6116
    %v6384 = vunpack.c.l.b16 %v6117
    %v6385 = vunpack.c.h.b16 %v6117
    %v6386 = vunpack.c.l.b16 %v6118
    %v6387 = vunpack.c.h.b16 %v6118
    %v6388 = vunpack.c.l.b16 %v6119
    %v6389 = vunpack.c.h.b16 %v6119
    %v6390 = vunpack.c.l.b16 %v6120
    %v6391 = vunpack.c.h.b16 %v6120
    %v6392 = vunpack.c.l.b16 %v6121
    %v6393 = vunpack.c.h.b16 %v6121
    %v6394 = vunpack.c.l.b16 %v6122
    %v6395 = vunpack.c.h.b16 %v6122
    %v6396 = vunpack.c.l.b16 %v6123
    %v6397 = vunpack.c.h.b16 %v6123
    %v6398 = vunpack.c.l.b16 %v6124
    %v6399 = vunpack.c.h.b16 %v6124
    %v6400 = vunpack.c.l.b16 %v6125
    %v6401 = vunpack.c.h.b16 %v6125
    %v6402 = vunpack.c.l.b16 %v6126
    %v6403 = vunpack.c.h.b16 %v6126
    %v6404 = vunpack.c.l.b16 %v6127
    %v6405 = vunpack.c.h.b16 %v6127
    %v6406 = vunpack.c.l.b16 %v6128
    %v6407 = vunpack.c.h.b16 %v6128
    %v6408 = vunpack.c.l.b16 %v6129
    %v6409 = vunpack.c.h.b16 %v6129
    %v6410 = vunpack.c.l.b16 %v6130
    %v6411 = vunpack.c.h.b16 %v6130
    %v6412 = vunpack.c.l.b16 %v6131
    %v6413 = vunpack.c.h.b16 %v6131
    %v6414 = vunpack.c.l.b16 %v6132
    %v6415 = vunpack.c.h.b16 %v6132
    %v6416 = vunpack.c.l.b16 %v6133
    %v6417 = vunpack.c.h.b16 %v6133
    %v6418 = vunpack.c.l.b16 %v6134
    %v6419 = vunpack.c.h.b16 %v6134
    %v6420 = vunpack.c.l.b16 %v6135
    %v6421 = vunpack.c.h.b16 %v6135
    %v6422 = vunpack.c.l.b16 %v6136
    %v6423 = vunpack.c.h.b16 %v6136
    %v6424 = vunpack.c.l.b16 %v6137
    %v6425 = vunpack.c.h.b16 %v6137
    %v6426 = vunpack.c.l.b16 %v6138
    %v6427 = vunpack.c.h.b16 %v6138
    %v6428 = vunpack.c.l.b16 %v6139
    %v6429 = vunpack.c.h.b16 %v6139
    %v6430 = vunpack.c.l.b16 %v6140
    %v6431 = vunpack.c.h.b16 %v6140
    %v6432 = vunpack.c.l.b16 %v6141
    %v6433 = vunpack.c.h.b16 %v6141
    %v6434 = vunpack.c.l.b16 %v6142
    %v6435 = vunpack.c.h.b16 %v6142
    %v6436 = vunpack.c.l.b16 %v6143
    %v6437 = vunpack.c.h.b16 %v6143
    %v6438 = vunpack.c.l.b16 %v6144
    %v6439 = vunpack.c.h.b16 %v6144
    %v6440 = vunpack.c.l.b16 %v6145
    %v6441 = vunpack.c.h.b16 %v6145
    %v6442 = vunpack.c.l.b16 %v6146
    %v6443 = vunpack.c.h.b16 %v6146
    %v6444 = vunpack.c.l.b16 %v6147
    %v6445 = vunpack.c.h.b16 %v6147
    %v6446 = vunpack.c.l.b16 %v6148
    %v6447 = vunpack.c.h.b16 %v6148
    %v6448 = vunpack.c.l.b16 %v6149
    %v6449 = vunpack.c.h.b16 %v6149
    %v6450 = vpack.c.b16 %v6252, %v6250
    %v6451 = vpack.c.b16 %v6253, %v6251
    %v6452 = vpack.c.b16 %v6256, %v6254
    %v6453 = vpack.c.b16 %v6257, %v6255
    %v6454 = vpack.c.b16 %v6260, %v6258
    %v6455 = vpack.c.b16 %v6261, %v6259
    %v6456 = vpack.c.b16 %v6264, %v6262
    %v6457 = vpack.c.b16 %v6265, %v6263
    %v6458 = vpack.c.b16 %v6268, %v6266
    %v6459 = vpack.c.b16 %v6269, %v6267
    %v6460 = vpack.c.b16 %v6272, %v6270
    %v6461 = vpack.c.b16 %v6273, %v6271
    %v6462 = vpack.c.b16 %v6276, %v6274
    %v6463 = vpack.c.b16 %v6277, %v6275
    %v6464 = vpack.c.b16 %v6280, %v6278
    %v6465 = vpack.c.b16 %v6281, %v6279
    %v6466 = vpack.c.b16 %v6284, %v6282
    %v6467 = vpack.c.b16 %v6285, %v6283
    %v6468 = vpack.c.b16 %v6288, %v6286
    %v6469 = vpack.c.b16 %v6289, %v6287
    %v6470 = vpack.c.b16 %v6292, %v6290
    %v6471 = vpack.c.b16 %v6293, %v6291
    %v6472 = vpack.c.b16 %v6296, %v6294
    %v6473 = vpack.c.b16 %v6297, %v6295
    %v6474 = vpack.c.b16 %v6300, %v6298
    %v6475 = vpack.c.b16 %v6301, %v6299
    %v6476 = vpack.c.b16 %v6304, %v6302
    %v6477 = vpack.c.b16 %v6305, %v6303
    %v6478 = vpack.c.b16 %v6308, %v6306
    %v6479 = vpack.c.b16 %v6309, %v6307
    %v6480 = vpack.c.b16 %v6312, %v6310
    %v6481 = vpack.c.b16 %v6313, %v6311
    %v6482 = vpack.c.b16 %v6316, %v6314
    %v6483 = vpack.c.b16 %v6317, %v6315
    %v6484 = vpack.c.b16 %v6320, %v6318
    %v6485 = vpack.c.b16 %v6321, %v6319
    %v6486 = vpack.c.b16 %v6324, %v6322
    %v6487 = vpack.c.b16 %v6325, %v6323
    %v6488 = vpack.c.b16 %v6328, %v6326
    %v6489 = vpack.c.b16 %v6329, %v6327
    %v6490 = vpack.c.b16 %v6332, %v6330
    %v6491 = vpack.c.b16 %v6333, %v6331
    %v6492 = vpack.c.b16 %v6336, %v6334
    %v6493 = vpack.c.b16 %v6337, %v6335
    %v6494 = vpack.c.b16 %v6340, %v6338
    %v6495 = vpack.c.b16 %v6341, %v6339
    %v6496 = vpack.c.b16 %v6344, %v6342
    %v6497 = vpack.c.b16 %v6345, %v6343
    %v6498 = vpack.c.b16 %v6348, %v6346
    %v6499 = vpack.c.b16 %v6349, %v6347
    %v6500 = vpack.c.b16 %v6352, %v6350
    %v6501 = vpack.c.b16 %v6353, %v6351
    %v6502 = vpack.c.b16 %v6356, %v6354
    %v6503 = vpack.c.b16 %v6357, %v6355
    %v6504 = vpack.c.b16 %v6360, %v6358
    %v6505 = vpack.c.b16 %v6361, %v6359
    %v6506 = vpack.c.b16 %v6364, %v6362
    %v6507 = vpack.c.b16 %v6365, %v6363
    %v6508 = vpack.c.b16 %v6368, %v6366
    %v6509 = vpack.c.b16 %v6369, %v6367
    %v6510 = vpack.c.b16 %v6372, %v6370
    %v6511 = vpack.c.b16 %v6373, %v6371
    %v6512 = vpack.c.b16 %v6376, %v6374
    %v6513 = vpack.c.b16 %v6377, %v6375
    %v6514 = vpack.c.b16 %v6380, %v6378
    %v6515 = vpack.c.b16 %v6381, %v6379
    %v6516 = vpack.c.b16 %v6384, %v6382
    %v6517 = vpack.c.b16 %v6385, %v6383
    %v6518 = vpack.c.b16 %v6388, %v6386
    %v6519 = vpack.c.b16 %v6389, %v6387
    %v6520 = vpack.c.b16 %v6392, %v6390
    %v6521 = vpack.c.b16 %v6393, %v6391
    %v6522 = vpack.c.b16 %v6396, %v6394
    %v6523 = vpack.c.b16 %v6397, %v6395
    %v6524 = vpack.c.b16 %v6400, %v6398
    %v6525 = vpack.c.b16 %v6401, %v6399
    %v6526 = vpack.c.b16 %v6404, %v6402
    %v6527 = vpack.c.b16 %v6405, %v6403
    %v6528 = vpack.c.b16 %v6408, %v6406
    %v6529 = vpack.c.b16 %v6409, %v6407
    %v6530 = vpack.c.b16 %v6412, %v6410
    %v6531 = vpack.c.b16 %v6413, %v6411
    %v6532 = vpack.c.b16 %v6416, %v6414
    %v6533 = vpack.c.b16 %v6417, %v6415
    %v6534 = vpack.c.b16 %v6420, %v6418
    %v6535 = vpack.c.b16 %v6421, %v6419
    %v6536 = vpack.c.b16 %v6424, %v6422
    %v6537 = vpack.c.b16 %v6425, %v6423
    %v6538 = vpack.c.b16 %v6428, %v6426
    %v6539 = vpack.c.b16 %v6429, %v6427
    %v6540 = vpack.c.b16 %v6432, %v6430
    %v6541 = vpack.c.b16 %v6433, %v6431
    %v6542 = vpack.c.b16 %v6436, %v6434
    %v6543 = vpack.c.b16 %v6437, %v6435
    %v6544 = vpack.c.b16 %v6440, %v6438
    %v6545 = vpack.c.b16 %v6441, %v6439
    %v6546 = vpack.c.b16 %v6444, %v6442
    %v6547 = vpack.c.b16 %v6445, %v6443
    %v6548 = vpack.c.b16 %v6448, %v6446
    %v6549 = vpack.c.b16 %v6449, %v6447
    %v6651 = vsel %vm3229, %v6048, 0
    %6653 = vmatprep.subr.bf16.mxu0 %v6465
    %6654 = vmatpush1.bf16.msra.mxu0 %v6464
    %6655 = vmatprep.subr.bf16.mxu0 %v6463
    %6656 = vmatpush1.bf16.msra.mxu0 %v6462
    %6657 = vmatprep.subr.bf16.mxu0 %v6461
    %6658 = vmatpush1.bf16.msra.mxu0 %v6460
    %6659 = vmatprep.subr.bf16.mxu0 %v6459
    %6660 = vmatpush1.bf16.msra.mxu0 %v6458
    %6661 = vmatprep.subr.bf16.mxu0 %v6457
    %6662 = vmatpush1.bf16.msra.mxu0 %v6456
    %6663 = vmatprep.subr.bf16.mxu0 %v6455
    %6664 = vmatpush1.bf16.msra.mxu0 %v6454
    %6665 = vmatprep.subr.bf16.mxu0 %v6453
    %6666 = vmatpush1.bf16.msra.mxu0 %v6452
    %6667 = vmatprep.subr.bf16.mxu0 %v6451
    %6668 = vmatpush1.bf16.msra.mxu0 %v6450
    %6669 = vmatprep.subr.bf16.mxu0 %v6481
    %6670 = vmatpush2.bf16.msra.mxu0 %v6480
    %6671 = vmatprep.subr.bf16.mxu0 %v6479
    %6672 = vmatpush2.bf16.msra.mxu0 %v6478
    %6673 = vmatprep.subr.bf16.mxu0 %v6477
    %6674 = vmatpush2.bf16.msra.mxu0 %v6476
    %6675 = vmatprep.subr.bf16.mxu0 %v6475
    %6676 = vmatpush2.bf16.msra.mxu0 %v6474
    %6677 = vmatprep.subr.bf16.mxu0 %v6473
    %6678 = vmatpush2.bf16.msra.mxu0 %v6472
    %6679 = vmatprep.subr.bf16.mxu0 %v6471
    %6680 = vmatpush2.bf16.msra.mxu0 %v6470
    %6681 = vmatprep.subr.bf16.mxu0 %v6469
    %6682 = vmatpush2.bf16.msra.mxu0 %v6468
    %6683 = vmatprep.subr.bf16.mxu0 %v6467
    %6684 = vmatpush2.bf16.msra.mxu0 %v6466
    %6685 = vmatprep.mubr.bf16.mxu0 %v6043
    %6686 = vmatmul.mubr.bf16.gmra.mxu0 %v6042
    %v6687 = vpop.f32.mrf.mxu0
    %v6688 = vadd.f32 0.0, %v6687
    %v6689 = vpop.f32.mrf.mxu0
    %v6690 = vadd.f32 0.0, %v6689
    %v6691 = vpop.f32.mrf.mxu0
    %v6692 = vadd.f32 0.0, %v6691
    %v6693 = vpop.f32.mrf.mxu0
    %v6694 = vadd.f32 0.0, %v6693
    %6695 = vdwg.mxu0
    %6696 = vmatprep.subr.bf16.mxu0 %v6497
    %6697 = vmatpush1.bf16.msra.mxu0 %v6496
    %6698 = vmatprep.subr.bf16.mxu0 %v6495
    %6699 = vmatpush1.bf16.msra.mxu0 %v6494
    %6700 = vmatprep.subr.bf16.mxu0 %v6493
    %6701 = vmatpush1.bf16.msra.mxu0 %v6492
    %6702 = vmatprep.subr.bf16.mxu0 %v6491
    %6703 = vmatpush1.bf16.msra.mxu0 %v6490
    %6704 = vmatprep.subr.bf16.mxu0 %v6489
    %6705 = vmatpush1.bf16.msra.mxu0 %v6488
    %6706 = vmatprep.subr.bf16.mxu0 %v6487
    %6707 = vmatpush1.bf16.msra.mxu0 %v6486
    %6708 = vmatprep.subr.bf16.mxu0 %v6485
    %6709 = vmatpush1.bf16.msra.mxu0 %v6484
    %6710 = vmatprep.subr.bf16.mxu0 %v6483
    %6711 = vmatpush1.bf16.msra.mxu0 %v6482
    %6712 = vmatprep.subr.bf16.mxu0 %v6513
    %6713 = vmatpush2.bf16.msra.mxu0 %v6512
    %6714 = vmatprep.subr.bf16.mxu0 %v6511
    %6715 = vmatpush2.bf16.msra.mxu0 %v6510
    %6716 = vmatprep.subr.bf16.mxu0 %v6509
    %6717 = vmatpush2.bf16.msra.mxu0 %v6508
    %6718 = vmatprep.subr.bf16.mxu0 %v6507
    %6719 = vmatpush2.bf16.msra.mxu0 %v6506
    %6720 = vmatprep.subr.bf16.mxu0 %v6505
    %6721 = vmatpush2.bf16.msra.mxu0 %v6504
    %6722 = vmatprep.subr.bf16.mxu0 %v6503
    %6723 = vmatpush2.bf16.msra.mxu0 %v6502
    %6724 = vmatprep.subr.bf16.mxu0 %v6501
    %6725 = vmatpush2.bf16.msra.mxu0 %v6500
    %6726 = vmatprep.subr.bf16.mxu0 %v6499
    %6727 = vmatpush2.bf16.msra.mxu0 %v6498
    %6728 = vmatprep.mubr.bf16.mxu0 %v6045
    %6729 = vmatmul.mubr.bf16.gmra.mxu0 %v6044
    %v6730 = vpop.f32.mrf.mxu0
    %v6731 = vadd.f32 %v6688, %v6730
    %v6732 = vpop.f32.mrf.mxu0
    %v6733 = vadd.f32 %v6690, %v6732
    %v6734 = vpop.f32.mrf.mxu0
    %v6735 = vadd.f32 %v6692, %v6734
    %v6736 = vpop.f32.mrf.mxu0
    %v6737 = vadd.f32 %v6694, %v6736
    %6738 = vdwg.mxu0
    %6739 = vmatprep.subr.bf16.mxu0 %v6529
    %6740 = vmatpush1.bf16.msra.mxu0 %v6528
    %6741 = vmatprep.subr.bf16.mxu0 %v6527
    %6742 = vmatpush1.bf16.msra.mxu0 %v6526
    %6743 = vmatprep.subr.bf16.mxu0 %v6525
    %6744 = vmatpush1.bf16.msra.mxu0 %v6524
    %6745 = vmatprep.subr.bf16.mxu0 %v6523
    %6746 = vmatpush1.bf16.msra.mxu0 %v6522
    %6747 = vmatprep.subr.bf16.mxu0 %v6521
    %6748 = vmatpush1.bf16.msra.mxu0 %v6520
    %6749 = vmatprep.subr.bf16.mxu0 %v6519
    %6750 = vmatpush1.bf16.msra.mxu0 %v6518
    %6751 = vmatprep.subr.bf16.mxu0 %v6517
    %6752 = vmatpush1.bf16.msra.mxu0 %v6516
    %6753 = vmatprep.subr.bf16.mxu0 %v6515
    %6754 = vmatpush1.bf16.msra.mxu0 %v6514
    %6755 = vmatprep.subr.bf16.mxu0 %v6545
    %6756 = vmatpush2.bf16.msra.mxu0 %v6544
    %6757 = vmatprep.subr.bf16.mxu0 %v6543
    %6758 = vmatpush2.bf16.msra.mxu0 %v6542
    %6759 = vmatprep.subr.bf16.mxu0 %v6541
    %6760 = vmatpush2.bf16.msra.mxu0 %v6540
    %6761 = vmatprep.subr.bf16.mxu0 %v6539
    %6762 = vmatpush2.bf16.msra.mxu0 %v6538
    %6763 = vmatprep.subr.bf16.mxu0 %v6537
    %6764 = vmatpush2.bf16.msra.mxu0 %v6536
    %6765 = vmatprep.subr.bf16.mxu0 %v6535
    %6766 = vmatpush2.bf16.msra.mxu0 %v6534
    %6767 = vmatprep.subr.bf16.mxu0 %v6533
    %6768 = vmatpush2.bf16.msra.mxu0 %v6532
    %6769 = vmatprep.subr.bf16.mxu0 %v6531
    %6770 = vmatpush2.bf16.msra.mxu0 %v6530
    %6771 = vmatprep.mubr.bf16.mxu0 %v6047
    %6772 = vmatmul.mubr.bf16.gmra.mxu0 %v6046
    %v6773 = vpop.f32.mrf.mxu0
    %v6774 = vadd.f32 %v6731, %v6773
    %v6775 = vpop.f32.mrf.mxu0
    %v6776 = vadd.f32 %v6733, %v6775
    %v6777 = vpop.f32.mrf.mxu0
    %v6778 = vadd.f32 %v6735, %v6777
    %v6779 = vpop.f32.mrf.mxu0
    %v6780 = vadd.f32 %v6737, %v6779
    %6781 = vdwg.mxu0
    %6782 = vmatprep.subr.bf16.mxu0 0
    %6783 = vmatpush1.bf16.msra.mxu0 0
    %6784 = vmatprep.subr.bf16.mxu0 0
    %6785 = vmatpush1.bf16.msra.mxu0 0
    %6786 = vmatprep.subr.bf16.mxu0 0
    %6787 = vmatpush1.bf16.msra.mxu0 0
    %6788 = vmatprep.subr.bf16.mxu0 0
    %6789 = vmatpush1.bf16.msra.mxu0 0
    %6790 = vmatprep.subr.bf16.mxu0 0
    %6791 = vmatpush1.bf16.msra.mxu0 0
    %6792 = vmatprep.subr.bf16.mxu0 0
    %6793 = vmatpush1.bf16.msra.mxu0 0
    %6794 = vmatprep.subr.bf16.mxu0 %v6549
    %6795 = vmatpush1.bf16.msra.mxu0 %v6548
    %6796 = vmatprep.subr.bf16.mxu0 %v6547
    %6797 = vmatpush1.bf16.msra.mxu0 %v6546
    %6798 = vmatprep.subr.bf16.mxu0 0
    %6799 = vmatpush2.bf16.msra.mxu0 0
    %6800 = vmatprep.subr.bf16.mxu0 0
    %6801 = vmatpush2.bf16.msra.mxu0 0
    %6802 = vmatprep.subr.bf16.mxu0 0
    %6803 = vmatpush2.bf16.msra.mxu0 0
    %6804 = vmatprep.subr.bf16.mxu0 0
    %6805 = vmatpush2.bf16.msra.mxu0 0
    %6806 = vmatprep.subr.bf16.mxu0 0
    %6807 = vmatpush2.bf16.msra.mxu0 0
    %6808 = vmatprep.subr.bf16.mxu0 0
    %6809 = vmatpush2.bf16.msra.mxu0 0
    %6810 = vmatprep.subr.bf16.mxu0 0
    %6811 = vmatpush2.bf16.msra.mxu0 0
    %6812 = vmatprep.subr.bf16.mxu0 0
    %6813 = vmatpush2.bf16.msra.mxu0 0
    %6814 = vmatprep.mubr.bf16.mxu0 0
    %6815 = vmatmul.mubr.bf16.gmra.mxu0 %v6651
    %v6816 = vpop.f32.mrf.mxu0
    %v6817 = vadd.f32 %v6774, %v6816
    %v6818 = vpop.f32.mrf.mxu0
    %v6819 = vadd.f32 %v6776, %v6818
    %v6820 = vpop.f32.mrf.mxu0
    %v6821 = vadd.f32 %v6778, %v6820
    %v6822 = vpop.f32.mrf.mxu0
    %v6823 = vadd.f32 %v6780, %v6822
    %6824 = vdwg.mxu0
    %v6825 = vadd.f32 %v5922, %v6817
    %v6826 = vadd.f32 %v5924, %v6819
    %v6827 = vadd.f32 %v5926, %v6821
    %v6828 = vadd.f32 %v5928, %v6823
    %v6829 = vadd.f32 %v6825, %v6827
    %v6830 = vrot.slane %v6829, 4
    %v6831 = vadd.f32 %v6829, %v6830
    %v6832 = vrot.slane %v6831, 2
    %v6833 = vadd.f32 %v6831, %v6832
    %v6834 = vrot.slane %v6833, 1
    %v6835 = vadd.f32 %v6833, %v6834
    %v6836 = vadd.f32 %v6826, %v6828
    %v6837 = vrot.slane %v6836, 4
    %v6838 = vadd.f32 %v6836, %v6837
    %v6839 = vrot.slane %v6838, 2
    %v6840 = vadd.f32 %v6838, %v6839
    %v6841 = vrot.slane %v6840, 1
    %v6842 = vadd.f32 %v6840, %v6841
    %v6843 = vmul.f32 %v6825, %v6825
    %v6844 = vmul.f32 %v6826, %v6826
    %v6845 = vmul.f32 %v6827, %v6827
    %v6846 = vmul.f32 %v6828, %v6828
    %v6847 = vadd.f32 %v6843, %v6845
    %v6848 = vrot.slane %v6847, 4
    %v6849 = vadd.f32 %v6847, %v6848
    %v6850 = vrot.slane %v6849, 2
    %v6851 = vadd.f32 %v6849, %v6850
    %v6852 = vrot.slane %v6851, 1
    %v6853 = vadd.f32 %v6851, %v6852
    %v6854 = vadd.f32 %v6844, %v6846
    %v6855 = vrot.slane %v6854, 4
    %v6856 = vadd.f32 %v6854, %v6855
    %v6857 = vrot.slane %v6856, 2
    %v6858 = vadd.f32 %v6856, %v6857
    %v6859 = vrot.slane %v6858, 1
    %v6860 = vadd.f32 %v6858, %v6859
    %v6861 = vsel %vm3304, %v6835, %v6853
    %v6862 = vsel %vm3304, %v6842, %v6860
    %v6863 = vld [vmem:[%s9] sm:$0xff]
    %v6864 = vld [vmem:[%s9 + $0x8] sm:$0xff]
    %v6865 = vld [vmem:[%s9 + $0x10] sm:$0xff]
    %v6866 = vld [vmem:[%s9 + $0x18] sm:$0xff]
    %v6867 = vld [vmem:[%s9 + $0x20] sm:$0xff]
    %v6868 = vld [vmem:[%s9 + $0x28] sm:$0xff]
    %v6869 = vld [vmem:[%s9 + $0x30] sm:$0xff]
    %v6870 = vld [vmem:[%s9 + $0x38] sm:$0xff]
    %v6871 = vld [vmem:[%s9 + $0x40] sm:$0xff]
    %v6872 = vld [vmem:[%s9 + $0x48] sm:$0xff]
    %v6873 = vld [vmem:[%s9 + $0x50] sm:$0xff]
    %v6874 = vld [vmem:[%s9 + $0x58] sm:$0xff]
    %v6875 = vld [vmem:[%s9 + $0x60] sm:$0xff]
    %v6876 = vld [vmem:[%s9 + $0x68] sm:$0xff]
    %v6877 = vld [vmem:[%s9 + $0x70] sm:$0xff]
    %v6878 = vld [vmem:[%s9 + $0x78] sm:$0xff]
    %v6879 = vld [vmem:[%s9 + $0x80] sm:$0xff]
    %v6880 = vld [vmem:[%s9 + $0x88] sm:$0xff]
    %v6881 = vld [vmem:[%s9 + $0x90] sm:$0xff]
    %v6882 = vld [vmem:[%s9 + $0x98] sm:$0xff]
    %v6883 = vld [vmem:[%s9 + $0xa0] sm:$0xff]
    %v6884 = vld [vmem:[%s9 + $0xa8] sm:$0xff]
    %v6885 = vld [vmem:[%s9 + $0xb0] sm:$0xff]
    %v6886 = vld [vmem:[%s9 + $0xb8] sm:$0xff]
    %v6887 = vld [vmem:[%s9 + $0xc0] sm:$0xff]
    %v6888 = vld [vmem:[%s9 + $0xc8] sm:$0xff]
    %v6889 = vld [vmem:[%s9 + $0xd0] sm:$0xff]
    %v6890 = vld [vmem:[%s9 + $0xd8] sm:$0xff]
    %v6891 = vld [vmem:[%s9 + $0xe0] sm:$0xff]
    %v6892 = vld [vmem:[%s9 + $0xe8] sm:$0xff]
    %v6893 = vld [vmem:[%s9 + $0xf0] sm:$0xff]
    %v6894 = vld [vmem:[%s9 + $0xf8] sm:$0xff]
    %6895 = vmatprep.subr.mxu0 0.0
    %6896 = vmatpush1.msra.mxu0 %v6878
    %6897 = vmatprep.subr.mxu0 0.0
    %6898 = vmatpush1.msra.mxu0 %v6877
    %6899 = vmatprep.subr.mxu0 0.0
    %6900 = vmatpush1.msra.mxu0 %v6876
    %6901 = vmatprep.subr.mxu0 0.0
    %6902 = vmatpush1.msra.mxu0 %v6875
    %6903 = vmatprep.subr.mxu0 0.0
    %6904 = vmatpush1.msra.mxu0 %v6874
    %6905 = vmatprep.subr.mxu0 0.0
    %6906 = vmatpush1.msra.mxu0 %v6873
    %6907 = vmatprep.subr.mxu0 0.0
    %6908 = vmatpush1.msra.mxu0 %v6872
    %6909 = vmatprep.subr.mxu0 0.0
    %6910 = vmatpush1.msra.mxu0 %v6871
    %6911 = vmatprep.subr.mxu0 0.0
    %6912 = vmatpush1.msra.mxu0 %v6870
    %6913 = vmatprep.subr.mxu0 0.0
    %6914 = vmatpush1.msra.mxu0 %v6869
    %6915 = vmatprep.subr.mxu0 0.0
    %6916 = vmatpush1.msra.mxu0 %v6868
    %6917 = vmatprep.subr.mxu0 0.0
    %6918 = vmatpush1.msra.mxu0 %v6867
    %6919 = vmatprep.subr.mxu0 0.0
    %6920 = vmatpush1.msra.mxu0 %v6866
    %6921 = vmatprep.subr.mxu0 0.0
    %6922 = vmatpush1.msra.mxu0 %v6865
    %6923 = vmatprep.subr.mxu0 0.0
    %6924 = vmatpush1.msra.mxu0 %v6864
    %6925 = vmatprep.subr.mxu0 0.0
    %6926 = vmatpush1.msra.mxu0 %v6863
    %6927 = vmatprep.subr.mxu0 0.0
    %6928 = vmatpush2.msra.mxu0 %v6894
    %6929 = vmatprep.subr.mxu0 0.0
    %6930 = vmatpush2.msra.mxu0 %v6893
    %6931 = vmatprep.subr.mxu0 0.0
    %6932 = vmatpush2.msra.mxu0 %v6892
    %6933 = vmatprep.subr.mxu0 0.0
    %6934 = vmatpush2.msra.mxu0 %v6891
    %6935 = vmatprep.subr.mxu0 0.0
    %6936 = vmatpush2.msra.mxu0 %v6890
    %6937 = vmatprep.subr.mxu0 0.0
    %6938 = vmatpush2.msra.mxu0 %v6889
    %6939 = vmatprep.subr.mxu0 0.0
    %6940 = vmatpush2.msra.mxu0 %v6888
    %6941 = vmatprep.subr.mxu0 0.0
    %6942 = vmatpush2.msra.mxu0 %v6887
    %6943 = vmatprep.subr.mxu0 0.0
    %6944 = vmatpush2.msra.mxu0 %v6886
    %6945 = vmatprep.subr.mxu0 0.0
    %6946 = vmatpush2.msra.mxu0 %v6885
    %6947 = vmatprep.subr.mxu0 0.0
    %6948 = vmatpush2.msra.mxu0 %v6884
    %6949 = vmatprep.subr.mxu0 0.0
    %6950 = vmatpush2.msra.mxu0 %v6883
    %6951 = vmatprep.subr.mxu0 0.0
    %6952 = vmatpush2.msra.mxu0 %v6882
    %6953 = vmatprep.subr.mxu0 0.0
    %6954 = vmatpush2.msra.mxu0 %v6881
    %6955 = vmatprep.subr.mxu0 0.0
    %6956 = vmatpush2.msra.mxu0 %v6880
    %6957 = vmatprep.subr.mxu0 0.0
    %6958 = vmatpush2.msra.mxu0 %v6879
    %6959 = vmatprep.mubr.f32.mxu0 %v6862
    %6960 = vmatmul.mubr.f32.gmra.mxu0 %v6861
    %v6961 = vpop.f32.mrf.mxu0
    %v6962 = vadd.f32 0.0, %v6961
    %v6963 = vpop.f32.mrf.mxu0
    %6964 = vdwg.mxu0
    %v6965 = vmul.f32 %v6962, 0.0009765625
    %v6966 = vmul.f32 %v6965, %v6965
    %v6968 = vrot.slane %v6966, 7
    %v6970 = vsub.f32 %v6965, %v6968
    %v6971 = vld [vmem:[#allocation11] sm:$0x1]
    %v6972 = vadd.f32 %v6970, 1e-05
    %v6973 = vrsqrt.pop %v6972
    %v6976 = vunpack.c.l.s4 1966171168
    %v6977 = vunpack.c.0.s8 %v6976
    %v6978 = vlaneseq
    %v6979 = vshrl.u32 %v6978, 7
    %v6980 = vsub.s32 %v6977, %v6979
    %v6981 = vrot.slane %v6973, %v6980
    %v6982 = vcombine.high %v6981, %v6981
    %v6984 = vunpack.c.l.s4 1966171168
    %v6985 = vunpack.c.0.s8 %v6984
    %v6986 = vlaneseq
    %v6987 = vshrl.u32 %v6986, 7
    %v6988 = vsub.s32 %v6985, %v6987
    %v6989 = vrot.slane %v6982, %v6988
    %v6991 = vmul.f32 %v6971, %v6989
    %v6992 = vld [vmem:[#allocation13] sm:$0x1]
    %v6993 = vmul.f32 %v6965, %v6991
    %v6994 = vsub.f32 %v6992, %v6993
    %v6996 = vlaneseq
    %v6997 = vshrl.u32 %v6996, 7
    %v6998 = vsub.s32 0, %v6997
    %v6999 = vrot.slane %v6994, %v6998
    %v7001 = vsel %vm3304, %v6991, %v6999
    %v7002 = vld [vmem:[#allocation14] sm:$0xff]
    %v7004 = vcombine.high %v7002, %v7002
    %vm7005 = vcmask 31744
    %v7007 = vsel %vm7005, %v7001, 0
    %vm7009 = vcmask 1043456
    %v7010 = vsel %vm7009, %v7002, 0
    %v7012 = vsel %vm7009, %v7004, 0
    %7014 = vmatprep.subr.mxu0 0.0
    %7015 = vmatpush1.msra.mxu0 0.0
    %7016 = vmatprep.subr.mxu0 0.0
    %7017 = vmatpush1.msra.mxu0 0.0
    %7018 = vmatprep.subr.mxu0 0.0
    %7019 = vmatpush1.msra.mxu0 0.0
    %7020 = vmatprep.subr.mxu0 0.0
    %7021 = vmatpush1.msra.mxu0 0.0
    %7022 = vmatprep.subr.mxu0 0.0
    %7023 = vmatpush1.msra.mxu0 0.0
    %7024 = vmatprep.subr.mxu0 0.0
    %7025 = vmatpush1.msra.mxu0 0.0
    %7026 = vmatprep.subr.mxu0 0.0
    %7027 = vmatpush1.msra.mxu0 0.0
    %7028 = vmatprep.subr.mxu0 0.0
    %7029 = vmatpush1.msra.mxu0 0.0
    %7030 = vmatprep.subr.mxu0 0.0
    %7031 = vmatpush1.msra.mxu0 0.0
    %7032 = vmatprep.subr.mxu0 0.0
    %7033 = vmatpush1.msra.mxu0 0.0
    %7034 = vmatprep.subr.mxu0 0.0
    %7035 = vmatpush1.msra.mxu0 0.0
    %7036 = vmatprep.subr.mxu0 0.0
    %7037 = vmatpush1.msra.mxu0 0.0
    %7038 = vmatprep.subr.mxu0 0.0
    %7039 = vmatpush1.msra.mxu0 0.0
    %7040 = vmatprep.subr.mxu0 0.0
    %7041 = vmatpush1.msra.mxu0 0.0
    %7042 = vmatprep.subr.mxu0 0.0
    %7043 = vmatpush1.msra.mxu0 0.0
    %7044 = vmatprep.subr.mxu0 %v7012
    %7045 = vmatpush1.msra.mxu0 %v7010
    %7046 = vmatprep.subr.mxu0 0.0
    %7047 = vmatpush2.msra.mxu0 0.0
    %7048 = vmatprep.subr.mxu0 0.0
    %7049 = vmatpush2.msra.mxu0 0.0
    %7050 = vmatprep.subr.mxu0 0.0
    %7051 = vmatpush2.msra.mxu0 0.0
    %7052 = vmatprep.subr.mxu0 0.0
    %7053 = vmatpush2.msra.mxu0 0.0
    %7054 = vmatprep.subr.mxu0 0.0
    %7055 = vmatpush2.msra.mxu0 0.0
    %7056 = vmatprep.subr.mxu0 0.0
    %7057 = vmatpush2.msra.mxu0 0.0
    %7058 = vmatprep.subr.mxu0 0.0
    %7059 = vmatpush2.msra.mxu0 0.0
    %7060 = vmatprep.subr.mxu0 0.0
    %7061 = vmatpush2.msra.mxu0 0.0
    %7062 = vmatprep.subr.mxu0 0.0
    %7063 = vmatpush2.msra.mxu0 0.0
    %7064 = vmatprep.subr.mxu0 0.0
    %7065 = vmatpush2.msra.mxu0 0.0
    %7066 = vmatprep.subr.mxu0 0.0
    %7067 = vmatpush2.msra.mxu0 0.0
    %7068 = vmatprep.subr.mxu0 0.0
    %7069 = vmatpush2.msra.mxu0 0.0
    %7070 = vmatprep.subr.mxu0 0.0
    %7071 = vmatpush2.msra.mxu0 0.0
    %7072 = vmatprep.subr.mxu0 0.0
    %7073 = vmatpush2.msra.mxu0 0.0
    %7074 = vmatprep.subr.mxu0 0.0
    %7075 = vmatpush2.msra.mxu0 0.0
    %7076 = vmatprep.subr.mxu0 0.0
    %7077 = vmatpush2.msra.mxu0 0.0
    %7078 = vmatprep.mubr.f32.mxu0 0.0
    %7079 = vmatmul.mubr.f32.gmra.mxu0 %v7007
    %v7080 = vpop.f32.mrf.mxu0
    %v7081 = vadd.f32 0.0, %v7080
    %v7082 = vpop.f32.mrf.mxu0
    %v7083 = vadd.f32 0.0, %v7082
    %7084 = vdwg.mxu0
    %v7085 = vlaneseq
    %v7086 = vshrl.u32 %v7085, 7
    %v7087 = vsub.s32 0, %v7086
    %v7088 = vrot.slane %v7081, %v7087
    %v7089 = vlaneseq
    %v7090 = vshrl.u32 %v7089, 7
    %v7091 = vsub.s32 0, %v7090
    %v7092 = vrot.slane %v7083, %v7091
    %v7093 = vmul.f32 %v6825, %v7088
    %v7094 = vmul.f32 %v6826, %v7092
    %v7095 = vmul.f32 %v6827, %v7088
    %v7096 = vmul.f32 %v6828, %v7092
    %v7097 = vlaneseq
    %v7098 = vshrl.u32 %v7097, 7
    %v7099 = vsub.s32 1, %v7098
    %v7100 = vrot.slane %v7081, %v7099
    %v7101 = vlaneseq
    %v7102 = vshrl.u32 %v7101, 7
    %v7103 = vsub.s32 1, %v7102
    %v7104 = vrot.slane %v7083, %v7103
    %v7105 = vadd.f32 %v7093, %v7100
    %v7106 = vadd.f32 %v7094, %v7104
    %v7107 = vadd.f32 %v7095, %v7100
    %v7108 = vadd.f32 %v7096, %v7104
    %vm7109 = vcmp.ge.f32.partialorder %v7105, 1.0
    %vm7110 = vcmp.ge.f32.partialorder %v7106, 1.0
    %vm7111 = vcmp.ge.f32.partialorder %v7107, 1.0
    %vm7112 = vcmp.ge.f32.partialorder %v7108, 1.0
    %v7113 = vsel %vm7109, 1, 0
    %v7114 = vsel %vm7110, 1, 0
    %v7115 = vsel %vm7111, 1, 0
    %v7116 = vsel %vm7112, 1, 0
    %v7117 = vcvt.s32.f32 %v7113
    %v7118 = vcvt.s32.f32 %v7114
    %v7119 = vcvt.s32.f32 %v7115
    %v7120 = vcvt.s32.f32 %v7116
    %7121 = vst [vmem:[%s11] sm:$0xff] %v7117
    %7122 = vst [vmem:[%s11 + $0x8] sm:$0xff] %v7118
    %7123 = vst [vmem:[%s11 + $0x10] sm:$0xff] %v7119
    %7124 = vst [vmem:[%s11 + $0x18] sm:$0xff] %v7120
    // Predicated region
    $region78: #{spiking_bottleneck_3d.1} parent=1 // pred_check
      _
    $region79: #{spiking_bottleneck_3d.1} parent=1 // pred_check_branch
      %7126 = sbr.rel (0) target = $region81
    $region80: #{spiking_bottleneck_3d.1} parent=1 // pred_region
      _
    $region81: #{spiking_bottleneck_3d.1} parent=1 // pred_fallthru
      _
    // Predicated region
    $region82: #{spiking_bottleneck_3d.1} parent=1 // pred_check
      _
    $region83: #{spiking_bottleneck_3d.1} parent=1 // pred_check_branch
      %7128 = sbr.rel (0) target = $region85
    $region84: #{spiking_bottleneck_3d.1} parent=1 // pred_region
      _
    $region85: #{spiking_bottleneck_3d.1} parent=1 // pred_fallthru
      _
    %7129 = vsyncpa [#allocation4], 1
    %7130 = vsyncpa [#allocation6], 1
    %7131 = vsyncpa [#allocation9], 1
    %7132 = vsyncpa [#allocation12], 1
    %7133 = vsyncpa [#allocation15], 1

</llo_original>
